<compile_context>
chip_gen: v7x
topology: tpu7x:2x2x1
jax: 0.10.0
libtpu: 0.0.40
codegen_flags: <defaults>
</compile_context>

<pallas_src>
import functools
import math

import jax
import jax.numpy as jnp
from jax.experimental import pallas as pl
from jax.experimental.pallas import tpu as pltpu

KSIZE = 5
PAD = 2
BN_EPS = 1e-5


def _round_up(v, m):
    return (v + m - 1) // m * m


def _lenet_kernel(x_ref, mask_ref, *rest, relus, Wp, slack):
    """All conv(+BN)+ReLU layers for one batch element, entirely in VMEM.

    rest = (w0, b0, w1, b1, ..., w4, b4, o_ref, act_ref, patch_ref)
      w_i : (Cout_pad_i, 25*Cin_pad_i)  BN-scale-folded, zero-padded weights
      b_i : (Cout_pad_i, 1)             fused bias (zero in padded rows)
      act_ref   : (Cmax, slack + P + slack)  activation buffer with zero halo
      patch_ref : (25*Cmax, P)               im2col scratch
    """
    n_layers = len(relus)
    wb_refs = rest[:2 * n_layers]
    o_ref = rest[2 * n_layers]
    act_ref = rest[2 * n_layers + 1]
    patch_ref = rest[2 * n_layers + 2]

    P = mask_ref.shape[1]

    # Zero the activation buffer once per batch element: this provides (a) the
    # zero halo read by the shifted im2col views, (b) zero rows for padded
    # channels and (c) a zero padding ring. Then drop this batch element's
    # padded input in (channel-padded to 8 in the wrapper -> aligned store).
    act_ref[...] = jnp.zeros(act_ref.shape, act_ref.dtype)
    cin0 = x_ref.shape[1]
    act_ref[0:cin0, slack:slack + P] = x_ref[0]

    mask = mask_ref[...]  # (1, P): 1.0 on the valid HxW window, 0.0 elsewhere.

    for li in range(n_layers):
        w_ref = wb_refs[2 * li]
        b_ref = wb_refs[2 * li + 1]
        cout_p, k = w_ref.shape
        cin_p = k // (KSIZE * KSIZE)

        # im2col: 25 statically shifted full-width views of the padded feature
        # map, stacked on the (8-aligned) sublane axis -> (25*cin_p, P).
        for dy in range(KSIZE):
            for dx in range(KSIZE):
                t = dy * KSIZE + dx
                shift = (dy - PAD) * Wp + (dx - PAD)
                start = slack + shift
                patch_ref[t * cin_p:(t + 1) * cin_p, :] = (
                    act_ref[0:cin_p, start:start + P])

        # Whole conv layer as one MXU matmul: (Cout_pad, 25*Cin_pad) x
        # (25*Cin_pad, P) with a lane-dense N = P, f32 accumulation.
        y = jnp.dot(w_ref[...], patch_ref[0:k, :],
                    preferred_element_type=jnp.float32)
        y = y + b_ref[...]
        if relus[li]:
            y = jnp.maximum(y, 0.0)

        if li == n_layers - 1:
            # Channel 0 of the last layer is the network output. Write it
            # directly; the padding ring is cropped in the wrapper.
            o_ref[0] = y[0:1, :]
        else:
            # Re-zero the padding ring so the next layer sees exact zero
            # padding (padded channel rows are already exactly zero because
            # their weight rows and biases are zero).
            act_ref[0:cout_p, slack:slack + P] = y * mask


@functools.partial(jax.jit, static_argnames=("relus",))
def _lenet_forward_impl(x_nchw, weights, scales, biases, relus):
    x = x_nchw.astype(jnp.float32)          # x = x.float()
    N, C, H, W = x.shape
    Hp = H + 2 * PAD
    # Pad the width so the flattened padded map (Hp * Wp) is a multiple of 128
    # -> lane-dense, unmasked vector accesses (for 16x16: Wp=32, P=640).
    Wp = _round_up(W + 2 * PAD, 128 // math.gcd(Hp, 128))
    P = Hp * Wp
    slack = _round_up(PAD * Wp + PAD, 128)  # halo for the shifted im2col views
    assert slack >= PAD * Wp + PAD

    # Pad spatially ONCE for the whole network, pad the input channels up to a
    # sublane multiple (zeros match the zero weight columns), flatten to
    # (N, C_pad0, Hp*Wp).
    c_pad0 = _round_up(C, 8)
    xp = jnp.pad(x, ((0, 0), (0, c_pad0 - C),
                     (PAD, Hp - H - PAD), (PAD, Wp - W - PAD)))
    xp = xp.reshape(N, c_pad0, P)

    # Mask of the valid HxW window inside the padded map.
    mask = jnp.zeros((Hp, Wp), jnp.float32).at[PAD:PAD + H, PAD:PAD + W].set(1.0)
    mask = mask.reshape(1, P)

    # Fold the BN scale into the conv weights, pad channels to multiples of 8
    # and flatten to (Cout_pad, 25*Cin_pad) matching the kernel patch layout.
    flat_args = []
    max_cp = c_pad0
    for w, s, b in zip(weights, scales, biases):
        kh, kw, cin, cout = w.shape
        cin_p = _round_up(cin, 8)
        cout_p = _round_up(cout, 8)
        max_cp = max(max_cp, cin_p, cout_p)
        wf = (w * s.reshape(1, 1, 1, cout)).astype(jnp.float32)
        wf = jnp.transpose(wf, (3, 0, 1, 2))                  # (Cout, 5, 5, Cin)
        wf = jnp.pad(wf, ((0, cout_p - cout), (0, 0), (0, 0), (0, cin_p - cin)))
        wf = wf.reshape(cout_p, kh * kw * cin_p)
        bf = jnp.pad(b.astype(jnp.float32), (0, cout_p - cout)).reshape(cout_p, 1)
        flat_args += [wf, bf]

    kernel = functools.partial(_lenet_kernel, relus=relus, Wp=Wp, slack=slack)

    in_specs = [
        pl.BlockSpec((1, c_pad0, P), lambda n: (n, 0, 0)),  # this batch element
        pl.BlockSpec((1, P), lambda n: (0, 0)),             # interior mask
    ]
    for a in flat_args:                                     # weights / biases
        in_specs.append(pl.BlockSpec(a.shape, lambda n: (0, 0)))

    out = pl.pallas_call(
        kernel,
        out_shape=jax.ShapeDtypeStruct((N, 1, P), jnp.float32),
        grid=(N,),
        in_specs=in_specs,
        out_specs=pl.BlockSpec((1, 1, P), lambda n: (n, 0, 0)),
        scratch_shapes=[
            pltpu.VMEM((max_cp, slack + P + slack), jnp.float32),  # act + halo
            pltpu.VMEM((KSIZE * KSIZE * max_cp, P), jnp.float32),  # im2col patch
        ],
        compiler_params=pltpu.CompilerParams(
            dimension_semantics=("parallel",)),  # v7x: batch elements across TCs
    )(xp, mask, *flat_args)

    # Back to NCHW, dropping the padding ring / width slack.
    return out.reshape(N, 1, Hp, Wp)[:, :, PAD:PAD + H, PAD:PAD + W]


def lenet_forward(x_nchw, params):
    """Forward pass. Input/output in NCHW to match torch semantics."""
    weights = tuple(p[0] for p in params)
    scales = tuple(p[1] for p in params)
    biases = tuple(p[2] for p in params)
    relus = tuple(bool(p[3]) for p in params)
    return _lenet_forward_impl(x_nchw, weights, scales, biases, relus=relus)


def init_params(key):
    """Deterministic synthetic parameters matching the module's shapes."""
    chans = [2, 4, 8, 12, 6, 1]
    params = []
    for li in range(5):
        cin, cout = chans[li], chans[li + 1]
        key, kw, kb, kg, kbe, km, kv = jax.random.split(key, 7)
        # Conv weight stored as (5, 5, Cin, Cout)  (torch layout is (Cout,Cin,5,5))
        w = jax.random.normal(kw, (KSIZE, KSIZE, cin, cout), jnp.float32) * 0.1
        conv_b = jax.random.normal(kb, (cout,), jnp.float32) * 0.1
        if li < 4:
            # BatchNorm2d in inference mode: fold (gamma, beta, mean, var) into
            # a per-channel scale/bias.
            gamma = 1.0 + 0.1 * jax.random.normal(kg, (cout,), jnp.float32)
            beta = 0.1 * jax.random.normal(kbe, (cout,), jnp.float32)
            mean = 0.1 * jax.random.normal(km, (cout,), jnp.float32)
            var = jax.nn.softplus(jax.random.normal(kv, (cout,), jnp.float32))
            s = gamma / jnp.sqrt(var + BN_EPS)
            eff_scale = s
            eff_bias = (conv_b - mean) * s + beta
            relu = True
        else:
            eff_scale = jnp.ones((cout,), jnp.float32)
            eff_bias = conv_b
            relu = False
        params.append((w, eff_scale, eff_bias, relu))
    return params


def _reference_forward(x_nchw, params):
    """Pure-JAX reference (lax conv) for a correctness sanity check."""
    x = x_nchw.astype(jnp.float32)
    x = jnp.transpose(x, (0, 2, 3, 1))
    for (w, s, b, relu) in params:
        y = jax.lax.conv_general_dilated(
            x, w, window_strides=(1, 1), padding=((PAD, PAD), (PAD, PAD)),
            dimension_numbers=("NHWC", "HWIO", "NHWC"))
        y = y * s.reshape(1, 1, 1, -1) + b.reshape(1, 1, 1, -1)
        if relu:
            y = jnp.maximum(y, 0.0)
        x = y
    return jnp.transpose(x, (0, 3, 1, 2))


if __name__ == "__main__":
    key = jax.random.PRNGKey(0)
    kx, kp = jax.random.split(key)

    # Small input consistent with the module: NCHW, 2 input channels.
    N, C, H, W = 2, 2, 16, 16
    x = jax.random.normal(kx, (N, C, H, W), jnp.float32)

    params = init_params(kp)

    out = jax.block_until_ready(lenet_forward(x, params))
    assert out.shape == (N, 1, H, W), out.shape

    ref = jax.block_until_ready(_reference_forward(x, params))
    assert jnp.allclose(out, ref, rtol=1e-4, atol=1e-4), "mismatch vs reference"

    print("KERNEL_OK")
</pallas_src>

<mosaic_0001>
module attributes {stable_mosaic.version = 11 : i64} {
  func.func @_lenet_kernel(%arg0: i32, %arg1: memref<1x8x640xf32, #tpu.memory_space<vmem>>, %arg2: memref<1x640xf32, #tpu.memory_space<vmem>>, %arg3: memref<8x200xf32, #tpu.memory_space<vmem>>, %arg4: memref<8x1xf32, #tpu.memory_space<vmem>>, %arg5: memref<8x200xf32, #tpu.memory_space<vmem>>, %arg6: memref<8x1xf32, #tpu.memory_space<vmem>>, %arg7: memref<16x200xf32, #tpu.memory_space<vmem>>, %arg8: memref<16x1xf32, #tpu.memory_space<vmem>>, %arg9: memref<8x400xf32, #tpu.memory_space<vmem>>, %arg10: memref<8x1xf32, #tpu.memory_space<vmem>>, %arg11: memref<8x200xf32, #tpu.memory_space<vmem>>, %arg12: memref<8x1xf32, #tpu.memory_space<vmem>>, %arg13: memref<1x1x640xf32, #tpu.memory_space<vmem>>, %arg14: memref<16x896xf32, #tpu.memory_space<vmem>>, %arg15: memref<400x640xf32, #tpu.memory_space<vmem>>) attributes {dimension_semantics = [#tpu.dimension_semantics<parallel>], iteration_bounds = array<i64: 2>, scalar_prefetch = 0 : i64, scratch_operands = 2 : i64, tpu.core_type = #tpu.core_type<tc>, window_params = [{transform_indices = @transform_0, window_bounds = array<i64: 1, 8, 640>}, {pipeline_mode = #tpu.pipeline_mode<synchronous>, transform_indices = @transform_1, window_bounds = array<i64: 1, 640>}, {pipeline_mode = #tpu.pipeline_mode<synchronous>, transform_indices = @transform_2, window_bounds = array<i64: 8, 200>}, {pipeline_mode = #tpu.pipeline_mode<synchronous>, transform_indices = @transform_3, window_bounds = array<i64: 8, 1>}, {pipeline_mode = #tpu.pipeline_mode<synchronous>, transform_indices = @transform_4, window_bounds = array<i64: 8, 200>}, {pipeline_mode = #tpu.pipeline_mode<synchronous>, transform_indices = @transform_5, window_bounds = array<i64: 8, 1>}, {pipeline_mode = #tpu.pipeline_mode<synchronous>, transform_indices = @transform_6, window_bounds = array<i64: 16, 200>}, {pipeline_mode = #tpu.pipeline_mode<synchronous>, transform_indices = @transform_7, window_bounds = array<i64: 16, 1>}, {pipeline_mode = #tpu.pipeline_mode<synchronous>, transform_indices = @transform_8, window_bounds = array<i64: 8, 400>}, {pipeline_mode = #tpu.pipeline_mode<synchronous>, transform_indices = @transform_9, window_bounds = array<i64: 8, 1>}, {pipeline_mode = #tpu.pipeline_mode<synchronous>, transform_indices = @transform_10, window_bounds = array<i64: 8, 200>}, {pipeline_mode = #tpu.pipeline_mode<synchronous>, transform_indices = @transform_11, window_bounds = array<i64: 8, 1>}, {transform_indices = @transform_12, window_bounds = array<i64: 1, 1, 640>}]} {
    %cst = arith.constant 0.000000e+00 : f32
    %0 = vector.broadcast %cst : f32 to vector<16x896xf32>
    %c0 = arith.constant 0 : index
    %c0_0 = arith.constant 0 : index
    %1 = vector.load %arg14[%c0, %c0_0] : memref<16x896xf32, #tpu.memory_space<vmem>>, vector<16x896xf32>
    tpu.vector_store %arg14[%c0, %c0_0], %0 {strides = array<i32>} : memref<16x896xf32, #tpu.memory_space<vmem>>, vector<16x896xf32>,
    %c0_1 = arith.constant 0 : index
    %c0_2 = arith.constant 0 : index
    %c0_3 = arith.constant 0 : index
    %2 = vector.load %arg1[%c0_1, %c0_2, %c0_3] : memref<1x8x640xf32, #tpu.memory_space<vmem>>, vector<1x8x640xf32>
    %3 = vector.shape_cast %2 : vector<1x8x640xf32> to vector<8x640xf32>
    %c0_4 = arith.constant 0 : index
    %c128 = arith.constant 128 : index
    %4 = vector.load %arg14[%c0_4, %c128] : memref<16x896xf32, #tpu.memory_space<vmem>>, vector<8x640xf32>
    tpu.vector_store %arg14[%c0_4, %c128], %3 {strides = array<i32>} : memref<16x896xf32, #tpu.memory_space<vmem>>, vector<8x640xf32>,
    %c0_5 = arith.constant 0 : index
    %c0_6 = arith.constant 0 : index
    %5 = vector.load %arg2[%c0_5, %c0_6] : memref<1x640xf32, #tpu.memory_space<vmem>>, vector<1x640xf32>
    %c0_7 = arith.constant 0 : index
    %c62 = arith.constant 62 : index
    %6 = vector.load %arg14[%c0_7, %c62] : memref<16x896xf32, #tpu.memory_space<vmem>>, vector<8x640xf32>
    %c0_8 = arith.constant 0 : index
    %c0_9 = arith.constant 0 : index
    %7 = vector.load %arg15[%c0_8, %c0_9] : memref<400x640xf32, #tpu.memory_space<vmem>>, vector<8x640xf32>
    tpu.vector_store %arg15[%c0_8, %c0_9], %6 {strides = array<i32>} : memref<400x640xf32, #tpu.memory_space<vmem>>, vector<8x640xf32>,
    %c0_10 = arith.constant 0 : index
    %c63 = arith.constant 63 : index
    %8 = vector.load %arg14[%c0_10, %c63] : memref<16x896xf32, #tpu.memory_space<vmem>>, vector<8x640xf32>
    %c8 = arith.constant 8 : index
    %c0_11 = arith.constant 0 : index
    %9 = vector.load %arg15[%c8, %c0_11] : memref<400x640xf32, #tpu.memory_space<vmem>>, vector<8x640xf32>
    tpu.vector_store %arg15[%c8, %c0_11], %8 {strides = array<i32>} : memref<400x640xf32, #tpu.memory_space<vmem>>, vector<8x640xf32>,
    %c0_12 = arith.constant 0 : index
    %c64 = arith.constant 64 : index
    %10 = vector.load %arg14[%c0_12, %c64] : memref<16x896xf32, #tpu.memory_space<vmem>>, vector<8x640xf32>
    %c16 = arith.constant 16 : index
    %c0_13 = arith.constant 0 : index
    %11 = vector.load %arg15[%c16, %c0_13] : memref<400x640xf32, #tpu.memory_space<vmem>>, vector<8x640xf32>
    tpu.vector_store %arg15[%c16, %c0_13], %10 {strides = array<i32>} : memref<400x640xf32, #tpu.memory_space<vmem>>, vector<8x640xf32>,
    %c0_14 = arith.constant 0 : index
    %c65 = arith.constant 65 : index
    %12 = vector.load %arg14[%c0_14, %c65] : memref<16x896xf32, #tpu.memory_space<vmem>>, vector<8x640xf32>
    %c24 = arith.constant 24 : index
    %c0_15 = arith.constant 0 : index
    %13 = vector.load %arg15[%c24, %c0_15] : memref<400x640xf32, #tpu.memory_space<vmem>>, vector<8x640xf32>
    tpu.vector_store %arg15[%c24, %c0_15], %12 {strides = array<i32>} : memref<400x640xf32, #tpu.memory_space<vmem>>, vector<8x640xf32>,
    %c0_16 = arith.constant 0 : index
    %c66 = arith.constant 66 : index
    %14 = vector.load %arg14[%c0_16, %c66] : memref<16x896xf32, #tpu.memory_space<vmem>>, vector<8x640xf32>
    %c32 = arith.constant 32 : index
    %c0_17 = arith.constant 0 : index
    %15 = vector.load %arg15[%c32, %c0_17] : memref<400x640xf32, #tpu.memory_space<vmem>>, vector<8x640xf32>
    tpu.vector_store %arg15[%c32, %c0_17], %14 {strides = array<i32>} : memref<400x640xf32, #tpu.memory_space<vmem>>, vector<8x640xf32>,
    %c0_18 = arith.constant 0 : index
    %c94 = arith.constant 94 : index
    %16 = vector.load %arg14[%c0_18, %c94] : memref<16x896xf32, #tpu.memory_space<vmem>>, vector<8x640xf32>
    %c40 = arith.constant 40 : index
    %c0_19 = arith.constant 0 : index
    %17 = vector.load %arg15[%c40, %c0_19] : memref<400x640xf32, #tpu.memory_space<vmem>>, vector<8x640xf32>
    tpu.vector_store %arg15[%c40, %c0_19], %16 {strides = array<i32>} : memref<400x640xf32, #tpu.memory_space<vmem>>, vector<8x640xf32>,
    %c0_20 = arith.constant 0 : index
    %c95 = arith.constant 95 : index
    %18 = vector.load %arg14[%c0_20, %c95] : memref<16x896xf32, #tpu.memory_space<vmem>>, vector<8x640xf32>
    %c48 = arith.constant 48 : index
    %c0_21 = arith.constant 0 : index
    %19 = vector.load %arg15[%c48, %c0_21] : memref<400x640xf32, #tpu.memory_space<vmem>>, vector<8x640xf32>
    tpu.vector_store %arg15[%c48, %c0_21], %18 {strides = array<i32>} : memref<400x640xf32, #tpu.memory_space<vmem>>, vector<8x640xf32>,
    %c0_22 = arith.constant 0 : index
    %c96 = arith.constant 96 : index
    %20 = vector.load %arg14[%c0_22, %c96] : memref<16x896xf32, #tpu.memory_space<vmem>>, vector<8x640xf32>
    %c56 = arith.constant 56 : index
    %c0_23 = arith.constant 0 : index
    %21 = vector.load %arg15[%c56, %c0_23] : memref<400x640xf32, #tpu.memory_space<vmem>>, vector<8x640xf32>
    tpu.vector_store %arg15[%c56, %c0_23], %20 {strides = array<i32>} : memref<400x640xf32, #tpu.memory_space<vmem>>, vector<8x640xf32>,
    %c0_24 = arith.constant 0 : index
    %c97 = arith.constant 97 : index
    %22 = vector.load %arg14[%c0_24, %c97] : memref<16x896xf32, #tpu.memory_space<vmem>>, vector<8x640xf32>
    %c64_25 = arith.constant 64 : index
    %c0_26 = arith.constant 0 : index
    %23 = vector.load %arg15[%c64_25, %c0_26] : memref<400x640xf32, #tpu.memory_space<vmem>>, vector<8x640xf32>
    tpu.vector_store %arg15[%c64_25, %c0_26], %22 {strides = array<i32>} : memref<400x640xf32, #tpu.memory_space<vmem>>, vector<8x640xf32>,
    %c0_27 = arith.constant 0 : index
    %c98 = arith.constant 98 : index
    %24 = vector.load %arg14[%c0_27, %c98] : memref<16x896xf32, #tpu.memory_space<vmem>>, vector<8x640xf32>
    %c72 = arith.constant 72 : index
    %c0_28 = arith.constant 0 : index
    %25 = vector.load %arg15[%c72, %c0_28] : memref<400x640xf32, #tpu.memory_space<vmem>>, vector<8x640xf32>
    tpu.vector_store %arg15[%c72, %c0_28], %24 {strides = array<i32>} : memref<400x640xf32, #tpu.memory_space<vmem>>, vector<8x640xf32>,
    %c0_29 = arith.constant 0 : index
    %c126 = arith.constant 126 : index
    %26 = vector.load %arg14[%c0_29, %c126] : memref<16x896xf32, #tpu.memory_space<vmem>>, vector<8x640xf32>
    %c80 = arith.constant 80 : index
    %c0_30 = arith.constant 0 : index
    %27 = vector.load %arg15[%c80, %c0_30] : memref<400x640xf32, #tpu.memory_space<vmem>>, vector<8x640xf32>
    tpu.vector_store %arg15[%c80, %c0_30], %26 {strides = array<i32>} : memref<400x640xf32, #tpu.memory_space<vmem>>, vector<8x640xf32>,
    %c0_31 = arith.constant 0 : index
    %c127 = arith.constant 127 : index
    %28 = vector.load %arg14[%c0_31, %c127] : memref<16x896xf32, #tpu.memory_space<vmem>>, vector<8x640xf32>
    %c88 = arith.constant 88 : index
    %c0_32 = arith.constant 0 : index
    %29 = vector.load %arg15[%c88, %c0_32] : memref<400x640xf32, #tpu.memory_space<vmem>>, vector<8x640xf32>
    tpu.vector_store %arg15[%c88, %c0_32], %28 {strides = array<i32>} : memref<400x640xf32, #tpu.memory_space<vmem>>, vector<8x640xf32>,
    %c0_33 = arith.constant 0 : index
    %c128_34 = arith.constant 128 : index
    %30 = vector.load %arg14[%c0_33, %c128_34] : memref<16x896xf32, #tpu.memory_space<vmem>>, vector<8x640xf32>
    %c96_35 = arith.constant 96 : index
    %c0_36 = arith.constant 0 : index
    %31 = vector.load %arg15[%c96_35, %c0_36] : memref<400x640xf32, #tpu.memory_space<vmem>>, vector<8x640xf32>
    tpu.vector_store %arg15[%c96_35, %c0_36], %30 {strides = array<i32>} : memref<400x640xf32, #tpu.memory_space<vmem>>, vector<8x640xf32>,
    %c0_37 = arith.constant 0 : index
    %c129 = arith.constant 129 : index
    %32 = vector.load %arg14[%c0_37, %c129] : memref<16x896xf32, #tpu.memory_space<vmem>>, vector<8x640xf32>
    %c104 = arith.constant 104 : index
    %c0_38 = arith.constant 0 : index
    %33 = vector.load %arg15[%c104, %c0_38] : memref<400x640xf32, #tpu.memory_space<vmem>>, vector<8x640xf32>
    tpu.vector_store %arg15[%c104, %c0_38], %32 {strides = array<i32>} : memref<400x640xf32, #tpu.memory_space<vmem>>, vector<8x640xf32>,
    %c0_39 = arith.constant 0 : index
    %c130 = arith.constant 130 : index
    %34 = vector.load %arg14[%c0_39, %c130] : memref<16x896xf32, #tpu.memory_space<vmem>>, vector<8x640xf32>
    %c112 = arith.constant 112 : index
    %c0_40 = arith.constant 0 : index
    %35 = vector.load %arg15[%c112, %c0_40] : memref<400x640xf32, #tpu.memory_space<vmem>>, vector<8x640xf32>
    tpu.vector_store %arg15[%c112, %c0_40], %34 {strides = array<i32>} : memref<400x640xf32, #tpu.memory_space<vmem>>, vector<8x640xf32>,
    %c0_41 = arith.constant 0 : index
    %c158 = arith.constant 158 : index
    %36 = vector.load %arg14[%c0_41, %c158] : memref<16x896xf32, #tpu.memory_space<vmem>>, vector<8x640xf32>
    %c120 = arith.constant 120 : index
    %c0_42 = arith.constant 0 : index
    %37 = vector.load %arg15[%c120, %c0_42] : memref<400x640xf32, #tpu.memory_space<vmem>>, vector<8x640xf32>
    tpu.vector_store %arg15[%c120, %c0_42], %36 {strides = array<i32>} : memref<400x640xf32, #tpu.memory_space<vmem>>, vector<8x640xf32>,
    %c0_43 = arith.constant 0 : index
    %c159 = arith.constant 159 : index
    %38 = vector.load %arg14[%c0_43, %c159] : memref<16x896xf32, #tpu.memory_space<vmem>>, vector<8x640xf32>
    %c128_44 = arith.constant 128 : index
    %c0_45 = arith.constant 0 : index
    %39 = vector.load %arg15[%c128_44, %c0_45] : memref<400x640xf32, #tpu.memory_space<vmem>>, vector<8x640xf32>
    tpu.vector_store %arg15[%c128_44, %c0_45], %38 {strides = array<i32>} : memref<400x640xf32, #tpu.memory_space<vmem>>, vector<8x640xf32>,
    %c0_46 = arith.constant 0 : index
    %c160 = arith.constant 160 : index
    %40 = vector.load %arg14[%c0_46, %c160] : memref<16x896xf32, #tpu.memory_space<vmem>>, vector<8x640xf32>
    %c136 = arith.constant 136 : index
    %c0_47 = arith.constant 0 : index
    %41 = vector.load %arg15[%c136, %c0_47] : memref<400x640xf32, #tpu.memory_space<vmem>>, vector<8x640xf32>
    tpu.vector_store %arg15[%c136, %c0_47], %40 {strides = array<i32>} : memref<400x640xf32, #tpu.memory_space<vmem>>, vector<8x640xf32>,
    %c0_48 = arith.constant 0 : index
    %c161 = arith.constant 161 : index
    %42 = vector.load %arg14[%c0_48, %c161] : memref<16x896xf32, #tpu.memory_space<vmem>>, vector<8x640xf32>
    %c144 = arith.constant 144 : index
    %c0_49 = arith.constant 0 : index
    %43 = vector.load %arg15[%c144, %c0_49] : memref<400x640xf32, #tpu.memory_space<vmem>>, vector<8x640xf32>
    tpu.vector_store %arg15[%c144, %c0_49], %42 {strides = array<i32>} : memref<400x640xf32, #tpu.memory_space<vmem>>, vector<8x640xf32>,
    %c0_50 = arith.constant 0 : index
    %c162 = arith.constant 162 : index
    %44 = vector.load %arg14[%c0_50, %c162] : memref<16x896xf32, #tpu.memory_space<vmem>>, vector<8x640xf32>
    %c152 = arith.constant 152 : index
    %c0_51 = arith.constant 0 : index
    %45 = vector.load %arg15[%c152, %c0_51] : memref<400x640xf32, #tpu.memory_space<vmem>>, vector<8x640xf32>
    tpu.vector_store %arg15[%c152, %c0_51], %44 {strides = array<i32>} : memref<400x640xf32, #tpu.memory_space<vmem>>, vector<8x640xf32>,
    %c0_52 = arith.constant 0 : index
    %c190 = arith.constant 190 : index
    %46 = vector.load %arg14[%c0_52, %c190] : memref<16x896xf32, #tpu.memory_space<vmem>>, vector<8x640xf32>
    %c160_53 = arith.constant 160 : index
    %c0_54 = arith.constant 0 : index
    %47 = vector.load %arg15[%c160_53, %c0_54] : memref<400x640xf32, #tpu.memory_space<vmem>>, vector<8x640xf32>
    tpu.vector_store %arg15[%c160_53, %c0_54], %46 {strides = array<i32>} : memref<400x640xf32, #tpu.memory_space<vmem>>, vector<8x640xf32>,
    %c0_55 = arith.constant 0 : index
    %c191 = arith.constant 191 : index
    %48 = vector.load %arg14[%c0_55, %c191] : memref<16x896xf32, #tpu.memory_space<vmem>>, vector<8x640xf32>
    %c168 = arith.constant 168 : index
    %c0_56 = arith.constant 0 : index
    %49 = vector.load %arg15[%c168, %c0_56] : memref<400x640xf32, #tpu.memory_space<vmem>>, vector<8x640xf32>
    tpu.vector_store %arg15[%c168, %c0_56], %48 {strides = array<i32>} : memref<400x640xf32, #tpu.memory_space<vmem>>, vector<8x640xf32>,
    %c0_57 = arith.constant 0 : index
    %c192 = arith.constant 192 : index
    %50 = vector.load %arg14[%c0_57, %c192] : memref<16x896xf32, #tpu.memory_space<vmem>>, vector<8x640xf32>
    %c176 = arith.constant 176 : index
    %c0_58 = arith.constant 0 : index
    %51 = vector.load %arg15[%c176, %c0_58] : memref<400x640xf32, #tpu.memory_space<vmem>>, vector<8x640xf32>
    tpu.vector_store %arg15[%c176, %c0_58], %50 {strides = array<i32>} : memref<400x640xf32, #tpu.memory_space<vmem>>, vector<8x640xf32>,
    %c0_59 = arith.constant 0 : index
    %c193 = arith.constant 193 : index
    %52 = vector.load %arg14[%c0_59, %c193] : memref<16x896xf32, #tpu.memory_space<vmem>>, vector<8x640xf32>
    %c184 = arith.constant 184 : index
    %c0_60 = arith.constant 0 : index
    %53 = vector.load %arg15[%c184, %c0_60] : memref<400x640xf32, #tpu.memory_space<vmem>>, vector<8x640xf32>
    tpu.vector_store %arg15[%c184, %c0_60], %52 {strides = array<i32>} : memref<400x640xf32, #tpu.memory_space<vmem>>, vector<8x640xf32>,
    %c0_61 = arith.constant 0 : index
    %c194 = arith.constant 194 : index
    %54 = vector.load %arg14[%c0_61, %c194] : memref<16x896xf32, #tpu.memory_space<vmem>>, vector<8x640xf32>
    %c192_62 = arith.constant 192 : index
    %c0_63 = arith.constant 0 : index
    %55 = vector.load %arg15[%c192_62, %c0_63] : memref<400x640xf32, #tpu.memory_space<vmem>>, vector<8x640xf32>
    tpu.vector_store %arg15[%c192_62, %c0_63], %54 {strides = array<i32>} : memref<400x640xf32, #tpu.memory_space<vmem>>, vector<8x640xf32>,
    %c0_64 = arith.constant 0 : index
    %c0_65 = arith.constant 0 : index
    %56 = vector.load %arg3[%c0_64, %c0_65] : memref<8x200xf32, #tpu.memory_space<vmem>>, vector<8x200xf32>
    %c0_66 = arith.constant 0 : index
    %c0_67 = arith.constant 0 : index
    %57 = vector.load %arg15[%c0_66, %c0_67] : memref<400x640xf32, #tpu.memory_space<vmem>>, vector<200x640xf32>
    %cst_68 = arith.constant dense<0.000000e+00> : vector<8x640xf32>
    %58 = tpu.matmul %56, %57, %cst_68 {dimension_numbers = #tpu.dot_dimension_numbers<[1], [0], [0], [1], [0, 0, 1, 1], [], []>} : vector<8x200xf32>, vector<200x640xf32>, vector<8x640xf32> -> vector<8x640xf32>
    %c0_69 = arith.constant 0 : index
    %c0_70 = arith.constant 0 : index
    %59 = vector.load %arg4[%c0_69, %c0_70] : memref<8x1xf32, #tpu.memory_space<vmem>>, vector<8x1xf32>
    %60 = vector.broadcast %59 : vector<8x1xf32> to vector<8x640xf32>
    %61 = arith.addf %58, %60 : vector<8x640xf32>
    %cst_71 = arith.constant 0.000000e+00 : f32
    %62 = vector.broadcast %cst_71 : f32 to vector<8x640xf32>
    %63 = arith.maximumf %61, %62 : vector<8x640xf32>
    %64 = vector.broadcast %5 : vector<1x640xf32> to vector<8x640xf32>
    %65 = arith.mulf %63, %64 : vector<8x640xf32>
    %c0_72 = arith.constant 0 : index
    %c128_73 = arith.constant 128 : index
    %66 = vector.load %arg14[%c0_72, %c128_73] : memref<16x896xf32, #tpu.memory_space<vmem>>, vector<8x640xf32>
    tpu.vector_store %arg14[%c0_72, %c128_73], %65 {strides = array<i32>} : memref<16x896xf32, #tpu.memory_space<vmem>>, vector<8x640xf32>,
    %c0_74 = arith.constant 0 : index
    %c62_75 = arith.constant 62 : index
    %67 = vector.load %arg14[%c0_74, %c62_75] : memref<16x896xf32, #tpu.memory_space<vmem>>, vector<8x640xf32>
    %c0_76 = arith.constant 0 : index
    %c0_77 = arith.constant 0 : index
    %68 = vector.load %arg15[%c0_76, %c0_77] : memref<400x640xf32, #tpu.memory_space<vmem>>, vector<8x640xf32>
    tpu.vector_store %arg15[%c0_76, %c0_77], %67 {strides = array<i32>} : memref<400x640xf32, #tpu.memory_space<vmem>>, vector<8x640xf32>,
    %c0_78 = arith.constant 0 : index
    %c63_79 = arith.constant 63 : index
    %69 = vector.load %arg14[%c0_78, %c63_79] : memref<16x896xf32, #tpu.memory_space<vmem>>, vector<8x640xf32>
    %c8_80 = arith.constant 8 : index
    %c0_81 = arith.constant 0 : index
    %70 = vector.load %arg15[%c8_80, %c0_81] : memref<400x640xf32, #tpu.memory_space<vmem>>, vector<8x640xf32>
    tpu.vector_store %arg15[%c8_80, %c0_81], %69 {strides = array<i32>} : memref<400x640xf32, #tpu.memory_space<vmem>>, vector<8x640xf32>,
    %c0_82 = arith.constant 0 : index
    %c64_83 = arith.constant 64 : index
    %71 = vector.load %arg14[%c0_82, %c64_83] : memref<16x896xf32, #tpu.memory_space<vmem>>, vector<8x640xf32>
    %c16_84 = arith.constant 16 : index
    %c0_85 = arith.constant 0 : index
    %72 = vector.load %arg15[%c16_84, %c0_85] : memref<400x640xf32, #tpu.memory_space<vmem>>, vector<8x640xf32>
    tpu.vector_store %arg15[%c16_84, %c0_85], %71 {strides = array<i32>} : memref<400x640xf32, #tpu.memory_space<vmem>>, vector<8x640xf32>,
    %c0_86 = arith.constant 0 : index
    %c65_87 = arith.constant 65 : index
    %73 = vector.load %arg14[%c0_86, %c65_87] : memref<16x896xf32, #tpu.memory_space<vmem>>, vector<8x640xf32>
    %c24_88 = arith.constant 24 : index
    %c0_89 = arith.constant 0 : index
    %74 = vector.load %arg15[%c24_88, %c0_89] : memref<400x640xf32, #tpu.memory_space<vmem>>, vector<8x640xf32>
    tpu.vector_store %arg15[%c24_88, %c0_89], %73 {strides = array<i32>} : memref<400x640xf32, #tpu.memory_space<vmem>>, vector<8x640xf32>,
    %c0_90 = arith.constant 0 : index
    %c66_91 = arith.constant 66 : index
    %75 = vector.load %arg14[%c0_90, %c66_91] : memref<16x896xf32, #tpu.memory_space<vmem>>, vector<8x640xf32>
    %c32_92 = arith.constant 32 : index
    %c0_93 = arith.constant 0 : index
    %76 = vector.load %arg15[%c32_92, %c0_93] : memref<400x640xf32, #tpu.memory_space<vmem>>, vector<8x640xf32>
    tpu.vector_store %arg15[%c32_92, %c0_93], %75 {strides = array<i32>} : memref<400x640xf32, #tpu.memory_space<vmem>>, vector<8x640xf32>,
    %c0_94 = arith.constant 0 : index
    %c94_95 = arith.constant 94 : index
    %77 = vector.load %arg14[%c0_94, %c94_95] : memref<16x896xf32, #tpu.memory_space<vmem>>, vector<8x640xf32>
    %c40_96 = arith.constant 40 : index
    %c0_97 = arith.constant 0 : index
    %78 = vector.load %arg15[%c40_96, %c0_97] : memref<400x640xf32, #tpu.memory_space<vmem>>, vector<8x640xf32>
    tpu.vector_store %arg15[%c40_96, %c0_97], %77 {strides = array<i32>} : memref<400x640xf32, #tpu.memory_space<vmem>>, vector<8x640xf32>,
    %c0_98 = arith.constant 0 : index
    %c95_99 = arith.constant 95 : index
    %79 = vector.load %arg14[%c0_98, %c95_99] : memref<16x896xf32, #tpu.memory_space<vmem>>, vector<8x640xf32>
    %c48_100 = arith.constant 48 : index
    %c0_101 = arith.constant 0 : index
    %80 = vector.load %arg15[%c48_100, %c0_101] : memref<400x640xf32, #tpu.memory_space<vmem>>, vector<8x640xf32>
    tpu.vector_store %arg15[%c48_100, %c0_101], %79 {strides = array<i32>} : memref<400x640xf32, #tpu.memory_space<vmem>>, vector<8x640xf32>,
    %c0_102 = arith.constant 0 : index
    %c96_103 = arith.constant 96 : index
    %81 = vector.load %arg14[%c0_102, %c96_103] : memref<16x896xf32, #tpu.memory_space<vmem>>, vector<8x640xf32>
    %c56_104 = arith.constant 56 : index
    %c0_105 = arith.constant 0 : index
    %82 = vector.load %arg15[%c56_104, %c0_105] : memref<400x640xf32, #tpu.memory_space<vmem>>, vector<8x640xf32>
    tpu.vector_store %arg15[%c56_104, %c0_105], %81 {strides = array<i32>} : memref<400x640xf32, #tpu.memory_space<vmem>>, vector<8x640xf32>,
    %c0_106 = arith.constant 0 : index
    %c97_107 = arith.constant 97 : index
    %83 = vector.load %arg14[%c0_106, %c97_107] : memref<16x896xf32, #tpu.memory_space<vmem>>, vector<8x640xf32>
    %c64_108 = arith.constant 64 : index
    %c0_109 = arith.constant 0 : index
    %84 = vector.load %arg15[%c64_108, %c0_109] : memref<400x640xf32, #tpu.memory_space<vmem>>, vector<8x640xf32>
    tpu.vector_store %arg15[%c64_108, %c0_109], %83 {strides = array<i32>} : memref<400x640xf32, #tpu.memory_space<vmem>>, vector<8x640xf32>,
    %c0_110 = arith.constant 0 : index
    %c98_111 = arith.constant 98 : index
    %85 = vector.load %arg14[%c0_110, %c98_111] : memref<16x896xf32, #tpu.memory_space<vmem>>, vector<8x640xf32>
    %c72_112 = arith.constant 72 : index
    %c0_113 = arith.constant 0 : index
    %86 = vector.load %arg15[%c72_112, %c0_113] : memref<400x640xf32, #tpu.memory_space<vmem>>, vector<8x640xf32>
    tpu.vector_store %arg15[%c72_112, %c0_113], %85 {strides = array<i32>} : memref<400x640xf32, #tpu.memory_space<vmem>>, vector<8x640xf32>,
    %c0_114 = arith.constant 0 : index
    %c126_115 = arith.constant 126 : index
    %87 = vector.load %arg14[%c0_114, %c126_115] : memref<16x896xf32, #tpu.memory_space<vmem>>, vector<8x640xf32>
    %c80_116 = arith.constant 80 : index
    %c0_117 = arith.constant 0 : index
    %88 = vector.load %arg15[%c80_116, %c0_117] : memref<400x640xf32, #tpu.memory_space<vmem>>, vector<8x640xf32>
    tpu.vector_store %arg15[%c80_116, %c0_117], %87 {strides = array<i32>} : memref<400x640xf32, #tpu.memory_space<vmem>>, vector<8x640xf32>,
    %c0_118 = arith.constant 0 : index
    %c127_119 = arith.constant 127 : index
    %89 = vector.load %arg14[%c0_118, %c127_119] : memref<16x896xf32, #tpu.memory_space<vmem>>, vector<8x640xf32>
    %c88_120 = arith.constant 88 : index
    %c0_121 = arith.constant 0 : index
    %90 = vector.load %arg15[%c88_120, %c0_121] : memref<400x640xf32, #tpu.memory_space<vmem>>, vector<8x640xf32>
    tpu.vector_store %arg15[%c88_120, %c0_121], %89 {strides = array<i32>} : memref<400x640xf32, #tpu.memory_space<vmem>>, vector<8x640xf32>,
    %c0_122 = arith.constant 0 : index
    %c128_123 = arith.constant 128 : index
    %91 = vector.load %arg14[%c0_122, %c128_123] : memref<16x896xf32, #tpu.memory_space<vmem>>, vector<8x640xf32>
    %c96_124 = arith.constant 96 : index
    %c0_125 = arith.constant 0 : index
    %92 = vector.load %arg15[%c96_124, %c0_125] : memref<400x640xf32, #tpu.memory_space<vmem>>, vector<8x640xf32>
    tpu.vector_store %arg15[%c96_124, %c0_125], %91 {strides = array<i32>} : memref<400x640xf32, #tpu.memory_space<vmem>>, vector<8x640xf32>,
    %c0_126 = arith.constant 0 : index
    %c129_127 = arith.constant 129 : index
    %93 = vector.load %arg14[%c0_126, %c129_127] : memref<16x896xf32, #tpu.memory_space<vmem>>, vector<8x640xf32>
    %c104_128 = arith.constant 104 : index
    %c0_129 = arith.constant 0 : index
    %94 = vector.load %arg15[%c104_128, %c0_129] : memref<400x640xf32, #tpu.memory_space<vmem>>, vector<8x640xf32>
    tpu.vector_store %arg15[%c104_128, %c0_129], %93 {strides = array<i32>} : memref<400x640xf32, #tpu.memory_space<vmem>>, vector<8x640xf32>,
    %c0_130 = arith.constant 0 : index
    %c130_131 = arith.constant 130 : index
    %95 = vector.load %arg14[%c0_130, %c130_131] : memref<16x896xf32, #tpu.memory_space<vmem>>, vector<8x640xf32>
    %c112_132 = arith.constant 112 : index
    %c0_133 = arith.constant 0 : index
    %96 = vector.load %arg15[%c112_132, %c0_133] : memref<400x640xf32, #tpu.memory_space<vmem>>, vector<8x640xf32>
    tpu.vector_store %arg15[%c112_132, %c0_133], %95 {strides = array<i32>} : memref<400x640xf32, #tpu.memory_space<vmem>>, vector<8x640xf32>,
    %c0_134 = arith.constant 0 : index
    %c158_135 = arith.constant 158 : index
    %97 = vector.load %arg14[%c0_134, %c158_135] : memref<16x896xf32, #tpu.memory_space<vmem>>, vector<8x640xf32>
    %c120_136 = arith.constant 120 : index
    %c0_137 = arith.constant 0 : index
    %98 = vector.load %arg15[%c120_136, %c0_137] : memref<400x640xf32, #tpu.memory_space<vmem>>, vector<8x640xf32>
    tpu.vector_store %arg15[%c120_136, %c0_137], %97 {strides = array<i32>} : memref<400x640xf32, #tpu.memory_space<vmem>>, vector<8x640xf32>,
    %c0_138 = arith.constant 0 : index
    %c159_139 = arith.constant 159 : index
    %99 = vector.load %arg14[%c0_138, %c159_139] : memref<16x896xf32, #tpu.memory_space<vmem>>, vector<8x640xf32>
    %c128_140 = arith.constant 128 : index
    %c0_141 = arith.constant 0 : index
    %100 = vector.load %arg15[%c128_140, %c0_141] : memref<400x640xf32, #tpu.memory_space<vmem>>, vector<8x640xf32>
    tpu.vector_store %arg15[%c128_140, %c0_141], %99 {strides = array<i32>} : memref<400x640xf32, #tpu.memory_space<vmem>>, vector<8x640xf32>,
    %c0_142 = arith.constant 0 : index
    %c160_143 = arith.constant 160 : index
    %101 = vector.load %arg14[%c0_142, %c160_143] : memref<16x896xf32, #tpu.memory_space<vmem>>, vector<8x640xf32>
    %c136_144 = arith.constant 136 : index
    %c0_145 = arith.constant 0 : index
    %102 = vector.load %arg15[%c136_144, %c0_145] : memref<400x640xf32, #tpu.memory_space<vmem>>, vector<8x640xf32>
    tpu.vector_store %arg15[%c136_144, %c0_145], %101 {strides = array<i32>} : memref<400x640xf32, #tpu.memory_space<vmem>>, vector<8x640xf32>,
    %c0_146 = arith.constant 0 : index
    %c161_147 = arith.constant 161 : index
    %103 = vector.load %arg14[%c0_146, %c161_147] : memref<16x896xf32, #tpu.memory_space<vmem>>, vector<8x640xf32>
    %c144_148 = arith.constant 144 : index
    %c0_149 = arith.constant 0 : index
    %104 = vector.load %arg15[%c144_148, %c0_149] : memref<400x640xf32, #tpu.memory_space<vmem>>, vector<8x640xf32>
    tpu.vector_store %arg15[%c144_148, %c0_149], %103 {strides = array<i32>} : memref<400x640xf32, #tpu.memory_space<vmem>>, vector<8x640xf32>,
    %c0_150 = arith.constant 0 : index
    %c162_151 = arith.constant 162 : index
    %105 = vector.load %arg14[%c0_150, %c162_151] : memref<16x896xf32, #tpu.memory_space<vmem>>, vector<8x640xf32>
    %c152_152 = arith.constant 152 : index
    %c0_153 = arith.constant 0 : index
    %106 = vector.load %arg15[%c152_152, %c0_153] : memref<400x640xf32, #tpu.memory_space<vmem>>, vector<8x640xf32>
    tpu.vector_store %arg15[%c152_152, %c0_153], %105 {strides = array<i32>} : memref<400x640xf32, #tpu.memory_space<vmem>>, vector<8x640xf32>,
    %c0_154 = arith.constant 0 : index
    %c190_155 = arith.constant 190 : index
    %107 = vector.load %arg14[%c0_154, %c190_155] : memref<16x896xf32, #tpu.memory_space<vmem>>, vector<8x640xf32>
    %c160_156 = arith.constant 160 : index
    %c0_157 = arith.constant 0 : index
    %108 = vector.load %arg15[%c160_156, %c0_157] : memref<400x640xf32, #tpu.memory_space<vmem>>, vector<8x640xf32>
    tpu.vector_store %arg15[%c160_156, %c0_157], %107 {strides = array<i32>} : memref<400x640xf32, #tpu.memory_space<vmem>>, vector<8x640xf32>,
    %c0_158 = arith.constant 0 : index
    %c191_159 = arith.constant 191 : index
    %109 = vector.load %arg14[%c0_158, %c191_159] : memref<16x896xf32, #tpu.memory_space<vmem>>, vector<8x640xf32>
    %c168_160 = arith.constant 168 : index
    %c0_161 = arith.constant 0 : index
    %110 = vector.load %arg15[%c168_160, %c0_161] : memref<400x640xf32, #tpu.memory_space<vmem>>, vector<8x640xf32>
    tpu.vector_store %arg15[%c168_160, %c0_161], %109 {strides = array<i32>} : memref<400x640xf32, #tpu.memory_space<vmem>>, vector<8x640xf32>,
    %c0_162 = arith.constant 0 : index
    %c192_163 = arith.constant 192 : index
    %111 = vector.load %arg14[%c0_162, %c192_163] : memref<16x896xf32, #tpu.memory_space<vmem>>, vector<8x640xf32>
    %c176_164 = arith.constant 176 : index
    %c0_165 = arith.constant 0 : index
    %112 = vector.load %arg15[%c176_164, %c0_165] : memref<400x640xf32, #tpu.memory_space<vmem>>, vector<8x640xf32>
    tpu.vector_store %arg15[%c176_164, %c0_165], %111 {strides = array<i32>} : memref<400x640xf32, #tpu.memory_space<vmem>>, vector<8x640xf32>,
    %c0_166 = arith.constant 0 : index
    %c193_167 = arith.constant 193 : index
    %113 = vector.load %arg14[%c0_166, %c193_167] : memref<16x896xf32, #tpu.memory_space<vmem>>, vector<8x640xf32>
    %c184_168 = arith.constant 184 : index
    %c0_169 = arith.constant 0 : index
    %114 = vector.load %arg15[%c184_168, %c0_169] : memref<400x640xf32, #tpu.memory_space<vmem>>, vector<8x640xf32>
    tpu.vector_store %arg15[%c184_168, %c0_169], %113 {strides = array<i32>} : memref<400x640xf32, #tpu.memory_space<vmem>>, vector<8x640xf32>,
    %c0_170 = arith.constant 0 : index
    %c194_171 = arith.constant 194 : index
    %115 = vector.load %arg14[%c0_170, %c194_171] : memref<16x896xf32, #tpu.memory_space<vmem>>, vector<8x640xf32>
    %c192_172 = arith.constant 192 : index
    %c0_173 = arith.constant 0 : index
    %116 = vector.load %arg15[%c192_172, %c0_173] : memref<400x640xf32, #tpu.memory_space<vmem>>, vector<8x640xf32>
    tpu.vector_store %arg15[%c192_172, %c0_173], %115 {strides = array<i32>} : memref<400x640xf32, #tpu.memory_space<vmem>>, vector<8x640xf32>,
    %c0_174 = arith.constant 0 : index
    %c0_175 = arith.constant 0 : index
    %117 = vector.load %arg5[%c0_174, %c0_175] : memref<8x200xf32, #tpu.memory_space<vmem>>, vector<8x200xf32>
    %c0_176 = arith.constant 0 : index
    %c0_177 = arith.constant 0 : index
    %118 = vector.load %arg15[%c0_176, %c0_177] : memref<400x640xf32, #tpu.memory_space<vmem>>, vector<200x640xf32>
    %cst_178 = arith.constant dense<0.000000e+00> : vector<8x640xf32>
    %119 = tpu.matmul %117, %118, %cst_178 {dimension_numbers = #tpu.dot_dimension_numbers<[1], [0], [0], [1], [0, 0, 1, 1], [], []>} : vector<8x200xf32>, vector<200x640xf32>, vector<8x640xf32> -> vector<8x640xf32>
    %c0_179 = arith.constant 0 : index
    %c0_180 = arith.constant 0 : index
    %120 = vector.load %arg6[%c0_179, %c0_180] : memref<8x1xf32, #tpu.memory_space<vmem>>, vector<8x1xf32>
    %121 = vector.broadcast %120 : vector<8x1xf32> to vector<8x640xf32>
    %122 = arith.addf %119, %121 : vector<8x640xf32>
    %cst_181 = arith.constant 0.000000e+00 : f32
    %123 = vector.broadcast %cst_181 : f32 to vector<8x640xf32>
    %124 = arith.maximumf %122, %123 : vector<8x640xf32>
    %125 = vector.broadcast %5 : vector<1x640xf32> to vector<8x640xf32>
    %126 = arith.mulf %124, %125 : vector<8x640xf32>
    %c0_182 = arith.constant 0 : index
    %c128_183 = arith.constant 128 : index
    %127 = vector.load %arg14[%c0_182, %c128_183] : memref<16x896xf32, #tpu.memory_space<vmem>>, vector<8x640xf32>
    tpu.vector_store %arg14[%c0_182, %c128_183], %126 {strides = array<i32>} : memref<16x896xf32, #tpu.memory_space<vmem>>, vector<8x640xf32>,
    %c0_184 = arith.constant 0 : index
    %c62_185 = arith.constant 62 : index
    %128 = vector.load %arg14[%c0_184, %c62_185] : memref<16x896xf32, #tpu.memory_space<vmem>>, vector<8x640xf32>
    %c0_186 = arith.constant 0 : index
    %c0_187 = arith.constant 0 : index
    %129 = vector.load %arg15[%c0_186, %c0_187] : memref<400x640xf32, #tpu.memory_space<vmem>>, vector<8x640xf32>
    tpu.vector_store %arg15[%c0_186, %c0_187], %128 {strides = array<i32>} : memref<400x640xf32, #tpu.memory_space<vmem>>, vector<8x640xf32>,
    %c0_188 = arith.constant 0 : index
    %c63_189 = arith.constant 63 : index
    %130 = vector.load %arg14[%c0_188, %c63_189] : memref<16x896xf32, #tpu.memory_space<vmem>>, vector<8x640xf32>
    %c8_190 = arith.constant 8 : index
    %c0_191 = arith.constant 0 : index
    %131 = vector.load %arg15[%c8_190, %c0_191] : memref<400x640xf32, #tpu.memory_space<vmem>>, vector<8x640xf32>
    tpu.vector_store %arg15[%c8_190, %c0_191], %130 {strides = array<i32>} : memref<400x640xf32, #tpu.memory_space<vmem>>, vector<8x640xf32>,
    %c0_192 = arith.constant 0 : index
    %c64_193 = arith.constant 64 : index
    %132 = vector.load %arg14[%c0_192, %c64_193] : memref<16x896xf32, #tpu.memory_space<vmem>>, vector<8x640xf32>
    %c16_194 = arith.constant 16 : index
    %c0_195 = arith.constant 0 : index
    %133 = vector.load %arg15[%c16_194, %c0_195] : memref<400x640xf32, #tpu.memory_space<vmem>>, vector<8x640xf32>
    tpu.vector_store %arg15[%c16_194, %c0_195], %132 {strides = array<i32>} : memref<400x640xf32, #tpu.memory_space<vmem>>, vector<8x640xf32>,
    %c0_196 = arith.constant 0 : index
    %c65_197 = arith.constant 65 : index
    %134 = vector.load %arg14[%c0_196, %c65_197] : memref<16x896xf32, #tpu.memory_space<vmem>>, vector<8x640xf32>
    %c24_198 = arith.constant 24 : index
    %c0_199 = arith.constant 0 : index
    %135 = vector.load %arg15[%c24_198, %c0_199] : memref<400x640xf32, #tpu.memory_space<vmem>>, vector<8x640xf32>
    tpu.vector_store %arg15[%c24_198, %c0_199], %134 {strides = array<i32>} : memref<400x640xf32, #tpu.memory_space<vmem>>, vector<8x640xf32>,
    %c0_200 = arith.constant 0 : index
    %c66_201 = arith.constant 66 : index
    %136 = vector.load %arg14[%c0_200, %c66_201] : memref<16x896xf32, #tpu.memory_space<vmem>>, vector<8x640xf32>
    %c32_202 = arith.constant 32 : index
    %c0_203 = arith.constant 0 : index
    %137 = vector.load %arg15[%c32_202, %c0_203] : memref<400x640xf32, #tpu.memory_space<vmem>>, vector<8x640xf32>
    tpu.vector_store %arg15[%c32_202, %c0_203], %136 {strides = array<i32>} : memref<400x640xf32, #tpu.memory_space<vmem>>, vector<8x640xf32>,
    %c0_204 = arith.constant 0 : index
    %c94_205 = arith.constant 94 : index
    %138 = vector.load %arg14[%c0_204, %c94_205] : memref<16x896xf32, #tpu.memory_space<vmem>>, vector<8x640xf32>
    %c40_206 = arith.constant 40 : index
    %c0_207 = arith.constant 0 : index
    %139 = vector.load %arg15[%c40_206, %c0_207] : memref<400x640xf32, #tpu.memory_space<vmem>>, vector<8x640xf32>
    tpu.vector_store %arg15[%c40_206, %c0_207], %138 {strides = array<i32>} : memref<400x640xf32, #tpu.memory_space<vmem>>, vector<8x640xf32>,
    %c0_208 = arith.constant 0 : index
    %c95_209 = arith.constant 95 : index
    %140 = vector.load %arg14[%c0_208, %c95_209] : memref<16x896xf32, #tpu.memory_space<vmem>>, vector<8x640xf32>
    %c48_210 = arith.constant 48 : index
    %c0_211 = arith.constant 0 : index
    %141 = vector.load %arg15[%c48_210, %c0_211] : memref<400x640xf32, #tpu.memory_space<vmem>>, vector<8x640xf32>
    tpu.vector_store %arg15[%c48_210, %c0_211], %140 {strides = array<i32>} : memref<400x640xf32, #tpu.memory_space<vmem>>, vector<8x640xf32>,
    %c0_212 = arith.constant 0 : index
    %c96_213 = arith.constant 96 : index
    %142 = vector.load %arg14[%c0_212, %c96_213] : memref<16x896xf32, #tpu.memory_space<vmem>>, vector<8x640xf32>
    %c56_214 = arith.constant 56 : index
    %c0_215 = arith.constant 0 : index
    %143 = vector.load %arg15[%c56_214, %c0_215] : memref<400x640xf32, #tpu.memory_space<vmem>>, vector<8x640xf32>
    tpu.vector_store %arg15[%c56_214, %c0_215], %142 {strides = array<i32>} : memref<400x640xf32, #tpu.memory_space<vmem>>, vector<8x640xf32>,
    %c0_216 = arith.constant 0 : index
    %c97_217 = arith.constant 97 : index
    %144 = vector.load %arg14[%c0_216, %c97_217] : memref<16x896xf32, #tpu.memory_space<vmem>>, vector<8x640xf32>
    %c64_218 = arith.constant 64 : index
    %c0_219 = arith.constant 0 : index
    %145 = vector.load %arg15[%c64_218, %c0_219] : memref<400x640xf32, #tpu.memory_space<vmem>>, vector<8x640xf32>
    tpu.vector_store %arg15[%c64_218, %c0_219], %144 {strides = array<i32>} : memref<400x640xf32, #tpu.memory_space<vmem>>, vector<8x640xf32>,
    %c0_220 = arith.constant 0 : index
    %c98_221 = arith.constant 98 : index
    %146 = vector.load %arg14[%c0_220, %c98_221] : memref<16x896xf32, #tpu.memory_space<vmem>>, vector<8x640xf32>
    %c72_222 = arith.constant 72 : index
    %c0_223 = arith.constant 0 : index
    %147 = vector.load %arg15[%c72_222, %c0_223] : memref<400x640xf32, #tpu.memory_space<vmem>>, vector<8x640xf32>
    tpu.vector_store %arg15[%c72_222, %c0_223], %146 {strides = array<i32>} : memref<400x640xf32, #tpu.memory_space<vmem>>, vector<8x640xf32>,
    %c0_224 = arith.constant 0 : index
    %c126_225 = arith.constant 126 : index
    %148 = vector.load %arg14[%c0_224, %c126_225] : memref<16x896xf32, #tpu.memory_space<vmem>>, vector<8x640xf32>
    %c80_226 = arith.constant 80 : index
    %c0_227 = arith.constant 0 : index
    %149 = vector.load %arg15[%c80_226, %c0_227] : memref<400x640xf32, #tpu.memory_space<vmem>>, vector<8x640xf32>
    tpu.vector_store %arg15[%c80_226, %c0_227], %148 {strides = array<i32>} : memref<400x640xf32, #tpu.memory_space<vmem>>, vector<8x640xf32>,
    %c0_228 = arith.constant 0 : index
    %c127_229 = arith.constant 127 : index
    %150 = vector.load %arg14[%c0_228, %c127_229] : memref<16x896xf32, #tpu.memory_space<vmem>>, vector<8x640xf32>
    %c88_230 = arith.constant 88 : index
    %c0_231 = arith.constant 0 : index
    %151 = vector.load %arg15[%c88_230, %c0_231] : memref<400x640xf32, #tpu.memory_space<vmem>>, vector<8x640xf32>
    tpu.vector_store %arg15[%c88_230, %c0_231], %150 {strides = array<i32>} : memref<400x640xf32, #tpu.memory_space<vmem>>, vector<8x640xf32>,
    %c0_232 = arith.constant 0 : index
    %c128_233 = arith.constant 128 : index
    %152 = vector.load %arg14[%c0_232, %c128_233] : memref<16x896xf32, #tpu.memory_space<vmem>>, vector<8x640xf32>
    %c96_234 = arith.constant 96 : index
    %c0_235 = arith.constant 0 : index
    %153 = vector.load %arg15[%c96_234, %c0_235] : memref<400x640xf32, #tpu.memory_space<vmem>>, vector<8x640xf32>
    tpu.vector_store %arg15[%c96_234, %c0_235], %152 {strides = array<i32>} : memref<400x640xf32, #tpu.memory_space<vmem>>, vector<8x640xf32>,
    %c0_236 = arith.constant 0 : index
    %c129_237 = arith.constant 129 : index
    %154 = vector.load %arg14[%c0_236, %c129_237] : memref<16x896xf32, #tpu.memory_space<vmem>>, vector<8x640xf32>
    %c104_238 = arith.constant 104 : index
    %c0_239 = arith.constant 0 : index
    %155 = vector.load %arg15[%c104_238, %c0_239] : memref<400x640xf32, #tpu.memory_space<vmem>>, vector<8x640xf32>
    tpu.vector_store %arg15[%c104_238, %c0_239], %154 {strides = array<i32>} : memref<400x640xf32, #tpu.memory_space<vmem>>, vector<8x640xf32>,
    %c0_240 = arith.constant 0 : index
    %c130_241 = arith.constant 130 : index
    %156 = vector.load %arg14[%c0_240, %c130_241] : memref<16x896xf32, #tpu.memory_space<vmem>>, vector<8x640xf32>
    %c112_242 = arith.constant 112 : index
    %c0_243 = arith.constant 0 : index
    %157 = vector.load %arg15[%c112_242, %c0_243] : memref<400x640xf32, #tpu.memory_space<vmem>>, vector<8x640xf32>
    tpu.vector_store %arg15[%c112_242, %c0_243], %156 {strides = array<i32>} : memref<400x640xf32, #tpu.memory_space<vmem>>, vector<8x640xf32>,
    %c0_244 = arith.constant 0 : index
    %c158_245 = arith.constant 158 : index
    %158 = vector.load %arg14[%c0_244, %c158_245] : memref<16x896xf32, #tpu.memory_space<vmem>>, vector<8x640xf32>
    %c120_246 = arith.constant 120 : index
    %c0_247 = arith.constant 0 : index
    %159 = vector.load %arg15[%c120_246, %c0_247] : memref<400x640xf32, #tpu.memory_space<vmem>>, vector<8x640xf32>
    tpu.vector_store %arg15[%c120_246, %c0_247], %158 {strides = array<i32>} : memref<400x640xf32, #tpu.memory_space<vmem>>, vector<8x640xf32>,
    %c0_248 = arith.constant 0 : index
    %c159_249 = arith.constant 159 : index
    %160 = vector.load %arg14[%c0_248, %c159_249] : memref<16x896xf32, #tpu.memory_space<vmem>>, vector<8x640xf32>
    %c128_250 = arith.constant 128 : index
    %c0_251 = arith.constant 0 : index
    %161 = vector.load %arg15[%c128_250, %c0_251] : memref<400x640xf32, #tpu.memory_space<vmem>>, vector<8x640xf32>
    tpu.vector_store %arg15[%c128_250, %c0_251], %160 {strides = array<i32>} : memref<400x640xf32, #tpu.memory_space<vmem>>, vector<8x640xf32>,
    %c0_252 = arith.constant 0 : index
    %c160_253 = arith.constant 160 : index
    %162 = vector.load %arg14[%c0_252, %c160_253] : memref<16x896xf32, #tpu.memory_space<vmem>>, vector<8x640xf32>
    %c136_254 = arith.constant 136 : index
    %c0_255 = arith.constant 0 : index
    %163 = vector.load %arg15[%c136_254, %c0_255] : memref<400x640xf32, #tpu.memory_space<vmem>>, vector<8x640xf32>
    tpu.vector_store %arg15[%c136_254, %c0_255], %162 {strides = array<i32>} : memref<400x640xf32, #tpu.memory_space<vmem>>, vector<8x640xf32>,
    %c0_256 = arith.constant 0 : index
    %c161_257 = arith.constant 161 : index
    %164 = vector.load %arg14[%c0_256, %c161_257] : memref<16x896xf32, #tpu.memory_space<vmem>>, vector<8x640xf32>
    %c144_258 = arith.constant 144 : index
    %c0_259 = arith.constant 0 : index
    %165 = vector.load %arg15[%c144_258, %c0_259] : memref<400x640xf32, #tpu.memory_space<vmem>>, vector<8x640xf32>
    tpu.vector_store %arg15[%c144_258, %c0_259], %164 {strides = array<i32>} : memref<400x640xf32, #tpu.memory_space<vmem>>, vector<8x640xf32>,
    %c0_260 = arith.constant 0 : index
    %c162_261 = arith.constant 162 : index
    %166 = vector.load %arg14[%c0_260, %c162_261] : memref<16x896xf32, #tpu.memory_space<vmem>>, vector<8x640xf32>
    %c152_262 = arith.constant 152 : index
    %c0_263 = arith.constant 0 : index
    %167 = vector.load %arg15[%c152_262, %c0_263] : memref<400x640xf32, #tpu.memory_space<vmem>>, vector<8x640xf32>
    tpu.vector_store %arg15[%c152_262, %c0_263], %166 {strides = array<i32>} : memref<400x640xf32, #tpu.memory_space<vmem>>, vector<8x640xf32>,
    %c0_264 = arith.constant 0 : index
    %c190_265 = arith.constant 190 : index
    %168 = vector.load %arg14[%c0_264, %c190_265] : memref<16x896xf32, #tpu.memory_space<vmem>>, vector<8x640xf32>
    %c160_266 = arith.constant 160 : index
    %c0_267 = arith.constant 0 : index
    %169 = vector.load %arg15[%c160_266, %c0_267] : memref<400x640xf32, #tpu.memory_space<vmem>>, vector<8x640xf32>
    tpu.vector_store %arg15[%c160_266, %c0_267], %168 {strides = array<i32>} : memref<400x640xf32, #tpu.memory_space<vmem>>, vector<8x640xf32>,
    %c0_268 = arith.constant 0 : index
    %c191_269 = arith.constant 191 : index
    %170 = vector.load %arg14[%c0_268, %c191_269] : memref<16x896xf32, #tpu.memory_space<vmem>>, vector<8x640xf32>
    %c168_270 = arith.constant 168 : index
    %c0_271 = arith.constant 0 : index
    %171 = vector.load %arg15[%c168_270, %c0_271] : memref<400x640xf32, #tpu.memory_space<vmem>>, vector<8x640xf32>
    tpu.vector_store %arg15[%c168_270, %c0_271], %170 {strides = array<i32>} : memref<400x640xf32, #tpu.memory_space<vmem>>, vector<8x640xf32>,
    %c0_272 = arith.constant 0 : index
    %c192_273 = arith.constant 192 : index
    %172 = vector.load %arg14[%c0_272, %c192_273] : memref<16x896xf32, #tpu.memory_space<vmem>>, vector<8x640xf32>
    %c176_274 = arith.constant 176 : index
    %c0_275 = arith.constant 0 : index
    %173 = vector.load %arg15[%c176_274, %c0_275] : memref<400x640xf32, #tpu.memory_space<vmem>>, vector<8x640xf32>
    tpu.vector_store %arg15[%c176_274, %c0_275], %172 {strides = array<i32>} : memref<400x640xf32, #tpu.memory_space<vmem>>, vector<8x640xf32>,
    %c0_276 = arith.constant 0 : index
    %c193_277 = arith.constant 193 : index
    %174 = vector.load %arg14[%c0_276, %c193_277] : memref<16x896xf32, #tpu.memory_space<vmem>>, vector<8x640xf32>
    %c184_278 = arith.constant 184 : index
    %c0_279 = arith.constant 0 : index
    %175 = vector.load %arg15[%c184_278, %c0_279] : memref<400x640xf32, #tpu.memory_space<vmem>>, vector<8x640xf32>
    tpu.vector_store %arg15[%c184_278, %c0_279], %174 {strides = array<i32>} : memref<400x640xf32, #tpu.memory_space<vmem>>, vector<8x640xf32>,
    %c0_280 = arith.constant 0 : index
    %c194_281 = arith.constant 194 : index
    %176 = vector.load %arg14[%c0_280, %c194_281] : memref<16x896xf32, #tpu.memory_space<vmem>>, vector<8x640xf32>
    %c192_282 = arith.constant 192 : index
    %c0_283 = arith.constant 0 : index
    %177 = vector.load %arg15[%c192_282, %c0_283] : memref<400x640xf32, #tpu.memory_space<vmem>>, vector<8x640xf32>
    tpu.vector_store %arg15[%c192_282, %c0_283], %176 {strides = array<i32>} : memref<400x640xf32, #tpu.memory_space<vmem>>, vector<8x640xf32>,
    %c0_284 = arith.constant 0 : index
    %c0_285 = arith.constant 0 : index
    %178 = vector.load %arg7[%c0_284, %c0_285] : memref<16x200xf32, #tpu.memory_space<vmem>>, vector<16x200xf32>
    %c0_286 = arith.constant 0 : index
    %c0_287 = arith.constant 0 : index
    %179 = vector.load %arg15[%c0_286, %c0_287] : memref<400x640xf32, #tpu.memory_space<vmem>>, vector<200x640xf32>
    %cst_288 = arith.constant dense<0.000000e+00> : vector<16x640xf32>
    %180 = tpu.matmul %178, %179, %cst_288 {dimension_numbers = #tpu.dot_dimension_numbers<[1], [0], [0], [1], [0, 0, 1, 1], [], []>} : vector<16x200xf32>, vector<200x640xf32>, vector<16x640xf32> -> vector<16x640xf32>
    %c0_289 = arith.constant 0 : index
    %c0_290 = arith.constant 0 : index
    %181 = vector.load %arg8[%c0_289, %c0_290] : memref<16x1xf32, #tpu.memory_space<vmem>>, vector<16x1xf32>
    %182 = vector.broadcast %181 : vector<16x1xf32> to vector<16x640xf32>
    %183 = arith.addf %180, %182 : vector<16x640xf32>
    %cst_291 = arith.constant 0.000000e+00 : f32
    %184 = vector.broadcast %cst_291 : f32 to vector<16x640xf32>
    %185 = arith.maximumf %183, %184 : vector<16x640xf32>
    %186 = vector.broadcast %5 : vector<1x640xf32> to vector<16x640xf32>
    %187 = arith.mulf %185, %186 : vector<16x640xf32>
    %c0_292 = arith.constant 0 : index
    %c128_293 = arith.constant 128 : index
    %188 = vector.load %arg14[%c0_292, %c128_293] : memref<16x896xf32, #tpu.memory_space<vmem>>, vector<16x640xf32>
    tpu.vector_store %arg14[%c0_292, %c128_293], %187 {strides = array<i32>} : memref<16x896xf32, #tpu.memory_space<vmem>>, vector<16x640xf32>,
    %c0_294 = arith.constant 0 : index
    %c62_295 = arith.constant 62 : index
    %189 = vector.load %arg14[%c0_294, %c62_295] : memref<16x896xf32, #tpu.memory_space<vmem>>, vector<16x640xf32>
    %c0_296 = arith.constant 0 : index
    %c0_297 = arith.constant 0 : index
    %190 = vector.load %arg15[%c0_296, %c0_297] : memref<400x640xf32, #tpu.memory_space<vmem>>, vector<16x640xf32>
    tpu.vector_store %arg15[%c0_296, %c0_297], %189 {strides = array<i32>} : memref<400x640xf32, #tpu.memory_space<vmem>>, vector<16x640xf32>,
    %c0_298 = arith.constant 0 : index
    %c63_299 = arith.constant 63 : index
    %191 = vector.load %arg14[%c0_298, %c63_299] : memref<16x896xf32, #tpu.memory_space<vmem>>, vector<16x640xf32>
    %c16_300 = arith.constant 16 : index
    %c0_301 = arith.constant 0 : index
    %192 = vector.load %arg15[%c16_300, %c0_301] : memref<400x640xf32, #tpu.memory_space<vmem>>, vector<16x640xf32>
    tpu.vector_store %arg15[%c16_300, %c0_301], %191 {strides = array<i32>} : memref<400x640xf32, #tpu.memory_space<vmem>>, vector<16x640xf32>,
    %c0_302 = arith.constant 0 : index
    %c64_303 = arith.constant 64 : index
    %193 = vector.load %arg14[%c0_302, %c64_303] : memref<16x896xf32, #tpu.memory_space<vmem>>, vector<16x640xf32>
    %c32_304 = arith.constant 32 : index
    %c0_305 = arith.constant 0 : index
    %194 = vector.load %arg15[%c32_304, %c0_305] : memref<400x640xf32, #tpu.memory_space<vmem>>, vector<16x640xf32>
    tpu.vector_store %arg15[%c32_304, %c0_305], %193 {strides = array<i32>} : memref<400x640xf32, #tpu.memory_space<vmem>>, vector<16x640xf32>,
    %c0_306 = arith.constant 0 : index
    %c65_307 = arith.constant 65 : index
    %195 = vector.load %arg14[%c0_306, %c65_307] : memref<16x896xf32, #tpu.memory_space<vmem>>, vector<16x640xf32>
    %c48_308 = arith.constant 48 : index
    %c0_309 = arith.constant 0 : index
    %196 = vector.load %arg15[%c48_308, %c0_309] : memref<400x640xf32, #tpu.memory_space<vmem>>, vector<16x640xf32>
    tpu.vector_store %arg15[%c48_308, %c0_309], %195 {strides = array<i32>} : memref<400x640xf32, #tpu.memory_space<vmem>>, vector<16x640xf32>,
    %c0_310 = arith.constant 0 : index
    %c66_311 = arith.constant 66 : index
    %197 = vector.load %arg14[%c0_310, %c66_311] : memref<16x896xf32, #tpu.memory_space<vmem>>, vector<16x640xf32>
    %c64_312 = arith.constant 64 : index
    %c0_313 = arith.constant 0 : index
    %198 = vector.load %arg15[%c64_312, %c0_313] : memref<400x640xf32, #tpu.memory_space<vmem>>, vector<16x640xf32>
    tpu.vector_store %arg15[%c64_312, %c0_313], %197 {strides = array<i32>} : memref<400x640xf32, #tpu.memory_space<vmem>>, vector<16x640xf32>,
    %c0_314 = arith.constant 0 : index
    %c94_315 = arith.constant 94 : index
    %199 = vector.load %arg14[%c0_314, %c94_315] : memref<16x896xf32, #tpu.memory_space<vmem>>, vector<16x640xf32>
    %c80_316 = arith.constant 80 : index
    %c0_317 = arith.constant 0 : index
    %200 = vector.load %arg15[%c80_316, %c0_317] : memref<400x640xf32, #tpu.memory_space<vmem>>, vector<16x640xf32>
    tpu.vector_store %arg15[%c80_316, %c0_317], %199 {strides = array<i32>} : memref<400x640xf32, #tpu.memory_space<vmem>>, vector<16x640xf32>,
    %c0_318 = arith.constant 0 : index
    %c95_319 = arith.constant 95 : index
    %201 = vector.load %arg14[%c0_318, %c95_319] : memref<16x896xf32, #tpu.memory_space<vmem>>, vector<16x640xf32>
    %c96_320 = arith.constant 96 : index
    %c0_321 = arith.constant 0 : index
    %202 = vector.load %arg15[%c96_320, %c0_321] : memref<400x640xf32, #tpu.memory_space<vmem>>, vector<16x640xf32>
    tpu.vector_store %arg15[%c96_320, %c0_321], %201 {strides = array<i32>} : memref<400x640xf32, #tpu.memory_space<vmem>>, vector<16x640xf32>,
    %c0_322 = arith.constant 0 : index
    %c96_323 = arith.constant 96 : index
    %203 = vector.load %arg14[%c0_322, %c96_323] : memref<16x896xf32, #tpu.memory_space<vmem>>, vector<16x640xf32>
    %c112_324 = arith.constant 112 : index
    %c0_325 = arith.constant 0 : index
    %204 = vector.load %arg15[%c112_324, %c0_325] : memref<400x640xf32, #tpu.memory_space<vmem>>, vector<16x640xf32>
    tpu.vector_store %arg15[%c112_324, %c0_325], %203 {strides = array<i32>} : memref<400x640xf32, #tpu.memory_space<vmem>>, vector<16x640xf32>,
    %c0_326 = arith.constant 0 : index
    %c97_327 = arith.constant 97 : index
    %205 = vector.load %arg14[%c0_326, %c97_327] : memref<16x896xf32, #tpu.memory_space<vmem>>, vector<16x640xf32>
    %c128_328 = arith.constant 128 : index
    %c0_329 = arith.constant 0 : index
    %206 = vector.load %arg15[%c128_328, %c0_329] : memref<400x640xf32, #tpu.memory_space<vmem>>, vector<16x640xf32>
    tpu.vector_store %arg15[%c128_328, %c0_329], %205 {strides = array<i32>} : memref<400x640xf32, #tpu.memory_space<vmem>>, vector<16x640xf32>,
    %c0_330 = arith.constant 0 : index
    %c98_331 = arith.constant 98 : index
    %207 = vector.load %arg14[%c0_330, %c98_331] : memref<16x896xf32, #tpu.memory_space<vmem>>, vector<16x640xf32>
    %c144_332 = arith.constant 144 : index
    %c0_333 = arith.constant 0 : index
    %208 = vector.load %arg15[%c144_332, %c0_333] : memref<400x640xf32, #tpu.memory_space<vmem>>, vector<16x640xf32>
    tpu.vector_store %arg15[%c144_332, %c0_333], %207 {strides = array<i32>} : memref<400x640xf32, #tpu.memory_space<vmem>>, vector<16x640xf32>,
    %c0_334 = arith.constant 0 : index
    %c126_335 = arith.constant 126 : index
    %209 = vector.load %arg14[%c0_334, %c126_335] : memref<16x896xf32, #tpu.memory_space<vmem>>, vector<16x640xf32>
    %c160_336 = arith.constant 160 : index
    %c0_337 = arith.constant 0 : index
    %210 = vector.load %arg15[%c160_336, %c0_337] : memref<400x640xf32, #tpu.memory_space<vmem>>, vector<16x640xf32>
    tpu.vector_store %arg15[%c160_336, %c0_337], %209 {strides = array<i32>} : memref<400x640xf32, #tpu.memory_space<vmem>>, vector<16x640xf32>,
    %c0_338 = arith.constant 0 : index
    %c127_339 = arith.constant 127 : index
    %211 = vector.load %arg14[%c0_338, %c127_339] : memref<16x896xf32, #tpu.memory_space<vmem>>, vector<16x640xf32>
    %c176_340 = arith.constant 176 : index
    %c0_341 = arith.constant 0 : index
    %212 = vector.load %arg15[%c176_340, %c0_341] : memref<400x640xf32, #tpu.memory_space<vmem>>, vector<16x640xf32>
    tpu.vector_store %arg15[%c176_340, %c0_341], %211 {strides = array<i32>} : memref<400x640xf32, #tpu.memory_space<vmem>>, vector<16x640xf32>,
    %c0_342 = arith.constant 0 : index
    %c128_343 = arith.constant 128 : index
    %213 = vector.load %arg14[%c0_342, %c128_343] : memref<16x896xf32, #tpu.memory_space<vmem>>, vector<16x640xf32>
    %c192_344 = arith.constant 192 : index
    %c0_345 = arith.constant 0 : index
    %214 = vector.load %arg15[%c192_344, %c0_345] : memref<400x640xf32, #tpu.memory_space<vmem>>, vector<16x640xf32>
    tpu.vector_store %arg15[%c192_344, %c0_345], %213 {strides = array<i32>} : memref<400x640xf32, #tpu.memory_space<vmem>>, vector<16x640xf32>,
    %c0_346 = arith.constant 0 : index
    %c129_347 = arith.constant 129 : index
    %215 = vector.load %arg14[%c0_346, %c129_347] : memref<16x896xf32, #tpu.memory_space<vmem>>, vector<16x640xf32>
    %c208 = arith.constant 208 : index
    %c0_348 = arith.constant 0 : index
    %216 = vector.load %arg15[%c208, %c0_348] : memref<400x640xf32, #tpu.memory_space<vmem>>, vector<16x640xf32>
    tpu.vector_store %arg15[%c208, %c0_348], %215 {strides = array<i32>} : memref<400x640xf32, #tpu.memory_space<vmem>>, vector<16x640xf32>,
    %c0_349 = arith.constant 0 : index
    %c130_350 = arith.constant 130 : index
    %217 = vector.load %arg14[%c0_349, %c130_350] : memref<16x896xf32, #tpu.memory_space<vmem>>, vector<16x640xf32>
    %c224 = arith.constant 224 : index
    %c0_351 = arith.constant 0 : index
    %218 = vector.load %arg15[%c224, %c0_351] : memref<400x640xf32, #tpu.memory_space<vmem>>, vector<16x640xf32>
    tpu.vector_store %arg15[%c224, %c0_351], %217 {strides = array<i32>} : memref<400x640xf32, #tpu.memory_space<vmem>>, vector<16x640xf32>,
    %c0_352 = arith.constant 0 : index
    %c158_353 = arith.constant 158 : index
    %219 = vector.load %arg14[%c0_352, %c158_353] : memref<16x896xf32, #tpu.memory_space<vmem>>, vector<16x640xf32>
    %c240 = arith.constant 240 : index
    %c0_354 = arith.constant 0 : index
    %220 = vector.load %arg15[%c240, %c0_354] : memref<400x640xf32, #tpu.memory_space<vmem>>, vector<16x640xf32>
    tpu.vector_store %arg15[%c240, %c0_354], %219 {strides = array<i32>} : memref<400x640xf32, #tpu.memory_space<vmem>>, vector<16x640xf32>,
    %c0_355 = arith.constant 0 : index
    %c159_356 = arith.constant 159 : index
    %221 = vector.load %arg14[%c0_355, %c159_356] : memref<16x896xf32, #tpu.memory_space<vmem>>, vector<16x640xf32>
    %c256 = arith.constant 256 : index
    %c0_357 = arith.constant 0 : index
    %222 = vector.load %arg15[%c256, %c0_357] : memref<400x640xf32, #tpu.memory_space<vmem>>, vector<16x640xf32>
    tpu.vector_store %arg15[%c256, %c0_357], %221 {strides = array<i32>} : memref<400x640xf32, #tpu.memory_space<vmem>>, vector<16x640xf32>,
    %c0_358 = arith.constant 0 : index
    %c160_359 = arith.constant 160 : index
    %223 = vector.load %arg14[%c0_358, %c160_359] : memref<16x896xf32, #tpu.memory_space<vmem>>, vector<16x640xf32>
    %c272 = arith.constant 272 : index
    %c0_360 = arith.constant 0 : index
    %224 = vector.load %arg15[%c272, %c0_360] : memref<400x640xf32, #tpu.memory_space<vmem>>, vector<16x640xf32>
    tpu.vector_store %arg15[%c272, %c0_360], %223 {strides = array<i32>} : memref<400x640xf32, #tpu.memory_space<vmem>>, vector<16x640xf32>,
    %c0_361 = arith.constant 0 : index
    %c161_362 = arith.constant 161 : index
    %225 = vector.load %arg14[%c0_361, %c161_362] : memref<16x896xf32, #tpu.memory_space<vmem>>, vector<16x640xf32>
    %c288 = arith.constant 288 : index
    %c0_363 = arith.constant 0 : index
    %226 = vector.load %arg15[%c288, %c0_363] : memref<400x640xf32, #tpu.memory_space<vmem>>, vector<16x640xf32>
    tpu.vector_store %arg15[%c288, %c0_363], %225 {strides = array<i32>} : memref<400x640xf32, #tpu.memory_space<vmem>>, vector<16x640xf32>,
    %c0_364 = arith.constant 0 : index
    %c162_365 = arith.constant 162 : index
    %227 = vector.load %arg14[%c0_364, %c162_365] : memref<16x896xf32, #tpu.memory_space<vmem>>, vector<16x640xf32>
    %c304 = arith.constant 304 : index
    %c0_366 = arith.constant 0 : index
    %228 = vector.load %arg15[%c304, %c0_366] : memref<400x640xf32, #tpu.memory_space<vmem>>, vector<16x640xf32>
    tpu.vector_store %arg15[%c304, %c0_366], %227 {strides = array<i32>} : memref<400x640xf32, #tpu.memory_space<vmem>>, vector<16x640xf32>,
    %c0_367 = arith.constant 0 : index
    %c190_368 = arith.constant 190 : index
    %229 = vector.load %arg14[%c0_367, %c190_368] : memref<16x896xf32, #tpu.memory_space<vmem>>, vector<16x640xf32>
    %c320 = arith.constant 320 : index
    %c0_369 = arith.constant 0 : index
    %230 = vector.load %arg15[%c320, %c0_369] : memref<400x640xf32, #tpu.memory_space<vmem>>, vector<16x640xf32>
    tpu.vector_store %arg15[%c320, %c0_369], %229 {strides = array<i32>} : memref<400x640xf32, #tpu.memory_space<vmem>>, vector<16x640xf32>,
    %c0_370 = arith.constant 0 : index
    %c191_371 = arith.constant 191 : index
    %231 = vector.load %arg14[%c0_370, %c191_371] : memref<16x896xf32, #tpu.memory_space<vmem>>, vector<16x640xf32>
    %c336 = arith.constant 336 : index
    %c0_372 = arith.constant 0 : index
    %232 = vector.load %arg15[%c336, %c0_372] : memref<400x640xf32, #tpu.memory_space<vmem>>, vector<16x640xf32>
    tpu.vector_store %arg15[%c336, %c0_372], %231 {strides = array<i32>} : memref<400x640xf32, #tpu.memory_space<vmem>>, vector<16x640xf32>,
    %c0_373 = arith.constant 0 : index
    %c192_374 = arith.constant 192 : index
    %233 = vector.load %arg14[%c0_373, %c192_374] : memref<16x896xf32, #tpu.memory_space<vmem>>, vector<16x640xf32>
    %c352 = arith.constant 352 : index
    %c0_375 = arith.constant 0 : index
    %234 = vector.load %arg15[%c352, %c0_375] : memref<400x640xf32, #tpu.memory_space<vmem>>, vector<16x640xf32>
    tpu.vector_store %arg15[%c352, %c0_375], %233 {strides = array<i32>} : memref<400x640xf32, #tpu.memory_space<vmem>>, vector<16x640xf32>,
    %c0_376 = arith.constant 0 : index
    %c193_377 = arith.constant 193 : index
    %235 = vector.load %arg14[%c0_376, %c193_377] : memref<16x896xf32, #tpu.memory_space<vmem>>, vector<16x640xf32>
    %c368 = arith.constant 368 : index
    %c0_378 = arith.constant 0 : index
    %236 = vector.load %arg15[%c368, %c0_378] : memref<400x640xf32, #tpu.memory_space<vmem>>, vector<16x640xf32>
    tpu.vector_store %arg15[%c368, %c0_378], %235 {strides = array<i32>} : memref<400x640xf32, #tpu.memory_space<vmem>>, vector<16x640xf32>,
    %c0_379 = arith.constant 0 : index
    %c194_380 = arith.constant 194 : index
    %237 = vector.load %arg14[%c0_379, %c194_380] : memref<16x896xf32, #tpu.memory_space<vmem>>, vector<16x640xf32>
    %c384 = arith.constant 384 : index
    %c0_381 = arith.constant 0 : index
    %238 = vector.load %arg15[%c384, %c0_381] : memref<400x640xf32, #tpu.memory_space<vmem>>, vector<16x640xf32>
    tpu.vector_store %arg15[%c384, %c0_381], %237 {strides = array<i32>} : memref<400x640xf32, #tpu.memory_space<vmem>>, vector<16x640xf32>,
    %c0_382 = arith.constant 0 : index
    %c0_383 = arith.constant 0 : index
    %239 = vector.load %arg9[%c0_382, %c0_383] : memref<8x400xf32, #tpu.memory_space<vmem>>, vector<8x400xf32>
    %c0_384 = arith.constant 0 : index
    %c0_385 = arith.constant 0 : index
    %240 = vector.load %arg15[%c0_384, %c0_385] : memref<400x640xf32, #tpu.memory_space<vmem>>, vector<400x640xf32>
    %cst_386 = arith.constant dense<0.000000e+00> : vector<8x640xf32>
    %241 = tpu.matmul %239, %240, %cst_386 {dimension_numbers = #tpu.dot_dimension_numbers<[1], [0], [0], [1], [0, 0, 1, 1], [], []>} : vector<8x400xf32>, vector<400x640xf32>, vector<8x640xf32> -> vector<8x640xf32>
    %c0_387 = arith.constant 0 : index
    %c0_388 = arith.constant 0 : index
    %242 = vector.load %arg10[%c0_387, %c0_388] : memref<8x1xf32, #tpu.memory_space<vmem>>, vector<8x1xf32>
    %243 = vector.broadcast %242 : vector<8x1xf32> to vector<8x640xf32>
    %244 = arith.addf %241, %243 : vector<8x640xf32>
    %cst_389 = arith.constant 0.000000e+00 : f32
    %245 = vector.broadcast %cst_389 : f32 to vector<8x640xf32>
    %246 = arith.maximumf %244, %245 : vector<8x640xf32>
    %247 = vector.broadcast %5 : vector<1x640xf32> to vector<8x640xf32>
    %248 = arith.mulf %246, %247 : vector<8x640xf32>
    %c0_390 = arith.constant 0 : index
    %c128_391 = arith.constant 128 : index
    %249 = vector.load %arg14[%c0_390, %c128_391] : memref<16x896xf32, #tpu.memory_space<vmem>>, vector<8x640xf32>
    tpu.vector_store %arg14[%c0_390, %c128_391], %248 {strides = array<i32>} : memref<16x896xf32, #tpu.memory_space<vmem>>, vector<8x640xf32>,
    %c0_392 = arith.constant 0 : index
    %c62_393 = arith.constant 62 : index
    %250 = vector.load %arg14[%c0_392, %c62_393] : memref<16x896xf32, #tpu.memory_space<vmem>>, vector<8x640xf32>
    %c0_394 = arith.constant 0 : index
    %c0_395 = arith.constant 0 : index
    %251 = vector.load %arg15[%c0_394, %c0_395] : memref<400x640xf32, #tpu.memory_space<vmem>>, vector<8x640xf32>
    tpu.vector_store %arg15[%c0_394, %c0_395], %250 {strides = array<i32>} : memref<400x640xf32, #tpu.memory_space<vmem>>, vector<8x640xf32>,
    %c0_396 = arith.constant 0 : index
    %c63_397 = arith.constant 63 : index
    %252 = vector.load %arg14[%c0_396, %c63_397] : memref<16x896xf32, #tpu.memory_space<vmem>>, vector<8x640xf32>
    %c8_398 = arith.constant 8 : index
    %c0_399 = arith.constant 0 : index
    %253 = vector.load %arg15[%c8_398, %c0_399] : memref<400x640xf32, #tpu.memory_space<vmem>>, vector<8x640xf32>
    tpu.vector_store %arg15[%c8_398, %c0_399], %252 {strides = array<i32>} : memref<400x640xf32, #tpu.memory_space<vmem>>, vector<8x640xf32>,
    %c0_400 = arith.constant 0 : index
    %c64_401 = arith.constant 64 : index
    %254 = vector.load %arg14[%c0_400, %c64_401] : memref<16x896xf32, #tpu.memory_space<vmem>>, vector<8x640xf32>
    %c16_402 = arith.constant 16 : index
    %c0_403 = arith.constant 0 : index
    %255 = vector.load %arg15[%c16_402, %c0_403] : memref<400x640xf32, #tpu.memory_space<vmem>>, vector<8x640xf32>
    tpu.vector_store %arg15[%c16_402, %c0_403], %254 {strides = array<i32>} : memref<400x640xf32, #tpu.memory_space<vmem>>, vector<8x640xf32>,
    %c0_404 = arith.constant 0 : index
    %c65_405 = arith.constant 65 : index
    %256 = vector.load %arg14[%c0_404, %c65_405] : memref<16x896xf32, #tpu.memory_space<vmem>>, vector<8x640xf32>
    %c24_406 = arith.constant 24 : index
    %c0_407 = arith.constant 0 : index
    %257 = vector.load %arg15[%c24_406, %c0_407] : memref<400x640xf32, #tpu.memory_space<vmem>>, vector<8x640xf32>
    tpu.vector_store %arg15[%c24_406, %c0_407], %256 {strides = array<i32>} : memref<400x640xf32, #tpu.memory_space<vmem>>, vector<8x640xf32>,
    %c0_408 = arith.constant 0 : index
    %c66_409 = arith.constant 66 : index
    %258 = vector.load %arg14[%c0_408, %c66_409] : memref<16x896xf32, #tpu.memory_space<vmem>>, vector<8x640xf32>
    %c32_410 = arith.constant 32 : index
    %c0_411 = arith.constant 0 : index
    %259 = vector.load %arg15[%c32_410, %c0_411] : memref<400x640xf32, #tpu.memory_space<vmem>>, vector<8x640xf32>
    tpu.vector_store %arg15[%c32_410, %c0_411], %258 {strides = array<i32>} : memref<400x640xf32, #tpu.memory_space<vmem>>, vector<8x640xf32>,
    %c0_412 = arith.constant 0 : index
    %c94_413 = arith.constant 94 : index
    %260 = vector.load %arg14[%c0_412, %c94_413] : memref<16x896xf32, #tpu.memory_space<vmem>>, vector<8x640xf32>
    %c40_414 = arith.constant 40 : index
    %c0_415 = arith.constant 0 : index
    %261 = vector.load %arg15[%c40_414, %c0_415] : memref<400x640xf32, #tpu.memory_space<vmem>>, vector<8x640xf32>
    tpu.vector_store %arg15[%c40_414, %c0_415], %260 {strides = array<i32>} : memref<400x640xf32, #tpu.memory_space<vmem>>, vector<8x640xf32>,
    %c0_416 = arith.constant 0 : index
    %c95_417 = arith.constant 95 : index
    %262 = vector.load %arg14[%c0_416, %c95_417] : memref<16x896xf32, #tpu.memory_space<vmem>>, vector<8x640xf32>
    %c48_418 = arith.constant 48 : index
    %c0_419 = arith.constant 0 : index
    %263 = vector.load %arg15[%c48_418, %c0_419] : memref<400x640xf32, #tpu.memory_space<vmem>>, vector<8x640xf32>
    tpu.vector_store %arg15[%c48_418, %c0_419], %262 {strides = array<i32>} : memref<400x640xf32, #tpu.memory_space<vmem>>, vector<8x640xf32>,
    %c0_420 = arith.constant 0 : index
    %c96_421 = arith.constant 96 : index
    %264 = vector.load %arg14[%c0_420, %c96_421] : memref<16x896xf32, #tpu.memory_space<vmem>>, vector<8x640xf32>
    %c56_422 = arith.constant 56 : index
    %c0_423 = arith.constant 0 : index
    %265 = vector.load %arg15[%c56_422, %c0_423] : memref<400x640xf32, #tpu.memory_space<vmem>>, vector<8x640xf32>
    tpu.vector_store %arg15[%c56_422, %c0_423], %264 {strides = array<i32>} : memref<400x640xf32, #tpu.memory_space<vmem>>, vector<8x640xf32>,
    %c0_424 = arith.constant 0 : index
    %c97_425 = arith.constant 97 : index
    %266 = vector.load %arg14[%c0_424, %c97_425] : memref<16x896xf32, #tpu.memory_space<vmem>>, vector<8x640xf32>
    %c64_426 = arith.constant 64 : index
    %c0_427 = arith.constant 0 : index
    %267 = vector.load %arg15[%c64_426, %c0_427] : memref<400x640xf32, #tpu.memory_space<vmem>>, vector<8x640xf32>
    tpu.vector_store %arg15[%c64_426, %c0_427], %266 {strides = array<i32>} : memref<400x640xf32, #tpu.memory_space<vmem>>, vector<8x640xf32>,
    %c0_428 = arith.constant 0 : index
    %c98_429 = arith.constant 98 : index
    %268 = vector.load %arg14[%c0_428, %c98_429] : memref<16x896xf32, #tpu.memory_space<vmem>>, vector<8x640xf32>
    %c72_430 = arith.constant 72 : index
    %c0_431 = arith.constant 0 : index
    %269 = vector.load %arg15[%c72_430, %c0_431] : memref<400x640xf32, #tpu.memory_space<vmem>>, vector<8x640xf32>
    tpu.vector_store %arg15[%c72_430, %c0_431], %268 {strides = array<i32>} : memref<400x640xf32, #tpu.memory_space<vmem>>, vector<8x640xf32>,
    %c0_432 = arith.constant 0 : index
    %c126_433 = arith.constant 126 : index
    %270 = vector.load %arg14[%c0_432, %c126_433] : memref<16x896xf32, #tpu.memory_space<vmem>>, vector<8x640xf32>
    %c80_434 = arith.constant 80 : index
    %c0_435 = arith.constant 0 : index
    %271 = vector.load %arg15[%c80_434, %c0_435] : memref<400x640xf32, #tpu.memory_space<vmem>>, vector<8x640xf32>
    tpu.vector_store %arg15[%c80_434, %c0_435], %270 {strides = array<i32>} : memref<400x640xf32, #tpu.memory_space<vmem>>, vector<8x640xf32>,
    %c0_436 = arith.constant 0 : index
    %c127_437 = arith.constant 127 : index
    %272 = vector.load %arg14[%c0_436, %c127_437] : memref<16x896xf32, #tpu.memory_space<vmem>>, vector<8x640xf32>
    %c88_438 = arith.constant 88 : index
    %c0_439 = arith.constant 0 : index
    %273 = vector.load %arg15[%c88_438, %c0_439] : memref<400x640xf32, #tpu.memory_space<vmem>>, vector<8x640xf32>
    tpu.vector_store %arg15[%c88_438, %c0_439], %272 {strides = array<i32>} : memref<400x640xf32, #tpu.memory_space<vmem>>, vector<8x640xf32>,
    %c0_440 = arith.constant 0 : index
    %c128_441 = arith.constant 128 : index
    %274 = vector.load %arg14[%c0_440, %c128_441] : memref<16x896xf32, #tpu.memory_space<vmem>>, vector<8x640xf32>
    %c96_442 = arith.constant 96 : index
    %c0_443 = arith.constant 0 : index
    %275 = vector.load %arg15[%c96_442, %c0_443] : memref<400x640xf32, #tpu.memory_space<vmem>>, vector<8x640xf32>
    tpu.vector_store %arg15[%c96_442, %c0_443], %274 {strides = array<i32>} : memref<400x640xf32, #tpu.memory_space<vmem>>, vector<8x640xf32>,
    %c0_444 = arith.constant 0 : index
    %c129_445 = arith.constant 129 : index
    %276 = vector.load %arg14[%c0_444, %c129_445] : memref<16x896xf32, #tpu.memory_space<vmem>>, vector<8x640xf32>
    %c104_446 = arith.constant 104 : index
    %c0_447 = arith.constant 0 : index
    %277 = vector.load %arg15[%c104_446, %c0_447] : memref<400x640xf32, #tpu.memory_space<vmem>>, vector<8x640xf32>
    tpu.vector_store %arg15[%c104_446, %c0_447], %276 {strides = array<i32>} : memref<400x640xf32, #tpu.memory_space<vmem>>, vector<8x640xf32>,
    %c0_448 = arith.constant 0 : index
    %c130_449 = arith.constant 130 : index
    %278 = vector.load %arg14[%c0_448, %c130_449] : memref<16x896xf32, #tpu.memory_space<vmem>>, vector<8x640xf32>
    %c112_450 = arith.constant 112 : index
    %c0_451 = arith.constant 0 : index
    %279 = vector.load %arg15[%c112_450, %c0_451] : memref<400x640xf32, #tpu.memory_space<vmem>>, vector<8x640xf32>
    tpu.vector_store %arg15[%c112_450, %c0_451], %278 {strides = array<i32>} : memref<400x640xf32, #tpu.memory_space<vmem>>, vector<8x640xf32>,
    %c0_452 = arith.constant 0 : index
    %c158_453 = arith.constant 158 : index
    %280 = vector.load %arg14[%c0_452, %c158_453] : memref<16x896xf32, #tpu.memory_space<vmem>>, vector<8x640xf32>
    %c120_454 = arith.constant 120 : index
    %c0_455 = arith.constant 0 : index
    %281 = vector.load %arg15[%c120_454, %c0_455] : memref<400x640xf32, #tpu.memory_space<vmem>>, vector<8x640xf32>
    tpu.vector_store %arg15[%c120_454, %c0_455], %280 {strides = array<i32>} : memref<400x640xf32, #tpu.memory_space<vmem>>, vector<8x640xf32>,
    %c0_456 = arith.constant 0 : index
    %c159_457 = arith.constant 159 : index
    %282 = vector.load %arg14[%c0_456, %c159_457] : memref<16x896xf32, #tpu.memory_space<vmem>>, vector<8x640xf32>
    %c128_458 = arith.constant 128 : index
    %c0_459 = arith.constant 0 : index
    %283 = vector.load %arg15[%c128_458, %c0_459] : memref<400x640xf32, #tpu.memory_space<vmem>>, vector<8x640xf32>
    tpu.vector_store %arg15[%c128_458, %c0_459], %282 {strides = array<i32>} : memref<400x640xf32, #tpu.memory_space<vmem>>, vector<8x640xf32>,
    %c0_460 = arith.constant 0 : index
    %c160_461 = arith.constant 160 : index
    %284 = vector.load %arg14[%c0_460, %c160_461] : memref<16x896xf32, #tpu.memory_space<vmem>>, vector<8x640xf32>
    %c136_462 = arith.constant 136 : index
    %c0_463 = arith.constant 0 : index
    %285 = vector.load %arg15[%c136_462, %c0_463] : memref<400x640xf32, #tpu.memory_space<vmem>>, vector<8x640xf32>
    tpu.vector_store %arg15[%c136_462, %c0_463], %284 {strides = array<i32>} : memref<400x640xf32, #tpu.memory_space<vmem>>, vector<8x640xf32>,
    %c0_464 = arith.constant 0 : index
    %c161_465 = arith.constant 161 : index
    %286 = vector.load %arg14[%c0_464, %c161_465] : memref<16x896xf32, #tpu.memory_space<vmem>>, vector<8x640xf32>
    %c144_466 = arith.constant 144 : index
    %c0_467 = arith.constant 0 : index
    %287 = vector.load %arg15[%c144_466, %c0_467] : memref<400x640xf32, #tpu.memory_space<vmem>>, vector<8x640xf32>
    tpu.vector_store %arg15[%c144_466, %c0_467], %286 {strides = array<i32>} : memref<400x640xf32, #tpu.memory_space<vmem>>, vector<8x640xf32>,
    %c0_468 = arith.constant 0 : index
    %c162_469 = arith.constant 162 : index
    %288 = vector.load %arg14[%c0_468, %c162_469] : memref<16x896xf32, #tpu.memory_space<vmem>>, vector<8x640xf32>
    %c152_470 = arith.constant 152 : index
    %c0_471 = arith.constant 0 : index
    %289 = vector.load %arg15[%c152_470, %c0_471] : memref<400x640xf32, #tpu.memory_space<vmem>>, vector<8x640xf32>
    tpu.vector_store %arg15[%c152_470, %c0_471], %288 {strides = array<i32>} : memref<400x640xf32, #tpu.memory_space<vmem>>, vector<8x640xf32>,
    %c0_472 = arith.constant 0 : index
    %c190_473 = arith.constant 190 : index
    %290 = vector.load %arg14[%c0_472, %c190_473] : memref<16x896xf32, #tpu.memory_space<vmem>>, vector<8x640xf32>
    %c160_474 = arith.constant 160 : index
    %c0_475 = arith.constant 0 : index
    %291 = vector.load %arg15[%c160_474, %c0_475] : memref<400x640xf32, #tpu.memory_space<vmem>>, vector<8x640xf32>
    tpu.vector_store %arg15[%c160_474, %c0_475], %290 {strides = array<i32>} : memref<400x640xf32, #tpu.memory_space<vmem>>, vector<8x640xf32>,
    %c0_476 = arith.constant 0 : index
    %c191_477 = arith.constant 191 : index
    %292 = vector.load %arg14[%c0_476, %c191_477] : memref<16x896xf32, #tpu.memory_space<vmem>>, vector<8x640xf32>
    %c168_478 = arith.constant 168 : index
    %c0_479 = arith.constant 0 : index
    %293 = vector.load %arg15[%c168_478, %c0_479] : memref<400x640xf32, #tpu.memory_space<vmem>>, vector<8x640xf32>
    tpu.vector_store %arg15[%c168_478, %c0_479], %292 {strides = array<i32>} : memref<400x640xf32, #tpu.memory_space<vmem>>, vector<8x640xf32>,
    %c0_480 = arith.constant 0 : index
    %c192_481 = arith.constant 192 : index
    %294 = vector.load %arg14[%c0_480, %c192_481] : memref<16x896xf32, #tpu.memory_space<vmem>>, vector<8x640xf32>
    %c176_482 = arith.constant 176 : index
    %c0_483 = arith.constant 0 : index
    %295 = vector.load %arg15[%c176_482, %c0_483] : memref<400x640xf32, #tpu.memory_space<vmem>>, vector<8x640xf32>
    tpu.vector_store %arg15[%c176_482, %c0_483], %294 {strides = array<i32>} : memref<400x640xf32, #tpu.memory_space<vmem>>, vector<8x640xf32>,
    %c0_484 = arith.constant 0 : index
    %c193_485 = arith.constant 193 : index
    %296 = vector.load %arg14[%c0_484, %c193_485] : memref<16x896xf32, #tpu.memory_space<vmem>>, vector<8x640xf32>
    %c184_486 = arith.constant 184 : index
    %c0_487 = arith.constant 0 : index
    %297 = vector.load %arg15[%c184_486, %c0_487] : memref<400x640xf32, #tpu.memory_space<vmem>>, vector<8x640xf32>
    tpu.vector_store %arg15[%c184_486, %c0_487], %296 {strides = array<i32>} : memref<400x640xf32, #tpu.memory_space<vmem>>, vector<8x640xf32>,
    %c0_488 = arith.constant 0 : index
    %c194_489 = arith.constant 194 : index
    %298 = vector.load %arg14[%c0_488, %c194_489] : memref<16x896xf32, #tpu.memory_space<vmem>>, vector<8x640xf32>
    %c192_490 = arith.constant 192 : index
    %c0_491 = arith.constant 0 : index
    %299 = vector.load %arg15[%c192_490, %c0_491] : memref<400x640xf32, #tpu.memory_space<vmem>>, vector<8x640xf32>
    tpu.vector_store %arg15[%c192_490, %c0_491], %298 {strides = array<i32>} : memref<400x640xf32, #tpu.memory_space<vmem>>, vector<8x640xf32>,
    %c0_492 = arith.constant 0 : index
    %c0_493 = arith.constant 0 : index
    %300 = vector.load %arg11[%c0_492, %c0_493] : memref<8x200xf32, #tpu.memory_space<vmem>>, vector<8x200xf32>
    %c0_494 = arith.constant 0 : index
    %c0_495 = arith.constant 0 : index
    %301 = vector.load %arg15[%c0_494, %c0_495] : memref<400x640xf32, #tpu.memory_space<vmem>>, vector<200x640xf32>
    %cst_496 = arith.constant dense<0.000000e+00> : vector<8x640xf32>
    %302 = tpu.matmul %300, %301, %cst_496 {dimension_numbers = #tpu.dot_dimension_numbers<[1], [0], [0], [1], [0, 0, 1, 1], [], []>} : vector<8x200xf32>, vector<200x640xf32>, vector<8x640xf32> -> vector<8x640xf32>
    %c0_497 = arith.constant 0 : index
    %c0_498 = arith.constant 0 : index
    %303 = vector.load %arg12[%c0_497, %c0_498] : memref<8x1xf32, #tpu.memory_space<vmem>>, vector<8x1xf32>
    %304 = vector.broadcast %303 : vector<8x1xf32> to vector<8x640xf32>
    %305 = arith.addf %302, %304 : vector<8x640xf32>
    %306 = vector.extract_strided_slice %305 {offsets = [0, 0], sizes = [1, 640], strides = [1, 1]} : vector<8x640xf32> to vector<1x640xf32>
    %c0_499 = arith.constant 0 : index
    %c0_500 = arith.constant 0 : index
    %c0_501 = arith.constant 0 : index
    %307 = vector.load %arg13[%c0_499, %c0_500, %c0_501] : memref<1x1x640xf32, #tpu.memory_space<vmem>>, vector<1x1x640xf32>
    %308 = vector.shape_cast %307 : vector<1x1x640xf32> to vector<1x640xf32>
    %309 = vector.shape_cast %306 : vector<1x640xf32> to vector<1x1x640xf32>
    tpu.vector_store %arg13[%c0_499, %c0_500, %c0_501], %309 {strides = array<i32>} : memref<1x1x640xf32, #tpu.memory_space<vmem>>, vector<1x1x640xf32>,
    return
  }
  func.func @transform_0(%arg0: i32) -> (i32, i32, i32) {
    %c0_i32 = arith.constant 0 : i32
    %c0_i32_0 = arith.constant 0 : i32
    %c0_i32_1 = arith.constant 0 : i32
    return %arg0, %c0_i32, %c0_i32_0 : i32, i32, i32
  }
  func.func @transform_1(%arg0: i32) -> (i32, i32) {
    %c0_i32 = arith.constant 0 : i32
    %c0_i32_0 = arith.constant 0 : i32
    %c0_i32_1 = arith.constant 0 : i32
    return %c0_i32, %c0_i32_0 : i32, i32
  }
  func.func @transform_2(%arg0: i32) -> (i32, i32) {
    %c0_i32 = arith.constant 0 : i32
    %c0_i32_0 = arith.constant 0 : i32
    %c0_i32_1 = arith.constant 0 : i32
    return %c0_i32, %c0_i32_0 : i32, i32
  }
  func.func @transform_3(%arg0: i32) -> (i32, i32) {
    %c0_i32 = arith.constant 0 : i32
    %c0_i32_0 = arith.constant 0 : i32
    %c0_i32_1 = arith.constant 0 : i32
    return %c0_i32, %c0_i32_0 : i32, i32
  }
  func.func @transform_4(%arg0: i32) -> (i32, i32) {
    %c0_i32 = arith.constant 0 : i32
    %c0_i32_0 = arith.constant 0 : i32
    %c0_i32_1 = arith.constant 0 : i32
    return %c0_i32, %c0_i32_0 : i32, i32
  }
  func.func @transform_5(%arg0: i32) -> (i32, i32) {
    %c0_i32 = arith.constant 0 : i32
    %c0_i32_0 = arith.constant 0 : i32
    %c0_i32_1 = arith.constant 0 : i32
    return %c0_i32, %c0_i32_0 : i32, i32
  }
  func.func @transform_6(%arg0: i32) -> (i32, i32) {
    %c0_i32 = arith.constant 0 : i32
    %c0_i32_0 = arith.constant 0 : i32
    %c0_i32_1 = arith.constant 0 : i32
    return %c0_i32, %c0_i32_0 : i32, i32
  }
  func.func @transform_7(%arg0: i32) -> (i32, i32) {
    %c0_i32 = arith.constant 0 : i32
    %c0_i32_0 = arith.constant 0 : i32
    %c0_i32_1 = arith.constant 0 : i32
    return %c0_i32, %c0_i32_0 : i32, i32
  }
  func.func @transform_8(%arg0: i32) -> (i32, i32) {
    %c0_i32 = arith.constant 0 : i32
    %c0_i32_0 = arith.constant 0 : i32
    %c0_i32_1 = arith.constant 0 : i32
    return %c0_i32, %c0_i32_0 : i32, i32
  }
  func.func @transform_9(%arg0: i32) -> (i32, i32) {
    %c0_i32 = arith.constant 0 : i32
    %c0_i32_0 = arith.constant 0 : i32
    %c0_i32_1 = arith.constant 0 : i32
    return %c0_i32, %c0_i32_0 : i32, i32
  }
  func.func @transform_10(%arg0: i32) -> (i32, i32) {
    %c0_i32 = arith.constant 0 : i32
    %c0_i32_0 = arith.constant 0 : i32
    %c0_i32_1 = arith.constant 0 : i32
    return %c0_i32, %c0_i32_0 : i32, i32
  }
  func.func @transform_11(%arg0: i32) -> (i32, i32) {
    %c0_i32 = arith.constant 0 : i32
    %c0_i32_0 = arith.constant 0 : i32
    %c0_i32_1 = arith.constant 0 : i32
    return %c0_i32, %c0_i32_0 : i32, i32
  }
  func.func @transform_12(%arg0: i32) -> (i32, i32, i32) {
    %c0_i32 = arith.constant 0 : i32
    %c0_i32_0 = arith.constant 0 : i32
    %c0_i32_1 = arith.constant 0 : i32
    return %arg0, %c0_i32, %c0_i32_0 : i32, i32, i32
  }
}

</mosaic_0001>

<llo_original>
// kernel: _lenet_forward_impl.1
$region0: #{_lenet_forward_impl.1}
  #allocation0 [shape = 'u32[]', space=smem, size = 0x4, offset = 0x4, fixed_abs, tag = 'smem constant byte address 0x4 - core index']
  #allocation1 [shape = 'u32[144,128]{1,0:T(1,128)}', space=vmem, size = 0x12000, scoped, tag = 'internal scratch']
  #allocation2 [shape = 'f32[16,896]{1,0:T(8,128)}', space=vmem, size = 0xe000, scoped, tag = 'scratch operand']
  #allocation3 [shape = 'f32[400,640]{1,0:T(8,128)}', space=vmem, size = 0xfa000, scoped, tag = 'scratch operand']
  %s0 = inlined_call_operand.vmem [shape: f32[2,8,640], index: 0, kind: input, shape index: {}]
  %s1 = inlined_call_operand.vmem [shape: f32[1,640], index: 1, kind: input, shape index: {}]
  %s2 = inlined_call_operand.vmem [shape: f32[8,200], index: 2, kind: input, shape index: {}]
  %s3 = inlined_call_operand.vmem [shape: f32[8,1], index: 3, kind: input, shape index: {}]
  %s4 = inlined_call_operand.vmem [shape: f32[8,200], index: 4, kind: input, shape index: {}]
  %s5 = inlined_call_operand.vmem [shape: f32[8,1], index: 5, kind: input, shape index: {}]
  %s6 = inlined_call_operand.vmem [shape: f32[16,200], index: 6, kind: input, shape index: {}]
  %s7 = inlined_call_operand.vmem [shape: f32[16,1], index: 7, kind: input, shape index: {}]
  %s8 = inlined_call_operand.vmem [shape: f32[8,400], index: 8, kind: input, shape index: {}]
  %s9 = inlined_call_operand.vmem [shape: f32[8,1], index: 9, kind: input, shape index: {}]
  %s10 = inlined_call_operand.vmem [shape: f32[8,200], index: 10, kind: input, shape index: {}]
  %s11 = inlined_call_operand.vmem [shape: f32[8,1], index: 11, kind: input, shape index: {}]
  %s12 = inlined_call_operand.vmem [shape: f32[2,1,640], index: 12, kind: output, shape index: {}]
  %s13 = sld [smem:[#allocation0]]
  $region81: #{_lenet_forward_impl.1} parent=0
    _
  %s15 = ssub.s32 1, %s13
  %s16 = scalar_select 0, %s15, %s13
  loop: start=0, step=1, limit=4
  $region2: #{_lenet_forward_impl.1} parent=0 // loop_pre_header
    _
  $region3: #{_lenet_forward_impl.1} parent=0 // loop_header
    %s18 = sphi 0, %s22
    %p19 = scmp.ge.s32.totalorder %s18, 4
    %s28 = sphi 0, %s30
    %s31 = sphi 0, %s28
    %s32 = sphi 0, %s31
    %s48 = sphi 0, %s32
    %s52 = sphi 0, %s52
    %s54 = sphi 0, %s52
    %s55 = sphi 0, %s54
    %s69 = sphi 0, %s55
    %s73 = sphi 0, %s73
    %s75 = sphi 0, %s73
    %s76 = sphi 0, %s75
    %s90 = sphi 0, %s76
    %s94 = sphi 0, %s94
    %s96 = sphi 0, %s94
    %s97 = sphi 0, %s96
    %s111 = sphi 0, %s97
    %s115 = sphi 0, %s115
    %s117 = sphi 0, %s115
    %s118 = sphi 0, %s117
    %s132 = sphi 0, %s118
    %s136 = sphi 0, %s136
    %s138 = sphi 0, %s136
    %s139 = sphi 0, %s138
    %s153 = sphi 0, %s139
    %s157 = sphi 0, %s157
    %s159 = sphi 0, %s157
    %s160 = sphi 0, %s159
    %s174 = sphi 0, %s160
    %s178 = sphi 0, %s178
    %s180 = sphi 0, %s178
    %s181 = sphi 0, %s180
    %s195 = sphi 0, %s181
    %s199 = sphi 0, %s199
    %s201 = sphi 0, %s199
    %s202 = sphi 0, %s201
    %s216 = sphi 0, %s202
    %s220 = sphi 0, %s220
    %s222 = sphi 0, %s220
    %s223 = sphi 0, %s222
    %s237 = sphi 0, %s223
    %s241 = sphi 0, %s241
    %s243 = sphi 0, %s241
    %s244 = sphi 0, %s243
    %s258 = sphi 0, %s244
    %s262 = sphi 0, %s262
    %s264 = sphi 0, %s262
    %s265 = sphi 0, %s264
    %s279 = sphi 0, %s265
    %s285 = sphi 0, %s287
    %s288 = sphi 0, %s285
    %s289 = sphi 0, %s288
    %s305 = sphi 0, %s289
  $region4: #{_lenet_forward_impl.1} parent=0 // loop_header_branch
    %21 = sbr.rel (%p19) target = $region8
  $region5: #{_lenet_forward_impl.1} parent=0 // loop_body
    %s23 = ssub.s32 %s18, 1
    %s24 = ssub.s32 %s18, 2
    %s25 = sadd.s32 %s18, 1
    %s26 = ssub.s32 %s18, %s25
    %p27 = scmp.eq.s32.totalorder %s26, 0
    %s29 = sadd.s32 %s28, 1
    %s30 = scalar_select %p27, %s28, %s29
    %p33 = pneg %p27
    %p34 = scmp.eq.s32.totalorder %s18, 1
    %p35 = por %p33, %p34
    %p36 = scmp.ne.s32.totalorder %s28, %s31
    %p37 = scmp.eq.s32.totalorder %s18, 0
    %p38 = por %p36, %p37
    %p39 = scmp.ne.s32.totalorder %s28, %s31
    %p40 = scmp.eq.s32.totalorder %s23, 1
    %p41 = por %p39, %p40
    %p42 = scmp.ne.s32.totalorder %s31, %s32
    %p43 = scmp.eq.s32.totalorder %s23, 0
    %p44 = por %p42, %p43
    %p45 = scmp.ne.s32.totalorder %s31, %s32
    %p46 = scmp.eq.s32.totalorder %s24, 1
    %p47 = por %p45, %p46
    %p49 = scmp.ne.s32.totalorder %s32, %s48
    %p50 = scmp.eq.s32.totalorder %s24, 0
    %p51 = por %p49, %p50
    %s53 = sadd.s32 %s52, 1
    %p56 = scmp.eq.s32.totalorder %s18, 1
    %p57 = scmp.ne.s32.totalorder %s52, %s54
    %p58 = scmp.eq.s32.totalorder %s18, 0
    %p59 = por %p57, %p58
    %p60 = scmp.ne.s32.totalorder %s52, %s54
    %p61 = scmp.eq.s32.totalorder %s23, 1
    %p62 = por %p60, %p61
    %p63 = scmp.ne.s32.totalorder %s54, %s55
    %p64 = scmp.eq.s32.totalorder %s23, 0
    %p65 = por %p63, %p64
    %p66 = scmp.ne.s32.totalorder %s54, %s55
    %p67 = scmp.eq.s32.totalorder %s24, 1
    %p68 = por %p66, %p67
    %p70 = scmp.ne.s32.totalorder %s55, %s69
    %p71 = scmp.eq.s32.totalorder %s24, 0
    %p72 = por %p70, %p71
    %s74 = sadd.s32 %s73, 1
    %p77 = scmp.eq.s32.totalorder %s18, 1
    %p78 = scmp.ne.s32.totalorder %s73, %s75
    %p79 = scmp.eq.s32.totalorder %s18, 0
    %p80 = por %p78, %p79
    %p81 = scmp.ne.s32.totalorder %s73, %s75
    %p82 = scmp.eq.s32.totalorder %s23, 1
    %p83 = por %p81, %p82
    %p84 = scmp.ne.s32.totalorder %s75, %s76
    %p85 = scmp.eq.s32.totalorder %s23, 0
    %p86 = por %p84, %p85
    %p87 = scmp.ne.s32.totalorder %s75, %s76
    %p88 = scmp.eq.s32.totalorder %s24, 1
    %p89 = por %p87, %p88
    %p91 = scmp.ne.s32.totalorder %s76, %s90
    %p92 = scmp.eq.s32.totalorder %s24, 0
    %p93 = por %p91, %p92
    %s95 = sadd.s32 %s94, 1
    %p98 = scmp.eq.s32.totalorder %s18, 1
    %p99 = scmp.ne.s32.totalorder %s94, %s96
    %p100 = scmp.eq.s32.totalorder %s18, 0
    %p101 = por %p99, %p100
    %p102 = scmp.ne.s32.totalorder %s94, %s96
    %p103 = scmp.eq.s32.totalorder %s23, 1
    %p104 = por %p102, %p103
    %p105 = scmp.ne.s32.totalorder %s96, %s97
    %p106 = scmp.eq.s32.totalorder %s23, 0
    %p107 = por %p105, %p106
    %p108 = scmp.ne.s32.totalorder %s96, %s97
    %p109 = scmp.eq.s32.totalorder %s24, 1
    %p110 = por %p108, %p109
    %p112 = scmp.ne.s32.totalorder %s97, %s111
    %p113 = scmp.eq.s32.totalorder %s24, 0
    %p114 = por %p112, %p113
    %s116 = sadd.s32 %s115, 1
    %p119 = scmp.eq.s32.totalorder %s18, 1
    %p120 = scmp.ne.s32.totalorder %s115, %s117
    %p121 = scmp.eq.s32.totalorder %s18, 0
    %p122 = por %p120, %p121
    %p123 = scmp.ne.s32.totalorder %s115, %s117
    %p124 = scmp.eq.s32.totalorder %s23, 1
    %p125 = por %p123, %p124
    %p126 = scmp.ne.s32.totalorder %s117, %s118
    %p127 = scmp.eq.s32.totalorder %s23, 0
    %p128 = por %p126, %p127
    %p129 = scmp.ne.s32.totalorder %s117, %s118
    %p130 = scmp.eq.s32.totalorder %s24, 1
    %p131 = por %p129, %p130
    %p133 = scmp.ne.s32.totalorder %s118, %s132
    %p134 = scmp.eq.s32.totalorder %s24, 0
    %p135 = por %p133, %p134
    %s137 = sadd.s32 %s136, 1
    %p140 = scmp.eq.s32.totalorder %s18, 1
    %p141 = scmp.ne.s32.totalorder %s136, %s138
    %p142 = scmp.eq.s32.totalorder %s18, 0
    %p143 = por %p141, %p142
    %p144 = scmp.ne.s32.totalorder %s136, %s138
    %p145 = scmp.eq.s32.totalorder %s23, 1
    %p146 = por %p144, %p145
    %p147 = scmp.ne.s32.totalorder %s138, %s139
    %p148 = scmp.eq.s32.totalorder %s23, 0
    %p149 = por %p147, %p148
    %p150 = scmp.ne.s32.totalorder %s138, %s139
    %p151 = scmp.eq.s32.totalorder %s24, 1
    %p152 = por %p150, %p151
    %p154 = scmp.ne.s32.totalorder %s139, %s153
    %p155 = scmp.eq.s32.totalorder %s24, 0
    %p156 = por %p154, %p155
    %s158 = sadd.s32 %s157, 1
    %p161 = scmp.eq.s32.totalorder %s18, 1
    %p162 = scmp.ne.s32.totalorder %s157, %s159
    %p163 = scmp.eq.s32.totalorder %s18, 0
    %p164 = por %p162, %p163
    %p165 = scmp.ne.s32.totalorder %s157, %s159
    %p166 = scmp.eq.s32.totalorder %s23, 1
    %p167 = por %p165, %p166
    %p168 = scmp.ne.s32.totalorder %s159, %s160
    %p169 = scmp.eq.s32.totalorder %s23, 0
    %p170 = por %p168, %p169
    %p171 = scmp.ne.s32.totalorder %s159, %s160
    %p172 = scmp.eq.s32.totalorder %s24, 1
    %p173 = por %p171, %p172
    %p175 = scmp.ne.s32.totalorder %s160, %s174
    %p176 = scmp.eq.s32.totalorder %s24, 0
    %p177 = por %p175, %p176
    %s179 = sadd.s32 %s178, 1
    %p182 = scmp.eq.s32.totalorder %s18, 1
    %p183 = scmp.ne.s32.totalorder %s178, %s180
    %p184 = scmp.eq.s32.totalorder %s18, 0
    %p185 = por %p183, %p184
    %p186 = scmp.ne.s32.totalorder %s178, %s180
    %p187 = scmp.eq.s32.totalorder %s23, 1
    %p188 = por %p186, %p187
    %p189 = scmp.ne.s32.totalorder %s180, %s181
    %p190 = scmp.eq.s32.totalorder %s23, 0
    %p191 = por %p189, %p190
    %p192 = scmp.ne.s32.totalorder %s180, %s181
    %p193 = scmp.eq.s32.totalorder %s24, 1
    %p194 = por %p192, %p193
    %p196 = scmp.ne.s32.totalorder %s181, %s195
    %p197 = scmp.eq.s32.totalorder %s24, 0
    %p198 = por %p196, %p197
    %s200 = sadd.s32 %s199, 1
    %p203 = scmp.eq.s32.totalorder %s18, 1
    %p204 = scmp.ne.s32.totalorder %s199, %s201
    %p205 = scmp.eq.s32.totalorder %s18, 0
    %p206 = por %p204, %p205
    %p207 = scmp.ne.s32.totalorder %s199, %s201
    %p208 = scmp.eq.s32.totalorder %s23, 1
    %p209 = por %p207, %p208
    %p210 = scmp.ne.s32.totalorder %s201, %s202
    %p211 = scmp.eq.s32.totalorder %s23, 0
    %p212 = por %p210, %p211
    %p213 = scmp.ne.s32.totalorder %s201, %s202
    %p214 = scmp.eq.s32.totalorder %s24, 1
    %p215 = por %p213, %p214
    %p217 = scmp.ne.s32.totalorder %s202, %s216
    %p218 = scmp.eq.s32.totalorder %s24, 0
    %p219 = por %p217, %p218
    %s221 = sadd.s32 %s220, 1
    %p224 = scmp.eq.s32.totalorder %s18, 1
    %p225 = scmp.ne.s32.totalorder %s220, %s222
    %p226 = scmp.eq.s32.totalorder %s18, 0
    %p227 = por %p225, %p226
    %p228 = scmp.ne.s32.totalorder %s220, %s222
    %p229 = scmp.eq.s32.totalorder %s23, 1
    %p230 = por %p228, %p229
    %p231 = scmp.ne.s32.totalorder %s222, %s223
    %p232 = scmp.eq.s32.totalorder %s23, 0
    %p233 = por %p231, %p232
    %p234 = scmp.ne.s32.totalorder %s222, %s223
    %p235 = scmp.eq.s32.totalorder %s24, 1
    %p236 = por %p234, %p235
    %p238 = scmp.ne.s32.totalorder %s223, %s237
    %p239 = scmp.eq.s32.totalorder %s24, 0
    %p240 = por %p238, %p239
    %s242 = sadd.s32 %s241, 1
    %p245 = scmp.eq.s32.totalorder %s18, 1
    %p246 = scmp.ne.s32.totalorder %s241, %s243
    %p247 = scmp.eq.s32.totalorder %s18, 0
    %p248 = por %p246, %p247
    %p249 = scmp.ne.s32.totalorder %s241, %s243
    %p250 = scmp.eq.s32.totalorder %s23, 1
    %p251 = por %p249, %p250
    %p252 = scmp.ne.s32.totalorder %s243, %s244
    %p253 = scmp.eq.s32.totalorder %s23, 0
    %p254 = por %p252, %p253
    %p255 = scmp.ne.s32.totalorder %s243, %s244
    %p256 = scmp.eq.s32.totalorder %s24, 1
    %p257 = por %p255, %p256
    %p259 = scmp.ne.s32.totalorder %s244, %s258
    %p260 = scmp.eq.s32.totalorder %s24, 0
    %p261 = por %p259, %p260
    %s263 = sadd.s32 %s262, 1
    %p266 = scmp.eq.s32.totalorder %s18, 1
    %p267 = scmp.ne.s32.totalorder %s262, %s264
    %p268 = scmp.eq.s32.totalorder %s18, 0
    %p269 = por %p267, %p268
    %p270 = scmp.ne.s32.totalorder %s262, %s264
    %p271 = scmp.eq.s32.totalorder %s23, 1
    %p272 = por %p270, %p271
    %p273 = scmp.ne.s32.totalorder %s264, %s265
    %p274 = scmp.eq.s32.totalorder %s23, 0
    %p275 = por %p273, %p274
    %p276 = scmp.ne.s32.totalorder %s264, %s265
    %p277 = scmp.eq.s32.totalorder %s24, 1
    %p278 = por %p276, %p277
    %p280 = scmp.ne.s32.totalorder %s265, %s279
    %p281 = scmp.eq.s32.totalorder %s24, 0
    %p282 = por %p280, %p281
    %s283 = ssub.s32 %s18, %s25
    %p284 = scmp.eq.s32.totalorder %s283, 0
    %s286 = sadd.s32 %s285, 1
    %s287 = scalar_select %p284, %s285, %s286
    %p290 = pneg %p284
    %p291 = scmp.eq.s32.totalorder %s18, 1
    %p292 = por %p290, %p291
    %p293 = scmp.ne.s32.totalorder %s285, %s288
    %p294 = scmp.eq.s32.totalorder %s18, 0
    %p295 = por %p293, %p294
    %p296 = scmp.ne.s32.totalorder %s285, %s288
    %p297 = scmp.eq.s32.totalorder %s23, 1
    %p298 = por %p296, %p297
    %p299 = scmp.ne.s32.totalorder %s288, %s289
    %p300 = scmp.eq.s32.totalorder %s23, 0
    %p301 = por %p299, %p300
    %p302 = scmp.ne.s32.totalorder %s288, %s289
    %p303 = scmp.eq.s32.totalorder %s24, 1
    %p304 = por %p302, %p303
    %p306 = scmp.ne.s32.totalorder %s289, %s305
    %p307 = scmp.eq.s32.totalorder %s24, 0
    %p308 = por %p306, %p307
    %p309 = scmp.le.s32.totalorder 1, %s18
    %p310 = scmp.lt.s32.totalorder %s18, 3
    %p311 = pnand %p309, %p310
    %p312 = pneg %p311
    // Predicated region
    $region9: #{_lenet_forward_impl.1} parent=5 // pred_check
      _
    $region10: #{_lenet_forward_impl.1} parent=5 // pred_check_branch
      %314 = sbr.rel (%p311) target = $region12
    $region11: #{_lenet_forward_impl.1} parent=5 // pred_region
      %s315 = ssub.s32 %s18, 1
      // Predicated region
      $region13: #{_lenet_forward_impl.1} parent=11 // pred_check
        %p316 = pneg %p65
      $region14: #{_lenet_forward_impl.1} parent=11 // pred_check_branch
        %318 = sbr.rel (%p316) target = $region16
      $region15: #{_lenet_forward_impl.1} parent=11 // pred_region
        _
      $region16: #{_lenet_forward_impl.1} parent=11 // pred_fallthru
        _
      // Predicated region
      $region17: #{_lenet_forward_impl.1} parent=11 // pred_check
        %p319 = pneg %p86
      $region18: #{_lenet_forward_impl.1} parent=11 // pred_check_branch
        %321 = sbr.rel (%p319) target = $region20
      $region19: #{_lenet_forward_impl.1} parent=11 // pred_region
        _
      $region20: #{_lenet_forward_impl.1} parent=11 // pred_fallthru
        _
      // Predicated region
      $region21: #{_lenet_forward_impl.1} parent=11 // pred_check
        %p322 = pneg %p107
      $region22: #{_lenet_forward_impl.1} parent=11 // pred_check_branch
        %324 = sbr.rel (%p322) target = $region24
      $region23: #{_lenet_forward_impl.1} parent=11 // pred_region
        _
      $region24: #{_lenet_forward_impl.1} parent=11 // pred_fallthru
        _
      // Predicated region
      $region25: #{_lenet_forward_impl.1} parent=11 // pred_check
        %p325 = pneg %p128
      $region26: #{_lenet_forward_impl.1} parent=11 // pred_check_branch
        %327 = sbr.rel (%p325) target = $region28
      $region27: #{_lenet_forward_impl.1} parent=11 // pred_region
        _
      $region28: #{_lenet_forward_impl.1} parent=11 // pred_fallthru
        _
      // Predicated region
      $region29: #{_lenet_forward_impl.1} parent=11 // pred_check
        %p328 = pneg %p149
      $region30: #{_lenet_forward_impl.1} parent=11 // pred_check_branch
        %330 = sbr.rel (%p328) target = $region32
      $region31: #{_lenet_forward_impl.1} parent=11 // pred_region
        _
      $region32: #{_lenet_forward_impl.1} parent=11 // pred_fallthru
        _
      // Predicated region
      $region33: #{_lenet_forward_impl.1} parent=11 // pred_check
        %p331 = pneg %p170
      $region34: #{_lenet_forward_impl.1} parent=11 // pred_check_branch
        %333 = sbr.rel (%p331) target = $region36
      $region35: #{_lenet_forward_impl.1} parent=11 // pred_region
        _
      $region36: #{_lenet_forward_impl.1} parent=11 // pred_fallthru
        _
      // Predicated region
      $region37: #{_lenet_forward_impl.1} parent=11 // pred_check
        %p334 = pneg %p191
      $region38: #{_lenet_forward_impl.1} parent=11 // pred_check_branch
        %336 = sbr.rel (%p334) target = $region40
      $region39: #{_lenet_forward_impl.1} parent=11 // pred_region
        _
      $region40: #{_lenet_forward_impl.1} parent=11 // pred_fallthru
        _
      // Predicated region
      $region41: #{_lenet_forward_impl.1} parent=11 // pred_check
        %p337 = pneg %p212
      $region42: #{_lenet_forward_impl.1} parent=11 // pred_check_branch
        %339 = sbr.rel (%p337) target = $region44
      $region43: #{_lenet_forward_impl.1} parent=11 // pred_region
        _
      $region44: #{_lenet_forward_impl.1} parent=11 // pred_fallthru
        _
      // Predicated region
      $region45: #{_lenet_forward_impl.1} parent=11 // pred_check
        %p340 = pneg %p233
      $region46: #{_lenet_forward_impl.1} parent=11 // pred_check_branch
        %342 = sbr.rel (%p340) target = $region48
      $region47: #{_lenet_forward_impl.1} parent=11 // pred_region
        _
      $region48: #{_lenet_forward_impl.1} parent=11 // pred_fallthru
        _
      // Predicated region
      $region49: #{_lenet_forward_impl.1} parent=11 // pred_check
        %p343 = pneg %p254
      $region50: #{_lenet_forward_impl.1} parent=11 // pred_check_branch
        %345 = sbr.rel (%p343) target = $region52
      $region51: #{_lenet_forward_impl.1} parent=11 // pred_region
        _
      $region52: #{_lenet_forward_impl.1} parent=11 // pred_fallthru
        _
      // Predicated region
      $region53: #{_lenet_forward_impl.1} parent=11 // pred_check
        %p346 = pneg %p275
      $region54: #{_lenet_forward_impl.1} parent=11 // pred_check_branch
        %348 = sbr.rel (%p346) target = $region56
      $region55: #{_lenet_forward_impl.1} parent=11 // pred_region
        _
      $region56: #{_lenet_forward_impl.1} parent=11 // pred_fallthru
        _
    $region12: #{_lenet_forward_impl.1} parent=5 // pred_fallthru
      _
    %p349 = scmp.lt.s32.totalorder %s18, 2
    // Predicated region
    $region57: #{_lenet_forward_impl.1} parent=5 // pred_check
      %p350 = pneg %p349
    $region58: #{_lenet_forward_impl.1} parent=5 // pred_check_branch
      %352 = sbr.rel (%p350) target = $region60
    $region59: #{_lenet_forward_impl.1} parent=5 // pred_region
      // Predicated region
      $region61: #{_lenet_forward_impl.1} parent=59 // pred_check
        %p353 = pneg %p38
      $region62: #{_lenet_forward_impl.1} parent=59 // pred_check_branch
        %355 = sbr.rel (%p353) target = $region64
      $region63: #{_lenet_forward_impl.1} parent=59 // pred_region
        %p356 = scmp.lt.s32.totalorder %s18, 1
        %s357 = scalar_select %p356, %s18, 1
        %s358 = smul.addr %s357, 5
        %s359 = smul.addr %s358, 8
        %s360 = scalar_lea.vmem %s0, %s359
      $region64: #{_lenet_forward_impl.1} parent=59 // pred_fallthru
        _
    $region60: #{_lenet_forward_impl.1} parent=5 // pred_fallthru
      _
    %p361 = scmp.le.s32.totalorder 1, %s18
    %p362 = scmp.lt.s32.totalorder %s18, 3
    %p363 = pnand %p361, %p362
    %p364 = pneg %p363
    // Predicated region
    $region65: #{_lenet_forward_impl.1} parent=5 // pred_check
      _
    $region66: #{_lenet_forward_impl.1} parent=5 // pred_check_branch
      %366 = sbr.rel (%p363) target = $region68
    $region67: #{_lenet_forward_impl.1} parent=5 // pred_region
      %s367 = ssub.s32 %s18, 1
      %p368 = scmp.lt.s32.totalorder %s23, 1
      %s369 = scalar_select %p368, %s23, 1
      %s370 = smul.addr %s369, 5
      %s371 = smul.addr %s370, 8
      %s372 = scalar_lea.vmem %s0, %s371
      %p373 = pneg %p44
      %p374 = pneg %p41
      %p375 = pneg %p65
      %p376 = pneg %p62
      %p377 = pneg %p86
      %p378 = pneg %p83
      %p379 = pneg %p107
      %p380 = pneg %p104
      %p381 = pneg %p128
      %p382 = pneg %p125
      %p383 = pneg %p149
      %p384 = pneg %p146
      %p385 = pneg %p170
      %p386 = pneg %p167
      %p387 = pneg %p191
      %p388 = pneg %p188
      %p389 = pneg %p212
      %p390 = pneg %p209
      %p391 = pneg %p233
      %p392 = pneg %p230
      %p393 = pneg %p254
      %p394 = pneg %p251
      %p395 = pneg %p275
      %p396 = pneg %p272
      %p397 = pneg %p301
      %p398 = pneg %p298
      %p399 = scmp.lt.s32.totalorder %s23, 1
      %s400 = scalar_select %p399, %s23, 1
      %s401 = smul.addr %s400, 5
      %s402 = scalar_lea.vmem %s12, %s401
      %p403 = scmp.lt.s32.totalorder %s23, 1
      %s404 = scalar_select %p403, %s23, 1
      %s405 = smul.addr %s404, 5
      %s406 = smul.addr %s405, 8
      %s407 = scalar_lea.vmem %s0, %s406
      %p408 = scmp.lt.s32.totalorder %s23, 1
      %s409 = scalar_select %p408, %s23, 1
      %s410 = smul.addr %s409, 5
      %s411 = scalar_lea.vmem %s12, %s410
      %412 = vst [vmem:[#allocation2] sm:$0xff] 0.0
      %413 = vst [vmem:[#allocation2 + $0x8] sm:$0xff] 0.0
      %414 = vst [vmem:[#allocation2 + $0x10] sm:$0xff] 0.0
      %415 = vst [vmem:[#allocation2 + $0x18] sm:$0xff] 0.0
      %416 = vst [vmem:[#allocation2 + $0x20] sm:$0xff] 0.0
      %417 = vst [vmem:[#allocation2 + $0x28] sm:$0xff] 0.0
      %418 = vst [vmem:[#allocation2 + $0x30] sm:$0xff] 0.0
      %419 = vst [vmem:[#allocation2 + $0x38] sm:$0xff] 0.0
      %420 = vst [vmem:[#allocation2 + $0x40] sm:$0xff] 0.0
      %421 = vst [vmem:[#allocation2 + $0x48] sm:$0xff] 0.0
      %422 = vst [vmem:[#allocation2 + $0x50] sm:$0xff] 0.0
      %423 = vst [vmem:[#allocation2 + $0x58] sm:$0xff] 0.0
      %424 = vst [vmem:[#allocation2 + $0x60] sm:$0xff] 0.0
      %425 = vst [vmem:[#allocation2 + $0x68] sm:$0xff] 0.0
      %v426 = vld [vmem:[%s407] sm:$0xff]
      %v427 = vld [vmem:[%s407 + $0x8] sm:$0xff]
      %v428 = vld [vmem:[%s407 + $0x10] sm:$0xff]
      %v429 = vld [vmem:[%s407 + $0x18] sm:$0xff]
      %v430 = vld [vmem:[%s407 + $0x20] sm:$0xff]
      %431 = vst [vmem:[#allocation2 + $0x8] sm:$0xff] %v426
      %432 = vst [vmem:[#allocation2 + $0x10] sm:$0xff] %v427
      %433 = vst [vmem:[#allocation2 + $0x18] sm:$0xff] %v428
      %434 = vst [vmem:[#allocation2 + $0x20] sm:$0xff] %v429
      %435 = vst [vmem:[#allocation2 + $0x28] sm:$0xff] %v430
      %v436 = vld [vmem:[%s1] sm:$0x1f]
      %v437 = vld [vmem:[#allocation2] sm:$0xff]
      %v438 = vld [vmem:[#allocation2 + $0x8] sm:$0xff]
      %v439 = vld [vmem:[#allocation2 + $0x10] sm:$0xff]
      %v440 = vld [vmem:[#allocation2 + $0x18] sm:$0xff]
      %v441 = vld [vmem:[#allocation2 + $0x20] sm:$0xff]
      %v442 = vld [vmem:[#allocation2 + $0x28] sm:$0xff]
      %449 = vrot.lane.b32.xlu0 %v437, 66
      %v450 = vpop.permute.xlu0 %449
      %451 = vrot.lane.b32.xlu0 %v438, 66
      %v452 = vpop.permute.xlu0 %451
      %453 = vrot.lane.b32.xlu0 %v439, 66
      %v454 = vpop.permute.xlu0 %453
      %455 = vrot.lane.b32.xlu0 %v440, 66
      %v456 = vpop.permute.xlu0 %455
      %457 = vrot.lane.b32.xlu0 %v441, 66
      %v458 = vpop.permute.xlu0 %457
      %459 = vrot.lane.b32.xlu0 %v442, 66
      %v460 = vpop.permute.xlu0 %459
      %vm461 = vcmask 539648
      %v462 = vsel %vm461, %v450, %v452
      %v463 = vsel %vm461, %v452, %v454
      %v464 = vsel %vm461, %v454, %v456
      %v465 = vsel %vm461, %v456, %v458
      %v466 = vsel %vm461, %v458, %v460
      %472 = vst [vmem:[#allocation3] sm:$0xff] %v462
      %473 = vst [vmem:[#allocation3 + $0x8] sm:$0xff] %v463
      %474 = vst [vmem:[#allocation3 + $0x10] sm:$0xff] %v464
      %475 = vst [vmem:[#allocation3 + $0x18] sm:$0xff] %v465
      %476 = vst [vmem:[#allocation3 + $0x20] sm:$0xff] %v466
      %v477 = vld [vmem:[#allocation2] sm:$0xff]
      %v478 = vld [vmem:[#allocation2 + $0x8] sm:$0xff]
      %v479 = vld [vmem:[#allocation2 + $0x10] sm:$0xff]
      %v480 = vld [vmem:[#allocation2 + $0x18] sm:$0xff]
      %v481 = vld [vmem:[#allocation2 + $0x20] sm:$0xff]
      %v482 = vld [vmem:[#allocation2 + $0x28] sm:$0xff]
      %489 = vrot.lane.b32.xlu0 %v477, 65
      %v490 = vpop.permute.xlu0 %489
      %491 = vrot.lane.b32.xlu0 %v478, 65
      %v492 = vpop.permute.xlu0 %491
      %493 = vrot.lane.b32.xlu0 %v479, 65
      %v494 = vpop.permute.xlu0 %493
      %495 = vrot.lane.b32.xlu0 %v480, 65
      %v496 = vpop.permute.xlu0 %495
      %497 = vrot.lane.b32.xlu0 %v481, 65
      %v498 = vpop.permute.xlu0 %497
      %499 = vrot.lane.b32.xlu0 %v482, 65
      %v500 = vpop.permute.xlu0 %499
      %vm501 = vcmask 531456
      %v502 = vsel %vm501, %v490, %v492
      %v503 = vsel %vm501, %v492, %v494
      %v504 = vsel %vm501, %v494, %v496
      %v505 = vsel %vm501, %v496, %v498
      %v506 = vsel %vm501, %v498, %v500
      %512 = vst [vmem:[#allocation3 + $0x28] sm:$0xff] %v502
      %513 = vst [vmem:[#allocation3 + $0x30] sm:$0xff] %v503
      %514 = vst [vmem:[#allocation3 + $0x38] sm:$0xff] %v504
      %515 = vst [vmem:[#allocation3 + $0x40] sm:$0xff] %v505
      %516 = vst [vmem:[#allocation3 + $0x48] sm:$0xff] %v506
      %v517 = vld [vmem:[#allocation2] sm:$0xff]
      %v518 = vld [vmem:[#allocation2 + $0x8] sm:$0xff]
      %v519 = vld [vmem:[#allocation2 + $0x10] sm:$0xff]
      %v520 = vld [vmem:[#allocation2 + $0x18] sm:$0xff]
      %v521 = vld [vmem:[#allocation2 + $0x20] sm:$0xff]
      %v522 = vld [vmem:[#allocation2 + $0x28] sm:$0xff]
      %529 = vrot.lane.b32.xlu0 %v517, 64
      %v530 = vpop.permute.xlu0 %529
      %531 = vrot.lane.b32.xlu0 %v518, 64
      %v532 = vpop.permute.xlu0 %531
      %533 = vrot.lane.b32.xlu0 %v519, 64
      %v534 = vpop.permute.xlu0 %533
      %535 = vrot.lane.b32.xlu0 %v520, 64
      %v536 = vpop.permute.xlu0 %535
      %537 = vrot.lane.b32.xlu0 %v521, 64
      %v538 = vpop.permute.xlu0 %537
      %539 = vrot.lane.b32.xlu0 %v522, 64
      %v540 = vpop.permute.xlu0 %539
      %vm541 = vcmask 523264
      %v542 = vsel %vm541, %v530, %v532
      %v543 = vsel %vm541, %v532, %v534
      %v544 = vsel %vm541, %v534, %v536
      %v545 = vsel %vm541, %v536, %v538
      %v546 = vsel %vm541, %v538, %v540
      %552 = vst [vmem:[#allocation3 + $0x50] sm:$0xff] %v542
      %553 = vst [vmem:[#allocation3 + $0x58] sm:$0xff] %v543
      %554 = vst [vmem:[#allocation3 + $0x60] sm:$0xff] %v544
      %555 = vst [vmem:[#allocation3 + $0x68] sm:$0xff] %v545
      %556 = vst [vmem:[#allocation3 + $0x70] sm:$0xff] %v546
      %v557 = vld [vmem:[#allocation2] sm:$0xff]
      %v558 = vld [vmem:[#allocation2 + $0x8] sm:$0xff]
      %v559 = vld [vmem:[#allocation2 + $0x10] sm:$0xff]
      %v560 = vld [vmem:[#allocation2 + $0x18] sm:$0xff]
      %v561 = vld [vmem:[#allocation2 + $0x20] sm:$0xff]
      %v562 = vld [vmem:[#allocation2 + $0x28] sm:$0xff]
      %569 = vrot.lane.b32.xlu0 %v557, 63
      %v570 = vpop.permute.xlu0 %569
      %571 = vrot.lane.b32.xlu0 %v558, 63
      %v572 = vpop.permute.xlu0 %571
      %573 = vrot.lane.b32.xlu0 %v559, 63
      %v574 = vpop.permute.xlu0 %573
      %575 = vrot.lane.b32.xlu0 %v560, 63
      %v576 = vpop.permute.xlu0 %575
      %577 = vrot.lane.b32.xlu0 %v561, 63
      %v578 = vpop.permute.xlu0 %577
      %579 = vrot.lane.b32.xlu0 %v562, 63
      %v580 = vpop.permute.xlu0 %579
      %vm581 = vcmask 515072
      %v582 = vsel %vm581, %v570, %v572
      %v583 = vsel %vm581, %v572, %v574
      %v584 = vsel %vm581, %v574, %v576
      %v585 = vsel %vm581, %v576, %v578
      %v586 = vsel %vm581, %v578, %v580
      %592 = vst [vmem:[#allocation3 + $0x78] sm:$0xff] %v582
      %593 = vst [vmem:[#allocation3 + $0x80] sm:$0xff] %v583
      %594 = vst [vmem:[#allocation3 + $0x88] sm:$0xff] %v584
      %595 = vst [vmem:[#allocation3 + $0x90] sm:$0xff] %v585
      %596 = vst [vmem:[#allocation3 + $0x98] sm:$0xff] %v586
      %v597 = vld [vmem:[#allocation2] sm:$0xff]
      %v598 = vld [vmem:[#allocation2 + $0x8] sm:$0xff]
      %v599 = vld [vmem:[#allocation2 + $0x10] sm:$0xff]
      %v600 = vld [vmem:[#allocation2 + $0x18] sm:$0xff]
      %v601 = vld [vmem:[#allocation2 + $0x20] sm:$0xff]
      %v602 = vld [vmem:[#allocation2 + $0x28] sm:$0xff]
      %609 = vrot.lane.b32.xlu0 %v597, 62
      %v610 = vpop.permute.xlu0 %609
      %611 = vrot.lane.b32.xlu0 %v598, 62
      %v612 = vpop.permute.xlu0 %611
      %613 = vrot.lane.b32.xlu0 %v599, 62
      %v614 = vpop.permute.xlu0 %613
      %615 = vrot.lane.b32.xlu0 %v600, 62
      %v616 = vpop.permute.xlu0 %615
      %617 = vrot.lane.b32.xlu0 %v601, 62
      %v618 = vpop.permute.xlu0 %617
      %619 = vrot.lane.b32.xlu0 %v602, 62
      %v620 = vpop.permute.xlu0 %619
      %vm621 = vcmask 506880
      %v622 = vsel %vm621, %v610, %v612
      %v623 = vsel %vm621, %v612, %v614
      %v624 = vsel %vm621, %v614, %v616
      %v625 = vsel %vm621, %v616, %v618
      %v626 = vsel %vm621, %v618, %v620
      %632 = vst [vmem:[#allocation3 + $0xa0] sm:$0xff] %v622
      %633 = vst [vmem:[#allocation3 + $0xa8] sm:$0xff] %v623
      %634 = vst [vmem:[#allocation3 + $0xb0] sm:$0xff] %v624
      %635 = vst [vmem:[#allocation3 + $0xb8] sm:$0xff] %v625
      %636 = vst [vmem:[#allocation3 + $0xc0] sm:$0xff] %v626
      %v637 = vld [vmem:[#allocation2] sm:$0xff]
      %v638 = vld [vmem:[#allocation2 + $0x8] sm:$0xff]
      %v639 = vld [vmem:[#allocation2 + $0x10] sm:$0xff]
      %v640 = vld [vmem:[#allocation2 + $0x18] sm:$0xff]
      %v641 = vld [vmem:[#allocation2 + $0x20] sm:$0xff]
      %v642 = vld [vmem:[#allocation2 + $0x28] sm:$0xff]
      %649 = vrot.lane.b32.xlu0 %v637, 34
      %v650 = vpop.permute.xlu0 %649
      %651 = vrot.lane.b32.xlu0 %v638, 34
      %v652 = vpop.permute.xlu0 %651
      %653 = vrot.lane.b32.xlu0 %v639, 34
      %v654 = vpop.permute.xlu0 %653
      %655 = vrot.lane.b32.xlu0 %v640, 34
      %v656 = vpop.permute.xlu0 %655
      %657 = vrot.lane.b32.xlu0 %v641, 34
      %v658 = vpop.permute.xlu0 %657
      %659 = vrot.lane.b32.xlu0 %v642, 34
      %v660 = vpop.permute.xlu0 %659
      %vm661 = vcmask 277504
      %v662 = vsel %vm661, %v650, %v652
      %v663 = vsel %vm661, %v652, %v654
      %v664 = vsel %vm661, %v654, %v656
      %v665 = vsel %vm661, %v656, %v658
      %v666 = vsel %vm661, %v658, %v660
      %672 = vst [vmem:[#allocation3 + $0xc8] sm:$0xff] %v662
      %673 = vst [vmem:[#allocation3 + $0xd0] sm:$0xff] %v663
      %674 = vst [vmem:[#allocation3 + $0xd8] sm:$0xff] %v664
      %675 = vst [vmem:[#allocation3 + $0xe0] sm:$0xff] %v665
      %676 = vst [vmem:[#allocation3 + $0xe8] sm:$0xff] %v666
      %v677 = vld [vmem:[#allocation2] sm:$0xff]
      %v678 = vld [vmem:[#allocation2 + $0x8] sm:$0xff]
      %v679 = vld [vmem:[#allocation2 + $0x10] sm:$0xff]
      %v680 = vld [vmem:[#allocation2 + $0x18] sm:$0xff]
      %v681 = vld [vmem:[#allocation2 + $0x20] sm:$0xff]
      %v682 = vld [vmem:[#allocation2 + $0x28] sm:$0xff]
      %689 = vrot.lane.b32.xlu0 %v677, 33
      %v690 = vpop.permute.xlu0 %689
      %691 = vrot.lane.b32.xlu0 %v678, 33
      %v692 = vpop.permute.xlu0 %691
      %693 = vrot.lane.b32.xlu0 %v679, 33
      %v694 = vpop.permute.xlu0 %693
      %695 = vrot.lane.b32.xlu0 %v680, 33
      %v696 = vpop.permute.xlu0 %695
      %697 = vrot.lane.b32.xlu0 %v681, 33
      %v698 = vpop.permute.xlu0 %697
      %699 = vrot.lane.b32.xlu0 %v682, 33
      %v700 = vpop.permute.xlu0 %699
      %vm701 = vcmask 269312
      %v702 = vsel %vm701, %v690, %v692
      %v703 = vsel %vm701, %v692, %v694
      %v704 = vsel %vm701, %v694, %v696
      %v705 = vsel %vm701, %v696, %v698
      %v706 = vsel %vm701, %v698, %v700
      %712 = vst [vmem:[#allocation3 + $0xf0] sm:$0xff] %v702
      %713 = vst [vmem:[#allocation3 + $0xf8] sm:$0xff] %v703
      %714 = vst [vmem:[#allocation3 + $0x100] sm:$0xff] %v704
      %715 = vst [vmem:[#allocation3 + $0x108] sm:$0xff] %v705
      %716 = vst [vmem:[#allocation3 + $0x110] sm:$0xff] %v706
      %v717 = vld [vmem:[#allocation2] sm:$0xff]
      %v718 = vld [vmem:[#allocation2 + $0x8] sm:$0xff]
      %v719 = vld [vmem:[#allocation2 + $0x10] sm:$0xff]
      %v720 = vld [vmem:[#allocation2 + $0x18] sm:$0xff]
      %v721 = vld [vmem:[#allocation2 + $0x20] sm:$0xff]
      %v722 = vld [vmem:[#allocation2 + $0x28] sm:$0xff]
      %729 = vrot.lane.b32.xlu0 %v717, 32
      %v730 = vpop.permute.xlu0 %729
      %731 = vrot.lane.b32.xlu0 %v718, 32
      %v732 = vpop.permute.xlu0 %731
      %733 = vrot.lane.b32.xlu0 %v719, 32
      %v734 = vpop.permute.xlu0 %733
      %735 = vrot.lane.b32.xlu0 %v720, 32
      %v736 = vpop.permute.xlu0 %735
      %737 = vrot.lane.b32.xlu0 %v721, 32
      %v738 = vpop.permute.xlu0 %737
      %739 = vrot.lane.b32.xlu0 %v722, 32
      %v740 = vpop.permute.xlu0 %739
      %vm741 = vcmask 261120
      %v742 = vsel %vm741, %v730, %v732
      %v743 = vsel %vm741, %v732, %v734
      %v744 = vsel %vm741, %v734, %v736
      %v745 = vsel %vm741, %v736, %v738
      %v746 = vsel %vm741, %v738, %v740
      %752 = vst [vmem:[#allocation3 + $0x118] sm:$0xff] %v742
      %753 = vst [vmem:[#allocation3 + $0x120] sm:$0xff] %v743
      %754 = vst [vmem:[#allocation3 + $0x128] sm:$0xff] %v744
      %755 = vst [vmem:[#allocation3 + $0x130] sm:$0xff] %v745
      %756 = vst [vmem:[#allocation3 + $0x138] sm:$0xff] %v746
      %v757 = vld [vmem:[#allocation2] sm:$0xff]
      %v758 = vld [vmem:[#allocation2 + $0x8] sm:$0xff]
      %v759 = vld [vmem:[#allocation2 + $0x10] sm:$0xff]
      %v760 = vld [vmem:[#allocation2 + $0x18] sm:$0xff]
      %v761 = vld [vmem:[#allocation2 + $0x20] sm:$0xff]
      %v762 = vld [vmem:[#allocation2 + $0x28] sm:$0xff]
      %769 = vrot.lane.b32.xlu0 %v757, 31
      %v770 = vpop.permute.xlu0 %769
      %771 = vrot.lane.b32.xlu0 %v758, 31
      %v772 = vpop.permute.xlu0 %771
      %773 = vrot.lane.b32.xlu0 %v759, 31
      %v774 = vpop.permute.xlu0 %773
      %775 = vrot.lane.b32.xlu0 %v760, 31
      %v776 = vpop.permute.xlu0 %775
      %777 = vrot.lane.b32.xlu0 %v761, 31
      %v778 = vpop.permute.xlu0 %777
      %779 = vrot.lane.b32.xlu0 %v762, 31
      %v780 = vpop.permute.xlu0 %779
      %vm781 = vcmask 252928
      %v782 = vsel %vm781, %v770, %v772
      %v783 = vsel %vm781, %v772, %v774
      %v784 = vsel %vm781, %v774, %v776
      %v785 = vsel %vm781, %v776, %v778
      %v786 = vsel %vm781, %v778, %v780
      %792 = vst [vmem:[#allocation3 + $0x140] sm:$0xff] %v782
      %793 = vst [vmem:[#allocation3 + $0x148] sm:$0xff] %v783
      %794 = vst [vmem:[#allocation3 + $0x150] sm:$0xff] %v784
      %795 = vst [vmem:[#allocation3 + $0x158] sm:$0xff] %v785
      %796 = vst [vmem:[#allocation3 + $0x160] sm:$0xff] %v786
      %v797 = vld [vmem:[#allocation2] sm:$0xff]
      %v798 = vld [vmem:[#allocation2 + $0x8] sm:$0xff]
      %v799 = vld [vmem:[#allocation2 + $0x10] sm:$0xff]
      %v800 = vld [vmem:[#allocation2 + $0x18] sm:$0xff]
      %v801 = vld [vmem:[#allocation2 + $0x20] sm:$0xff]
      %v802 = vld [vmem:[#allocation2 + $0x28] sm:$0xff]
      %809 = vrot.lane.b32.xlu0 %v797, 30
      %v810 = vpop.permute.xlu0 %809
      %811 = vrot.lane.b32.xlu0 %v798, 30
      %v812 = vpop.permute.xlu0 %811
      %813 = vrot.lane.b32.xlu0 %v799, 30
      %v814 = vpop.permute.xlu0 %813
      %815 = vrot.lane.b32.xlu0 %v800, 30
      %v816 = vpop.permute.xlu0 %815
      %817 = vrot.lane.b32.xlu0 %v801, 30
      %v818 = vpop.permute.xlu0 %817
      %819 = vrot.lane.b32.xlu0 %v802, 30
      %v820 = vpop.permute.xlu0 %819
      %vm821 = vcmask 244736
      %v822 = vsel %vm821, %v810, %v812
      %v823 = vsel %vm821, %v812, %v814
      %v824 = vsel %vm821, %v814, %v816
      %v825 = vsel %vm821, %v816, %v818
      %v826 = vsel %vm821, %v818, %v820
      %832 = vst [vmem:[#allocation3 + $0x168] sm:$0xff] %v822
      %833 = vst [vmem:[#allocation3 + $0x170] sm:$0xff] %v823
      %834 = vst [vmem:[#allocation3 + $0x178] sm:$0xff] %v824
      %835 = vst [vmem:[#allocation3 + $0x180] sm:$0xff] %v825
      %836 = vst [vmem:[#allocation3 + $0x188] sm:$0xff] %v826
      %v837 = vld [vmem:[#allocation2] sm:$0xff]
      %v838 = vld [vmem:[#allocation2 + $0x8] sm:$0xff]
      %v839 = vld [vmem:[#allocation2 + $0x10] sm:$0xff]
      %v840 = vld [vmem:[#allocation2 + $0x18] sm:$0xff]
      %v841 = vld [vmem:[#allocation2 + $0x20] sm:$0xff]
      %v842 = vld [vmem:[#allocation2 + $0x28] sm:$0xff]
      %849 = vrot.lane.b32.xlu0 %v837, 2
      %v850 = vpop.permute.xlu0 %849
      %851 = vrot.lane.b32.xlu0 %v838, 2
      %v852 = vpop.permute.xlu0 %851
      %853 = vrot.lane.b32.xlu0 %v839, 2
      %v854 = vpop.permute.xlu0 %853
      %855 = vrot.lane.b32.xlu0 %v840, 2
      %v856 = vpop.permute.xlu0 %855
      %857 = vrot.lane.b32.xlu0 %v841, 2
      %v858 = vpop.permute.xlu0 %857
      %859 = vrot.lane.b32.xlu0 %v842, 2
      %v860 = vpop.permute.xlu0 %859
      %vm861 = vcmask 15360
      %v862 = vsel %vm861, %v850, %v852
      %v863 = vsel %vm861, %v852, %v854
      %v864 = vsel %vm861, %v854, %v856
      %v865 = vsel %vm861, %v856, %v858
      %v866 = vsel %vm861, %v858, %v860
      %872 = vst [vmem:[#allocation3 + $0x190] sm:$0xff] %v862
      %873 = vst [vmem:[#allocation3 + $0x198] sm:$0xff] %v863
      %874 = vst [vmem:[#allocation3 + $0x1a0] sm:$0xff] %v864
      %875 = vst [vmem:[#allocation3 + $0x1a8] sm:$0xff] %v865
      %876 = vst [vmem:[#allocation3 + $0x1b0] sm:$0xff] %v866
      %v877 = vld [vmem:[#allocation2] sm:$0xff]
      %v878 = vld [vmem:[#allocation2 + $0x8] sm:$0xff]
      %v879 = vld [vmem:[#allocation2 + $0x10] sm:$0xff]
      %v880 = vld [vmem:[#allocation2 + $0x18] sm:$0xff]
      %v881 = vld [vmem:[#allocation2 + $0x20] sm:$0xff]
      %v882 = vld [vmem:[#allocation2 + $0x28] sm:$0xff]
      %889 = vrot.lane.b32.xlu0 %v877, 1
      %v890 = vpop.permute.xlu0 %889
      %891 = vrot.lane.b32.xlu0 %v878, 1
      %v892 = vpop.permute.xlu0 %891
      %893 = vrot.lane.b32.xlu0 %v879, 1
      %v894 = vpop.permute.xlu0 %893
      %895 = vrot.lane.b32.xlu0 %v880, 1
      %v896 = vpop.permute.xlu0 %895
      %897 = vrot.lane.b32.xlu0 %v881, 1
      %v898 = vpop.permute.xlu0 %897
      %899 = vrot.lane.b32.xlu0 %v882, 1
      %v900 = vpop.permute.xlu0 %899
      %vm901 = vcmask 7168
      %v902 = vsel %vm901, %v890, %v892
      %v903 = vsel %vm901, %v892, %v894
      %v904 = vsel %vm901, %v894, %v896
      %v905 = vsel %vm901, %v896, %v898
      %v906 = vsel %vm901, %v898, %v900
      %912 = vst [vmem:[#allocation3 + $0x1b8] sm:$0xff] %v902
      %913 = vst [vmem:[#allocation3 + $0x1c0] sm:$0xff] %v903
      %914 = vst [vmem:[#allocation3 + $0x1c8] sm:$0xff] %v904
      %915 = vst [vmem:[#allocation3 + $0x1d0] sm:$0xff] %v905
      %916 = vst [vmem:[#allocation3 + $0x1d8] sm:$0xff] %v906
      %v917 = vld [vmem:[#allocation2 + $0x8] sm:$0xff]
      %v918 = vld [vmem:[#allocation2 + $0x10] sm:$0xff]
      %v919 = vld [vmem:[#allocation2 + $0x18] sm:$0xff]
      %v920 = vld [vmem:[#allocation2 + $0x20] sm:$0xff]
      %v921 = vld [vmem:[#allocation2 + $0x28] sm:$0xff]
      %922 = vst [vmem:[#allocation3 + $0x1e0] sm:$0xff] %v917
      %923 = vst [vmem:[#allocation3 + $0x1e8] sm:$0xff] %v918
      %924 = vst [vmem:[#allocation3 + $0x1f0] sm:$0xff] %v919
      %925 = vst [vmem:[#allocation3 + $0x1f8] sm:$0xff] %v920
      %926 = vst [vmem:[#allocation3 + $0x200] sm:$0xff] %v921
      %v927 = vld [vmem:[#allocation2 + $0x8] sm:$0xff]
      %v928 = vld [vmem:[#allocation2 + $0x10] sm:$0xff]
      %v929 = vld [vmem:[#allocation2 + $0x18] sm:$0xff]
      %v930 = vld [vmem:[#allocation2 + $0x20] sm:$0xff]
      %v931 = vld [vmem:[#allocation2 + $0x28] sm:$0xff]
      %v932 = vld [vmem:[#allocation2 + $0x30] sm:$0xff]
      %939 = vrot.lane.b32.xlu0 %v927, 127
      %v940 = vpop.permute.xlu0 %939
      %941 = vrot.lane.b32.xlu0 %v928, 127
      %v942 = vpop.permute.xlu0 %941
      %943 = vrot.lane.b32.xlu0 %v929, 127
      %v944 = vpop.permute.xlu0 %943
      %945 = vrot.lane.b32.xlu0 %v930, 127
      %v946 = vpop.permute.xlu0 %945
      %947 = vrot.lane.b32.xlu0 %v931, 127
      %v948 = vpop.permute.xlu0 %947
      %949 = vrot.lane.b32.xlu0 %v932, 127
      %v950 = vpop.permute.xlu0 %949
      %vm951 = vcmask 1039360
      %v952 = vsel %vm951, %v940, %v942
      %v953 = vsel %vm951, %v942, %v944
      %v954 = vsel %vm951, %v944, %v946
      %v955 = vsel %vm951, %v946, %v948
      %v956 = vsel %vm951, %v948, %v950
      %962 = vst [vmem:[#allocation3 + $0x208] sm:$0xff] %v952
      %963 = vst [vmem:[#allocation3 + $0x210] sm:$0xff] %v953
      %964 = vst [vmem:[#allocation3 + $0x218] sm:$0xff] %v954
      %965 = vst [vmem:[#allocation3 + $0x220] sm:$0xff] %v955
      %966 = vst [vmem:[#allocation3 + $0x228] sm:$0xff] %v956
      %v967 = vld [vmem:[#allocation2 + $0x8] sm:$0xff]
      %v968 = vld [vmem:[#allocation2 + $0x10] sm:$0xff]
      %v969 = vld [vmem:[#allocation2 + $0x18] sm:$0xff]
      %v970 = vld [vmem:[#allocation2 + $0x20] sm:$0xff]
      %v971 = vld [vmem:[#allocation2 + $0x28] sm:$0xff]
      %v972 = vld [vmem:[#allocation2 + $0x30] sm:$0xff]
      %979 = vrot.lane.b32.xlu0 %v967, 126
      %v980 = vpop.permute.xlu0 %979
      %981 = vrot.lane.b32.xlu0 %v968, 126
      %v982 = vpop.permute.xlu0 %981
      %983 = vrot.lane.b32.xlu0 %v969, 126
      %v984 = vpop.permute.xlu0 %983
      %985 = vrot.lane.b32.xlu0 %v970, 126
      %v986 = vpop.permute.xlu0 %985
      %987 = vrot.lane.b32.xlu0 %v971, 126
      %v988 = vpop.permute.xlu0 %987
      %989 = vrot.lane.b32.xlu0 %v972, 126
      %v990 = vpop.permute.xlu0 %989
      %vm991 = vcmask 1031168
      %v992 = vsel %vm991, %v980, %v982
      %v993 = vsel %vm991, %v982, %v984
      %v994 = vsel %vm991, %v984, %v986
      %v995 = vsel %vm991, %v986, %v988
      %v996 = vsel %vm991, %v988, %v990
      %1002 = vst [vmem:[#allocation3 + $0x230] sm:$0xff] %v992
      %1003 = vst [vmem:[#allocation3 + $0x238] sm:$0xff] %v993
      %1004 = vst [vmem:[#allocation3 + $0x240] sm:$0xff] %v994
      %1005 = vst [vmem:[#allocation3 + $0x248] sm:$0xff] %v995
      %1006 = vst [vmem:[#allocation3 + $0x250] sm:$0xff] %v996
      %v1007 = vld [vmem:[#allocation2 + $0x8] sm:$0xff]
      %v1008 = vld [vmem:[#allocation2 + $0x10] sm:$0xff]
      %v1009 = vld [vmem:[#allocation2 + $0x18] sm:$0xff]
      %v1010 = vld [vmem:[#allocation2 + $0x20] sm:$0xff]
      %v1011 = vld [vmem:[#allocation2 + $0x28] sm:$0xff]
      %v1012 = vld [vmem:[#allocation2 + $0x30] sm:$0xff]
      %1019 = vrot.lane.b32.xlu0 %v1007, 98
      %v1020 = vpop.permute.xlu0 %1019
      %1021 = vrot.lane.b32.xlu0 %v1008, 98
      %v1022 = vpop.permute.xlu0 %1021
      %1023 = vrot.lane.b32.xlu0 %v1009, 98
      %v1024 = vpop.permute.xlu0 %1023
      %1025 = vrot.lane.b32.xlu0 %v1010, 98
      %v1026 = vpop.permute.xlu0 %1025
      %1027 = vrot.lane.b32.xlu0 %v1011, 98
      %v1028 = vpop.permute.xlu0 %1027
      %1029 = vrot.lane.b32.xlu0 %v1012, 98
      %v1030 = vpop.permute.xlu0 %1029
      %vm1031 = vcmask 801792
      %v1032 = vsel %vm1031, %v1020, %v1022
      %v1033 = vsel %vm1031, %v1022, %v1024
      %v1034 = vsel %vm1031, %v1024, %v1026
      %v1035 = vsel %vm1031, %v1026, %v1028
      %v1036 = vsel %vm1031, %v1028, %v1030
      %1042 = vst [vmem:[#allocation3 + $0x258] sm:$0xff] %v1032
      %1043 = vst [vmem:[#allocation3 + $0x260] sm:$0xff] %v1033
      %1044 = vst [vmem:[#allocation3 + $0x268] sm:$0xff] %v1034
      %1045 = vst [vmem:[#allocation3 + $0x270] sm:$0xff] %v1035
      %1046 = vst [vmem:[#allocation3 + $0x278] sm:$0xff] %v1036
      %v1047 = vld [vmem:[#allocation2 + $0x8] sm:$0xff]
      %v1048 = vld [vmem:[#allocation2 + $0x10] sm:$0xff]
      %v1049 = vld [vmem:[#allocation2 + $0x18] sm:$0xff]
      %v1050 = vld [vmem:[#allocation2 + $0x20] sm:$0xff]
      %v1051 = vld [vmem:[#allocation2 + $0x28] sm:$0xff]
      %v1052 = vld [vmem:[#allocation2 + $0x30] sm:$0xff]
      %1059 = vrot.lane.b32.xlu0 %v1047, 97
      %v1060 = vpop.permute.xlu0 %1059
      %1061 = vrot.lane.b32.xlu0 %v1048, 97
      %v1062 = vpop.permute.xlu0 %1061
      %1063 = vrot.lane.b32.xlu0 %v1049, 97
      %v1064 = vpop.permute.xlu0 %1063
      %1065 = vrot.lane.b32.xlu0 %v1050, 97
      %v1066 = vpop.permute.xlu0 %1065
      %1067 = vrot.lane.b32.xlu0 %v1051, 97
      %v1068 = vpop.permute.xlu0 %1067
      %1069 = vrot.lane.b32.xlu0 %v1052, 97
      %v1070 = vpop.permute.xlu0 %1069
      %vm1071 = vcmask 793600
      %v1072 = vsel %vm1071, %v1060, %v1062
      %v1073 = vsel %vm1071, %v1062, %v1064
      %v1074 = vsel %vm1071, %v1064, %v1066
      %v1075 = vsel %vm1071, %v1066, %v1068
      %v1076 = vsel %vm1071, %v1068, %v1070
      %1082 = vst [vmem:[#allocation3 + $0x280] sm:$0xff] %v1072
      %1083 = vst [vmem:[#allocation3 + $0x288] sm:$0xff] %v1073
      %1084 = vst [vmem:[#allocation3 + $0x290] sm:$0xff] %v1074
      %1085 = vst [vmem:[#allocation3 + $0x298] sm:$0xff] %v1075
      %1086 = vst [vmem:[#allocation3 + $0x2a0] sm:$0xff] %v1076
      %v1087 = vld [vmem:[#allocation2 + $0x8] sm:$0xff]
      %v1088 = vld [vmem:[#allocation2 + $0x10] sm:$0xff]
      %v1089 = vld [vmem:[#allocation2 + $0x18] sm:$0xff]
      %v1090 = vld [vmem:[#allocation2 + $0x20] sm:$0xff]
      %v1091 = vld [vmem:[#allocation2 + $0x28] sm:$0xff]
      %v1092 = vld [vmem:[#allocation2 + $0x30] sm:$0xff]
      %1099 = vrot.lane.b32.xlu0 %v1087, 96
      %v1100 = vpop.permute.xlu0 %1099
      %1101 = vrot.lane.b32.xlu0 %v1088, 96
      %v1102 = vpop.permute.xlu0 %1101
      %1103 = vrot.lane.b32.xlu0 %v1089, 96
      %v1104 = vpop.permute.xlu0 %1103
      %1105 = vrot.lane.b32.xlu0 %v1090, 96
      %v1106 = vpop.permute.xlu0 %1105
      %1107 = vrot.lane.b32.xlu0 %v1091, 96
      %v1108 = vpop.permute.xlu0 %1107
      %1109 = vrot.lane.b32.xlu0 %v1092, 96
      %v1110 = vpop.permute.xlu0 %1109
      %vm1111 = vcmask 785408
      %v1112 = vsel %vm1111, %v1100, %v1102
      %v1113 = vsel %vm1111, %v1102, %v1104
      %v1114 = vsel %vm1111, %v1104, %v1106
      %v1115 = vsel %vm1111, %v1106, %v1108
      %v1116 = vsel %vm1111, %v1108, %v1110
      %1122 = vst [vmem:[#allocation3 + $0x2a8] sm:$0xff] %v1112
      %1123 = vst [vmem:[#allocation3 + $0x2b0] sm:$0xff] %v1113
      %1124 = vst [vmem:[#allocation3 + $0x2b8] sm:$0xff] %v1114
      %1125 = vst [vmem:[#allocation3 + $0x2c0] sm:$0xff] %v1115
      %1126 = vst [vmem:[#allocation3 + $0x2c8] sm:$0xff] %v1116
      %v1127 = vld [vmem:[#allocation2 + $0x8] sm:$0xff]
      %v1128 = vld [vmem:[#allocation2 + $0x10] sm:$0xff]
      %v1129 = vld [vmem:[#allocation2 + $0x18] sm:$0xff]
      %v1130 = vld [vmem:[#allocation2 + $0x20] sm:$0xff]
      %v1131 = vld [vmem:[#allocation2 + $0x28] sm:$0xff]
      %v1132 = vld [vmem:[#allocation2 + $0x30] sm:$0xff]
      %1139 = vrot.lane.b32.xlu0 %v1127, 95
      %v1140 = vpop.permute.xlu0 %1139
      %1141 = vrot.lane.b32.xlu0 %v1128, 95
      %v1142 = vpop.permute.xlu0 %1141
      %1143 = vrot.lane.b32.xlu0 %v1129, 95
      %v1144 = vpop.permute.xlu0 %1143
      %1145 = vrot.lane.b32.xlu0 %v1130, 95
      %v1146 = vpop.permute.xlu0 %1145
      %1147 = vrot.lane.b32.xlu0 %v1131, 95
      %v1148 = vpop.permute.xlu0 %1147
      %1149 = vrot.lane.b32.xlu0 %v1132, 95
      %v1150 = vpop.permute.xlu0 %1149
      %vm1151 = vcmask 777216
      %v1152 = vsel %vm1151, %v1140, %v1142
      %v1153 = vsel %vm1151, %v1142, %v1144
      %v1154 = vsel %vm1151, %v1144, %v1146
      %v1155 = vsel %vm1151, %v1146, %v1148
      %v1156 = vsel %vm1151, %v1148, %v1150
      %1162 = vst [vmem:[#allocation3 + $0x2d0] sm:$0xff] %v1152
      %1163 = vst [vmem:[#allocation3 + $0x2d8] sm:$0xff] %v1153
      %1164 = vst [vmem:[#allocation3 + $0x2e0] sm:$0xff] %v1154
      %1165 = vst [vmem:[#allocation3 + $0x2e8] sm:$0xff] %v1155
      %1166 = vst [vmem:[#allocation3 + $0x2f0] sm:$0xff] %v1156
      %v1167 = vld [vmem:[#allocation2 + $0x8] sm:$0xff]
      %v1168 = vld [vmem:[#allocation2 + $0x10] sm:$0xff]
      %v1169 = vld [vmem:[#allocation2 + $0x18] sm:$0xff]
      %v1170 = vld [vmem:[#allocation2 + $0x20] sm:$0xff]
      %v1171 = vld [vmem:[#allocation2 + $0x28] sm:$0xff]
      %v1172 = vld [vmem:[#allocation2 + $0x30] sm:$0xff]
      %1179 = vrot.lane.b32.xlu0 %v1167, 94
      %v1180 = vpop.permute.xlu0 %1179
      %1181 = vrot.lane.b32.xlu0 %v1168, 94
      %v1182 = vpop.permute.xlu0 %1181
      %1183 = vrot.lane.b32.xlu0 %v1169, 94
      %v1184 = vpop.permute.xlu0 %1183
      %1185 = vrot.lane.b32.xlu0 %v1170, 94
      %v1186 = vpop.permute.xlu0 %1185
      %1187 = vrot.lane.b32.xlu0 %v1171, 94
      %v1188 = vpop.permute.xlu0 %1187
      %1189 = vrot.lane.b32.xlu0 %v1172, 94
      %v1190 = vpop.permute.xlu0 %1189
      %vm1191 = vcmask 769024
      %v1192 = vsel %vm1191, %v1180, %v1182
      %v1193 = vsel %vm1191, %v1182, %v1184
      %v1194 = vsel %vm1191, %v1184, %v1186
      %v1195 = vsel %vm1191, %v1186, %v1188
      %v1196 = vsel %vm1191, %v1188, %v1190
      %1202 = vst [vmem:[#allocation3 + $0x2f8] sm:$0xff] %v1192
      %1203 = vst [vmem:[#allocation3 + $0x300] sm:$0xff] %v1193
      %1204 = vst [vmem:[#allocation3 + $0x308] sm:$0xff] %v1194
      %1205 = vst [vmem:[#allocation3 + $0x310] sm:$0xff] %v1195
      %1206 = vst [vmem:[#allocation3 + $0x318] sm:$0xff] %v1196
      %v1207 = vld [vmem:[#allocation2 + $0x8] sm:$0xff]
      %v1208 = vld [vmem:[#allocation2 + $0x10] sm:$0xff]
      %v1209 = vld [vmem:[#allocation2 + $0x18] sm:$0xff]
      %v1210 = vld [vmem:[#allocation2 + $0x20] sm:$0xff]
      %v1211 = vld [vmem:[#allocation2 + $0x28] sm:$0xff]
      %v1212 = vld [vmem:[#allocation2 + $0x30] sm:$0xff]
      %1219 = vrot.lane.b32.xlu0 %v1207, 66
      %v1220 = vpop.permute.xlu0 %1219
      %1221 = vrot.lane.b32.xlu0 %v1208, 66
      %v1222 = vpop.permute.xlu0 %1221
      %1223 = vrot.lane.b32.xlu0 %v1209, 66
      %v1224 = vpop.permute.xlu0 %1223
      %1225 = vrot.lane.b32.xlu0 %v1210, 66
      %v1226 = vpop.permute.xlu0 %1225
      %1227 = vrot.lane.b32.xlu0 %v1211, 66
      %v1228 = vpop.permute.xlu0 %1227
      %1229 = vrot.lane.b32.xlu0 %v1212, 66
      %v1230 = vpop.permute.xlu0 %1229
      %v1231 = vsel %vm461, %v1220, %v1222
      %v1232 = vsel %vm461, %v1222, %v1224
      %v1233 = vsel %vm461, %v1224, %v1226
      %v1234 = vsel %vm461, %v1226, %v1228
      %v1235 = vsel %vm461, %v1228, %v1230
      %1241 = vst [vmem:[#allocation3 + $0x320] sm:$0xff] %v1231
      %1242 = vst [vmem:[#allocation3 + $0x328] sm:$0xff] %v1232
      %1243 = vst [vmem:[#allocation3 + $0x330] sm:$0xff] %v1233
      %1244 = vst [vmem:[#allocation3 + $0x338] sm:$0xff] %v1234
      %1245 = vst [vmem:[#allocation3 + $0x340] sm:$0xff] %v1235
      %v1246 = vld [vmem:[#allocation2 + $0x8] sm:$0xff]
      %v1247 = vld [vmem:[#allocation2 + $0x10] sm:$0xff]
      %v1248 = vld [vmem:[#allocation2 + $0x18] sm:$0xff]
      %v1249 = vld [vmem:[#allocation2 + $0x20] sm:$0xff]
      %v1250 = vld [vmem:[#allocation2 + $0x28] sm:$0xff]
      %v1251 = vld [vmem:[#allocation2 + $0x30] sm:$0xff]
      %1258 = vrot.lane.b32.xlu0 %v1246, 65
      %v1259 = vpop.permute.xlu0 %1258
      %1260 = vrot.lane.b32.xlu0 %v1247, 65
      %v1261 = vpop.permute.xlu0 %1260
      %1262 = vrot.lane.b32.xlu0 %v1248, 65
      %v1263 = vpop.permute.xlu0 %1262
      %1264 = vrot.lane.b32.xlu0 %v1249, 65
      %v1265 = vpop.permute.xlu0 %1264
      %1266 = vrot.lane.b32.xlu0 %v1250, 65
      %v1267 = vpop.permute.xlu0 %1266
      %1268 = vrot.lane.b32.xlu0 %v1251, 65
      %v1269 = vpop.permute.xlu0 %1268
      %v1270 = vsel %vm501, %v1259, %v1261
      %v1271 = vsel %vm501, %v1261, %v1263
      %v1272 = vsel %vm501, %v1263, %v1265
      %v1273 = vsel %vm501, %v1265, %v1267
      %v1274 = vsel %vm501, %v1267, %v1269
      %1280 = vst [vmem:[#allocation3 + $0x348] sm:$0xff] %v1270
      %1281 = vst [vmem:[#allocation3 + $0x350] sm:$0xff] %v1271
      %1282 = vst [vmem:[#allocation3 + $0x358] sm:$0xff] %v1272
      %1283 = vst [vmem:[#allocation3 + $0x360] sm:$0xff] %v1273
      %1284 = vst [vmem:[#allocation3 + $0x368] sm:$0xff] %v1274
      %v1285 = vld [vmem:[#allocation2 + $0x8] sm:$0xff]
      %v1286 = vld [vmem:[#allocation2 + $0x10] sm:$0xff]
      %v1287 = vld [vmem:[#allocation2 + $0x18] sm:$0xff]
      %v1288 = vld [vmem:[#allocation2 + $0x20] sm:$0xff]
      %v1289 = vld [vmem:[#allocation2 + $0x28] sm:$0xff]
      %v1290 = vld [vmem:[#allocation2 + $0x30] sm:$0xff]
      %1297 = vrot.lane.b32.xlu0 %v1285, 64
      %v1298 = vpop.permute.xlu0 %1297
      %1299 = vrot.lane.b32.xlu0 %v1286, 64
      %v1300 = vpop.permute.xlu0 %1299
      %1301 = vrot.lane.b32.xlu0 %v1287, 64
      %v1302 = vpop.permute.xlu0 %1301
      %1303 = vrot.lane.b32.xlu0 %v1288, 64
      %v1304 = vpop.permute.xlu0 %1303
      %1305 = vrot.lane.b32.xlu0 %v1289, 64
      %v1306 = vpop.permute.xlu0 %1305
      %1307 = vrot.lane.b32.xlu0 %v1290, 64
      %v1308 = vpop.permute.xlu0 %1307
      %v1309 = vsel %vm541, %v1298, %v1300
      %v1310 = vsel %vm541, %v1300, %v1302
      %v1311 = vsel %vm541, %v1302, %v1304
      %v1312 = vsel %vm541, %v1304, %v1306
      %v1313 = vsel %vm541, %v1306, %v1308
      %1319 = vst [vmem:[#allocation3 + $0x370] sm:$0xff] %v1309
      %1320 = vst [vmem:[#allocation3 + $0x378] sm:$0xff] %v1310
      %1321 = vst [vmem:[#allocation3 + $0x380] sm:$0xff] %v1311
      %1322 = vst [vmem:[#allocation3 + $0x388] sm:$0xff] %v1312
      %1323 = vst [vmem:[#allocation3 + $0x390] sm:$0xff] %v1313
      %v1324 = vld [vmem:[#allocation2 + $0x8] sm:$0xff]
      %v1325 = vld [vmem:[#allocation2 + $0x10] sm:$0xff]
      %v1326 = vld [vmem:[#allocation2 + $0x18] sm:$0xff]
      %v1327 = vld [vmem:[#allocation2 + $0x20] sm:$0xff]
      %v1328 = vld [vmem:[#allocation2 + $0x28] sm:$0xff]
      %v1329 = vld [vmem:[#allocation2 + $0x30] sm:$0xff]
      %1336 = vrot.lane.b32.xlu0 %v1324, 63
      %v1337 = vpop.permute.xlu0 %1336
      %1338 = vrot.lane.b32.xlu0 %v1325, 63
      %v1339 = vpop.permute.xlu0 %1338
      %1340 = vrot.lane.b32.xlu0 %v1326, 63
      %v1341 = vpop.permute.xlu0 %1340
      %1342 = vrot.lane.b32.xlu0 %v1327, 63
      %v1343 = vpop.permute.xlu0 %1342
      %1344 = vrot.lane.b32.xlu0 %v1328, 63
      %v1345 = vpop.permute.xlu0 %1344
      %1346 = vrot.lane.b32.xlu0 %v1329, 63
      %v1347 = vpop.permute.xlu0 %1346
      %v1348 = vsel %vm581, %v1337, %v1339
      %v1349 = vsel %vm581, %v1339, %v1341
      %v1350 = vsel %vm581, %v1341, %v1343
      %v1351 = vsel %vm581, %v1343, %v1345
      %v1352 = vsel %vm581, %v1345, %v1347
      %1358 = vst [vmem:[#allocation3 + $0x398] sm:$0xff] %v1348
      %1359 = vst [vmem:[#allocation3 + $0x3a0] sm:$0xff] %v1349
      %1360 = vst [vmem:[#allocation3 + $0x3a8] sm:$0xff] %v1350
      %1361 = vst [vmem:[#allocation3 + $0x3b0] sm:$0xff] %v1351
      %1362 = vst [vmem:[#allocation3 + $0x3b8] sm:$0xff] %v1352
      %v1363 = vld [vmem:[#allocation2 + $0x8] sm:$0xff]
      %v1364 = vld [vmem:[#allocation2 + $0x10] sm:$0xff]
      %v1365 = vld [vmem:[#allocation2 + $0x18] sm:$0xff]
      %v1366 = vld [vmem:[#allocation2 + $0x20] sm:$0xff]
      %v1367 = vld [vmem:[#allocation2 + $0x28] sm:$0xff]
      %v1368 = vld [vmem:[#allocation2 + $0x30] sm:$0xff]
      %1375 = vrot.lane.b32.xlu0 %v1363, 62
      %v1376 = vpop.permute.xlu0 %1375
      %1377 = vrot.lane.b32.xlu0 %v1364, 62
      %v1378 = vpop.permute.xlu0 %1377
      %1379 = vrot.lane.b32.xlu0 %v1365, 62
      %v1380 = vpop.permute.xlu0 %1379
      %1381 = vrot.lane.b32.xlu0 %v1366, 62
      %v1382 = vpop.permute.xlu0 %1381
      %1383 = vrot.lane.b32.xlu0 %v1367, 62
      %v1384 = vpop.permute.xlu0 %1383
      %1385 = vrot.lane.b32.xlu0 %v1368, 62
      %v1386 = vpop.permute.xlu0 %1385
      %v1387 = vsel %vm621, %v1376, %v1378
      %v1388 = vsel %vm621, %v1378, %v1380
      %v1389 = vsel %vm621, %v1380, %v1382
      %v1390 = vsel %vm621, %v1382, %v1384
      %v1391 = vsel %vm621, %v1384, %v1386
      %1397 = vst [vmem:[#allocation3 + $0x3c0] sm:$0xff] %v1387
      %1398 = vst [vmem:[#allocation3 + $0x3c8] sm:$0xff] %v1388
      %1399 = vst [vmem:[#allocation3 + $0x3d0] sm:$0xff] %v1389
      %1400 = vst [vmem:[#allocation3 + $0x3d8] sm:$0xff] %v1390
      %1401 = vst [vmem:[#allocation3 + $0x3e0] sm:$0xff] %v1391
      %v1402 = vld [vmem:[%s2] sm:$0xff]
      %v1403 = vld [vmem:[%s2 + $0x8] sm:$0xff]
      %v1404 = vld [vmem:[#allocation3] sm:$0xff]
      %v1405 = vld [vmem:[#allocation3 + $0x8] sm:$0xff]
      %v1406 = vld [vmem:[#allocation3 + $0x10] sm:$0xff]
      %v1407 = vld [vmem:[#allocation3 + $0x18] sm:$0xff]
      %v1408 = vld [vmem:[#allocation3 + $0x20] sm:$0xff]
      %v1409 = vld [vmem:[#allocation3 + $0x28] sm:$0xff]
      %v1410 = vld [vmem:[#allocation3 + $0x30] sm:$0xff]
      %v1411 = vld [vmem:[#allocation3 + $0x38] sm:$0xff]
      %v1412 = vld [vmem:[#allocation3 + $0x40] sm:$0xff]
      %v1413 = vld [vmem:[#allocation3 + $0x48] sm:$0xff]
      %v1414 = vld [vmem:[#allocation3 + $0x50] sm:$0xff]
      %v1415 = vld [vmem:[#allocation3 + $0x58] sm:$0xff]
      %v1416 = vld [vmem:[#allocation3 + $0x60] sm:$0xff]
      %v1417 = vld [vmem:[#allocation3 + $0x68] sm:$0xff]
      %v1418 = vld [vmem:[#allocation3 + $0x70] sm:$0xff]
      %v1419 = vld [vmem:[#allocation3 + $0x78] sm:$0xff]
      %v1420 = vld [vmem:[#allocation3 + $0x80] sm:$0xff]
      %v1421 = vld [vmem:[#allocation3 + $0x88] sm:$0xff]
      %v1422 = vld [vmem:[#allocation3 + $0x90] sm:$0xff]
      %v1423 = vld [vmem:[#allocation3 + $0x98] sm:$0xff]
      %v1424 = vld [vmem:[#allocation3 + $0xa0] sm:$0xff]
      %v1425 = vld [vmem:[#allocation3 + $0xa8] sm:$0xff]
      %v1426 = vld [vmem:[#allocation3 + $0xb0] sm:$0xff]
      %v1427 = vld [vmem:[#allocation3 + $0xb8] sm:$0xff]
      %v1428 = vld [vmem:[#allocation3 + $0xc0] sm:$0xff]
      %v1429 = vld [vmem:[#allocation3 + $0xc8] sm:$0xff]
      %v1430 = vld [vmem:[#allocation3 + $0xd0] sm:$0xff]
      %v1431 = vld [vmem:[#allocation3 + $0xd8] sm:$0xff]
      %v1432 = vld [vmem:[#allocation3 + $0xe0] sm:$0xff]
      %v1433 = vld [vmem:[#allocation3 + $0xe8] sm:$0xff]
      %v1434 = vld [vmem:[#allocation3 + $0xf0] sm:$0xff]
      %v1435 = vld [vmem:[#allocation3 + $0xf8] sm:$0xff]
      %v1436 = vld [vmem:[#allocation3 + $0x100] sm:$0xff]
      %v1437 = vld [vmem:[#allocation3 + $0x108] sm:$0xff]
      %v1438 = vld [vmem:[#allocation3 + $0x110] sm:$0xff]
      %v1439 = vld [vmem:[#allocation3 + $0x118] sm:$0xff]
      %v1440 = vld [vmem:[#allocation3 + $0x120] sm:$0xff]
      %v1441 = vld [vmem:[#allocation3 + $0x128] sm:$0xff]
      %v1442 = vld [vmem:[#allocation3 + $0x130] sm:$0xff]
      %v1443 = vld [vmem:[#allocation3 + $0x138] sm:$0xff]
      %v1444 = vld [vmem:[#allocation3 + $0x140] sm:$0xff]
      %v1445 = vld [vmem:[#allocation3 + $0x148] sm:$0xff]
      %v1446 = vld [vmem:[#allocation3 + $0x150] sm:$0xff]
      %v1447 = vld [vmem:[#allocation3 + $0x158] sm:$0xff]
      %v1448 = vld [vmem:[#allocation3 + $0x160] sm:$0xff]
      %v1449 = vld [vmem:[#allocation3 + $0x168] sm:$0xff]
      %v1450 = vld [vmem:[#allocation3 + $0x170] sm:$0xff]
      %v1451 = vld [vmem:[#allocation3 + $0x178] sm:$0xff]
      %v1452 = vld [vmem:[#allocation3 + $0x180] sm:$0xff]
      %v1453 = vld [vmem:[#allocation3 + $0x188] sm:$0xff]
      %v1454 = vld [vmem:[#allocation3 + $0x190] sm:$0xff]
      %v1455 = vld [vmem:[#allocation3 + $0x198] sm:$0xff]
      %v1456 = vld [vmem:[#allocation3 + $0x1a0] sm:$0xff]
      %v1457 = vld [vmem:[#allocation3 + $0x1a8] sm:$0xff]
      %v1458 = vld [vmem:[#allocation3 + $0x1b0] sm:$0xff]
      %v1459 = vld [vmem:[#allocation3 + $0x1b8] sm:$0xff]
      %v1460 = vld [vmem:[#allocation3 + $0x1c0] sm:$0xff]
      %v1461 = vld [vmem:[#allocation3 + $0x1c8] sm:$0xff]
      %v1462 = vld [vmem:[#allocation3 + $0x1d0] sm:$0xff]
      %v1463 = vld [vmem:[#allocation3 + $0x1d8] sm:$0xff]
      %v1464 = vld [vmem:[#allocation3 + $0x1e0] sm:$0xff]
      %v1465 = vld [vmem:[#allocation3 + $0x1e8] sm:$0xff]
      %v1466 = vld [vmem:[#allocation3 + $0x1f0] sm:$0xff]
      %v1467 = vld [vmem:[#allocation3 + $0x1f8] sm:$0xff]
      %v1468 = vld [vmem:[#allocation3 + $0x200] sm:$0xff]
      %v1469 = vld [vmem:[#allocation3 + $0x208] sm:$0xff]
      %v1470 = vld [vmem:[#allocation3 + $0x210] sm:$0xff]
      %v1471 = vld [vmem:[#allocation3 + $0x218] sm:$0xff]
      %v1472 = vld [vmem:[#allocation3 + $0x220] sm:$0xff]
      %v1473 = vld [vmem:[#allocation3 + $0x228] sm:$0xff]
      %v1474 = vld [vmem:[#allocation3 + $0x230] sm:$0xff]
      %v1475 = vld [vmem:[#allocation3 + $0x238] sm:$0xff]
      %v1476 = vld [vmem:[#allocation3 + $0x240] sm:$0xff]
      %v1477 = vld [vmem:[#allocation3 + $0x248] sm:$0xff]
      %v1478 = vld [vmem:[#allocation3 + $0x250] sm:$0xff]
      %v1479 = vld [vmem:[#allocation3 + $0x258] sm:$0xff]
      %v1480 = vld [vmem:[#allocation3 + $0x260] sm:$0xff]
      %v1481 = vld [vmem:[#allocation3 + $0x268] sm:$0xff]
      %v1482 = vld [vmem:[#allocation3 + $0x270] sm:$0xff]
      %v1483 = vld [vmem:[#allocation3 + $0x278] sm:$0xff]
      %v1484 = vld [vmem:[#allocation3 + $0x280] sm:$0xff]
      %v1485 = vld [vmem:[#allocation3 + $0x288] sm:$0xff]
      %v1486 = vld [vmem:[#allocation3 + $0x290] sm:$0xff]
      %v1487 = vld [vmem:[#allocation3 + $0x298] sm:$0xff]
      %v1488 = vld [vmem:[#allocation3 + $0x2a0] sm:$0xff]
      %v1489 = vld [vmem:[#allocation3 + $0x2a8] sm:$0xff]
      %v1490 = vld [vmem:[#allocation3 + $0x2b0] sm:$0xff]
      %v1491 = vld [vmem:[#allocation3 + $0x2b8] sm:$0xff]
      %v1492 = vld [vmem:[#allocation3 + $0x2c0] sm:$0xff]
      %v1493 = vld [vmem:[#allocation3 + $0x2c8] sm:$0xff]
      %v1494 = vld [vmem:[#allocation3 + $0x2d0] sm:$0xff]
      %v1495 = vld [vmem:[#allocation3 + $0x2d8] sm:$0xff]
      %v1496 = vld [vmem:[#allocation3 + $0x2e0] sm:$0xff]
      %v1497 = vld [vmem:[#allocation3 + $0x2e8] sm:$0xff]
      %v1498 = vld [vmem:[#allocation3 + $0x2f0] sm:$0xff]
      %v1499 = vld [vmem:[#allocation3 + $0x2f8] sm:$0xff]
      %v1500 = vld [vmem:[#allocation3 + $0x300] sm:$0xff]
      %v1501 = vld [vmem:[#allocation3 + $0x308] sm:$0xff]
      %v1502 = vld [vmem:[#allocation3 + $0x310] sm:$0xff]
      %v1503 = vld [vmem:[#allocation3 + $0x318] sm:$0xff]
      %v1504 = vld [vmem:[#allocation3 + $0x320] sm:$0xff]
      %v1505 = vld [vmem:[#allocation3 + $0x328] sm:$0xff]
      %v1506 = vld [vmem:[#allocation3 + $0x330] sm:$0xff]
      %v1507 = vld [vmem:[#allocation3 + $0x338] sm:$0xff]
      %v1508 = vld [vmem:[#allocation3 + $0x340] sm:$0xff]
      %v1509 = vld [vmem:[#allocation3 + $0x348] sm:$0xff]
      %v1510 = vld [vmem:[#allocation3 + $0x350] sm:$0xff]
      %v1511 = vld [vmem:[#allocation3 + $0x358] sm:$0xff]
      %v1512 = vld [vmem:[#allocation3 + $0x360] sm:$0xff]
      %v1513 = vld [vmem:[#allocation3 + $0x368] sm:$0xff]
      %v1514 = vld [vmem:[#allocation3 + $0x370] sm:$0xff]
      %v1515 = vld [vmem:[#allocation3 + $0x378] sm:$0xff]
      %v1516 = vld [vmem:[#allocation3 + $0x380] sm:$0xff]
      %v1517 = vld [vmem:[#allocation3 + $0x388] sm:$0xff]
      %v1518 = vld [vmem:[#allocation3 + $0x390] sm:$0xff]
      %v1519 = vld [vmem:[#allocation3 + $0x398] sm:$0xff]
      %v1520 = vld [vmem:[#allocation3 + $0x3a0] sm:$0xff]
      %v1521 = vld [vmem:[#allocation3 + $0x3a8] sm:$0xff]
      %v1522 = vld [vmem:[#allocation3 + $0x3b0] sm:$0xff]
      %v1523 = vld [vmem:[#allocation3 + $0x3b8] sm:$0xff]
      %v1524 = vld [vmem:[#allocation3 + $0x3c0] sm:$0xff]
      %v1525 = vld [vmem:[#allocation3 + $0x3c8] sm:$0xff]
      %v1526 = vld [vmem:[#allocation3 + $0x3d0] sm:$0xff]
      %v1527 = vld [vmem:[#allocation3 + $0x3d8] sm:$0xff]
      %v1528 = vld [vmem:[#allocation3 + $0x3e0] sm:$0xff]
      %v1529 = vld [vmem:[%s3] sm:$0xff]
      %1531 = vset.pattern.permute.xlu0 0
      %1532 = vperm.xlu0 %1531, %v1529
      %v1533 = vpop.permute.xlu0 %1532
      %vm1535 = vcmask 588800
      %v1537 = vsel %vm1535, %v1403, 0
      %1539 = vmatprep.subr.mxu0 %v1405
      %1540 = vmatpush1.msra.mxu0 %v1404
      %1541 = vmatprep.subr.mxu0 %v1410
      %1542 = vmatpush1.msra.mxu0 %v1409
      %1543 = vmatprep.subr.mxu0 %v1415
      %1544 = vmatpush1.msra.mxu0 %v1414
      %1545 = vmatprep.subr.mxu0 %v1420
      %1546 = vmatpush1.msra.mxu0 %v1419
      %1547 = vmatprep.subr.mxu0 %v1425
      %1548 = vmatpush1.msra.mxu0 %v1424
      %1549 = vmatprep.subr.mxu0 %v1430
      %1550 = vmatpush1.msra.mxu0 %v1429
      %1551 = vmatprep.subr.mxu0 %v1435
      %1552 = vmatpush1.msra.mxu0 %v1434
      %1553 = vmatprep.subr.mxu0 %v1440
      %1554 = vmatpush1.msra.mxu0 %v1439
      %1555 = vmatprep.subr.mxu0 %v1445
      %1556 = vmatpush1.msra.mxu0 %v1444
      %1557 = vmatprep.subr.mxu0 %v1450
      %1558 = vmatpush1.msra.mxu0 %v1449
      %1559 = vmatprep.subr.mxu0 %v1455
      %1560 = vmatpush1.msra.mxu0 %v1454
      %1561 = vmatprep.subr.mxu0 %v1460
      %1562 = vmatpush1.msra.mxu0 %v1459
      %1563 = vmatprep.subr.mxu0 %v1465
      %1564 = vmatpush1.msra.mxu0 %v1464
      %1565 = vmatprep.subr.mxu0 %v1470
      %1566 = vmatpush1.msra.mxu0 %v1469
      %1567 = vmatprep.subr.mxu0 %v1475
      %1568 = vmatpush1.msra.mxu0 %v1474
      %1569 = vmatprep.subr.mxu0 %v1480
      %1570 = vmatpush1.msra.mxu0 %v1479
      %1571 = vmatprep.subr.mxu0 %v1485
      %1572 = vmatpush1.msra.mxu0 %v1484
      %1573 = vmatprep.subr.mxu0 %v1490
      %1574 = vmatpush1.msra.mxu0 %v1489
      %1575 = vmatprep.subr.mxu0 %v1495
      %1576 = vmatpush1.msra.mxu0 %v1494
      %1577 = vmatprep.subr.mxu0 %v1500
      %1578 = vmatpush1.msra.mxu0 %v1499
      %1579 = vmatprep.subr.mxu0 %v1505
      %1580 = vmatpush1.msra.mxu0 %v1504
      %1581 = vmatprep.subr.mxu0 %v1510
      %1582 = vmatpush1.msra.mxu0 %v1509
      %1583 = vmatprep.subr.mxu0 %v1515
      %1584 = vmatpush1.msra.mxu0 %v1514
      %1585 = vmatprep.subr.mxu0 %v1520
      %1586 = vmatpush1.msra.mxu0 %v1519
      %1587 = vmatprep.subr.mxu0 %v1525
      %1588 = vmatpush1.msra.mxu0 %v1524
      %1589 = vmatprep.subr.mxu0 0.0
      %1590 = vmatpush1.msra.mxu0 0.0
      %1591 = vmatprep.subr.mxu0 0.0
      %1592 = vmatpush1.msra.mxu0 0.0
      %1593 = vmatprep.subr.mxu0 0.0
      %1594 = vmatpush1.msra.mxu0 0.0
      %1595 = vmatprep.subr.mxu0 0.0
      %1596 = vmatpush1.msra.mxu0 0.0
      %1597 = vmatprep.subr.mxu0 0.0
      %1598 = vmatpush1.msra.mxu0 0.0
      %1599 = vmatprep.subr.mxu0 0.0
      %1600 = vmatpush1.msra.mxu0 0.0
      %1601 = vmatprep.subr.mxu0 0.0
      %1602 = vmatpush1.msra.mxu0 0.0
      %1603 = vmatprep.mubr.f32.mxu0 %v1537
      %1604 = vmatmul.mubr.f32.gmra.mrb[0].mxu0 %v1402
      %v1605 = vpop.f32.mrb[0].mxu0
      %v1606 = vadd.f32 %v1533, %v1605
      %v1607 = vpop.f32.mrb[0].mxu0
      %v1608 = vadd.f32 %v1533, %v1607
      %1609 = vdwg.mxu0
      %1610 = vmatprep.subr.mxu0 %v1407
      %1611 = vmatpush1.msra.mxu0 %v1406
      %1612 = vmatprep.subr.mxu0 %v1412
      %1613 = vmatpush1.msra.mxu0 %v1411
      %1614 = vmatprep.subr.mxu0 %v1417
      %1615 = vmatpush1.msra.mxu0 %v1416
      %1616 = vmatprep.subr.mxu0 %v1422
      %1617 = vmatpush1.msra.mxu0 %v1421
      %1618 = vmatprep.subr.mxu0 %v1427
      %1619 = vmatpush1.msra.mxu0 %v1426
      %1620 = vmatprep.subr.mxu0 %v1432
      %1621 = vmatpush1.msra.mxu0 %v1431
      %1622 = vmatprep.subr.mxu0 %v1437
      %1623 = vmatpush1.msra.mxu0 %v1436
      %1624 = vmatprep.subr.mxu0 %v1442
      %1625 = vmatpush1.msra.mxu0 %v1441
      %1626 = vmatprep.subr.mxu0 %v1447
      %1627 = vmatpush1.msra.mxu0 %v1446
      %1628 = vmatprep.subr.mxu0 %v1452
      %1629 = vmatpush1.msra.mxu0 %v1451
      %1630 = vmatprep.subr.mxu0 %v1457
      %1631 = vmatpush1.msra.mxu0 %v1456
      %1632 = vmatprep.subr.mxu0 %v1462
      %1633 = vmatpush1.msra.mxu0 %v1461
      %1634 = vmatprep.subr.mxu0 %v1467
      %1635 = vmatpush1.msra.mxu0 %v1466
      %1636 = vmatprep.subr.mxu0 %v1472
      %1637 = vmatpush1.msra.mxu0 %v1471
      %1638 = vmatprep.subr.mxu0 %v1477
      %1639 = vmatpush1.msra.mxu0 %v1476
      %1640 = vmatprep.subr.mxu0 %v1482
      %1641 = vmatpush1.msra.mxu0 %v1481
      %1642 = vmatprep.subr.mxu0 %v1487
      %1643 = vmatpush1.msra.mxu0 %v1486
      %1644 = vmatprep.subr.mxu0 %v1492
      %1645 = vmatpush1.msra.mxu0 %v1491
      %1646 = vmatprep.subr.mxu0 %v1497
      %1647 = vmatpush1.msra.mxu0 %v1496
      %1648 = vmatprep.subr.mxu0 %v1502
      %1649 = vmatpush1.msra.mxu0 %v1501
      %1650 = vmatprep.subr.mxu0 %v1507
      %1651 = vmatpush1.msra.mxu0 %v1506
      %1652 = vmatprep.subr.mxu0 %v1512
      %1653 = vmatpush1.msra.mxu0 %v1511
      %1654 = vmatprep.subr.mxu0 %v1517
      %1655 = vmatpush1.msra.mxu0 %v1516
      %1656 = vmatprep.subr.mxu0 %v1522
      %1657 = vmatpush1.msra.mxu0 %v1521
      %1658 = vmatprep.subr.mxu0 %v1527
      %1659 = vmatpush1.msra.mxu0 %v1526
      %1660 = vmatprep.subr.mxu0 0.0
      %1661 = vmatpush1.msra.mxu0 0.0
      %1662 = vmatprep.subr.mxu0 0.0
      %1663 = vmatpush1.msra.mxu0 0.0
      %1664 = vmatprep.subr.mxu0 0.0
      %1665 = vmatpush1.msra.mxu0 0.0
      %1666 = vmatprep.subr.mxu0 0.0
      %1667 = vmatpush1.msra.mxu0 0.0
      %1668 = vmatprep.subr.mxu0 0.0
      %1669 = vmatpush1.msra.mxu0 0.0
      %1670 = vmatprep.subr.mxu0 0.0
      %1671 = vmatpush1.msra.mxu0 0.0
      %1672 = vmatprep.subr.mxu0 0.0
      %1673 = vmatpush1.msra.mxu0 0.0
      %1674 = vmatprep.mubr.f32.mxu0 %v1537
      %1675 = vmatmul.mubr.f32.gmra.mrb[0].mxu0 %v1402
      %v1676 = vpop.f32.mrb[0].mxu0
      %v1677 = vadd.f32 %v1533, %v1676
      %v1678 = vpop.f32.mrb[0].mxu0
      %v1679 = vadd.f32 %v1533, %v1678
      %1680 = vdwg.mxu0
      %1681 = vmatprep.subr.mxu0 0.0
      %1682 = vmatpush1.msra.mxu0 %v1408
      %1683 = vmatprep.subr.mxu0 0.0
      %1684 = vmatpush1.msra.mxu0 %v1413
      %1685 = vmatprep.subr.mxu0 0.0
      %1686 = vmatpush1.msra.mxu0 %v1418
      %1687 = vmatprep.subr.mxu0 0.0
      %1688 = vmatpush1.msra.mxu0 %v1423
      %1689 = vmatprep.subr.mxu0 0.0
      %1690 = vmatpush1.msra.mxu0 %v1428
      %1691 = vmatprep.subr.mxu0 0.0
      %1692 = vmatpush1.msra.mxu0 %v1433
      %1693 = vmatprep.subr.mxu0 0.0
      %1694 = vmatpush1.msra.mxu0 %v1438
      %1695 = vmatprep.subr.mxu0 0.0
      %1696 = vmatpush1.msra.mxu0 %v1443
      %1697 = vmatprep.subr.mxu0 0.0
      %1698 = vmatpush1.msra.mxu0 %v1448
      %1699 = vmatprep.subr.mxu0 0.0
      %1700 = vmatpush1.msra.mxu0 %v1453
      %1701 = vmatprep.subr.mxu0 0.0
      %1702 = vmatpush1.msra.mxu0 %v1458
      %1703 = vmatprep.subr.mxu0 0.0
      %1704 = vmatpush1.msra.mxu0 %v1463
      %1705 = vmatprep.subr.mxu0 0.0
      %1706 = vmatpush1.msra.mxu0 %v1468
      %1707 = vmatprep.subr.mxu0 0.0
      %1708 = vmatpush1.msra.mxu0 %v1473
      %1709 = vmatprep.subr.mxu0 0.0
      %1710 = vmatpush1.msra.mxu0 %v1478
      %1711 = vmatprep.subr.mxu0 0.0
      %1712 = vmatpush1.msra.mxu0 %v1483
      %1713 = vmatprep.subr.mxu0 0.0
      %1714 = vmatpush1.msra.mxu0 %v1488
      %1715 = vmatprep.subr.mxu0 0.0
      %1716 = vmatpush1.msra.mxu0 %v1493
      %1717 = vmatprep.subr.mxu0 0.0
      %1718 = vmatpush1.msra.mxu0 %v1498
      %1719 = vmatprep.subr.mxu0 0.0
      %1720 = vmatpush1.msra.mxu0 %v1503
      %1721 = vmatprep.subr.mxu0 0.0
      %1722 = vmatpush1.msra.mxu0 %v1508
      %1723 = vmatprep.subr.mxu0 0.0
      %1724 = vmatpush1.msra.mxu0 %v1513
      %1725 = vmatprep.subr.mxu0 0.0
      %1726 = vmatpush1.msra.mxu0 %v1518
      %1727 = vmatprep.subr.mxu0 0.0
      %1728 = vmatpush1.msra.mxu0 %v1523
      %1729 = vmatprep.subr.mxu0 0.0
      %1730 = vmatpush1.msra.mxu0 %v1528
      %1731 = vmatprep.subr.mxu0 0.0
      %1732 = vmatpush1.msra.mxu0 0.0
      %1733 = vmatprep.subr.mxu0 0.0
      %1734 = vmatpush1.msra.mxu0 0.0
      %1735 = vmatprep.subr.mxu0 0.0
      %1736 = vmatpush1.msra.mxu0 0.0
      %1737 = vmatprep.subr.mxu0 0.0
      %1738 = vmatpush1.msra.mxu0 0.0
      %1739 = vmatprep.subr.mxu0 0.0
      %1740 = vmatpush1.msra.mxu0 0.0
      %1741 = vmatprep.subr.mxu0 0.0
      %1742 = vmatpush1.msra.mxu0 0.0
      %1743 = vmatprep.subr.mxu0 0.0
      %1744 = vmatpush1.msra.mxu0 0.0
      %1745 = vmatprep.mubr.f32.mxu0 %v1537
      %1746 = vmatmul.mubr.f32.gmra.mrb[0].mxu0 %v1402
      %v1747 = vpop.f32.mrb[0].mxu0
      %v1748 = vadd.f32 %v1533, %v1747
      %v1749 = vpop.f32.mrb[0].mxu0
      %1750 = vdwg.mxu0
      %v1751 = vmax.f32 %v1606, 0.0
      %v1752 = vmax.f32 %v1608, 0.0
      %v1753 = vmax.f32 %v1677, 0.0
      %v1754 = vmax.f32 %v1679, 0.0
      %v1755 = vmax.f32 %v1748, 0.0
      %v1757 = vlaneseq
      %v1758 = vshrl.u32 %v1757, 7
      %v1759 = vsub.s32 0, %v1758
      %v1760 = vrot.slane %v436, %v1759
      %v1761 = vlaneseq
      %v1762 = vshrl.u32 %v1761, 7
      %v1763 = vsub.s32 1, %v1762
      %v1764 = vrot.slane %v436, %v1763
      %v1765 = vlaneseq
      %v1766 = vshrl.u32 %v1765, 7
      %v1767 = vsub.s32 2, %v1766
      %v1768 = vrot.slane %v436, %v1767
      %v1769 = vlaneseq
      %v1770 = vshrl.u32 %v1769, 7
      %v1771 = vsub.s32 3, %v1770
      %v1772 = vrot.slane %v436, %v1771
      %v1773 = vlaneseq
      %v1774 = vshrl.u32 %v1773, 7
      %v1775 = vsub.s32 4, %v1774
      %v1776 = vrot.slane %v436, %v1775
      %v1782 = vmul.f32 %v1751, %v1760
      %v1783 = vmul.f32 %v1752, %v1764
      %v1784 = vmul.f32 %v1753, %v1768
      %v1785 = vmul.f32 %v1754, %v1772
      %v1786 = vmul.f32 %v1755, %v1776
      %1787 = vst [vmem:[#allocation2 + $0x8] sm:$0xff] %v1782
      %1788 = vst [vmem:[#allocation2 + $0x10] sm:$0xff] %v1783
      %1789 = vst [vmem:[#allocation2 + $0x18] sm:$0xff] %v1784
      %1790 = vst [vmem:[#allocation2 + $0x20] sm:$0xff] %v1785
      %1791 = vst [vmem:[#allocation2 + $0x28] sm:$0xff] %v1786
      %v1792 = vld [vmem:[#allocation2] sm:$0xff]
      %v1793 = vld [vmem:[#allocation2 + $0x8] sm:$0xff]
      %v1794 = vld [vmem:[#allocation2 + $0x10] sm:$0xff]
      %v1795 = vld [vmem:[#allocation2 + $0x18] sm:$0xff]
      %v1796 = vld [vmem:[#allocation2 + $0x20] sm:$0xff]
      %v1797 = vld [vmem:[#allocation2 + $0x28] sm:$0xff]
      %1804 = vrot.lane.b32.xlu0 %v1792, 66
      %v1805 = vpop.permute.xlu0 %1804
      %1806 = vrot.lane.b32.xlu0 %v1793, 66
      %v1807 = vpop.permute.xlu0 %1806
      %1808 = vrot.lane.b32.xlu0 %v1794, 66
      %v1809 = vpop.permute.xlu0 %1808
      %1810 = vrot.lane.b32.xlu0 %v1795, 66
      %v1811 = vpop.permute.xlu0 %1810
      %1812 = vrot.lane.b32.xlu0 %v1796, 66
      %v1813 = vpop.permute.xlu0 %1812
      %1814 = vrot.lane.b32.xlu0 %v1797, 66
      %v1815 = vpop.permute.xlu0 %1814
      %v1816 = vsel %vm461, %v1805, %v1807
      %v1817 = vsel %vm461, %v1807, %v1809
      %v1818 = vsel %vm461, %v1809, %v1811
      %v1819 = vsel %vm461, %v1811, %v1813
      %v1820 = vsel %vm461, %v1813, %v1815
      %1826 = vst [vmem:[#allocation3] sm:$0xff] %v1816
      %1827 = vst [vmem:[#allocation3 + $0x8] sm:$0xff] %v1817
      %1828 = vst [vmem:[#allocation3 + $0x10] sm:$0xff] %v1818
      %1829 = vst [vmem:[#allocation3 + $0x18] sm:$0xff] %v1819
      %1830 = vst [vmem:[#allocation3 + $0x20] sm:$0xff] %v1820
      %v1831 = vld [vmem:[#allocation2] sm:$0xff]
      %v1832 = vld [vmem:[#allocation2 + $0x8] sm:$0xff]
      %v1833 = vld [vmem:[#allocation2 + $0x10] sm:$0xff]
      %v1834 = vld [vmem:[#allocation2 + $0x18] sm:$0xff]
      %v1835 = vld [vmem:[#allocation2 + $0x20] sm:$0xff]
      %v1836 = vld [vmem:[#allocation2 + $0x28] sm:$0xff]
      %1843 = vrot.lane.b32.xlu0 %v1831, 65
      %v1844 = vpop.permute.xlu0 %1843
      %1845 = vrot.lane.b32.xlu0 %v1832, 65
      %v1846 = vpop.permute.xlu0 %1845
      %1847 = vrot.lane.b32.xlu0 %v1833, 65
      %v1848 = vpop.permute.xlu0 %1847
      %1849 = vrot.lane.b32.xlu0 %v1834, 65
      %v1850 = vpop.permute.xlu0 %1849
      %1851 = vrot.lane.b32.xlu0 %v1835, 65
      %v1852 = vpop.permute.xlu0 %1851
      %1853 = vrot.lane.b32.xlu0 %v1836, 65
      %v1854 = vpop.permute.xlu0 %1853
      %v1855 = vsel %vm501, %v1844, %v1846
      %v1856 = vsel %vm501, %v1846, %v1848
      %v1857 = vsel %vm501, %v1848, %v1850
      %v1858 = vsel %vm501, %v1850, %v1852
      %v1859 = vsel %vm501, %v1852, %v1854
      %1865 = vst [vmem:[#allocation3 + $0x28] sm:$0xff] %v1855
      %1866 = vst [vmem:[#allocation3 + $0x30] sm:$0xff] %v1856
      %1867 = vst [vmem:[#allocation3 + $0x38] sm:$0xff] %v1857
      %1868 = vst [vmem:[#allocation3 + $0x40] sm:$0xff] %v1858
      %1869 = vst [vmem:[#allocation3 + $0x48] sm:$0xff] %v1859
      %v1870 = vld [vmem:[#allocation2] sm:$0xff]
      %v1871 = vld [vmem:[#allocation2 + $0x8] sm:$0xff]
      %v1872 = vld [vmem:[#allocation2 + $0x10] sm:$0xff]
      %v1873 = vld [vmem:[#allocation2 + $0x18] sm:$0xff]
      %v1874 = vld [vmem:[#allocation2 + $0x20] sm:$0xff]
      %v1875 = vld [vmem:[#allocation2 + $0x28] sm:$0xff]
      %1882 = vrot.lane.b32.xlu0 %v1870, 64
      %v1883 = vpop.permute.xlu0 %1882
      %1884 = vrot.lane.b32.xlu0 %v1871, 64
      %v1885 = vpop.permute.xlu0 %1884
      %1886 = vrot.lane.b32.xlu0 %v1872, 64
      %v1887 = vpop.permute.xlu0 %1886
      %1888 = vrot.lane.b32.xlu0 %v1873, 64
      %v1889 = vpop.permute.xlu0 %1888
      %1890 = vrot.lane.b32.xlu0 %v1874, 64
      %v1891 = vpop.permute.xlu0 %1890
      %1892 = vrot.lane.b32.xlu0 %v1875, 64
      %v1893 = vpop.permute.xlu0 %1892
      %v1894 = vsel %vm541, %v1883, %v1885
      %v1895 = vsel %vm541, %v1885, %v1887
      %v1896 = vsel %vm541, %v1887, %v1889
      %v1897 = vsel %vm541, %v1889, %v1891
      %v1898 = vsel %vm541, %v1891, %v1893
      %1904 = vst [vmem:[#allocation3 + $0x50] sm:$0xff] %v1894
      %1905 = vst [vmem:[#allocation3 + $0x58] sm:$0xff] %v1895
      %1906 = vst [vmem:[#allocation3 + $0x60] sm:$0xff] %v1896
      %1907 = vst [vmem:[#allocation3 + $0x68] sm:$0xff] %v1897
      %1908 = vst [vmem:[#allocation3 + $0x70] sm:$0xff] %v1898
      %v1909 = vld [vmem:[#allocation2] sm:$0xff]
      %v1910 = vld [vmem:[#allocation2 + $0x8] sm:$0xff]
      %v1911 = vld [vmem:[#allocation2 + $0x10] sm:$0xff]
      %v1912 = vld [vmem:[#allocation2 + $0x18] sm:$0xff]
      %v1913 = vld [vmem:[#allocation2 + $0x20] sm:$0xff]
      %v1914 = vld [vmem:[#allocation2 + $0x28] sm:$0xff]
      %1921 = vrot.lane.b32.xlu0 %v1909, 63
      %v1922 = vpop.permute.xlu0 %1921
      %1923 = vrot.lane.b32.xlu0 %v1910, 63
      %v1924 = vpop.permute.xlu0 %1923
      %1925 = vrot.lane.b32.xlu0 %v1911, 63
      %v1926 = vpop.permute.xlu0 %1925
      %1927 = vrot.lane.b32.xlu0 %v1912, 63
      %v1928 = vpop.permute.xlu0 %1927
      %1929 = vrot.lane.b32.xlu0 %v1913, 63
      %v1930 = vpop.permute.xlu0 %1929
      %1931 = vrot.lane.b32.xlu0 %v1914, 63
      %v1932 = vpop.permute.xlu0 %1931
      %v1933 = vsel %vm581, %v1922, %v1924
      %v1934 = vsel %vm581, %v1924, %v1926
      %v1935 = vsel %vm581, %v1926, %v1928
      %v1936 = vsel %vm581, %v1928, %v1930
      %v1937 = vsel %vm581, %v1930, %v1932
      %1943 = vst [vmem:[#allocation3 + $0x78] sm:$0xff] %v1933
      %1944 = vst [vmem:[#allocation3 + $0x80] sm:$0xff] %v1934
      %1945 = vst [vmem:[#allocation3 + $0x88] sm:$0xff] %v1935
      %1946 = vst [vmem:[#allocation3 + $0x90] sm:$0xff] %v1936
      %1947 = vst [vmem:[#allocation3 + $0x98] sm:$0xff] %v1937
      %v1948 = vld [vmem:[#allocation2] sm:$0xff]
      %v1949 = vld [vmem:[#allocation2 + $0x8] sm:$0xff]
      %v1950 = vld [vmem:[#allocation2 + $0x10] sm:$0xff]
      %v1951 = vld [vmem:[#allocation2 + $0x18] sm:$0xff]
      %v1952 = vld [vmem:[#allocation2 + $0x20] sm:$0xff]
      %v1953 = vld [vmem:[#allocation2 + $0x28] sm:$0xff]
      %1960 = vrot.lane.b32.xlu0 %v1948, 62
      %v1961 = vpop.permute.xlu0 %1960
      %1962 = vrot.lane.b32.xlu0 %v1949, 62
      %v1963 = vpop.permute.xlu0 %1962
      %1964 = vrot.lane.b32.xlu0 %v1950, 62
      %v1965 = vpop.permute.xlu0 %1964
      %1966 = vrot.lane.b32.xlu0 %v1951, 62
      %v1967 = vpop.permute.xlu0 %1966
      %1968 = vrot.lane.b32.xlu0 %v1952, 62
      %v1969 = vpop.permute.xlu0 %1968
      %1970 = vrot.lane.b32.xlu0 %v1953, 62
      %v1971 = vpop.permute.xlu0 %1970
      %v1972 = vsel %vm621, %v1961, %v1963
      %v1973 = vsel %vm621, %v1963, %v1965
      %v1974 = vsel %vm621, %v1965, %v1967
      %v1975 = vsel %vm621, %v1967, %v1969
      %v1976 = vsel %vm621, %v1969, %v1971
      %1982 = vst [vmem:[#allocation3 + $0xa0] sm:$0xff] %v1972
      %1983 = vst [vmem:[#allocation3 + $0xa8] sm:$0xff] %v1973
      %1984 = vst [vmem:[#allocation3 + $0xb0] sm:$0xff] %v1974
      %1985 = vst [vmem:[#allocation3 + $0xb8] sm:$0xff] %v1975
      %1986 = vst [vmem:[#allocation3 + $0xc0] sm:$0xff] %v1976
      %v1987 = vld [vmem:[#allocation2] sm:$0xff]
      %v1988 = vld [vmem:[#allocation2 + $0x8] sm:$0xff]
      %v1989 = vld [vmem:[#allocation2 + $0x10] sm:$0xff]
      %v1990 = vld [vmem:[#allocation2 + $0x18] sm:$0xff]
      %v1991 = vld [vmem:[#allocation2 + $0x20] sm:$0xff]
      %v1992 = vld [vmem:[#allocation2 + $0x28] sm:$0xff]
      %1999 = vrot.lane.b32.xlu0 %v1987, 34
      %v2000 = vpop.permute.xlu0 %1999
      %2001 = vrot.lane.b32.xlu0 %v1988, 34
      %v2002 = vpop.permute.xlu0 %2001
      %2003 = vrot.lane.b32.xlu0 %v1989, 34
      %v2004 = vpop.permute.xlu0 %2003
      %2005 = vrot.lane.b32.xlu0 %v1990, 34
      %v2006 = vpop.permute.xlu0 %2005
      %2007 = vrot.lane.b32.xlu0 %v1991, 34
      %v2008 = vpop.permute.xlu0 %2007
      %2009 = vrot.lane.b32.xlu0 %v1992, 34
      %v2010 = vpop.permute.xlu0 %2009
      %v2011 = vsel %vm661, %v2000, %v2002
      %v2012 = vsel %vm661, %v2002, %v2004
      %v2013 = vsel %vm661, %v2004, %v2006
      %v2014 = vsel %vm661, %v2006, %v2008
      %v2015 = vsel %vm661, %v2008, %v2010
      %2021 = vst [vmem:[#allocation3 + $0xc8] sm:$0xff] %v2011
      %2022 = vst [vmem:[#allocation3 + $0xd0] sm:$0xff] %v2012
      %2023 = vst [vmem:[#allocation3 + $0xd8] sm:$0xff] %v2013
      %2024 = vst [vmem:[#allocation3 + $0xe0] sm:$0xff] %v2014
      %2025 = vst [vmem:[#allocation3 + $0xe8] sm:$0xff] %v2015
      %v2026 = vld [vmem:[#allocation2] sm:$0xff]
      %v2027 = vld [vmem:[#allocation2 + $0x8] sm:$0xff]
      %v2028 = vld [vmem:[#allocation2 + $0x10] sm:$0xff]
      %v2029 = vld [vmem:[#allocation2 + $0x18] sm:$0xff]
      %v2030 = vld [vmem:[#allocation2 + $0x20] sm:$0xff]
      %v2031 = vld [vmem:[#allocation2 + $0x28] sm:$0xff]
      %2038 = vrot.lane.b32.xlu0 %v2026, 33
      %v2039 = vpop.permute.xlu0 %2038
      %2040 = vrot.lane.b32.xlu0 %v2027, 33
      %v2041 = vpop.permute.xlu0 %2040
      %2042 = vrot.lane.b32.xlu0 %v2028, 33
      %v2043 = vpop.permute.xlu0 %2042
      %2044 = vrot.lane.b32.xlu0 %v2029, 33
      %v2045 = vpop.permute.xlu0 %2044
      %2046 = vrot.lane.b32.xlu0 %v2030, 33
      %v2047 = vpop.permute.xlu0 %2046
      %2048 = vrot.lane.b32.xlu0 %v2031, 33
      %v2049 = vpop.permute.xlu0 %2048
      %v2050 = vsel %vm701, %v2039, %v2041
      %v2051 = vsel %vm701, %v2041, %v2043
      %v2052 = vsel %vm701, %v2043, %v2045
      %v2053 = vsel %vm701, %v2045, %v2047
      %v2054 = vsel %vm701, %v2047, %v2049
      %2060 = vst [vmem:[#allocation3 + $0xf0] sm:$0xff] %v2050
      %2061 = vst [vmem:[#allocation3 + $0xf8] sm:$0xff] %v2051
      %2062 = vst [vmem:[#allocation3 + $0x100] sm:$0xff] %v2052
      %2063 = vst [vmem:[#allocation3 + $0x108] sm:$0xff] %v2053
      %2064 = vst [vmem:[#allocation3 + $0x110] sm:$0xff] %v2054
      %v2065 = vld [vmem:[#allocation2] sm:$0xff]
      %v2066 = vld [vmem:[#allocation2 + $0x8] sm:$0xff]
      %v2067 = vld [vmem:[#allocation2 + $0x10] sm:$0xff]
      %v2068 = vld [vmem:[#allocation2 + $0x18] sm:$0xff]
      %v2069 = vld [vmem:[#allocation2 + $0x20] sm:$0xff]
      %v2070 = vld [vmem:[#allocation2 + $0x28] sm:$0xff]
      %2077 = vrot.lane.b32.xlu0 %v2065, 32
      %v2078 = vpop.permute.xlu0 %2077
      %2079 = vrot.lane.b32.xlu0 %v2066, 32
      %v2080 = vpop.permute.xlu0 %2079
      %2081 = vrot.lane.b32.xlu0 %v2067, 32
      %v2082 = vpop.permute.xlu0 %2081
      %2083 = vrot.lane.b32.xlu0 %v2068, 32
      %v2084 = vpop.permute.xlu0 %2083
      %2085 = vrot.lane.b32.xlu0 %v2069, 32
      %v2086 = vpop.permute.xlu0 %2085
      %2087 = vrot.lane.b32.xlu0 %v2070, 32
      %v2088 = vpop.permute.xlu0 %2087
      %v2089 = vsel %vm741, %v2078, %v2080
      %v2090 = vsel %vm741, %v2080, %v2082
      %v2091 = vsel %vm741, %v2082, %v2084
      %v2092 = vsel %vm741, %v2084, %v2086
      %v2093 = vsel %vm741, %v2086, %v2088
      %2099 = vst [vmem:[#allocation3 + $0x118] sm:$0xff] %v2089
      %2100 = vst [vmem:[#allocation3 + $0x120] sm:$0xff] %v2090
      %2101 = vst [vmem:[#allocation3 + $0x128] sm:$0xff] %v2091
      %2102 = vst [vmem:[#allocation3 + $0x130] sm:$0xff] %v2092
      %2103 = vst [vmem:[#allocation3 + $0x138] sm:$0xff] %v2093
      %v2104 = vld [vmem:[#allocation2] sm:$0xff]
      %v2105 = vld [vmem:[#allocation2 + $0x8] sm:$0xff]
      %v2106 = vld [vmem:[#allocation2 + $0x10] sm:$0xff]
      %v2107 = vld [vmem:[#allocation2 + $0x18] sm:$0xff]
      %v2108 = vld [vmem:[#allocation2 + $0x20] sm:$0xff]
      %v2109 = vld [vmem:[#allocation2 + $0x28] sm:$0xff]
      %2116 = vrot.lane.b32.xlu0 %v2104, 31
      %v2117 = vpop.permute.xlu0 %2116
      %2118 = vrot.lane.b32.xlu0 %v2105, 31
      %v2119 = vpop.permute.xlu0 %2118
      %2120 = vrot.lane.b32.xlu0 %v2106, 31
      %v2121 = vpop.permute.xlu0 %2120
      %2122 = vrot.lane.b32.xlu0 %v2107, 31
      %v2123 = vpop.permute.xlu0 %2122
      %2124 = vrot.lane.b32.xlu0 %v2108, 31
      %v2125 = vpop.permute.xlu0 %2124
      %2126 = vrot.lane.b32.xlu0 %v2109, 31
      %v2127 = vpop.permute.xlu0 %2126
      %v2128 = vsel %vm781, %v2117, %v2119
      %v2129 = vsel %vm781, %v2119, %v2121
      %v2130 = vsel %vm781, %v2121, %v2123
      %v2131 = vsel %vm781, %v2123, %v2125
      %v2132 = vsel %vm781, %v2125, %v2127
      %2138 = vst [vmem:[#allocation3 + $0x140] sm:$0xff] %v2128
      %2139 = vst [vmem:[#allocation3 + $0x148] sm:$0xff] %v2129
      %2140 = vst [vmem:[#allocation3 + $0x150] sm:$0xff] %v2130
      %2141 = vst [vmem:[#allocation3 + $0x158] sm:$0xff] %v2131
      %2142 = vst [vmem:[#allocation3 + $0x160] sm:$0xff] %v2132
      %v2143 = vld [vmem:[#allocation2] sm:$0xff]
      %v2144 = vld [vmem:[#allocation2 + $0x8] sm:$0xff]
      %v2145 = vld [vmem:[#allocation2 + $0x10] sm:$0xff]
      %v2146 = vld [vmem:[#allocation2 + $0x18] sm:$0xff]
      %v2147 = vld [vmem:[#allocation2 + $0x20] sm:$0xff]
      %v2148 = vld [vmem:[#allocation2 + $0x28] sm:$0xff]
      %2155 = vrot.lane.b32.xlu0 %v2143, 30
      %v2156 = vpop.permute.xlu0 %2155
      %2157 = vrot.lane.b32.xlu0 %v2144, 30
      %v2158 = vpop.permute.xlu0 %2157
      %2159 = vrot.lane.b32.xlu0 %v2145, 30
      %v2160 = vpop.permute.xlu0 %2159
      %2161 = vrot.lane.b32.xlu0 %v2146, 30
      %v2162 = vpop.permute.xlu0 %2161
      %2163 = vrot.lane.b32.xlu0 %v2147, 30
      %v2164 = vpop.permute.xlu0 %2163
      %2165 = vrot.lane.b32.xlu0 %v2148, 30
      %v2166 = vpop.permute.xlu0 %2165
      %v2167 = vsel %vm821, %v2156, %v2158
      %v2168 = vsel %vm821, %v2158, %v2160
      %v2169 = vsel %vm821, %v2160, %v2162
      %v2170 = vsel %vm821, %v2162, %v2164
      %v2171 = vsel %vm821, %v2164, %v2166
      %2177 = vst [vmem:[#allocation3 + $0x168] sm:$0xff] %v2167
      %2178 = vst [vmem:[#allocation3 + $0x170] sm:$0xff] %v2168
      %2179 = vst [vmem:[#allocation3 + $0x178] sm:$0xff] %v2169
      %2180 = vst [vmem:[#allocation3 + $0x180] sm:$0xff] %v2170
      %2181 = vst [vmem:[#allocation3 + $0x188] sm:$0xff] %v2171
      %v2182 = vld [vmem:[#allocation2] sm:$0xff]
      %v2183 = vld [vmem:[#allocation2 + $0x8] sm:$0xff]
      %v2184 = vld [vmem:[#allocation2 + $0x10] sm:$0xff]
      %v2185 = vld [vmem:[#allocation2 + $0x18] sm:$0xff]
      %v2186 = vld [vmem:[#allocation2 + $0x20] sm:$0xff]
      %v2187 = vld [vmem:[#allocation2 + $0x28] sm:$0xff]
      %2194 = vrot.lane.b32.xlu0 %v2182, 2
      %v2195 = vpop.permute.xlu0 %2194
      %2196 = vrot.lane.b32.xlu0 %v2183, 2
      %v2197 = vpop.permute.xlu0 %2196
      %2198 = vrot.lane.b32.xlu0 %v2184, 2
      %v2199 = vpop.permute.xlu0 %2198
      %2200 = vrot.lane.b32.xlu0 %v2185, 2
      %v2201 = vpop.permute.xlu0 %2200
      %2202 = vrot.lane.b32.xlu0 %v2186, 2
      %v2203 = vpop.permute.xlu0 %2202
      %2204 = vrot.lane.b32.xlu0 %v2187, 2
      %v2205 = vpop.permute.xlu0 %2204
      %v2206 = vsel %vm861, %v2195, %v2197
      %v2207 = vsel %vm861, %v2197, %v2199
      %v2208 = vsel %vm861, %v2199, %v2201
      %v2209 = vsel %vm861, %v2201, %v2203
      %v2210 = vsel %vm861, %v2203, %v2205
      %2216 = vst [vmem:[#allocation3 + $0x190] sm:$0xff] %v2206
      %2217 = vst [vmem:[#allocation3 + $0x198] sm:$0xff] %v2207
      %2218 = vst [vmem:[#allocation3 + $0x1a0] sm:$0xff] %v2208
      %2219 = vst [vmem:[#allocation3 + $0x1a8] sm:$0xff] %v2209
      %2220 = vst [vmem:[#allocation3 + $0x1b0] sm:$0xff] %v2210
      %v2221 = vld [vmem:[#allocation2] sm:$0xff]
      %v2222 = vld [vmem:[#allocation2 + $0x8] sm:$0xff]
      %v2223 = vld [vmem:[#allocation2 + $0x10] sm:$0xff]
      %v2224 = vld [vmem:[#allocation2 + $0x18] sm:$0xff]
      %v2225 = vld [vmem:[#allocation2 + $0x20] sm:$0xff]
      %v2226 = vld [vmem:[#allocation2 + $0x28] sm:$0xff]
      %2233 = vrot.lane.b32.xlu0 %v2221, 1
      %v2234 = vpop.permute.xlu0 %2233
      %2235 = vrot.lane.b32.xlu0 %v2222, 1
      %v2236 = vpop.permute.xlu0 %2235
      %2237 = vrot.lane.b32.xlu0 %v2223, 1
      %v2238 = vpop.permute.xlu0 %2237
      %2239 = vrot.lane.b32.xlu0 %v2224, 1
      %v2240 = vpop.permute.xlu0 %2239
      %2241 = vrot.lane.b32.xlu0 %v2225, 1
      %v2242 = vpop.permute.xlu0 %2241
      %2243 = vrot.lane.b32.xlu0 %v2226, 1
      %v2244 = vpop.permute.xlu0 %2243
      %v2245 = vsel %vm901, %v2234, %v2236
      %v2246 = vsel %vm901, %v2236, %v2238
      %v2247 = vsel %vm901, %v2238, %v2240
      %v2248 = vsel %vm901, %v2240, %v2242
      %v2249 = vsel %vm901, %v2242, %v2244
      %2255 = vst [vmem:[#allocation3 + $0x1b8] sm:$0xff] %v2245
      %2256 = vst [vmem:[#allocation3 + $0x1c0] sm:$0xff] %v2246
      %2257 = vst [vmem:[#allocation3 + $0x1c8] sm:$0xff] %v2247
      %2258 = vst [vmem:[#allocation3 + $0x1d0] sm:$0xff] %v2248
      %2259 = vst [vmem:[#allocation3 + $0x1d8] sm:$0xff] %v2249
      %v2260 = vld [vmem:[#allocation2 + $0x8] sm:$0xff]
      %v2261 = vld [vmem:[#allocation2 + $0x10] sm:$0xff]
      %v2262 = vld [vmem:[#allocation2 + $0x18] sm:$0xff]
      %v2263 = vld [vmem:[#allocation2 + $0x20] sm:$0xff]
      %v2264 = vld [vmem:[#allocation2 + $0x28] sm:$0xff]
      %2265 = vst [vmem:[#allocation3 + $0x1e0] sm:$0xff] %v2260
      %2266 = vst [vmem:[#allocation3 + $0x1e8] sm:$0xff] %v2261
      %2267 = vst [vmem:[#allocation3 + $0x1f0] sm:$0xff] %v2262
      %2268 = vst [vmem:[#allocation3 + $0x1f8] sm:$0xff] %v2263
      %2269 = vst [vmem:[#allocation3 + $0x200] sm:$0xff] %v2264
      %v2270 = vld [vmem:[#allocation2 + $0x8] sm:$0xff]
      %v2271 = vld [vmem:[#allocation2 + $0x10] sm:$0xff]
      %v2272 = vld [vmem:[#allocation2 + $0x18] sm:$0xff]
      %v2273 = vld [vmem:[#allocation2 + $0x20] sm:$0xff]
      %v2274 = vld [vmem:[#allocation2 + $0x28] sm:$0xff]
      %v2275 = vld [vmem:[#allocation2 + $0x30] sm:$0xff]
      %2282 = vrot.lane.b32.xlu0 %v2270, 127
      %v2283 = vpop.permute.xlu0 %2282
      %2284 = vrot.lane.b32.xlu0 %v2271, 127
      %v2285 = vpop.permute.xlu0 %2284
      %2286 = vrot.lane.b32.xlu0 %v2272, 127
      %v2287 = vpop.permute.xlu0 %2286
      %2288 = vrot.lane.b32.xlu0 %v2273, 127
      %v2289 = vpop.permute.xlu0 %2288
      %2290 = vrot.lane.b32.xlu0 %v2274, 127
      %v2291 = vpop.permute.xlu0 %2290
      %2292 = vrot.lane.b32.xlu0 %v2275, 127
      %v2293 = vpop.permute.xlu0 %2292
      %v2294 = vsel %vm951, %v2283, %v2285
      %v2295 = vsel %vm951, %v2285, %v2287
      %v2296 = vsel %vm951, %v2287, %v2289
      %v2297 = vsel %vm951, %v2289, %v2291
      %v2298 = vsel %vm951, %v2291, %v2293
      %2304 = vst [vmem:[#allocation3 + $0x208] sm:$0xff] %v2294
      %2305 = vst [vmem:[#allocation3 + $0x210] sm:$0xff] %v2295
      %2306 = vst [vmem:[#allocation3 + $0x218] sm:$0xff] %v2296
      %2307 = vst [vmem:[#allocation3 + $0x220] sm:$0xff] %v2297
      %2308 = vst [vmem:[#allocation3 + $0x228] sm:$0xff] %v2298
      %v2309 = vld [vmem:[#allocation2 + $0x8] sm:$0xff]
      %v2310 = vld [vmem:[#allocation2 + $0x10] sm:$0xff]
      %v2311 = vld [vmem:[#allocation2 + $0x18] sm:$0xff]
      %v2312 = vld [vmem:[#allocation2 + $0x20] sm:$0xff]
      %v2313 = vld [vmem:[#allocation2 + $0x28] sm:$0xff]
      %v2314 = vld [vmem:[#allocation2 + $0x30] sm:$0xff]
      %2321 = vrot.lane.b32.xlu0 %v2309, 126
      %v2322 = vpop.permute.xlu0 %2321
      %2323 = vrot.lane.b32.xlu0 %v2310, 126
      %v2324 = vpop.permute.xlu0 %2323
      %2325 = vrot.lane.b32.xlu0 %v2311, 126
      %v2326 = vpop.permute.xlu0 %2325
      %2327 = vrot.lane.b32.xlu0 %v2312, 126
      %v2328 = vpop.permute.xlu0 %2327
      %2329 = vrot.lane.b32.xlu0 %v2313, 126
      %v2330 = vpop.permute.xlu0 %2329
      %2331 = vrot.lane.b32.xlu0 %v2314, 126
      %v2332 = vpop.permute.xlu0 %2331
      %v2333 = vsel %vm991, %v2322, %v2324
      %v2334 = vsel %vm991, %v2324, %v2326
      %v2335 = vsel %vm991, %v2326, %v2328
      %v2336 = vsel %vm991, %v2328, %v2330
      %v2337 = vsel %vm991, %v2330, %v2332
      %2343 = vst [vmem:[#allocation3 + $0x230] sm:$0xff] %v2333
      %2344 = vst [vmem:[#allocation3 + $0x238] sm:$0xff] %v2334
      %2345 = vst [vmem:[#allocation3 + $0x240] sm:$0xff] %v2335
      %2346 = vst [vmem:[#allocation3 + $0x248] sm:$0xff] %v2336
      %2347 = vst [vmem:[#allocation3 + $0x250] sm:$0xff] %v2337
      %v2348 = vld [vmem:[#allocation2 + $0x8] sm:$0xff]
      %v2349 = vld [vmem:[#allocation2 + $0x10] sm:$0xff]
      %v2350 = vld [vmem:[#allocation2 + $0x18] sm:$0xff]
      %v2351 = vld [vmem:[#allocation2 + $0x20] sm:$0xff]
      %v2352 = vld [vmem:[#allocation2 + $0x28] sm:$0xff]
      %v2353 = vld [vmem:[#allocation2 + $0x30] sm:$0xff]
      %2360 = vrot.lane.b32.xlu0 %v2348, 98
      %v2361 = vpop.permute.xlu0 %2360
      %2362 = vrot.lane.b32.xlu0 %v2349, 98
      %v2363 = vpop.permute.xlu0 %2362
      %2364 = vrot.lane.b32.xlu0 %v2350, 98
      %v2365 = vpop.permute.xlu0 %2364
      %2366 = vrot.lane.b32.xlu0 %v2351, 98
      %v2367 = vpop.permute.xlu0 %2366
      %2368 = vrot.lane.b32.xlu0 %v2352, 98
      %v2369 = vpop.permute.xlu0 %2368
      %2370 = vrot.lane.b32.xlu0 %v2353, 98
      %v2371 = vpop.permute.xlu0 %2370
      %v2372 = vsel %vm1031, %v2361, %v2363
      %v2373 = vsel %vm1031, %v2363, %v2365
      %v2374 = vsel %vm1031, %v2365, %v2367
      %v2375 = vsel %vm1031, %v2367, %v2369
      %v2376 = vsel %vm1031, %v2369, %v2371
      %2382 = vst [vmem:[#allocation3 + $0x258] sm:$0xff] %v2372
      %2383 = vst [vmem:[#allocation3 + $0x260] sm:$0xff] %v2373
      %2384 = vst [vmem:[#allocation3 + $0x268] sm:$0xff] %v2374
      %2385 = vst [vmem:[#allocation3 + $0x270] sm:$0xff] %v2375
      %2386 = vst [vmem:[#allocation3 + $0x278] sm:$0xff] %v2376
      %v2387 = vld [vmem:[#allocation2 + $0x8] sm:$0xff]
      %v2388 = vld [vmem:[#allocation2 + $0x10] sm:$0xff]
      %v2389 = vld [vmem:[#allocation2 + $0x18] sm:$0xff]
      %v2390 = vld [vmem:[#allocation2 + $0x20] sm:$0xff]
      %v2391 = vld [vmem:[#allocation2 + $0x28] sm:$0xff]
      %v2392 = vld [vmem:[#allocation2 + $0x30] sm:$0xff]
      %2399 = vrot.lane.b32.xlu0 %v2387, 97
      %v2400 = vpop.permute.xlu0 %2399
      %2401 = vrot.lane.b32.xlu0 %v2388, 97
      %v2402 = vpop.permute.xlu0 %2401
      %2403 = vrot.lane.b32.xlu0 %v2389, 97
      %v2404 = vpop.permute.xlu0 %2403
      %2405 = vrot.lane.b32.xlu0 %v2390, 97
      %v2406 = vpop.permute.xlu0 %2405
      %2407 = vrot.lane.b32.xlu0 %v2391, 97
      %v2408 = vpop.permute.xlu0 %2407
      %2409 = vrot.lane.b32.xlu0 %v2392, 97
      %v2410 = vpop.permute.xlu0 %2409
      %v2411 = vsel %vm1071, %v2400, %v2402
      %v2412 = vsel %vm1071, %v2402, %v2404
      %v2413 = vsel %vm1071, %v2404, %v2406
      %v2414 = vsel %vm1071, %v2406, %v2408
      %v2415 = vsel %vm1071, %v2408, %v2410
      %2421 = vst [vmem:[#allocation3 + $0x280] sm:$0xff] %v2411
      %2422 = vst [vmem:[#allocation3 + $0x288] sm:$0xff] %v2412
      %2423 = vst [vmem:[#allocation3 + $0x290] sm:$0xff] %v2413
      %2424 = vst [vmem:[#allocation3 + $0x298] sm:$0xff] %v2414
      %2425 = vst [vmem:[#allocation3 + $0x2a0] sm:$0xff] %v2415
      %v2426 = vld [vmem:[#allocation2 + $0x8] sm:$0xff]
      %v2427 = vld [vmem:[#allocation2 + $0x10] sm:$0xff]
      %v2428 = vld [vmem:[#allocation2 + $0x18] sm:$0xff]
      %v2429 = vld [vmem:[#allocation2 + $0x20] sm:$0xff]
      %v2430 = vld [vmem:[#allocation2 + $0x28] sm:$0xff]
      %v2431 = vld [vmem:[#allocation2 + $0x30] sm:$0xff]
      %2438 = vrot.lane.b32.xlu0 %v2426, 96
      %v2439 = vpop.permute.xlu0 %2438
      %2440 = vrot.lane.b32.xlu0 %v2427, 96
      %v2441 = vpop.permute.xlu0 %2440
      %2442 = vrot.lane.b32.xlu0 %v2428, 96
      %v2443 = vpop.permute.xlu0 %2442
      %2444 = vrot.lane.b32.xlu0 %v2429, 96
      %v2445 = vpop.permute.xlu0 %2444
      %2446 = vrot.lane.b32.xlu0 %v2430, 96
      %v2447 = vpop.permute.xlu0 %2446
      %2448 = vrot.lane.b32.xlu0 %v2431, 96
      %v2449 = vpop.permute.xlu0 %2448
      %v2450 = vsel %vm1111, %v2439, %v2441
      %v2451 = vsel %vm1111, %v2441, %v2443
      %v2452 = vsel %vm1111, %v2443, %v2445
      %v2453 = vsel %vm1111, %v2445, %v2447
      %v2454 = vsel %vm1111, %v2447, %v2449
      %2460 = vst [vmem:[#allocation3 + $0x2a8] sm:$0xff] %v2450
      %2461 = vst [vmem:[#allocation3 + $0x2b0] sm:$0xff] %v2451
      %2462 = vst [vmem:[#allocation3 + $0x2b8] sm:$0xff] %v2452
      %2463 = vst [vmem:[#allocation3 + $0x2c0] sm:$0xff] %v2453
      %2464 = vst [vmem:[#allocation3 + $0x2c8] sm:$0xff] %v2454
      %v2465 = vld [vmem:[#allocation2 + $0x8] sm:$0xff]
      %v2466 = vld [vmem:[#allocation2 + $0x10] sm:$0xff]
      %v2467 = vld [vmem:[#allocation2 + $0x18] sm:$0xff]
      %v2468 = vld [vmem:[#allocation2 + $0x20] sm:$0xff]
      %v2469 = vld [vmem:[#allocation2 + $0x28] sm:$0xff]
      %v2470 = vld [vmem:[#allocation2 + $0x30] sm:$0xff]
      %2477 = vrot.lane.b32.xlu0 %v2465, 95
      %v2478 = vpop.permute.xlu0 %2477
      %2479 = vrot.lane.b32.xlu0 %v2466, 95
      %v2480 = vpop.permute.xlu0 %2479
      %2481 = vrot.lane.b32.xlu0 %v2467, 95
      %v2482 = vpop.permute.xlu0 %2481
      %2483 = vrot.lane.b32.xlu0 %v2468, 95
      %v2484 = vpop.permute.xlu0 %2483
      %2485 = vrot.lane.b32.xlu0 %v2469, 95
      %v2486 = vpop.permute.xlu0 %2485
      %2487 = vrot.lane.b32.xlu0 %v2470, 95
      %v2488 = vpop.permute.xlu0 %2487
      %v2489 = vsel %vm1151, %v2478, %v2480
      %v2490 = vsel %vm1151, %v2480, %v2482
      %v2491 = vsel %vm1151, %v2482, %v2484
      %v2492 = vsel %vm1151, %v2484, %v2486
      %v2493 = vsel %vm1151, %v2486, %v2488
      %2499 = vst [vmem:[#allocation3 + $0x2d0] sm:$0xff] %v2489
      %2500 = vst [vmem:[#allocation3 + $0x2d8] sm:$0xff] %v2490
      %2501 = vst [vmem:[#allocation3 + $0x2e0] sm:$0xff] %v2491
      %2502 = vst [vmem:[#allocation3 + $0x2e8] sm:$0xff] %v2492
      %2503 = vst [vmem:[#allocation3 + $0x2f0] sm:$0xff] %v2493
      %v2504 = vld [vmem:[#allocation2 + $0x8] sm:$0xff]
      %v2505 = vld [vmem:[#allocation2 + $0x10] sm:$0xff]
      %v2506 = vld [vmem:[#allocation2 + $0x18] sm:$0xff]
      %v2507 = vld [vmem:[#allocation2 + $0x20] sm:$0xff]
      %v2508 = vld [vmem:[#allocation2 + $0x28] sm:$0xff]
      %v2509 = vld [vmem:[#allocation2 + $0x30] sm:$0xff]
      %2516 = vrot.lane.b32.xlu0 %v2504, 94
      %v2517 = vpop.permute.xlu0 %2516
      %2518 = vrot.lane.b32.xlu0 %v2505, 94
      %v2519 = vpop.permute.xlu0 %2518
      %2520 = vrot.lane.b32.xlu0 %v2506, 94
      %v2521 = vpop.permute.xlu0 %2520
      %2522 = vrot.lane.b32.xlu0 %v2507, 94
      %v2523 = vpop.permute.xlu0 %2522
      %2524 = vrot.lane.b32.xlu0 %v2508, 94
      %v2525 = vpop.permute.xlu0 %2524
      %2526 = vrot.lane.b32.xlu0 %v2509, 94
      %v2527 = vpop.permute.xlu0 %2526
      %v2528 = vsel %vm1191, %v2517, %v2519
      %v2529 = vsel %vm1191, %v2519, %v2521
      %v2530 = vsel %vm1191, %v2521, %v2523
      %v2531 = vsel %vm1191, %v2523, %v2525
      %v2532 = vsel %vm1191, %v2525, %v2527
      %2538 = vst [vmem:[#allocation3 + $0x2f8] sm:$0xff] %v2528
      %2539 = vst [vmem:[#allocation3 + $0x300] sm:$0xff] %v2529
      %2540 = vst [vmem:[#allocation3 + $0x308] sm:$0xff] %v2530
      %2541 = vst [vmem:[#allocation3 + $0x310] sm:$0xff] %v2531
      %2542 = vst [vmem:[#allocation3 + $0x318] sm:$0xff] %v2532
      %v2543 = vld [vmem:[#allocation2 + $0x8] sm:$0xff]
      %v2544 = vld [vmem:[#allocation2 + $0x10] sm:$0xff]
      %v2545 = vld [vmem:[#allocation2 + $0x18] sm:$0xff]
      %v2546 = vld [vmem:[#allocation2 + $0x20] sm:$0xff]
      %v2547 = vld [vmem:[#allocation2 + $0x28] sm:$0xff]
      %v2548 = vld [vmem:[#allocation2 + $0x30] sm:$0xff]
      %2555 = vrot.lane.b32.xlu0 %v2543, 66
      %v2556 = vpop.permute.xlu0 %2555
      %2557 = vrot.lane.b32.xlu0 %v2544, 66
      %v2558 = vpop.permute.xlu0 %2557
      %2559 = vrot.lane.b32.xlu0 %v2545, 66
      %v2560 = vpop.permute.xlu0 %2559
      %2561 = vrot.lane.b32.xlu0 %v2546, 66
      %v2562 = vpop.permute.xlu0 %2561
      %2563 = vrot.lane.b32.xlu0 %v2547, 66
      %v2564 = vpop.permute.xlu0 %2563
      %2565 = vrot.lane.b32.xlu0 %v2548, 66
      %v2566 = vpop.permute.xlu0 %2565
      %v2567 = vsel %vm461, %v2556, %v2558
      %v2568 = vsel %vm461, %v2558, %v2560
      %v2569 = vsel %vm461, %v2560, %v2562
      %v2570 = vsel %vm461, %v2562, %v2564
      %v2571 = vsel %vm461, %v2564, %v2566
      %2577 = vst [vmem:[#allocation3 + $0x320] sm:$0xff] %v2567
      %2578 = vst [vmem:[#allocation3 + $0x328] sm:$0xff] %v2568
      %2579 = vst [vmem:[#allocation3 + $0x330] sm:$0xff] %v2569
      %2580 = vst [vmem:[#allocation3 + $0x338] sm:$0xff] %v2570
      %2581 = vst [vmem:[#allocation3 + $0x340] sm:$0xff] %v2571
      %v2582 = vld [vmem:[#allocation2 + $0x8] sm:$0xff]
      %v2583 = vld [vmem:[#allocation2 + $0x10] sm:$0xff]
      %v2584 = vld [vmem:[#allocation2 + $0x18] sm:$0xff]
      %v2585 = vld [vmem:[#allocation2 + $0x20] sm:$0xff]
      %v2586 = vld [vmem:[#allocation2 + $0x28] sm:$0xff]
      %v2587 = vld [vmem:[#allocation2 + $0x30] sm:$0xff]
      %2594 = vrot.lane.b32.xlu0 %v2582, 65
      %v2595 = vpop.permute.xlu0 %2594
      %2596 = vrot.lane.b32.xlu0 %v2583, 65
      %v2597 = vpop.permute.xlu0 %2596
      %2598 = vrot.lane.b32.xlu0 %v2584, 65
      %v2599 = vpop.permute.xlu0 %2598
      %2600 = vrot.lane.b32.xlu0 %v2585, 65
      %v2601 = vpop.permute.xlu0 %2600
      %2602 = vrot.lane.b32.xlu0 %v2586, 65
      %v2603 = vpop.permute.xlu0 %2602
      %2604 = vrot.lane.b32.xlu0 %v2587, 65
      %v2605 = vpop.permute.xlu0 %2604
      %v2606 = vsel %vm501, %v2595, %v2597
      %v2607 = vsel %vm501, %v2597, %v2599
      %v2608 = vsel %vm501, %v2599, %v2601
      %v2609 = vsel %vm501, %v2601, %v2603
      %v2610 = vsel %vm501, %v2603, %v2605
      %2616 = vst [vmem:[#allocation3 + $0x348] sm:$0xff] %v2606
      %2617 = vst [vmem:[#allocation3 + $0x350] sm:$0xff] %v2607
      %2618 = vst [vmem:[#allocation3 + $0x358] sm:$0xff] %v2608
      %2619 = vst [vmem:[#allocation3 + $0x360] sm:$0xff] %v2609
      %2620 = vst [vmem:[#allocation3 + $0x368] sm:$0xff] %v2610
      %v2621 = vld [vmem:[#allocation2 + $0x8] sm:$0xff]
      %v2622 = vld [vmem:[#allocation2 + $0x10] sm:$0xff]
      %v2623 = vld [vmem:[#allocation2 + $0x18] sm:$0xff]
      %v2624 = vld [vmem:[#allocation2 + $0x20] sm:$0xff]
      %v2625 = vld [vmem:[#allocation2 + $0x28] sm:$0xff]
      %v2626 = vld [vmem:[#allocation2 + $0x30] sm:$0xff]
      %2633 = vrot.lane.b32.xlu0 %v2621, 64
      %v2634 = vpop.permute.xlu0 %2633
      %2635 = vrot.lane.b32.xlu0 %v2622, 64
      %v2636 = vpop.permute.xlu0 %2635
      %2637 = vrot.lane.b32.xlu0 %v2623, 64
      %v2638 = vpop.permute.xlu0 %2637
      %2639 = vrot.lane.b32.xlu0 %v2624, 64
      %v2640 = vpop.permute.xlu0 %2639
      %2641 = vrot.lane.b32.xlu0 %v2625, 64
      %v2642 = vpop.permute.xlu0 %2641
      %2643 = vrot.lane.b32.xlu0 %v2626, 64
      %v2644 = vpop.permute.xlu0 %2643
      %v2645 = vsel %vm541, %v2634, %v2636
      %v2646 = vsel %vm541, %v2636, %v2638
      %v2647 = vsel %vm541, %v2638, %v2640
      %v2648 = vsel %vm541, %v2640, %v2642
      %v2649 = vsel %vm541, %v2642, %v2644
      %2655 = vst [vmem:[#allocation3 + $0x370] sm:$0xff] %v2645
      %2656 = vst [vmem:[#allocation3 + $0x378] sm:$0xff] %v2646
      %2657 = vst [vmem:[#allocation3 + $0x380] sm:$0xff] %v2647
      %2658 = vst [vmem:[#allocation3 + $0x388] sm:$0xff] %v2648
      %2659 = vst [vmem:[#allocation3 + $0x390] sm:$0xff] %v2649
      %v2660 = vld [vmem:[#allocation2 + $0x8] sm:$0xff]
      %v2661 = vld [vmem:[#allocation2 + $0x10] sm:$0xff]
      %v2662 = vld [vmem:[#allocation2 + $0x18] sm:$0xff]
      %v2663 = vld [vmem:[#allocation2 + $0x20] sm:$0xff]
      %v2664 = vld [vmem:[#allocation2 + $0x28] sm:$0xff]
      %v2665 = vld [vmem:[#allocation2 + $0x30] sm:$0xff]
      %2672 = vrot.lane.b32.xlu0 %v2660, 63
      %v2673 = vpop.permute.xlu0 %2672
      %2674 = vrot.lane.b32.xlu0 %v2661, 63
      %v2675 = vpop.permute.xlu0 %2674
      %2676 = vrot.lane.b32.xlu0 %v2662, 63
      %v2677 = vpop.permute.xlu0 %2676
      %2678 = vrot.lane.b32.xlu0 %v2663, 63
      %v2679 = vpop.permute.xlu0 %2678
      %2680 = vrot.lane.b32.xlu0 %v2664, 63
      %v2681 = vpop.permute.xlu0 %2680
      %2682 = vrot.lane.b32.xlu0 %v2665, 63
      %v2683 = vpop.permute.xlu0 %2682
      %v2684 = vsel %vm581, %v2673, %v2675
      %v2685 = vsel %vm581, %v2675, %v2677
      %v2686 = vsel %vm581, %v2677, %v2679
      %v2687 = vsel %vm581, %v2679, %v2681
      %v2688 = vsel %vm581, %v2681, %v2683
      %2694 = vst [vmem:[#allocation3 + $0x398] sm:$0xff] %v2684
      %2695 = vst [vmem:[#allocation3 + $0x3a0] sm:$0xff] %v2685
      %2696 = vst [vmem:[#allocation3 + $0x3a8] sm:$0xff] %v2686
      %2697 = vst [vmem:[#allocation3 + $0x3b0] sm:$0xff] %v2687
      %2698 = vst [vmem:[#allocation3 + $0x3b8] sm:$0xff] %v2688
      %v2699 = vld [vmem:[#allocation2 + $0x8] sm:$0xff]
      %v2700 = vld [vmem:[#allocation2 + $0x10] sm:$0xff]
      %v2701 = vld [vmem:[#allocation2 + $0x18] sm:$0xff]
      %v2702 = vld [vmem:[#allocation2 + $0x20] sm:$0xff]
      %v2703 = vld [vmem:[#allocation2 + $0x28] sm:$0xff]
      %v2704 = vld [vmem:[#allocation2 + $0x30] sm:$0xff]
      %2711 = vrot.lane.b32.xlu0 %v2699, 62
      %v2712 = vpop.permute.xlu0 %2711
      %2713 = vrot.lane.b32.xlu0 %v2700, 62
      %v2714 = vpop.permute.xlu0 %2713
      %2715 = vrot.lane.b32.xlu0 %v2701, 62
      %v2716 = vpop.permute.xlu0 %2715
      %2717 = vrot.lane.b32.xlu0 %v2702, 62
      %v2718 = vpop.permute.xlu0 %2717
      %2719 = vrot.lane.b32.xlu0 %v2703, 62
      %v2720 = vpop.permute.xlu0 %2719
      %2721 = vrot.lane.b32.xlu0 %v2704, 62
      %v2722 = vpop.permute.xlu0 %2721
      %v2723 = vsel %vm621, %v2712, %v2714
      %v2724 = vsel %vm621, %v2714, %v2716
      %v2725 = vsel %vm621, %v2716, %v2718
      %v2726 = vsel %vm621, %v2718, %v2720
      %v2727 = vsel %vm621, %v2720, %v2722
      %2733 = vst [vmem:[#allocation3 + $0x3c0] sm:$0xff] %v2723
      %2734 = vst [vmem:[#allocation3 + $0x3c8] sm:$0xff] %v2724
      %2735 = vst [vmem:[#allocation3 + $0x3d0] sm:$0xff] %v2725
      %2736 = vst [vmem:[#allocation3 + $0x3d8] sm:$0xff] %v2726
      %2737 = vst [vmem:[#allocation3 + $0x3e0] sm:$0xff] %v2727
      %v2738 = vld [vmem:[%s4] sm:$0xff]
      %v2739 = vld [vmem:[%s4 + $0x8] sm:$0xff]
      %v2740 = vld [vmem:[#allocation3] sm:$0xff]
      %v2741 = vld [vmem:[#allocation3 + $0x8] sm:$0xff]
      %v2742 = vld [vmem:[#allocation3 + $0x10] sm:$0xff]
      %v2743 = vld [vmem:[#allocation3 + $0x18] sm:$0xff]
      %v2744 = vld [vmem:[#allocation3 + $0x20] sm:$0xff]
      %v2745 = vld [vmem:[#allocation3 + $0x28] sm:$0xff]
      %v2746 = vld [vmem:[#allocation3 + $0x30] sm:$0xff]
      %v2747 = vld [vmem:[#allocation3 + $0x38] sm:$0xff]
      %v2748 = vld [vmem:[#allocation3 + $0x40] sm:$0xff]
      %v2749 = vld [vmem:[#allocation3 + $0x48] sm:$0xff]
      %v2750 = vld [vmem:[#allocation3 + $0x50] sm:$0xff]
      %v2751 = vld [vmem:[#allocation3 + $0x58] sm:$0xff]
      %v2752 = vld [vmem:[#allocation3 + $0x60] sm:$0xff]
      %v2753 = vld [vmem:[#allocation3 + $0x68] sm:$0xff]
      %v2754 = vld [vmem:[#allocation3 + $0x70] sm:$0xff]
      %v2755 = vld [vmem:[#allocation3 + $0x78] sm:$0xff]
      %v2756 = vld [vmem:[#allocation3 + $0x80] sm:$0xff]
      %v2757 = vld [vmem:[#allocation3 + $0x88] sm:$0xff]
      %v2758 = vld [vmem:[#allocation3 + $0x90] sm:$0xff]
      %v2759 = vld [vmem:[#allocation3 + $0x98] sm:$0xff]
      %v2760 = vld [vmem:[#allocation3 + $0xa0] sm:$0xff]
      %v2761 = vld [vmem:[#allocation3 + $0xa8] sm:$0xff]
      %v2762 = vld [vmem:[#allocation3 + $0xb0] sm:$0xff]
      %v2763 = vld [vmem:[#allocation3 + $0xb8] sm:$0xff]
      %v2764 = vld [vmem:[#allocation3 + $0xc0] sm:$0xff]
      %v2765 = vld [vmem:[#allocation3 + $0xc8] sm:$0xff]
      %v2766 = vld [vmem:[#allocation3 + $0xd0] sm:$0xff]
      %v2767 = vld [vmem:[#allocation3 + $0xd8] sm:$0xff]
      %v2768 = vld [vmem:[#allocation3 + $0xe0] sm:$0xff]
      %v2769 = vld [vmem:[#allocation3 + $0xe8] sm:$0xff]
      %v2770 = vld [vmem:[#allocation3 + $0xf0] sm:$0xff]
      %v2771 = vld [vmem:[#allocation3 + $0xf8] sm:$0xff]
      %v2772 = vld [vmem:[#allocation3 + $0x100] sm:$0xff]
      %v2773 = vld [vmem:[#allocation3 + $0x108] sm:$0xff]
      %v2774 = vld [vmem:[#allocation3 + $0x110] sm:$0xff]
      %v2775 = vld [vmem:[#allocation3 + $0x118] sm:$0xff]
      %v2776 = vld [vmem:[#allocation3 + $0x120] sm:$0xff]
      %v2777 = vld [vmem:[#allocation3 + $0x128] sm:$0xff]
      %v2778 = vld [vmem:[#allocation3 + $0x130] sm:$0xff]
      %v2779 = vld [vmem:[#allocation3 + $0x138] sm:$0xff]
      %v2780 = vld [vmem:[#allocation3 + $0x140] sm:$0xff]
      %v2781 = vld [vmem:[#allocation3 + $0x148] sm:$0xff]
      %v2782 = vld [vmem:[#allocation3 + $0x150] sm:$0xff]
      %v2783 = vld [vmem:[#allocation3 + $0x158] sm:$0xff]
      %v2784 = vld [vmem:[#allocation3 + $0x160] sm:$0xff]
      %v2785 = vld [vmem:[#allocation3 + $0x168] sm:$0xff]
      %v2786 = vld [vmem:[#allocation3 + $0x170] sm:$0xff]
      %v2787 = vld [vmem:[#allocation3 + $0x178] sm:$0xff]
      %v2788 = vld [vmem:[#allocation3 + $0x180] sm:$0xff]
      %v2789 = vld [vmem:[#allocation3 + $0x188] sm:$0xff]
      %v2790 = vld [vmem:[#allocation3 + $0x190] sm:$0xff]
      %v2791 = vld [vmem:[#allocation3 + $0x198] sm:$0xff]
      %v2792 = vld [vmem:[#allocation3 + $0x1a0] sm:$0xff]
      %v2793 = vld [vmem:[#allocation3 + $0x1a8] sm:$0xff]
      %v2794 = vld [vmem:[#allocation3 + $0x1b0] sm:$0xff]
      %v2795 = vld [vmem:[#allocation3 + $0x1b8] sm:$0xff]
      %v2796 = vld [vmem:[#allocation3 + $0x1c0] sm:$0xff]
      %v2797 = vld [vmem:[#allocation3 + $0x1c8] sm:$0xff]
      %v2798 = vld [vmem:[#allocation3 + $0x1d0] sm:$0xff]
      %v2799 = vld [vmem:[#allocation3 + $0x1d8] sm:$0xff]
      %v2800 = vld [vmem:[#allocation3 + $0x1e0] sm:$0xff]
      %v2801 = vld [vmem:[#allocation3 + $0x1e8] sm:$0xff]
      %v2802 = vld [vmem:[#allocation3 + $0x1f0] sm:$0xff]
      %v2803 = vld [vmem:[#allocation3 + $0x1f8] sm:$0xff]
      %v2804 = vld [vmem:[#allocation3 + $0x200] sm:$0xff]
      %v2805 = vld [vmem:[#allocation3 + $0x208] sm:$0xff]
      %v2806 = vld [vmem:[#allocation3 + $0x210] sm:$0xff]
      %v2807 = vld [vmem:[#allocation3 + $0x218] sm:$0xff]
      %v2808 = vld [vmem:[#allocation3 + $0x220] sm:$0xff]
      %v2809 = vld [vmem:[#allocation3 + $0x228] sm:$0xff]
      %v2810 = vld [vmem:[#allocation3 + $0x230] sm:$0xff]
      %v2811 = vld [vmem:[#allocation3 + $0x238] sm:$0xff]
      %v2812 = vld [vmem:[#allocation3 + $0x240] sm:$0xff]
      %v2813 = vld [vmem:[#allocation3 + $0x248] sm:$0xff]
      %v2814 = vld [vmem:[#allocation3 + $0x250] sm:$0xff]
      %v2815 = vld [vmem:[#allocation3 + $0x258] sm:$0xff]
      %v2816 = vld [vmem:[#allocation3 + $0x260] sm:$0xff]
      %v2817 = vld [vmem:[#allocation3 + $0x268] sm:$0xff]
      %v2818 = vld [vmem:[#allocation3 + $0x270] sm:$0xff]
      %v2819 = vld [vmem:[#allocation3 + $0x278] sm:$0xff]
      %v2820 = vld [vmem:[#allocation3 + $0x280] sm:$0xff]
      %v2821 = vld [vmem:[#allocation3 + $0x288] sm:$0xff]
      %v2822 = vld [vmem:[#allocation3 + $0x290] sm:$0xff]
      %v2823 = vld [vmem:[#allocation3 + $0x298] sm:$0xff]
      %v2824 = vld [vmem:[#allocation3 + $0x2a0] sm:$0xff]
      %v2825 = vld [vmem:[#allocation3 + $0x2a8] sm:$0xff]
      %v2826 = vld [vmem:[#allocation3 + $0x2b0] sm:$0xff]
      %v2827 = vld [vmem:[#allocation3 + $0x2b8] sm:$0xff]
      %v2828 = vld [vmem:[#allocation3 + $0x2c0] sm:$0xff]
      %v2829 = vld [vmem:[#allocation3 + $0x2c8] sm:$0xff]
      %v2830 = vld [vmem:[#allocation3 + $0x2d0] sm:$0xff]
      %v2831 = vld [vmem:[#allocation3 + $0x2d8] sm:$0xff]
      %v2832 = vld [vmem:[#allocation3 + $0x2e0] sm:$0xff]
      %v2833 = vld [vmem:[#allocation3 + $0x2e8] sm:$0xff]
      %v2834 = vld [vmem:[#allocation3 + $0x2f0] sm:$0xff]
      %v2835 = vld [vmem:[#allocation3 + $0x2f8] sm:$0xff]
      %v2836 = vld [vmem:[#allocation3 + $0x300] sm:$0xff]
      %v2837 = vld [vmem:[#allocation3 + $0x308] sm:$0xff]
      %v2838 = vld [vmem:[#allocation3 + $0x310] sm:$0xff]
      %v2839 = vld [vmem:[#allocation3 + $0x318] sm:$0xff]
      %v2840 = vld [vmem:[#allocation3 + $0x320] sm:$0xff]
      %v2841 = vld [vmem:[#allocation3 + $0x328] sm:$0xff]
      %v2842 = vld [vmem:[#allocation3 + $0x330] sm:$0xff]
      %v2843 = vld [vmem:[#allocation3 + $0x338] sm:$0xff]
      %v2844 = vld [vmem:[#allocation3 + $0x340] sm:$0xff]
      %v2845 = vld [vmem:[#allocation3 + $0x348] sm:$0xff]
      %v2846 = vld [vmem:[#allocation3 + $0x350] sm:$0xff]
      %v2847 = vld [vmem:[#allocation3 + $0x358] sm:$0xff]
      %v2848 = vld [vmem:[#allocation3 + $0x360] sm:$0xff]
      %v2849 = vld [vmem:[#allocation3 + $0x368] sm:$0xff]
      %v2850 = vld [vmem:[#allocation3 + $0x370] sm:$0xff]
      %v2851 = vld [vmem:[#allocation3 + $0x378] sm:$0xff]
      %v2852 = vld [vmem:[#allocation3 + $0x380] sm:$0xff]
      %v2853 = vld [vmem:[#allocation3 + $0x388] sm:$0xff]
      %v2854 = vld [vmem:[#allocation3 + $0x390] sm:$0xff]
      %v2855 = vld [vmem:[#allocation3 + $0x398] sm:$0xff]
      %v2856 = vld [vmem:[#allocation3 + $0x3a0] sm:$0xff]
      %v2857 = vld [vmem:[#allocation3 + $0x3a8] sm:$0xff]
      %v2858 = vld [vmem:[#allocation3 + $0x3b0] sm:$0xff]
      %v2859 = vld [vmem:[#allocation3 + $0x3b8] sm:$0xff]
      %v2860 = vld [vmem:[#allocation3 + $0x3c0] sm:$0xff]
      %v2861 = vld [vmem:[#allocation3 + $0x3c8] sm:$0xff]
      %v2862 = vld [vmem:[#allocation3 + $0x3d0] sm:$0xff]
      %v2863 = vld [vmem:[#allocation3 + $0x3d8] sm:$0xff]
      %v2864 = vld [vmem:[#allocation3 + $0x3e0] sm:$0xff]
      %v2865 = vld [vmem:[%s5] sm:$0xff]
      %2867 = vset.pattern.permute.xlu0 0
      %2868 = vperm.xlu0 %2867, %v2865
      %v2869 = vpop.permute.xlu0 %2868
      %v2872 = vsel %vm1535, %v2739, 0
      %2874 = vmatprep.subr.mxu0 %v2741
      %2875 = vmatpush1.msra.mxu0 %v2740
      %2876 = vmatprep.subr.mxu0 %v2746
      %2877 = vmatpush1.msra.mxu0 %v2745
      %2878 = vmatprep.subr.mxu0 %v2751
      %2879 = vmatpush1.msra.mxu0 %v2750
      %2880 = vmatprep.subr.mxu0 %v2756
      %2881 = vmatpush1.msra.mxu0 %v2755
      %2882 = vmatprep.subr.mxu0 %v2761
      %2883 = vmatpush1.msra.mxu0 %v2760
      %2884 = vmatprep.subr.mxu0 %v2766
      %2885 = vmatpush1.msra.mxu0 %v2765
      %2886 = vmatprep.subr.mxu0 %v2771
      %2887 = vmatpush1.msra.mxu0 %v2770
      %2888 = vmatprep.subr.mxu0 %v2776
      %2889 = vmatpush1.msra.mxu0 %v2775
      %2890 = vmatprep.subr.mxu0 %v2781
      %2891 = vmatpush1.msra.mxu0 %v2780
      %2892 = vmatprep.subr.mxu0 %v2786
      %2893 = vmatpush1.msra.mxu0 %v2785
      %2894 = vmatprep.subr.mxu0 %v2791
      %2895 = vmatpush1.msra.mxu0 %v2790
      %2896 = vmatprep.subr.mxu0 %v2796
      %2897 = vmatpush1.msra.mxu0 %v2795
      %2898 = vmatprep.subr.mxu0 %v2801
      %2899 = vmatpush1.msra.mxu0 %v2800
      %2900 = vmatprep.subr.mxu0 %v2806
      %2901 = vmatpush1.msra.mxu0 %v2805
      %2902 = vmatprep.subr.mxu0 %v2811
      %2903 = vmatpush1.msra.mxu0 %v2810
      %2904 = vmatprep.subr.mxu0 %v2816
      %2905 = vmatpush1.msra.mxu0 %v2815
      %2906 = vmatprep.subr.mxu0 %v2821
      %2907 = vmatpush1.msra.mxu0 %v2820
      %2908 = vmatprep.subr.mxu0 %v2826
      %2909 = vmatpush1.msra.mxu0 %v2825
      %2910 = vmatprep.subr.mxu0 %v2831
      %2911 = vmatpush1.msra.mxu0 %v2830
      %2912 = vmatprep.subr.mxu0 %v2836
      %2913 = vmatpush1.msra.mxu0 %v2835
      %2914 = vmatprep.subr.mxu0 %v2841
      %2915 = vmatpush1.msra.mxu0 %v2840
      %2916 = vmatprep.subr.mxu0 %v2846
      %2917 = vmatpush1.msra.mxu0 %v2845
      %2918 = vmatprep.subr.mxu0 %v2851
      %2919 = vmatpush1.msra.mxu0 %v2850
      %2920 = vmatprep.subr.mxu0 %v2856
      %2921 = vmatpush1.msra.mxu0 %v2855
      %2922 = vmatprep.subr.mxu0 %v2861
      %2923 = vmatpush1.msra.mxu0 %v2860
      %2924 = vmatprep.subr.mxu0 0.0
      %2925 = vmatpush1.msra.mxu0 0.0
      %2926 = vmatprep.subr.mxu0 0.0
      %2927 = vmatpush1.msra.mxu0 0.0
      %2928 = vmatprep.subr.mxu0 0.0
      %2929 = vmatpush1.msra.mxu0 0.0
      %2930 = vmatprep.subr.mxu0 0.0
      %2931 = vmatpush1.msra.mxu0 0.0
      %2932 = vmatprep.subr.mxu0 0.0
      %2933 = vmatpush1.msra.mxu0 0.0
      %2934 = vmatprep.subr.mxu0 0.0
      %2935 = vmatpush1.msra.mxu0 0.0
      %2936 = vmatprep.subr.mxu0 0.0
      %2937 = vmatpush1.msra.mxu0 0.0
      %2938 = vmatprep.mubr.f32.mxu0 %v2872
      %2939 = vmatmul.mubr.f32.gmra.mrb[0].mxu0 %v2738
      %v2940 = vpop.f32.mrb[0].mxu0
      %v2941 = vadd.f32 %v2869, %v2940
      %v2942 = vpop.f32.mrb[0].mxu0
      %v2943 = vadd.f32 %v2869, %v2942
      %2944 = vdwg.mxu0
      %2945 = vmatprep.subr.mxu0 %v2743
      %2946 = vmatpush1.msra.mxu0 %v2742
      %2947 = vmatprep.subr.mxu0 %v2748
      %2948 = vmatpush1.msra.mxu0 %v2747
      %2949 = vmatprep.subr.mxu0 %v2753
      %2950 = vmatpush1.msra.mxu0 %v2752
      %2951 = vmatprep.subr.mxu0 %v2758
      %2952 = vmatpush1.msra.mxu0 %v2757
      %2953 = vmatprep.subr.mxu0 %v2763
      %2954 = vmatpush1.msra.mxu0 %v2762
      %2955 = vmatprep.subr.mxu0 %v2768
      %2956 = vmatpush1.msra.mxu0 %v2767
      %2957 = vmatprep.subr.mxu0 %v2773
      %2958 = vmatpush1.msra.mxu0 %v2772
      %2959 = vmatprep.subr.mxu0 %v2778
      %2960 = vmatpush1.msra.mxu0 %v2777
      %2961 = vmatprep.subr.mxu0 %v2783
      %2962 = vmatpush1.msra.mxu0 %v2782
      %2963 = vmatprep.subr.mxu0 %v2788
      %2964 = vmatpush1.msra.mxu0 %v2787
      %2965 = vmatprep.subr.mxu0 %v2793
      %2966 = vmatpush1.msra.mxu0 %v2792
      %2967 = vmatprep.subr.mxu0 %v2798
      %2968 = vmatpush1.msra.mxu0 %v2797
      %2969 = vmatprep.subr.mxu0 %v2803
      %2970 = vmatpush1.msra.mxu0 %v2802
      %2971 = vmatprep.subr.mxu0 %v2808
      %2972 = vmatpush1.msra.mxu0 %v2807
      %2973 = vmatprep.subr.mxu0 %v2813
      %2974 = vmatpush1.msra.mxu0 %v2812
      %2975 = vmatprep.subr.mxu0 %v2818
      %2976 = vmatpush1.msra.mxu0 %v2817
      %2977 = vmatprep.subr.mxu0 %v2823
      %2978 = vmatpush1.msra.mxu0 %v2822
      %2979 = vmatprep.subr.mxu0 %v2828
      %2980 = vmatpush1.msra.mxu0 %v2827
      %2981 = vmatprep.subr.mxu0 %v2833
      %2982 = vmatpush1.msra.mxu0 %v2832
      %2983 = vmatprep.subr.mxu0 %v2838
      %2984 = vmatpush1.msra.mxu0 %v2837
      %2985 = vmatprep.subr.mxu0 %v2843
      %2986 = vmatpush1.msra.mxu0 %v2842
      %2987 = vmatprep.subr.mxu0 %v2848
      %2988 = vmatpush1.msra.mxu0 %v2847
      %2989 = vmatprep.subr.mxu0 %v2853
      %2990 = vmatpush1.msra.mxu0 %v2852
      %2991 = vmatprep.subr.mxu0 %v2858
      %2992 = vmatpush1.msra.mxu0 %v2857
      %2993 = vmatprep.subr.mxu0 %v2863
      %2994 = vmatpush1.msra.mxu0 %v2862
      %2995 = vmatprep.subr.mxu0 0.0
      %2996 = vmatpush1.msra.mxu0 0.0
      %2997 = vmatprep.subr.mxu0 0.0
      %2998 = vmatpush1.msra.mxu0 0.0
      %2999 = vmatprep.subr.mxu0 0.0
      %3000 = vmatpush1.msra.mxu0 0.0
      %3001 = vmatprep.subr.mxu0 0.0
      %3002 = vmatpush1.msra.mxu0 0.0
      %3003 = vmatprep.subr.mxu0 0.0
      %3004 = vmatpush1.msra.mxu0 0.0
      %3005 = vmatprep.subr.mxu0 0.0
      %3006 = vmatpush1.msra.mxu0 0.0
      %3007 = vmatprep.subr.mxu0 0.0
      %3008 = vmatpush1.msra.mxu0 0.0
      %3009 = vmatprep.mubr.f32.mxu0 %v2872
      %3010 = vmatmul.mubr.f32.gmra.mrb[0].mxu0 %v2738
      %v3011 = vpop.f32.mrb[0].mxu0
      %v3012 = vadd.f32 %v2869, %v3011
      %v3013 = vpop.f32.mrb[0].mxu0
      %v3014 = vadd.f32 %v2869, %v3013
      %3015 = vdwg.mxu0
      %3016 = vmatprep.subr.mxu0 0.0
      %3017 = vmatpush1.msra.mxu0 %v2744
      %3018 = vmatprep.subr.mxu0 0.0
      %3019 = vmatpush1.msra.mxu0 %v2749
      %3020 = vmatprep.subr.mxu0 0.0
      %3021 = vmatpush1.msra.mxu0 %v2754
      %3022 = vmatprep.subr.mxu0 0.0
      %3023 = vmatpush1.msra.mxu0 %v2759
      %3024 = vmatprep.subr.mxu0 0.0
      %3025 = vmatpush1.msra.mxu0 %v2764
      %3026 = vmatprep.subr.mxu0 0.0
      %3027 = vmatpush1.msra.mxu0 %v2769
      %3028 = vmatprep.subr.mxu0 0.0
      %3029 = vmatpush1.msra.mxu0 %v2774
      %3030 = vmatprep.subr.mxu0 0.0
      %3031 = vmatpush1.msra.mxu0 %v2779
      %3032 = vmatprep.subr.mxu0 0.0
      %3033 = vmatpush1.msra.mxu0 %v2784
      %3034 = vmatprep.subr.mxu0 0.0
      %3035 = vmatpush1.msra.mxu0 %v2789
      %3036 = vmatprep.subr.mxu0 0.0
      %3037 = vmatpush1.msra.mxu0 %v2794
      %3038 = vmatprep.subr.mxu0 0.0
      %3039 = vmatpush1.msra.mxu0 %v2799
      %3040 = vmatprep.subr.mxu0 0.0
      %3041 = vmatpush1.msra.mxu0 %v2804
      %3042 = vmatprep.subr.mxu0 0.0
      %3043 = vmatpush1.msra.mxu0 %v2809
      %3044 = vmatprep.subr.mxu0 0.0
      %3045 = vmatpush1.msra.mxu0 %v2814
      %3046 = vmatprep.subr.mxu0 0.0
      %3047 = vmatpush1.msra.mxu0 %v2819
      %3048 = vmatprep.subr.mxu0 0.0
      %3049 = vmatpush1.msra.mxu0 %v2824
      %3050 = vmatprep.subr.mxu0 0.0
      %3051 = vmatpush1.msra.mxu0 %v2829
      %3052 = vmatprep.subr.mxu0 0.0
      %3053 = vmatpush1.msra.mxu0 %v2834
      %3054 = vmatprep.subr.mxu0 0.0
      %3055 = vmatpush1.msra.mxu0 %v2839
      %3056 = vmatprep.subr.mxu0 0.0
      %3057 = vmatpush1.msra.mxu0 %v2844
      %3058 = vmatprep.subr.mxu0 0.0
      %3059 = vmatpush1.msra.mxu0 %v2849
      %3060 = vmatprep.subr.mxu0 0.0
      %3061 = vmatpush1.msra.mxu0 %v2854
      %3062 = vmatprep.subr.mxu0 0.0
      %3063 = vmatpush1.msra.mxu0 %v2859
      %3064 = vmatprep.subr.mxu0 0.0
      %3065 = vmatpush1.msra.mxu0 %v2864
      %3066 = vmatprep.subr.mxu0 0.0
      %3067 = vmatpush1.msra.mxu0 0.0
      %3068 = vmatprep.subr.mxu0 0.0
      %3069 = vmatpush1.msra.mxu0 0.0
      %3070 = vmatprep.subr.mxu0 0.0
      %3071 = vmatpush1.msra.mxu0 0.0
      %3072 = vmatprep.subr.mxu0 0.0
      %3073 = vmatpush1.msra.mxu0 0.0
      %3074 = vmatprep.subr.mxu0 0.0
      %3075 = vmatpush1.msra.mxu0 0.0
      %3076 = vmatprep.subr.mxu0 0.0
      %3077 = vmatpush1.msra.mxu0 0.0
      %3078 = vmatprep.subr.mxu0 0.0
      %3079 = vmatpush1.msra.mxu0 0.0
      %3080 = vmatprep.mubr.f32.mxu0 %v2872
      %3081 = vmatmul.mubr.f32.gmra.mrb[0].mxu0 %v2738
      %v3082 = vpop.f32.mrb[0].mxu0
      %v3083 = vadd.f32 %v2869, %v3082
      %v3084 = vpop.f32.mrb[0].mxu0
      %3085 = vdwg.mxu0
      %v3086 = vmax.f32 %v2941, 0.0
      %v3087 = vmax.f32 %v2943, 0.0
      %v3088 = vmax.f32 %v3012, 0.0
      %v3089 = vmax.f32 %v3014, 0.0
      %v3090 = vmax.f32 %v3083, 0.0
      %v3091 = vmul.f32 %v3086, %v1760
      %v3092 = vmul.f32 %v3087, %v1764
      %v3093 = vmul.f32 %v3088, %v1768
      %v3094 = vmul.f32 %v3089, %v1772
      %v3095 = vmul.f32 %v3090, %v1776
      %3096 = vst [vmem:[#allocation2 + $0x8] sm:$0xff] %v3091
      %3097 = vst [vmem:[#allocation2 + $0x10] sm:$0xff] %v3092
      %3098 = vst [vmem:[#allocation2 + $0x18] sm:$0xff] %v3093
      %3099 = vst [vmem:[#allocation2 + $0x20] sm:$0xff] %v3094
      %3100 = vst [vmem:[#allocation2 + $0x28] sm:$0xff] %v3095
      %v3101 = vld [vmem:[#allocation2] sm:$0xff]
      %v3102 = vld [vmem:[#allocation2 + $0x8] sm:$0xff]
      %v3103 = vld [vmem:[#allocation2 + $0x10] sm:$0xff]
      %v3104 = vld [vmem:[#allocation2 + $0x18] sm:$0xff]
      %v3105 = vld [vmem:[#allocation2 + $0x20] sm:$0xff]
      %v3106 = vld [vmem:[#allocation2 + $0x28] sm:$0xff]
      %3113 = vrot.lane.b32.xlu0 %v3101, 66
      %v3114 = vpop.permute.xlu0 %3113
      %3115 = vrot.lane.b32.xlu0 %v3102, 66
      %v3116 = vpop.permute.xlu0 %3115
      %3117 = vrot.lane.b32.xlu0 %v3103, 66
      %v3118 = vpop.permute.xlu0 %3117
      %3119 = vrot.lane.b32.xlu0 %v3104, 66
      %v3120 = vpop.permute.xlu0 %3119
      %3121 = vrot.lane.b32.xlu0 %v3105, 66
      %v3122 = vpop.permute.xlu0 %3121
      %3123 = vrot.lane.b32.xlu0 %v3106, 66
      %v3124 = vpop.permute.xlu0 %3123
      %v3125 = vsel %vm461, %v3114, %v3116
      %v3126 = vsel %vm461, %v3116, %v3118
      %v3127 = vsel %vm461, %v3118, %v3120
      %v3128 = vsel %vm461, %v3120, %v3122
      %v3129 = vsel %vm461, %v3122, %v3124
      %3135 = vst [vmem:[#allocation3] sm:$0xff] %v3125
      %3136 = vst [vmem:[#allocation3 + $0x8] sm:$0xff] %v3126
      %3137 = vst [vmem:[#allocation3 + $0x10] sm:$0xff] %v3127
      %3138 = vst [vmem:[#allocation3 + $0x18] sm:$0xff] %v3128
      %3139 = vst [vmem:[#allocation3 + $0x20] sm:$0xff] %v3129
      %v3140 = vld [vmem:[#allocation2] sm:$0xff]
      %v3141 = vld [vmem:[#allocation2 + $0x8] sm:$0xff]
      %v3142 = vld [vmem:[#allocation2 + $0x10] sm:$0xff]
      %v3143 = vld [vmem:[#allocation2 + $0x18] sm:$0xff]
      %v3144 = vld [vmem:[#allocation2 + $0x20] sm:$0xff]
      %v3145 = vld [vmem:[#allocation2 + $0x28] sm:$0xff]
      %3152 = vrot.lane.b32.xlu0 %v3140, 65
      %v3153 = vpop.permute.xlu0 %3152
      %3154 = vrot.lane.b32.xlu0 %v3141, 65
      %v3155 = vpop.permute.xlu0 %3154
      %3156 = vrot.lane.b32.xlu0 %v3142, 65
      %v3157 = vpop.permute.xlu0 %3156
      %3158 = vrot.lane.b32.xlu0 %v3143, 65
      %v3159 = vpop.permute.xlu0 %3158
      %3160 = vrot.lane.b32.xlu0 %v3144, 65
      %v3161 = vpop.permute.xlu0 %3160
      %3162 = vrot.lane.b32.xlu0 %v3145, 65
      %v3163 = vpop.permute.xlu0 %3162
      %v3164 = vsel %vm501, %v3153, %v3155
      %v3165 = vsel %vm501, %v3155, %v3157
      %v3166 = vsel %vm501, %v3157, %v3159
      %v3167 = vsel %vm501, %v3159, %v3161
      %v3168 = vsel %vm501, %v3161, %v3163
      %3174 = vst [vmem:[#allocation3 + $0x28] sm:$0xff] %v3164
      %3175 = vst [vmem:[#allocation3 + $0x30] sm:$0xff] %v3165
      %3176 = vst [vmem:[#allocation3 + $0x38] sm:$0xff] %v3166
      %3177 = vst [vmem:[#allocation3 + $0x40] sm:$0xff] %v3167
      %3178 = vst [vmem:[#allocation3 + $0x48] sm:$0xff] %v3168
      %v3179 = vld [vmem:[#allocation2] sm:$0xff]
      %v3180 = vld [vmem:[#allocation2 + $0x8] sm:$0xff]
      %v3181 = vld [vmem:[#allocation2 + $0x10] sm:$0xff]
      %v3182 = vld [vmem:[#allocation2 + $0x18] sm:$0xff]
      %v3183 = vld [vmem:[#allocation2 + $0x20] sm:$0xff]
      %v3184 = vld [vmem:[#allocation2 + $0x28] sm:$0xff]
      %3191 = vrot.lane.b32.xlu0 %v3179, 64
      %v3192 = vpop.permute.xlu0 %3191
      %3193 = vrot.lane.b32.xlu0 %v3180, 64
      %v3194 = vpop.permute.xlu0 %3193
      %3195 = vrot.lane.b32.xlu0 %v3181, 64
      %v3196 = vpop.permute.xlu0 %3195
      %3197 = vrot.lane.b32.xlu0 %v3182, 64
      %v3198 = vpop.permute.xlu0 %3197
      %3199 = vrot.lane.b32.xlu0 %v3183, 64
      %v3200 = vpop.permute.xlu0 %3199
      %3201 = vrot.lane.b32.xlu0 %v3184, 64
      %v3202 = vpop.permute.xlu0 %3201
      %v3203 = vsel %vm541, %v3192, %v3194
      %v3204 = vsel %vm541, %v3194, %v3196
      %v3205 = vsel %vm541, %v3196, %v3198
      %v3206 = vsel %vm541, %v3198, %v3200
      %v3207 = vsel %vm541, %v3200, %v3202
      %3213 = vst [vmem:[#allocation3 + $0x50] sm:$0xff] %v3203
      %3214 = vst [vmem:[#allocation3 + $0x58] sm:$0xff] %v3204
      %3215 = vst [vmem:[#allocation3 + $0x60] sm:$0xff] %v3205
      %3216 = vst [vmem:[#allocation3 + $0x68] sm:$0xff] %v3206
      %3217 = vst [vmem:[#allocation3 + $0x70] sm:$0xff] %v3207
      %v3218 = vld [vmem:[#allocation2] sm:$0xff]
      %v3219 = vld [vmem:[#allocation2 + $0x8] sm:$0xff]
      %v3220 = vld [vmem:[#allocation2 + $0x10] sm:$0xff]
      %v3221 = vld [vmem:[#allocation2 + $0x18] sm:$0xff]
      %v3222 = vld [vmem:[#allocation2 + $0x20] sm:$0xff]
      %v3223 = vld [vmem:[#allocation2 + $0x28] sm:$0xff]
      %3230 = vrot.lane.b32.xlu0 %v3218, 63
      %v3231 = vpop.permute.xlu0 %3230
      %3232 = vrot.lane.b32.xlu0 %v3219, 63
      %v3233 = vpop.permute.xlu0 %3232
      %3234 = vrot.lane.b32.xlu0 %v3220, 63
      %v3235 = vpop.permute.xlu0 %3234
      %3236 = vrot.lane.b32.xlu0 %v3221, 63
      %v3237 = vpop.permute.xlu0 %3236
      %3238 = vrot.lane.b32.xlu0 %v3222, 63
      %v3239 = vpop.permute.xlu0 %3238
      %3240 = vrot.lane.b32.xlu0 %v3223, 63
      %v3241 = vpop.permute.xlu0 %3240
      %v3242 = vsel %vm581, %v3231, %v3233
      %v3243 = vsel %vm581, %v3233, %v3235
      %v3244 = vsel %vm581, %v3235, %v3237
      %v3245 = vsel %vm581, %v3237, %v3239
      %v3246 = vsel %vm581, %v3239, %v3241
      %3252 = vst [vmem:[#allocation3 + $0x78] sm:$0xff] %v3242
      %3253 = vst [vmem:[#allocation3 + $0x80] sm:$0xff] %v3243
      %3254 = vst [vmem:[#allocation3 + $0x88] sm:$0xff] %v3244
      %3255 = vst [vmem:[#allocation3 + $0x90] sm:$0xff] %v3245
      %3256 = vst [vmem:[#allocation3 + $0x98] sm:$0xff] %v3246
      %v3257 = vld [vmem:[#allocation2] sm:$0xff]
      %v3258 = vld [vmem:[#allocation2 + $0x8] sm:$0xff]
      %v3259 = vld [vmem:[#allocation2 + $0x10] sm:$0xff]
      %v3260 = vld [vmem:[#allocation2 + $0x18] sm:$0xff]
      %v3261 = vld [vmem:[#allocation2 + $0x20] sm:$0xff]
      %v3262 = vld [vmem:[#allocation2 + $0x28] sm:$0xff]
      %3269 = vrot.lane.b32.xlu0 %v3257, 62
      %v3270 = vpop.permute.xlu0 %3269
      %3271 = vrot.lane.b32.xlu0 %v3258, 62
      %v3272 = vpop.permute.xlu0 %3271
      %3273 = vrot.lane.b32.xlu0 %v3259, 62
      %v3274 = vpop.permute.xlu0 %3273
      %3275 = vrot.lane.b32.xlu0 %v3260, 62
      %v3276 = vpop.permute.xlu0 %3275
      %3277 = vrot.lane.b32.xlu0 %v3261, 62
      %v3278 = vpop.permute.xlu0 %3277
      %3279 = vrot.lane.b32.xlu0 %v3262, 62
      %v3280 = vpop.permute.xlu0 %3279
      %v3281 = vsel %vm621, %v3270, %v3272
      %v3282 = vsel %vm621, %v3272, %v3274
      %v3283 = vsel %vm621, %v3274, %v3276
      %v3284 = vsel %vm621, %v3276, %v3278
      %v3285 = vsel %vm621, %v3278, %v3280
      %3291 = vst [vmem:[#allocation3 + $0xa0] sm:$0xff] %v3281
      %3292 = vst [vmem:[#allocation3 + $0xa8] sm:$0xff] %v3282
      %3293 = vst [vmem:[#allocation3 + $0xb0] sm:$0xff] %v3283
      %3294 = vst [vmem:[#allocation3 + $0xb8] sm:$0xff] %v3284
      %3295 = vst [vmem:[#allocation3 + $0xc0] sm:$0xff] %v3285
      %v3296 = vld [vmem:[#allocation2] sm:$0xff]
      %v3297 = vld [vmem:[#allocation2 + $0x8] sm:$0xff]
      %v3298 = vld [vmem:[#allocation2 + $0x10] sm:$0xff]
      %v3299 = vld [vmem:[#allocation2 + $0x18] sm:$0xff]
      %v3300 = vld [vmem:[#allocation2 + $0x20] sm:$0xff]
      %v3301 = vld [vmem:[#allocation2 + $0x28] sm:$0xff]
      %3308 = vrot.lane.b32.xlu0 %v3296, 34
      %v3309 = vpop.permute.xlu0 %3308
      %3310 = vrot.lane.b32.xlu0 %v3297, 34
      %v3311 = vpop.permute.xlu0 %3310
      %3312 = vrot.lane.b32.xlu0 %v3298, 34
      %v3313 = vpop.permute.xlu0 %3312
      %3314 = vrot.lane.b32.xlu0 %v3299, 34
      %v3315 = vpop.permute.xlu0 %3314
      %3316 = vrot.lane.b32.xlu0 %v3300, 34
      %v3317 = vpop.permute.xlu0 %3316
      %3318 = vrot.lane.b32.xlu0 %v3301, 34
      %v3319 = vpop.permute.xlu0 %3318
      %v3320 = vsel %vm661, %v3309, %v3311
      %v3321 = vsel %vm661, %v3311, %v3313
      %v3322 = vsel %vm661, %v3313, %v3315
      %v3323 = vsel %vm661, %v3315, %v3317
      %v3324 = vsel %vm661, %v3317, %v3319
      %3330 = vst [vmem:[#allocation3 + $0xc8] sm:$0xff] %v3320
      %3331 = vst [vmem:[#allocation3 + $0xd0] sm:$0xff] %v3321
      %3332 = vst [vmem:[#allocation3 + $0xd8] sm:$0xff] %v3322
      %3333 = vst [vmem:[#allocation3 + $0xe0] sm:$0xff] %v3323
      %3334 = vst [vmem:[#allocation3 + $0xe8] sm:$0xff] %v3324
      %v3335 = vld [vmem:[#allocation2] sm:$0xff]
      %v3336 = vld [vmem:[#allocation2 + $0x8] sm:$0xff]
      %v3337 = vld [vmem:[#allocation2 + $0x10] sm:$0xff]
      %v3338 = vld [vmem:[#allocation2 + $0x18] sm:$0xff]
      %v3339 = vld [vmem:[#allocation2 + $0x20] sm:$0xff]
      %v3340 = vld [vmem:[#allocation2 + $0x28] sm:$0xff]
      %3347 = vrot.lane.b32.xlu0 %v3335, 33
      %v3348 = vpop.permute.xlu0 %3347
      %3349 = vrot.lane.b32.xlu0 %v3336, 33
      %v3350 = vpop.permute.xlu0 %3349
      %3351 = vrot.lane.b32.xlu0 %v3337, 33
      %v3352 = vpop.permute.xlu0 %3351
      %3353 = vrot.lane.b32.xlu0 %v3338, 33
      %v3354 = vpop.permute.xlu0 %3353
      %3355 = vrot.lane.b32.xlu0 %v3339, 33
      %v3356 = vpop.permute.xlu0 %3355
      %3357 = vrot.lane.b32.xlu0 %v3340, 33
      %v3358 = vpop.permute.xlu0 %3357
      %v3359 = vsel %vm701, %v3348, %v3350
      %v3360 = vsel %vm701, %v3350, %v3352
      %v3361 = vsel %vm701, %v3352, %v3354
      %v3362 = vsel %vm701, %v3354, %v3356
      %v3363 = vsel %vm701, %v3356, %v3358
      %3369 = vst [vmem:[#allocation3 + $0xf0] sm:$0xff] %v3359
      %3370 = vst [vmem:[#allocation3 + $0xf8] sm:$0xff] %v3360
      %3371 = vst [vmem:[#allocation3 + $0x100] sm:$0xff] %v3361
      %3372 = vst [vmem:[#allocation3 + $0x108] sm:$0xff] %v3362
      %3373 = vst [vmem:[#allocation3 + $0x110] sm:$0xff] %v3363
      %v3374 = vld [vmem:[#allocation2] sm:$0xff]
      %v3375 = vld [vmem:[#allocation2 + $0x8] sm:$0xff]
      %v3376 = vld [vmem:[#allocation2 + $0x10] sm:$0xff]
      %v3377 = vld [vmem:[#allocation2 + $0x18] sm:$0xff]
      %v3378 = vld [vmem:[#allocation2 + $0x20] sm:$0xff]
      %v3379 = vld [vmem:[#allocation2 + $0x28] sm:$0xff]
      %3386 = vrot.lane.b32.xlu0 %v3374, 32
      %v3387 = vpop.permute.xlu0 %3386
      %3388 = vrot.lane.b32.xlu0 %v3375, 32
      %v3389 = vpop.permute.xlu0 %3388
      %3390 = vrot.lane.b32.xlu0 %v3376, 32
      %v3391 = vpop.permute.xlu0 %3390
      %3392 = vrot.lane.b32.xlu0 %v3377, 32
      %v3393 = vpop.permute.xlu0 %3392
      %3394 = vrot.lane.b32.xlu0 %v3378, 32
      %v3395 = vpop.permute.xlu0 %3394
      %3396 = vrot.lane.b32.xlu0 %v3379, 32
      %v3397 = vpop.permute.xlu0 %3396
      %v3398 = vsel %vm741, %v3387, %v3389
      %v3399 = vsel %vm741, %v3389, %v3391
      %v3400 = vsel %vm741, %v3391, %v3393
      %v3401 = vsel %vm741, %v3393, %v3395
      %v3402 = vsel %vm741, %v3395, %v3397
      %3408 = vst [vmem:[#allocation3 + $0x118] sm:$0xff] %v3398
      %3409 = vst [vmem:[#allocation3 + $0x120] sm:$0xff] %v3399
      %3410 = vst [vmem:[#allocation3 + $0x128] sm:$0xff] %v3400
      %3411 = vst [vmem:[#allocation3 + $0x130] sm:$0xff] %v3401
      %3412 = vst [vmem:[#allocation3 + $0x138] sm:$0xff] %v3402
      %v3413 = vld [vmem:[#allocation2] sm:$0xff]
      %v3414 = vld [vmem:[#allocation2 + $0x8] sm:$0xff]
      %v3415 = vld [vmem:[#allocation2 + $0x10] sm:$0xff]
      %v3416 = vld [vmem:[#allocation2 + $0x18] sm:$0xff]
      %v3417 = vld [vmem:[#allocation2 + $0x20] sm:$0xff]
      %v3418 = vld [vmem:[#allocation2 + $0x28] sm:$0xff]
      %3425 = vrot.lane.b32.xlu0 %v3413, 31
      %v3426 = vpop.permute.xlu0 %3425
      %3427 = vrot.lane.b32.xlu0 %v3414, 31
      %v3428 = vpop.permute.xlu0 %3427
      %3429 = vrot.lane.b32.xlu0 %v3415, 31
      %v3430 = vpop.permute.xlu0 %3429
      %3431 = vrot.lane.b32.xlu0 %v3416, 31
      %v3432 = vpop.permute.xlu0 %3431
      %3433 = vrot.lane.b32.xlu0 %v3417, 31
      %v3434 = vpop.permute.xlu0 %3433
      %3435 = vrot.lane.b32.xlu0 %v3418, 31
      %v3436 = vpop.permute.xlu0 %3435
      %v3437 = vsel %vm781, %v3426, %v3428
      %v3438 = vsel %vm781, %v3428, %v3430
      %v3439 = vsel %vm781, %v3430, %v3432
      %v3440 = vsel %vm781, %v3432, %v3434
      %v3441 = vsel %vm781, %v3434, %v3436
      %3447 = vst [vmem:[#allocation3 + $0x140] sm:$0xff] %v3437
      %3448 = vst [vmem:[#allocation3 + $0x148] sm:$0xff] %v3438
      %3449 = vst [vmem:[#allocation3 + $0x150] sm:$0xff] %v3439
      %3450 = vst [vmem:[#allocation3 + $0x158] sm:$0xff] %v3440
      %3451 = vst [vmem:[#allocation3 + $0x160] sm:$0xff] %v3441
      %v3452 = vld [vmem:[#allocation2] sm:$0xff]
      %v3453 = vld [vmem:[#allocation2 + $0x8] sm:$0xff]
      %v3454 = vld [vmem:[#allocation2 + $0x10] sm:$0xff]
      %v3455 = vld [vmem:[#allocation2 + $0x18] sm:$0xff]
      %v3456 = vld [vmem:[#allocation2 + $0x20] sm:$0xff]
      %v3457 = vld [vmem:[#allocation2 + $0x28] sm:$0xff]
      %3464 = vrot.lane.b32.xlu0 %v3452, 30
      %v3465 = vpop.permute.xlu0 %3464
      %3466 = vrot.lane.b32.xlu0 %v3453, 30
      %v3467 = vpop.permute.xlu0 %3466
      %3468 = vrot.lane.b32.xlu0 %v3454, 30
      %v3469 = vpop.permute.xlu0 %3468
      %3470 = vrot.lane.b32.xlu0 %v3455, 30
      %v3471 = vpop.permute.xlu0 %3470
      %3472 = vrot.lane.b32.xlu0 %v3456, 30
      %v3473 = vpop.permute.xlu0 %3472
      %3474 = vrot.lane.b32.xlu0 %v3457, 30
      %v3475 = vpop.permute.xlu0 %3474
      %v3476 = vsel %vm821, %v3465, %v3467
      %v3477 = vsel %vm821, %v3467, %v3469
      %v3478 = vsel %vm821, %v3469, %v3471
      %v3479 = vsel %vm821, %v3471, %v3473
      %v3480 = vsel %vm821, %v3473, %v3475
      %3486 = vst [vmem:[#allocation3 + $0x168] sm:$0xff] %v3476
      %3487 = vst [vmem:[#allocation3 + $0x170] sm:$0xff] %v3477
      %3488 = vst [vmem:[#allocation3 + $0x178] sm:$0xff] %v3478
      %3489 = vst [vmem:[#allocation3 + $0x180] sm:$0xff] %v3479
      %3490 = vst [vmem:[#allocation3 + $0x188] sm:$0xff] %v3480
      %v3491 = vld [vmem:[#allocation2] sm:$0xff]
      %v3492 = vld [vmem:[#allocation2 + $0x8] sm:$0xff]
      %v3493 = vld [vmem:[#allocation2 + $0x10] sm:$0xff]
      %v3494 = vld [vmem:[#allocation2 + $0x18] sm:$0xff]
      %v3495 = vld [vmem:[#allocation2 + $0x20] sm:$0xff]
      %v3496 = vld [vmem:[#allocation2 + $0x28] sm:$0xff]
      %3503 = vrot.lane.b32.xlu0 %v3491, 2
      %v3504 = vpop.permute.xlu0 %3503
      %3505 = vrot.lane.b32.xlu0 %v3492, 2
      %v3506 = vpop.permute.xlu0 %3505
      %3507 = vrot.lane.b32.xlu0 %v3493, 2
      %v3508 = vpop.permute.xlu0 %3507
      %3509 = vrot.lane.b32.xlu0 %v3494, 2
      %v3510 = vpop.permute.xlu0 %3509
      %3511 = vrot.lane.b32.xlu0 %v3495, 2
      %v3512 = vpop.permute.xlu0 %3511
      %3513 = vrot.lane.b32.xlu0 %v3496, 2
      %v3514 = vpop.permute.xlu0 %3513
      %v3515 = vsel %vm861, %v3504, %v3506
      %v3516 = vsel %vm861, %v3506, %v3508
      %v3517 = vsel %vm861, %v3508, %v3510
      %v3518 = vsel %vm861, %v3510, %v3512
      %v3519 = vsel %vm861, %v3512, %v3514
      %3525 = vst [vmem:[#allocation3 + $0x190] sm:$0xff] %v3515
      %3526 = vst [vmem:[#allocation3 + $0x198] sm:$0xff] %v3516
      %3527 = vst [vmem:[#allocation3 + $0x1a0] sm:$0xff] %v3517
      %3528 = vst [vmem:[#allocation3 + $0x1a8] sm:$0xff] %v3518
      %3529 = vst [vmem:[#allocation3 + $0x1b0] sm:$0xff] %v3519
      %v3530 = vld [vmem:[#allocation2] sm:$0xff]
      %v3531 = vld [vmem:[#allocation2 + $0x8] sm:$0xff]
      %v3532 = vld [vmem:[#allocation2 + $0x10] sm:$0xff]
      %v3533 = vld [vmem:[#allocation2 + $0x18] sm:$0xff]
      %v3534 = vld [vmem:[#allocation2 + $0x20] sm:$0xff]
      %v3535 = vld [vmem:[#allocation2 + $0x28] sm:$0xff]
      %3542 = vrot.lane.b32.xlu0 %v3530, 1
      %v3543 = vpop.permute.xlu0 %3542
      %3544 = vrot.lane.b32.xlu0 %v3531, 1
      %v3545 = vpop.permute.xlu0 %3544
      %3546 = vrot.lane.b32.xlu0 %v3532, 1
      %v3547 = vpop.permute.xlu0 %3546
      %3548 = vrot.lane.b32.xlu0 %v3533, 1
      %v3549 = vpop.permute.xlu0 %3548
      %3550 = vrot.lane.b32.xlu0 %v3534, 1
      %v3551 = vpop.permute.xlu0 %3550
      %3552 = vrot.lane.b32.xlu0 %v3535, 1
      %v3553 = vpop.permute.xlu0 %3552
      %v3554 = vsel %vm901, %v3543, %v3545
      %v3555 = vsel %vm901, %v3545, %v3547
      %v3556 = vsel %vm901, %v3547, %v3549
      %v3557 = vsel %vm901, %v3549, %v3551
      %v3558 = vsel %vm901, %v3551, %v3553
      %3564 = vst [vmem:[#allocation3 + $0x1b8] sm:$0xff] %v3554
      %3565 = vst [vmem:[#allocation3 + $0x1c0] sm:$0xff] %v3555
      %3566 = vst [vmem:[#allocation3 + $0x1c8] sm:$0xff] %v3556
      %3567 = vst [vmem:[#allocation3 + $0x1d0] sm:$0xff] %v3557
      %3568 = vst [vmem:[#allocation3 + $0x1d8] sm:$0xff] %v3558
      %v3569 = vld [vmem:[#allocation2 + $0x8] sm:$0xff]
      %v3570 = vld [vmem:[#allocation2 + $0x10] sm:$0xff]
      %v3571 = vld [vmem:[#allocation2 + $0x18] sm:$0xff]
      %v3572 = vld [vmem:[#allocation2 + $0x20] sm:$0xff]
      %v3573 = vld [vmem:[#allocation2 + $0x28] sm:$0xff]
      %3574 = vst [vmem:[#allocation3 + $0x1e0] sm:$0xff] %v3569
      %3575 = vst [vmem:[#allocation3 + $0x1e8] sm:$0xff] %v3570
      %3576 = vst [vmem:[#allocation3 + $0x1f0] sm:$0xff] %v3571
      %3577 = vst [vmem:[#allocation3 + $0x1f8] sm:$0xff] %v3572
      %3578 = vst [vmem:[#allocation3 + $0x200] sm:$0xff] %v3573
      %v3579 = vld [vmem:[#allocation2 + $0x8] sm:$0xff]
      %v3580 = vld [vmem:[#allocation2 + $0x10] sm:$0xff]
      %v3581 = vld [vmem:[#allocation2 + $0x18] sm:$0xff]
      %v3582 = vld [vmem:[#allocation2 + $0x20] sm:$0xff]
      %v3583 = vld [vmem:[#allocation2 + $0x28] sm:$0xff]
      %v3584 = vld [vmem:[#allocation2 + $0x30] sm:$0xff]
      %3591 = vrot.lane.b32.xlu0 %v3579, 127
      %v3592 = vpop.permute.xlu0 %3591
      %3593 = vrot.lane.b32.xlu0 %v3580, 127
      %v3594 = vpop.permute.xlu0 %3593
      %3595 = vrot.lane.b32.xlu0 %v3581, 127
      %v3596 = vpop.permute.xlu0 %3595
      %3597 = vrot.lane.b32.xlu0 %v3582, 127
      %v3598 = vpop.permute.xlu0 %3597
      %3599 = vrot.lane.b32.xlu0 %v3583, 127
      %v3600 = vpop.permute.xlu0 %3599
      %3601 = vrot.lane.b32.xlu0 %v3584, 127
      %v3602 = vpop.permute.xlu0 %3601
      %v3603 = vsel %vm951, %v3592, %v3594
      %v3604 = vsel %vm951, %v3594, %v3596
      %v3605 = vsel %vm951, %v3596, %v3598
      %v3606 = vsel %vm951, %v3598, %v3600
      %v3607 = vsel %vm951, %v3600, %v3602
      %3613 = vst [vmem:[#allocation3 + $0x208] sm:$0xff] %v3603
      %3614 = vst [vmem:[#allocation3 + $0x210] sm:$0xff] %v3604
      %3615 = vst [vmem:[#allocation3 + $0x218] sm:$0xff] %v3605
      %3616 = vst [vmem:[#allocation3 + $0x220] sm:$0xff] %v3606
      %3617 = vst [vmem:[#allocation3 + $0x228] sm:$0xff] %v3607
      %v3618 = vld [vmem:[#allocation2 + $0x8] sm:$0xff]
      %v3619 = vld [vmem:[#allocation2 + $0x10] sm:$0xff]
      %v3620 = vld [vmem:[#allocation2 + $0x18] sm:$0xff]
      %v3621 = vld [vmem:[#allocation2 + $0x20] sm:$0xff]
      %v3622 = vld [vmem:[#allocation2 + $0x28] sm:$0xff]
      %v3623 = vld [vmem:[#allocation2 + $0x30] sm:$0xff]
      %3630 = vrot.lane.b32.xlu0 %v3618, 126
      %v3631 = vpop.permute.xlu0 %3630
      %3632 = vrot.lane.b32.xlu0 %v3619, 126
      %v3633 = vpop.permute.xlu0 %3632
      %3634 = vrot.lane.b32.xlu0 %v3620, 126
      %v3635 = vpop.permute.xlu0 %3634
      %3636 = vrot.lane.b32.xlu0 %v3621, 126
      %v3637 = vpop.permute.xlu0 %3636
      %3638 = vrot.lane.b32.xlu0 %v3622, 126
      %v3639 = vpop.permute.xlu0 %3638
      %3640 = vrot.lane.b32.xlu0 %v3623, 126
      %v3641 = vpop.permute.xlu0 %3640
      %v3642 = vsel %vm991, %v3631, %v3633
      %v3643 = vsel %vm991, %v3633, %v3635
      %v3644 = vsel %vm991, %v3635, %v3637
      %v3645 = vsel %vm991, %v3637, %v3639
      %v3646 = vsel %vm991, %v3639, %v3641
      %3652 = vst [vmem:[#allocation3 + $0x230] sm:$0xff] %v3642
      %3653 = vst [vmem:[#allocation3 + $0x238] sm:$0xff] %v3643
      %3654 = vst [vmem:[#allocation3 + $0x240] sm:$0xff] %v3644
      %3655 = vst [vmem:[#allocation3 + $0x248] sm:$0xff] %v3645
      %3656 = vst [vmem:[#allocation3 + $0x250] sm:$0xff] %v3646
      %v3657 = vld [vmem:[#allocation2 + $0x8] sm:$0xff]
      %v3658 = vld [vmem:[#allocation2 + $0x10] sm:$0xff]
      %v3659 = vld [vmem:[#allocation2 + $0x18] sm:$0xff]
      %v3660 = vld [vmem:[#allocation2 + $0x20] sm:$0xff]
      %v3661 = vld [vmem:[#allocation2 + $0x28] sm:$0xff]
      %v3662 = vld [vmem:[#allocation2 + $0x30] sm:$0xff]
      %3669 = vrot.lane.b32.xlu0 %v3657, 98
      %v3670 = vpop.permute.xlu0 %3669
      %3671 = vrot.lane.b32.xlu0 %v3658, 98
      %v3672 = vpop.permute.xlu0 %3671
      %3673 = vrot.lane.b32.xlu0 %v3659, 98
      %v3674 = vpop.permute.xlu0 %3673
      %3675 = vrot.lane.b32.xlu0 %v3660, 98
      %v3676 = vpop.permute.xlu0 %3675
      %3677 = vrot.lane.b32.xlu0 %v3661, 98
      %v3678 = vpop.permute.xlu0 %3677
      %3679 = vrot.lane.b32.xlu0 %v3662, 98
      %v3680 = vpop.permute.xlu0 %3679
      %v3681 = vsel %vm1031, %v3670, %v3672
      %v3682 = vsel %vm1031, %v3672, %v3674
      %v3683 = vsel %vm1031, %v3674, %v3676
      %v3684 = vsel %vm1031, %v3676, %v3678
      %v3685 = vsel %vm1031, %v3678, %v3680
      %3691 = vst [vmem:[#allocation3 + $0x258] sm:$0xff] %v3681
      %3692 = vst [vmem:[#allocation3 + $0x260] sm:$0xff] %v3682
      %3693 = vst [vmem:[#allocation3 + $0x268] sm:$0xff] %v3683
      %3694 = vst [vmem:[#allocation3 + $0x270] sm:$0xff] %v3684
      %3695 = vst [vmem:[#allocation3 + $0x278] sm:$0xff] %v3685
      %v3696 = vld [vmem:[#allocation2 + $0x8] sm:$0xff]
      %v3697 = vld [vmem:[#allocation2 + $0x10] sm:$0xff]
      %v3698 = vld [vmem:[#allocation2 + $0x18] sm:$0xff]
      %v3699 = vld [vmem:[#allocation2 + $0x20] sm:$0xff]
      %v3700 = vld [vmem:[#allocation2 + $0x28] sm:$0xff]
      %v3701 = vld [vmem:[#allocation2 + $0x30] sm:$0xff]
      %3708 = vrot.lane.b32.xlu0 %v3696, 97
      %v3709 = vpop.permute.xlu0 %3708
      %3710 = vrot.lane.b32.xlu0 %v3697, 97
      %v3711 = vpop.permute.xlu0 %3710
      %3712 = vrot.lane.b32.xlu0 %v3698, 97
      %v3713 = vpop.permute.xlu0 %3712
      %3714 = vrot.lane.b32.xlu0 %v3699, 97
      %v3715 = vpop.permute.xlu0 %3714
      %3716 = vrot.lane.b32.xlu0 %v3700, 97
      %v3717 = vpop.permute.xlu0 %3716
      %3718 = vrot.lane.b32.xlu0 %v3701, 97
      %v3719 = vpop.permute.xlu0 %3718
      %v3720 = vsel %vm1071, %v3709, %v3711
      %v3721 = vsel %vm1071, %v3711, %v3713
      %v3722 = vsel %vm1071, %v3713, %v3715
      %v3723 = vsel %vm1071, %v3715, %v3717
      %v3724 = vsel %vm1071, %v3717, %v3719
      %3730 = vst [vmem:[#allocation3 + $0x280] sm:$0xff] %v3720
      %3731 = vst [vmem:[#allocation3 + $0x288] sm:$0xff] %v3721
      %3732 = vst [vmem:[#allocation3 + $0x290] sm:$0xff] %v3722
      %3733 = vst [vmem:[#allocation3 + $0x298] sm:$0xff] %v3723
      %3734 = vst [vmem:[#allocation3 + $0x2a0] sm:$0xff] %v3724
      %v3735 = vld [vmem:[#allocation2 + $0x8] sm:$0xff]
      %v3736 = vld [vmem:[#allocation2 + $0x10] sm:$0xff]
      %v3737 = vld [vmem:[#allocation2 + $0x18] sm:$0xff]
      %v3738 = vld [vmem:[#allocation2 + $0x20] sm:$0xff]
      %v3739 = vld [vmem:[#allocation2 + $0x28] sm:$0xff]
      %v3740 = vld [vmem:[#allocation2 + $0x30] sm:$0xff]
      %3747 = vrot.lane.b32.xlu0 %v3735, 96
      %v3748 = vpop.permute.xlu0 %3747
      %3749 = vrot.lane.b32.xlu0 %v3736, 96
      %v3750 = vpop.permute.xlu0 %3749
      %3751 = vrot.lane.b32.xlu0 %v3737, 96
      %v3752 = vpop.permute.xlu0 %3751
      %3753 = vrot.lane.b32.xlu0 %v3738, 96
      %v3754 = vpop.permute.xlu0 %3753
      %3755 = vrot.lane.b32.xlu0 %v3739, 96
      %v3756 = vpop.permute.xlu0 %3755
      %3757 = vrot.lane.b32.xlu0 %v3740, 96
      %v3758 = vpop.permute.xlu0 %3757
      %v3759 = vsel %vm1111, %v3748, %v3750
      %v3760 = vsel %vm1111, %v3750, %v3752
      %v3761 = vsel %vm1111, %v3752, %v3754
      %v3762 = vsel %vm1111, %v3754, %v3756
      %v3763 = vsel %vm1111, %v3756, %v3758
      %3769 = vst [vmem:[#allocation3 + $0x2a8] sm:$0xff] %v3759
      %3770 = vst [vmem:[#allocation3 + $0x2b0] sm:$0xff] %v3760
      %3771 = vst [vmem:[#allocation3 + $0x2b8] sm:$0xff] %v3761
      %3772 = vst [vmem:[#allocation3 + $0x2c0] sm:$0xff] %v3762
      %3773 = vst [vmem:[#allocation3 + $0x2c8] sm:$0xff] %v3763
      %v3774 = vld [vmem:[#allocation2 + $0x8] sm:$0xff]
      %v3775 = vld [vmem:[#allocation2 + $0x10] sm:$0xff]
      %v3776 = vld [vmem:[#allocation2 + $0x18] sm:$0xff]
      %v3777 = vld [vmem:[#allocation2 + $0x20] sm:$0xff]
      %v3778 = vld [vmem:[#allocation2 + $0x28] sm:$0xff]
      %v3779 = vld [vmem:[#allocation2 + $0x30] sm:$0xff]
      %3786 = vrot.lane.b32.xlu0 %v3774, 95
      %v3787 = vpop.permute.xlu0 %3786
      %3788 = vrot.lane.b32.xlu0 %v3775, 95
      %v3789 = vpop.permute.xlu0 %3788
      %3790 = vrot.lane.b32.xlu0 %v3776, 95
      %v3791 = vpop.permute.xlu0 %3790
      %3792 = vrot.lane.b32.xlu0 %v3777, 95
      %v3793 = vpop.permute.xlu0 %3792
      %3794 = vrot.lane.b32.xlu0 %v3778, 95
      %v3795 = vpop.permute.xlu0 %3794
      %3796 = vrot.lane.b32.xlu0 %v3779, 95
      %v3797 = vpop.permute.xlu0 %3796
      %v3798 = vsel %vm1151, %v3787, %v3789
      %v3799 = vsel %vm1151, %v3789, %v3791
      %v3800 = vsel %vm1151, %v3791, %v3793
      %v3801 = vsel %vm1151, %v3793, %v3795
      %v3802 = vsel %vm1151, %v3795, %v3797
      %3808 = vst [vmem:[#allocation3 + $0x2d0] sm:$0xff] %v3798
      %3809 = vst [vmem:[#allocation3 + $0x2d8] sm:$0xff] %v3799
      %3810 = vst [vmem:[#allocation3 + $0x2e0] sm:$0xff] %v3800
      %3811 = vst [vmem:[#allocation3 + $0x2e8] sm:$0xff] %v3801
      %3812 = vst [vmem:[#allocation3 + $0x2f0] sm:$0xff] %v3802
      %v3813 = vld [vmem:[#allocation2 + $0x8] sm:$0xff]
      %v3814 = vld [vmem:[#allocation2 + $0x10] sm:$0xff]
      %v3815 = vld [vmem:[#allocation2 + $0x18] sm:$0xff]
      %v3816 = vld [vmem:[#allocation2 + $0x20] sm:$0xff]
      %v3817 = vld [vmem:[#allocation2 + $0x28] sm:$0xff]
      %v3818 = vld [vmem:[#allocation2 + $0x30] sm:$0xff]
      %3825 = vrot.lane.b32.xlu0 %v3813, 94
      %v3826 = vpop.permute.xlu0 %3825
      %3827 = vrot.lane.b32.xlu0 %v3814, 94
      %v3828 = vpop.permute.xlu0 %3827
      %3829 = vrot.lane.b32.xlu0 %v3815, 94
      %v3830 = vpop.permute.xlu0 %3829
      %3831 = vrot.lane.b32.xlu0 %v3816, 94
      %v3832 = vpop.permute.xlu0 %3831
      %3833 = vrot.lane.b32.xlu0 %v3817, 94
      %v3834 = vpop.permute.xlu0 %3833
      %3835 = vrot.lane.b32.xlu0 %v3818, 94
      %v3836 = vpop.permute.xlu0 %3835
      %v3837 = vsel %vm1191, %v3826, %v3828
      %v3838 = vsel %vm1191, %v3828, %v3830
      %v3839 = vsel %vm1191, %v3830, %v3832
      %v3840 = vsel %vm1191, %v3832, %v3834
      %v3841 = vsel %vm1191, %v3834, %v3836
      %3847 = vst [vmem:[#allocation3 + $0x2f8] sm:$0xff] %v3837
      %3848 = vst [vmem:[#allocation3 + $0x300] sm:$0xff] %v3838
      %3849 = vst [vmem:[#allocation3 + $0x308] sm:$0xff] %v3839
      %3850 = vst [vmem:[#allocation3 + $0x310] sm:$0xff] %v3840
      %3851 = vst [vmem:[#allocation3 + $0x318] sm:$0xff] %v3841
      %v3852 = vld [vmem:[#allocation2 + $0x8] sm:$0xff]
      %v3853 = vld [vmem:[#allocation2 + $0x10] sm:$0xff]
      %v3854 = vld [vmem:[#allocation2 + $0x18] sm:$0xff]
      %v3855 = vld [vmem:[#allocation2 + $0x20] sm:$0xff]
      %v3856 = vld [vmem:[#allocation2 + $0x28] sm:$0xff]
      %v3857 = vld [vmem:[#allocation2 + $0x30] sm:$0xff]
      %3864 = vrot.lane.b32.xlu0 %v3852, 66
      %v3865 = vpop.permute.xlu0 %3864
      %3866 = vrot.lane.b32.xlu0 %v3853, 66
      %v3867 = vpop.permute.xlu0 %3866
      %3868 = vrot.lane.b32.xlu0 %v3854, 66
      %v3869 = vpop.permute.xlu0 %3868
      %3870 = vrot.lane.b32.xlu0 %v3855, 66
      %v3871 = vpop.permute.xlu0 %3870
      %3872 = vrot.lane.b32.xlu0 %v3856, 66
      %v3873 = vpop.permute.xlu0 %3872
      %3874 = vrot.lane.b32.xlu0 %v3857, 66
      %v3875 = vpop.permute.xlu0 %3874
      %v3876 = vsel %vm461, %v3865, %v3867
      %v3877 = vsel %vm461, %v3867, %v3869
      %v3878 = vsel %vm461, %v3869, %v3871
      %v3879 = vsel %vm461, %v3871, %v3873
      %v3880 = vsel %vm461, %v3873, %v3875
      %3886 = vst [vmem:[#allocation3 + $0x320] sm:$0xff] %v3876
      %3887 = vst [vmem:[#allocation3 + $0x328] sm:$0xff] %v3877
      %3888 = vst [vmem:[#allocation3 + $0x330] sm:$0xff] %v3878
      %3889 = vst [vmem:[#allocation3 + $0x338] sm:$0xff] %v3879
      %3890 = vst [vmem:[#allocation3 + $0x340] sm:$0xff] %v3880
      %v3891 = vld [vmem:[#allocation2 + $0x8] sm:$0xff]
      %v3892 = vld [vmem:[#allocation2 + $0x10] sm:$0xff]
      %v3893 = vld [vmem:[#allocation2 + $0x18] sm:$0xff]
      %v3894 = vld [vmem:[#allocation2 + $0x20] sm:$0xff]
      %v3895 = vld [vmem:[#allocation2 + $0x28] sm:$0xff]
      %v3896 = vld [vmem:[#allocation2 + $0x30] sm:$0xff]
      %3903 = vrot.lane.b32.xlu0 %v3891, 65
      %v3904 = vpop.permute.xlu0 %3903
      %3905 = vrot.lane.b32.xlu0 %v3892, 65
      %v3906 = vpop.permute.xlu0 %3905
      %3907 = vrot.lane.b32.xlu0 %v3893, 65
      %v3908 = vpop.permute.xlu0 %3907
      %3909 = vrot.lane.b32.xlu0 %v3894, 65
      %v3910 = vpop.permute.xlu0 %3909
      %3911 = vrot.lane.b32.xlu0 %v3895, 65
      %v3912 = vpop.permute.xlu0 %3911
      %3913 = vrot.lane.b32.xlu0 %v3896, 65
      %v3914 = vpop.permute.xlu0 %3913
      %v3915 = vsel %vm501, %v3904, %v3906
      %v3916 = vsel %vm501, %v3906, %v3908
      %v3917 = vsel %vm501, %v3908, %v3910
      %v3918 = vsel %vm501, %v3910, %v3912
      %v3919 = vsel %vm501, %v3912, %v3914
      %3925 = vst [vmem:[#allocation3 + $0x348] sm:$0xff] %v3915
      %3926 = vst [vmem:[#allocation3 + $0x350] sm:$0xff] %v3916
      %3927 = vst [vmem:[#allocation3 + $0x358] sm:$0xff] %v3917
      %3928 = vst [vmem:[#allocation3 + $0x360] sm:$0xff] %v3918
      %3929 = vst [vmem:[#allocation3 + $0x368] sm:$0xff] %v3919
      %v3930 = vld [vmem:[#allocation2 + $0x8] sm:$0xff]
      %v3931 = vld [vmem:[#allocation2 + $0x10] sm:$0xff]
      %v3932 = vld [vmem:[#allocation2 + $0x18] sm:$0xff]
      %v3933 = vld [vmem:[#allocation2 + $0x20] sm:$0xff]
      %v3934 = vld [vmem:[#allocation2 + $0x28] sm:$0xff]
      %v3935 = vld [vmem:[#allocation2 + $0x30] sm:$0xff]
      %3942 = vrot.lane.b32.xlu0 %v3930, 64
      %v3943 = vpop.permute.xlu0 %3942
      %3944 = vrot.lane.b32.xlu0 %v3931, 64
      %v3945 = vpop.permute.xlu0 %3944
      %3946 = vrot.lane.b32.xlu0 %v3932, 64
      %v3947 = vpop.permute.xlu0 %3946
      %3948 = vrot.lane.b32.xlu0 %v3933, 64
      %v3949 = vpop.permute.xlu0 %3948
      %3950 = vrot.lane.b32.xlu0 %v3934, 64
      %v3951 = vpop.permute.xlu0 %3950
      %3952 = vrot.lane.b32.xlu0 %v3935, 64
      %v3953 = vpop.permute.xlu0 %3952
      %v3954 = vsel %vm541, %v3943, %v3945
      %v3955 = vsel %vm541, %v3945, %v3947
      %v3956 = vsel %vm541, %v3947, %v3949
      %v3957 = vsel %vm541, %v3949, %v3951
      %v3958 = vsel %vm541, %v3951, %v3953
      %3964 = vst [vmem:[#allocation3 + $0x370] sm:$0xff] %v3954
      %3965 = vst [vmem:[#allocation3 + $0x378] sm:$0xff] %v3955
      %3966 = vst [vmem:[#allocation3 + $0x380] sm:$0xff] %v3956
      %3967 = vst [vmem:[#allocation3 + $0x388] sm:$0xff] %v3957
      %3968 = vst [vmem:[#allocation3 + $0x390] sm:$0xff] %v3958
      %v3969 = vld [vmem:[#allocation2 + $0x8] sm:$0xff]
      %v3970 = vld [vmem:[#allocation2 + $0x10] sm:$0xff]
      %v3971 = vld [vmem:[#allocation2 + $0x18] sm:$0xff]
      %v3972 = vld [vmem:[#allocation2 + $0x20] sm:$0xff]
      %v3973 = vld [vmem:[#allocation2 + $0x28] sm:$0xff]
      %v3974 = vld [vmem:[#allocation2 + $0x30] sm:$0xff]
      %3981 = vrot.lane.b32.xlu0 %v3969, 63
      %v3982 = vpop.permute.xlu0 %3981
      %3983 = vrot.lane.b32.xlu0 %v3970, 63
      %v3984 = vpop.permute.xlu0 %3983
      %3985 = vrot.lane.b32.xlu0 %v3971, 63
      %v3986 = vpop.permute.xlu0 %3985
      %3987 = vrot.lane.b32.xlu0 %v3972, 63
      %v3988 = vpop.permute.xlu0 %3987
      %3989 = vrot.lane.b32.xlu0 %v3973, 63
      %v3990 = vpop.permute.xlu0 %3989
      %3991 = vrot.lane.b32.xlu0 %v3974, 63
      %v3992 = vpop.permute.xlu0 %3991
      %v3993 = vsel %vm581, %v3982, %v3984
      %v3994 = vsel %vm581, %v3984, %v3986
      %v3995 = vsel %vm581, %v3986, %v3988
      %v3996 = vsel %vm581, %v3988, %v3990
      %v3997 = vsel %vm581, %v3990, %v3992
      %4003 = vst [vmem:[#allocation3 + $0x398] sm:$0xff] %v3993
      %4004 = vst [vmem:[#allocation3 + $0x3a0] sm:$0xff] %v3994
      %4005 = vst [vmem:[#allocation3 + $0x3a8] sm:$0xff] %v3995
      %4006 = vst [vmem:[#allocation3 + $0x3b0] sm:$0xff] %v3996
      %4007 = vst [vmem:[#allocation3 + $0x3b8] sm:$0xff] %v3997
      %v4008 = vld [vmem:[#allocation2 + $0x8] sm:$0xff]
      %v4009 = vld [vmem:[#allocation2 + $0x10] sm:$0xff]
      %v4010 = vld [vmem:[#allocation2 + $0x18] sm:$0xff]
      %v4011 = vld [vmem:[#allocation2 + $0x20] sm:$0xff]
      %v4012 = vld [vmem:[#allocation2 + $0x28] sm:$0xff]
      %v4013 = vld [vmem:[#allocation2 + $0x30] sm:$0xff]
      %4020 = vrot.lane.b32.xlu0 %v4008, 62
      %v4021 = vpop.permute.xlu0 %4020
      %4022 = vrot.lane.b32.xlu0 %v4009, 62
      %v4023 = vpop.permute.xlu0 %4022
      %4024 = vrot.lane.b32.xlu0 %v4010, 62
      %v4025 = vpop.permute.xlu0 %4024
      %4026 = vrot.lane.b32.xlu0 %v4011, 62
      %v4027 = vpop.permute.xlu0 %4026
      %4028 = vrot.lane.b32.xlu0 %v4012, 62
      %v4029 = vpop.permute.xlu0 %4028
      %4030 = vrot.lane.b32.xlu0 %v4013, 62
      %v4031 = vpop.permute.xlu0 %4030
      %v4032 = vsel %vm621, %v4021, %v4023
      %v4033 = vsel %vm621, %v4023, %v4025
      %v4034 = vsel %vm621, %v4025, %v4027
      %v4035 = vsel %vm621, %v4027, %v4029
      %v4036 = vsel %vm621, %v4029, %v4031
      %4042 = vst [vmem:[#allocation3 + $0x3c0] sm:$0xff] %v4032
      %4043 = vst [vmem:[#allocation3 + $0x3c8] sm:$0xff] %v4033
      %4044 = vst [vmem:[#allocation3 + $0x3d0] sm:$0xff] %v4034
      %4045 = vst [vmem:[#allocation3 + $0x3d8] sm:$0xff] %v4035
      %4046 = vst [vmem:[#allocation3 + $0x3e0] sm:$0xff] %v4036
      %v4047 = vld [vmem:[%s6] sm:$0xff]
      %v4048 = vld [vmem:[%s6 + $0x8] sm:$0xff]
      %v4049 = vld [vmem:[%s6 + $0x10] sm:$0xff]
      %v4050 = vld [vmem:[%s6 + $0x18] sm:$0xff]
      %v4051 = vld [vmem:[#allocation3] sm:$0xff]
      %v4052 = vld [vmem:[#allocation3 + $0x8] sm:$0xff]
      %v4053 = vld [vmem:[#allocation3 + $0x10] sm:$0xff]
      %v4054 = vld [vmem:[#allocation3 + $0x18] sm:$0xff]
      %v4055 = vld [vmem:[#allocation3 + $0x20] sm:$0xff]
      %v4056 = vld [vmem:[#allocation3 + $0x28] sm:$0xff]
      %v4057 = vld [vmem:[#allocation3 + $0x30] sm:$0xff]
      %v4058 = vld [vmem:[#allocation3 + $0x38] sm:$0xff]
      %v4059 = vld [vmem:[#allocation3 + $0x40] sm:$0xff]
      %v4060 = vld [vmem:[#allocation3 + $0x48] sm:$0xff]
      %v4061 = vld [vmem:[#allocation3 + $0x50] sm:$0xff]
      %v4062 = vld [vmem:[#allocation3 + $0x58] sm:$0xff]
      %v4063 = vld [vmem:[#allocation3 + $0x60] sm:$0xff]
      %v4064 = vld [vmem:[#allocation3 + $0x68] sm:$0xff]
      %v4065 = vld [vmem:[#allocation3 + $0x70] sm:$0xff]
      %v4066 = vld [vmem:[#allocation3 + $0x78] sm:$0xff]
      %v4067 = vld [vmem:[#allocation3 + $0x80] sm:$0xff]
      %v4068 = vld [vmem:[#allocation3 + $0x88] sm:$0xff]
      %v4069 = vld [vmem:[#allocation3 + $0x90] sm:$0xff]
      %v4070 = vld [vmem:[#allocation3 + $0x98] sm:$0xff]
      %v4071 = vld [vmem:[#allocation3 + $0xa0] sm:$0xff]
      %v4072 = vld [vmem:[#allocation3 + $0xa8] sm:$0xff]
      %v4073 = vld [vmem:[#allocation3 + $0xb0] sm:$0xff]
      %v4074 = vld [vmem:[#allocation3 + $0xb8] sm:$0xff]
      %v4075 = vld [vmem:[#allocation3 + $0xc0] sm:$0xff]
      %v4076 = vld [vmem:[#allocation3 + $0xc8] sm:$0xff]
      %v4077 = vld [vmem:[#allocation3 + $0xd0] sm:$0xff]
      %v4078 = vld [vmem:[#allocation3 + $0xd8] sm:$0xff]
      %v4079 = vld [vmem:[#allocation3 + $0xe0] sm:$0xff]
      %v4080 = vld [vmem:[#allocation3 + $0xe8] sm:$0xff]
      %v4081 = vld [vmem:[#allocation3 + $0xf0] sm:$0xff]
      %v4082 = vld [vmem:[#allocation3 + $0xf8] sm:$0xff]
      %v4083 = vld [vmem:[#allocation3 + $0x100] sm:$0xff]
      %v4084 = vld [vmem:[#allocation3 + $0x108] sm:$0xff]
      %v4085 = vld [vmem:[#allocation3 + $0x110] sm:$0xff]
      %v4086 = vld [vmem:[#allocation3 + $0x118] sm:$0xff]
      %v4087 = vld [vmem:[#allocation3 + $0x120] sm:$0xff]
      %v4088 = vld [vmem:[#allocation3 + $0x128] sm:$0xff]
      %v4089 = vld [vmem:[#allocation3 + $0x130] sm:$0xff]
      %v4090 = vld [vmem:[#allocation3 + $0x138] sm:$0xff]
      %v4091 = vld [vmem:[#allocation3 + $0x140] sm:$0xff]
      %v4092 = vld [vmem:[#allocation3 + $0x148] sm:$0xff]
      %v4093 = vld [vmem:[#allocation3 + $0x150] sm:$0xff]
      %v4094 = vld [vmem:[#allocation3 + $0x158] sm:$0xff]
      %v4095 = vld [vmem:[#allocation3 + $0x160] sm:$0xff]
      %v4096 = vld [vmem:[#allocation3 + $0x168] sm:$0xff]
      %v4097 = vld [vmem:[#allocation3 + $0x170] sm:$0xff]
      %v4098 = vld [vmem:[#allocation3 + $0x178] sm:$0xff]
      %v4099 = vld [vmem:[#allocation3 + $0x180] sm:$0xff]
      %v4100 = vld [vmem:[#allocation3 + $0x188] sm:$0xff]
      %v4101 = vld [vmem:[#allocation3 + $0x190] sm:$0xff]
      %v4102 = vld [vmem:[#allocation3 + $0x198] sm:$0xff]
      %v4103 = vld [vmem:[#allocation3 + $0x1a0] sm:$0xff]
      %v4104 = vld [vmem:[#allocation3 + $0x1a8] sm:$0xff]
      %v4105 = vld [vmem:[#allocation3 + $0x1b0] sm:$0xff]
      %v4106 = vld [vmem:[#allocation3 + $0x1b8] sm:$0xff]
      %v4107 = vld [vmem:[#allocation3 + $0x1c0] sm:$0xff]
      %v4108 = vld [vmem:[#allocation3 + $0x1c8] sm:$0xff]
      %v4109 = vld [vmem:[#allocation3 + $0x1d0] sm:$0xff]
      %v4110 = vld [vmem:[#allocation3 + $0x1d8] sm:$0xff]
      %v4111 = vld [vmem:[#allocation3 + $0x1e0] sm:$0xff]
      %v4112 = vld [vmem:[#allocation3 + $0x1e8] sm:$0xff]
      %v4113 = vld [vmem:[#allocation3 + $0x1f0] sm:$0xff]
      %v4114 = vld [vmem:[#allocation3 + $0x1f8] sm:$0xff]
      %v4115 = vld [vmem:[#allocation3 + $0x200] sm:$0xff]
      %v4116 = vld [vmem:[#allocation3 + $0x208] sm:$0xff]
      %v4117 = vld [vmem:[#allocation3 + $0x210] sm:$0xff]
      %v4118 = vld [vmem:[#allocation3 + $0x218] sm:$0xff]
      %v4119 = vld [vmem:[#allocation3 + $0x220] sm:$0xff]
      %v4120 = vld [vmem:[#allocation3 + $0x228] sm:$0xff]
      %v4121 = vld [vmem:[#allocation3 + $0x230] sm:$0xff]
      %v4122 = vld [vmem:[#allocation3 + $0x238] sm:$0xff]
      %v4123 = vld [vmem:[#allocation3 + $0x240] sm:$0xff]
      %v4124 = vld [vmem:[#allocation3 + $0x248] sm:$0xff]
      %v4125 = vld [vmem:[#allocation3 + $0x250] sm:$0xff]
      %v4126 = vld [vmem:[#allocation3 + $0x258] sm:$0xff]
      %v4127 = vld [vmem:[#allocation3 + $0x260] sm:$0xff]
      %v4128 = vld [vmem:[#allocation3 + $0x268] sm:$0xff]
      %v4129 = vld [vmem:[#allocation3 + $0x270] sm:$0xff]
      %v4130 = vld [vmem:[#allocation3 + $0x278] sm:$0xff]
      %v4131 = vld [vmem:[#allocation3 + $0x280] sm:$0xff]
      %v4132 = vld [vmem:[#allocation3 + $0x288] sm:$0xff]
      %v4133 = vld [vmem:[#allocation3 + $0x290] sm:$0xff]
      %v4134 = vld [vmem:[#allocation3 + $0x298] sm:$0xff]
      %v4135 = vld [vmem:[#allocation3 + $0x2a0] sm:$0xff]
      %v4136 = vld [vmem:[#allocation3 + $0x2a8] sm:$0xff]
      %v4137 = vld [vmem:[#allocation3 + $0x2b0] sm:$0xff]
      %v4138 = vld [vmem:[#allocation3 + $0x2b8] sm:$0xff]
      %v4139 = vld [vmem:[#allocation3 + $0x2c0] sm:$0xff]
      %v4140 = vld [vmem:[#allocation3 + $0x2c8] sm:$0xff]
      %v4141 = vld [vmem:[#allocation3 + $0x2d0] sm:$0xff]
      %v4142 = vld [vmem:[#allocation3 + $0x2d8] sm:$0xff]
      %v4143 = vld [vmem:[#allocation3 + $0x2e0] sm:$0xff]
      %v4144 = vld [vmem:[#allocation3 + $0x2e8] sm:$0xff]
      %v4145 = vld [vmem:[#allocation3 + $0x2f0] sm:$0xff]
      %v4146 = vld [vmem:[#allocation3 + $0x2f8] sm:$0xff]
      %v4147 = vld [vmem:[#allocation3 + $0x300] sm:$0xff]
      %v4148 = vld [vmem:[#allocation3 + $0x308] sm:$0xff]
      %v4149 = vld [vmem:[#allocation3 + $0x310] sm:$0xff]
      %v4150 = vld [vmem:[#allocation3 + $0x318] sm:$0xff]
      %v4151 = vld [vmem:[#allocation3 + $0x320] sm:$0xff]
      %v4152 = vld [vmem:[#allocation3 + $0x328] sm:$0xff]
      %v4153 = vld [vmem:[#allocation3 + $0x330] sm:$0xff]
      %v4154 = vld [vmem:[#allocation3 + $0x338] sm:$0xff]
      %v4155 = vld [vmem:[#allocation3 + $0x340] sm:$0xff]
      %v4156 = vld [vmem:[#allocation3 + $0x348] sm:$0xff]
      %v4157 = vld [vmem:[#allocation3 + $0x350] sm:$0xff]
      %v4158 = vld [vmem:[#allocation3 + $0x358] sm:$0xff]
      %v4159 = vld [vmem:[#allocation3 + $0x360] sm:$0xff]
      %v4160 = vld [vmem:[#allocation3 + $0x368] sm:$0xff]
      %v4161 = vld [vmem:[#allocation3 + $0x370] sm:$0xff]
      %v4162 = vld [vmem:[#allocation3 + $0x378] sm:$0xff]
      %v4163 = vld [vmem:[#allocation3 + $0x380] sm:$0xff]
      %v4164 = vld [vmem:[#allocation3 + $0x388] sm:$0xff]
      %v4165 = vld [vmem:[#allocation3 + $0x390] sm:$0xff]
      %v4166 = vld [vmem:[#allocation3 + $0x398] sm:$0xff]
      %v4167 = vld [vmem:[#allocation3 + $0x3a0] sm:$0xff]
      %v4168 = vld [vmem:[#allocation3 + $0x3a8] sm:$0xff]
      %v4169 = vld [vmem:[#allocation3 + $0x3b0] sm:$0xff]
      %v4170 = vld [vmem:[#allocation3 + $0x3b8] sm:$0xff]
      %v4171 = vld [vmem:[#allocation3 + $0x3c0] sm:$0xff]
      %v4172 = vld [vmem:[#allocation3 + $0x3c8] sm:$0xff]
      %v4173 = vld [vmem:[#allocation3 + $0x3d0] sm:$0xff]
      %v4174 = vld [vmem:[#allocation3 + $0x3d8] sm:$0xff]
      %v4175 = vld [vmem:[#allocation3 + $0x3e0] sm:$0xff]
      %v4176 = vld [vmem:[%s7] sm:$0xff]
      %v4177 = vld [vmem:[%s7 + $0x8] sm:$0xff]
      %4179 = vset.pattern.permute.xlu0 0
      %4180 = vperm.xlu0 %4179, %v4176
      %v4181 = vpop.permute.xlu0 %4180
      %4184 = vset.pattern.permute.xlu0 0
      %4185 = vperm.xlu0 %4184, %v4177
      %v4186 = vpop.permute.xlu0 %4185
      %v4189 = vsel %vm1535, %v4048, 0
      %v4192 = vsel %vm1535, %v4050, 0
      %4194 = vmatprep.subr.mxu0 %v4052
      %4195 = vmatpush1.msra.mxu0 %v4051
      %4196 = vmatprep.subr.mxu0 %v4057
      %4197 = vmatpush1.msra.mxu0 %v4056
      %4198 = vmatprep.subr.mxu0 %v4062
      %4199 = vmatpush1.msra.mxu0 %v4061
      %4200 = vmatprep.subr.mxu0 %v4067
      %4201 = vmatpush1.msra.mxu0 %v4066
      %4202 = vmatprep.subr.mxu0 %v4072
      %4203 = vmatpush1.msra.mxu0 %v4071
      %4204 = vmatprep.subr.mxu0 %v4077
      %4205 = vmatpush1.msra.mxu0 %v4076
      %4206 = vmatprep.subr.mxu0 %v4082
      %4207 = vmatpush1.msra.mxu0 %v4081
      %4208 = vmatprep.subr.mxu0 %v4087
      %4209 = vmatpush1.msra.mxu0 %v4086
      %4210 = vmatprep.subr.mxu0 %v4092
      %4211 = vmatpush1.msra.mxu0 %v4091
      %4212 = vmatprep.subr.mxu0 %v4097
      %4213 = vmatpush1.msra.mxu0 %v4096
      %4214 = vmatprep.subr.mxu0 %v4102
      %4215 = vmatpush1.msra.mxu0 %v4101
      %4216 = vmatprep.subr.mxu0 %v4107
      %4217 = vmatpush1.msra.mxu0 %v4106
      %4218 = vmatprep.subr.mxu0 %v4112
      %4219 = vmatpush1.msra.mxu0 %v4111
      %4220 = vmatprep.subr.mxu0 %v4117
      %4221 = vmatpush1.msra.mxu0 %v4116
      %4222 = vmatprep.subr.mxu0 %v4122
      %4223 = vmatpush1.msra.mxu0 %v4121
      %4224 = vmatprep.subr.mxu0 %v4127
      %4225 = vmatpush1.msra.mxu0 %v4126
      %4226 = vmatprep.subr.mxu0 %v4132
      %4227 = vmatpush1.msra.mxu0 %v4131
      %4228 = vmatprep.subr.mxu0 %v4137
      %4229 = vmatpush1.msra.mxu0 %v4136
      %4230 = vmatprep.subr.mxu0 %v4142
      %4231 = vmatpush1.msra.mxu0 %v4141
      %4232 = vmatprep.subr.mxu0 %v4147
      %4233 = vmatpush1.msra.mxu0 %v4146
      %4234 = vmatprep.subr.mxu0 %v4152
      %4235 = vmatpush1.msra.mxu0 %v4151
      %4236 = vmatprep.subr.mxu0 %v4157
      %4237 = vmatpush1.msra.mxu0 %v4156
      %4238 = vmatprep.subr.mxu0 %v4162
      %4239 = vmatpush1.msra.mxu0 %v4161
      %4240 = vmatprep.subr.mxu0 %v4167
      %4241 = vmatpush1.msra.mxu0 %v4166
      %4242 = vmatprep.subr.mxu0 %v4172
      %4243 = vmatpush1.msra.mxu0 %v4171
      %4244 = vmatprep.subr.mxu0 0.0
      %4245 = vmatpush1.msra.mxu0 0.0
      %4246 = vmatprep.subr.mxu0 0.0
      %4247 = vmatpush1.msra.mxu0 0.0
      %4248 = vmatprep.subr.mxu0 0.0
      %4249 = vmatpush1.msra.mxu0 0.0
      %4250 = vmatprep.subr.mxu0 0.0
      %4251 = vmatpush1.msra.mxu0 0.0
      %4252 = vmatprep.subr.mxu0 0.0
      %4253 = vmatpush1.msra.mxu0 0.0
      %4254 = vmatprep.subr.mxu0 0.0
      %4255 = vmatpush1.msra.mxu0 0.0
      %4256 = vmatprep.subr.mxu0 0.0
      %4257 = vmatpush1.msra.mxu0 0.0
      %4258 = vmatprep.mubr.f32.mxu0 %v4189
      %4259 = vmatmul.mubr.f32.gmra.mrb[0].mxu0 %v4047
      %v4260 = vpop.f32.mrb[0].mxu0
      %v4261 = vadd.f32 %v4181, %v4260
      %v4262 = vpop.f32.mrb[0].mxu0
      %v4263 = vadd.f32 %v4181, %v4262
      %4264 = vmatprep.mubr.f32.mxu0 %v4192
      %4265 = vmatmul.mubr.f32.gmra.mrb[0].mxu0 %v4049
      %v4266 = vpop.f32.mrb[0].mxu0
      %v4267 = vadd.f32 %v4186, %v4266
      %v4268 = vpop.f32.mrb[0].mxu0
      %v4269 = vadd.f32 %v4186, %v4268
      %4270 = vdwg.mxu0
      %4271 = vmatprep.subr.mxu0 %v4054
      %4272 = vmatpush1.msra.mxu0 %v4053
      %4273 = vmatprep.subr.mxu0 %v4059
      %4274 = vmatpush1.msra.mxu0 %v4058
      %4275 = vmatprep.subr.mxu0 %v4064
      %4276 = vmatpush1.msra.mxu0 %v4063
      %4277 = vmatprep.subr.mxu0 %v4069
      %4278 = vmatpush1.msra.mxu0 %v4068
      %4279 = vmatprep.subr.mxu0 %v4074
      %4280 = vmatpush1.msra.mxu0 %v4073
      %4281 = vmatprep.subr.mxu0 %v4079
      %4282 = vmatpush1.msra.mxu0 %v4078
      %4283 = vmatprep.subr.mxu0 %v4084
      %4284 = vmatpush1.msra.mxu0 %v4083
      %4285 = vmatprep.subr.mxu0 %v4089
      %4286 = vmatpush1.msra.mxu0 %v4088
      %4287 = vmatprep.subr.mxu0 %v4094
      %4288 = vmatpush1.msra.mxu0 %v4093
      %4289 = vmatprep.subr.mxu0 %v4099
      %4290 = vmatpush1.msra.mxu0 %v4098
      %4291 = vmatprep.subr.mxu0 %v4104
      %4292 = vmatpush1.msra.mxu0 %v4103
      %4293 = vmatprep.subr.mxu0 %v4109
      %4294 = vmatpush1.msra.mxu0 %v4108
      %4295 = vmatprep.subr.mxu0 %v4114
      %4296 = vmatpush1.msra.mxu0 %v4113
      %4297 = vmatprep.subr.mxu0 %v4119
      %4298 = vmatpush1.msra.mxu0 %v4118
      %4299 = vmatprep.subr.mxu0 %v4124
      %4300 = vmatpush1.msra.mxu0 %v4123
      %4301 = vmatprep.subr.mxu0 %v4129
      %4302 = vmatpush1.msra.mxu0 %v4128
      %4303 = vmatprep.subr.mxu0 %v4134
      %4304 = vmatpush1.msra.mxu0 %v4133
      %4305 = vmatprep.subr.mxu0 %v4139
      %4306 = vmatpush1.msra.mxu0 %v4138
      %4307 = vmatprep.subr.mxu0 %v4144
      %4308 = vmatpush1.msra.mxu0 %v4143
      %4309 = vmatprep.subr.mxu0 %v4149
      %4310 = vmatpush1.msra.mxu0 %v4148
      %4311 = vmatprep.subr.mxu0 %v4154
      %4312 = vmatpush1.msra.mxu0 %v4153
      %4313 = vmatprep.subr.mxu0 %v4159
      %4314 = vmatpush1.msra.mxu0 %v4158
      %4315 = vmatprep.subr.mxu0 %v4164
      %4316 = vmatpush1.msra.mxu0 %v4163
      %4317 = vmatprep.subr.mxu0 %v4169
      %4318 = vmatpush1.msra.mxu0 %v4168
      %4319 = vmatprep.subr.mxu0 %v4174
      %4320 = vmatpush1.msra.mxu0 %v4173
      %4321 = vmatprep.subr.mxu0 0.0
      %4322 = vmatpush1.msra.mxu0 0.0
      %4323 = vmatprep.subr.mxu0 0.0
      %4324 = vmatpush1.msra.mxu0 0.0
      %4325 = vmatprep.subr.mxu0 0.0
      %4326 = vmatpush1.msra.mxu0 0.0
      %4327 = vmatprep.subr.mxu0 0.0
      %4328 = vmatpush1.msra.mxu0 0.0
      %4329 = vmatprep.subr.mxu0 0.0
      %4330 = vmatpush1.msra.mxu0 0.0
      %4331 = vmatprep.subr.mxu0 0.0
      %4332 = vmatpush1.msra.mxu0 0.0
      %4333 = vmatprep.subr.mxu0 0.0
      %4334 = vmatpush1.msra.mxu0 0.0
      %4335 = vmatprep.mubr.f32.mxu0 %v4189
      %4336 = vmatmul.mubr.f32.gmra.mrb[0].mxu0 %v4047
      %v4337 = vpop.f32.mrb[0].mxu0
      %v4338 = vadd.f32 %v4181, %v4337
      %v4339 = vpop.f32.mrb[0].mxu0
      %v4340 = vadd.f32 %v4181, %v4339
      %4341 = vmatprep.mubr.f32.mxu0 %v4192
      %4342 = vmatmul.mubr.f32.gmra.mrb[0].mxu0 %v4049
      %v4343 = vpop.f32.mrb[0].mxu0
      %v4344 = vadd.f32 %v4186, %v4343
      %v4345 = vpop.f32.mrb[0].mxu0
      %v4346 = vadd.f32 %v4186, %v4345
      %4347 = vdwg.mxu0
      %4348 = vmatprep.subr.mxu0 0.0
      %4349 = vmatpush1.msra.mxu0 %v4055
      %4350 = vmatprep.subr.mxu0 0.0
      %4351 = vmatpush1.msra.mxu0 %v4060
      %4352 = vmatprep.subr.mxu0 0.0
      %4353 = vmatpush1.msra.mxu0 %v4065
      %4354 = vmatprep.subr.mxu0 0.0
      %4355 = vmatpush1.msra.mxu0 %v4070
      %4356 = vmatprep.subr.mxu0 0.0
      %4357 = vmatpush1.msra.mxu0 %v4075
      %4358 = vmatprep.subr.mxu0 0.0
      %4359 = vmatpush1.msra.mxu0 %v4080
      %4360 = vmatprep.subr.mxu0 0.0
      %4361 = vmatpush1.msra.mxu0 %v4085
      %4362 = vmatprep.subr.mxu0 0.0
      %4363 = vmatpush1.msra.mxu0 %v4090
      %4364 = vmatprep.subr.mxu0 0.0
      %4365 = vmatpush1.msra.mxu0 %v4095
      %4366 = vmatprep.subr.mxu0 0.0
      %4367 = vmatpush1.msra.mxu0 %v4100
      %4368 = vmatprep.subr.mxu0 0.0
      %4369 = vmatpush1.msra.mxu0 %v4105
      %4370 = vmatprep.subr.mxu0 0.0
      %4371 = vmatpush1.msra.mxu0 %v4110
      %4372 = vmatprep.subr.mxu0 0.0
      %4373 = vmatpush1.msra.mxu0 %v4115
      %4374 = vmatprep.subr.mxu0 0.0
      %4375 = vmatpush1.msra.mxu0 %v4120
      %4376 = vmatprep.subr.mxu0 0.0
      %4377 = vmatpush1.msra.mxu0 %v4125
      %4378 = vmatprep.subr.mxu0 0.0
      %4379 = vmatpush1.msra.mxu0 %v4130
      %4380 = vmatprep.subr.mxu0 0.0
      %4381 = vmatpush1.msra.mxu0 %v4135
      %4382 = vmatprep.subr.mxu0 0.0
      %4383 = vmatpush1.msra.mxu0 %v4140
      %4384 = vmatprep.subr.mxu0 0.0
      %4385 = vmatpush1.msra.mxu0 %v4145
      %4386 = vmatprep.subr.mxu0 0.0
      %4387 = vmatpush1.msra.mxu0 %v4150
      %4388 = vmatprep.subr.mxu0 0.0
      %4389 = vmatpush1.msra.mxu0 %v4155
      %4390 = vmatprep.subr.mxu0 0.0
      %4391 = vmatpush1.msra.mxu0 %v4160
      %4392 = vmatprep.subr.mxu0 0.0
      %4393 = vmatpush1.msra.mxu0 %v4165
      %4394 = vmatprep.subr.mxu0 0.0
      %4395 = vmatpush1.msra.mxu0 %v4170
      %4396 = vmatprep.subr.mxu0 0.0
      %4397 = vmatpush1.msra.mxu0 %v4175
      %4398 = vmatprep.subr.mxu0 0.0
      %4399 = vmatpush1.msra.mxu0 0.0
      %4400 = vmatprep.subr.mxu0 0.0
      %4401 = vmatpush1.msra.mxu0 0.0
      %4402 = vmatprep.subr.mxu0 0.0
      %4403 = vmatpush1.msra.mxu0 0.0
      %4404 = vmatprep.subr.mxu0 0.0
      %4405 = vmatpush1.msra.mxu0 0.0
      %4406 = vmatprep.subr.mxu0 0.0
      %4407 = vmatpush1.msra.mxu0 0.0
      %4408 = vmatprep.subr.mxu0 0.0
      %4409 = vmatpush1.msra.mxu0 0.0
      %4410 = vmatprep.subr.mxu0 0.0
      %4411 = vmatpush1.msra.mxu0 0.0
      %4412 = vmatprep.mubr.f32.mxu0 %v4189
      %4413 = vmatmul.mubr.f32.gmra.mrb[0].mxu0 %v4047
      %v4414 = vpop.f32.mrb[0].mxu0
      %v4415 = vadd.f32 %v4181, %v4414
      %v4416 = vpop.f32.mrb[0].mxu0
      %4417 = vmatprep.mubr.f32.mxu0 %v4192
      %4418 = vmatmul.mubr.f32.gmra.mrb[0].mxu0 %v4049
      %v4419 = vpop.f32.mrb[0].mxu0
      %v4420 = vadd.f32 %v4186, %v4419
      %v4421 = vpop.f32.mrb[0].mxu0
      %4422 = vdwg.mxu0
      %v4423 = vmax.f32 %v4261, 0.0
      %v4424 = vmax.f32 %v4263, 0.0
      %v4425 = vmax.f32 %v4338, 0.0
      %v4426 = vmax.f32 %v4340, 0.0
      %v4427 = vmax.f32 %v4415, 0.0
      %v4428 = vmax.f32 %v4267, 0.0
      %v4429 = vmax.f32 %v4269, 0.0
      %v4430 = vmax.f32 %v4344, 0.0
      %v4431 = vmax.f32 %v4346, 0.0
      %v4432 = vmax.f32 %v4420, 0.0
      %v4433 = vmul.f32 %v4423, %v1760
      %v4434 = vmul.f32 %v4424, %v1764
      %v4435 = vmul.f32 %v4425, %v1768
      %v4436 = vmul.f32 %v4426, %v1772
      %v4437 = vmul.f32 %v4427, %v1776
      %v4438 = vmul.f32 %v4428, %v1760
      %v4439 = vmul.f32 %v4429, %v1764
      %v4440 = vmul.f32 %v4430, %v1768
      %v4441 = vmul.f32 %v4431, %v1772
      %v4442 = vmul.f32 %v4432, %v1776
      %4443 = vst [vmem:[#allocation2 + $0x8] sm:$0xff] %v4433
      %4444 = vst [vmem:[#allocation2 + $0x10] sm:$0xff] %v4434
      %4445 = vst [vmem:[#allocation2 + $0x18] sm:$0xff] %v4435
      %4446 = vst [vmem:[#allocation2 + $0x20] sm:$0xff] %v4436
      %4447 = vst [vmem:[#allocation2 + $0x28] sm:$0xff] %v4437
      %4448 = vst [vmem:[#allocation2 + $0x40] sm:$0xff] %v4438
      %4449 = vst [vmem:[#allocation2 + $0x48] sm:$0xff] %v4439
      %4450 = vst [vmem:[#allocation2 + $0x50] sm:$0xff] %v4440
      %4451 = vst [vmem:[#allocation2 + $0x58] sm:$0xff] %v4441
      %4452 = vst [vmem:[#allocation2 + $0x60] sm:$0xff] %v4442
      %v4453 = vld [vmem:[#allocation2] sm:$0xff]
      %v4454 = vld [vmem:[#allocation2 + $0x8] sm:$0xff]
      %v4455 = vld [vmem:[#allocation2 + $0x10] sm:$0xff]
      %v4456 = vld [vmem:[#allocation2 + $0x18] sm:$0xff]
      %v4457 = vld [vmem:[#allocation2 + $0x20] sm:$0xff]
      %v4458 = vld [vmem:[#allocation2 + $0x28] sm:$0xff]
      %v4459 = vld [vmem:[#allocation2 + $0x38] sm:$0xff]
      %v4460 = vld [vmem:[#allocation2 + $0x40] sm:$0xff]
      %v4461 = vld [vmem:[#allocation2 + $0x48] sm:$0xff]
      %v4462 = vld [vmem:[#allocation2 + $0x50] sm:$0xff]
      %v4463 = vld [vmem:[#allocation2 + $0x58] sm:$0xff]
      %v4464 = vld [vmem:[#allocation2 + $0x60] sm:$0xff]
      %4477 = vrot.lane.b32.xlu0 %v4453, 66
      %v4478 = vpop.permute.xlu0 %4477
      %4479 = vrot.lane.b32.xlu0 %v4454, 66
      %v4480 = vpop.permute.xlu0 %4479
      %4481 = vrot.lane.b32.xlu0 %v4455, 66
      %v4482 = vpop.permute.xlu0 %4481
      %4483 = vrot.lane.b32.xlu0 %v4456, 66
      %v4484 = vpop.permute.xlu0 %4483
      %4485 = vrot.lane.b32.xlu0 %v4457, 66
      %v4486 = vpop.permute.xlu0 %4485
      %4487 = vrot.lane.b32.xlu0 %v4458, 66
      %v4488 = vpop.permute.xlu0 %4487
      %4489 = vrot.lane.b32.xlu0 %v4459, 66
      %v4490 = vpop.permute.xlu0 %4489
      %4491 = vrot.lane.b32.xlu0 %v4460, 66
      %v4492 = vpop.permute.xlu0 %4491
      %4493 = vrot.lane.b32.xlu0 %v4461, 66
      %v4494 = vpop.permute.xlu0 %4493
      %4495 = vrot.lane.b32.xlu0 %v4462, 66
      %v4496 = vpop.permute.xlu0 %4495
      %4497 = vrot.lane.b32.xlu0 %v4463, 66
      %v4498 = vpop.permute.xlu0 %4497
      %4499 = vrot.lane.b32.xlu0 %v4464, 66
      %v4500 = vpop.permute.xlu0 %4499
      %v4501 = vsel %vm461, %v4478, %v4480
      %v4502 = vsel %vm461, %v4480, %v4482
      %v4503 = vsel %vm461, %v4482, %v4484
      %v4504 = vsel %vm461, %v4484, %v4486
      %v4505 = vsel %vm461, %v4486, %v4488
      %v4506 = vsel %vm461, %v4490, %v4492
      %v4507 = vsel %vm461, %v4492, %v4494
      %v4508 = vsel %vm461, %v4494, %v4496
      %v4509 = vsel %vm461, %v4496, %v4498
      %v4510 = vsel %vm461, %v4498, %v4500
      %4521 = vst [vmem:[#allocation3] sm:$0xff] %v4501
      %4522 = vst [vmem:[#allocation3 + $0x8] sm:$0xff] %v4502
      %4523 = vst [vmem:[#allocation3 + $0x10] sm:$0xff] %v4503
      %4524 = vst [vmem:[#allocation3 + $0x18] sm:$0xff] %v4504
      %4525 = vst [vmem:[#allocation3 + $0x20] sm:$0xff] %v4505
      %4526 = vst [vmem:[#allocation3 + $0x28] sm:$0xff] %v4506
      %4527 = vst [vmem:[#allocation3 + $0x30] sm:$0xff] %v4507
      %4528 = vst [vmem:[#allocation3 + $0x38] sm:$0xff] %v4508
      %4529 = vst [vmem:[#allocation3 + $0x40] sm:$0xff] %v4509
      %4530 = vst [vmem:[#allocation3 + $0x48] sm:$0xff] %v4510
      %v4531 = vld [vmem:[#allocation2] sm:$0xff]
      %v4532 = vld [vmem:[#allocation2 + $0x8] sm:$0xff]
      %v4533 = vld [vmem:[#allocation2 + $0x10] sm:$0xff]
      %v4534 = vld [vmem:[#allocation2 + $0x18] sm:$0xff]
      %v4535 = vld [vmem:[#allocation2 + $0x20] sm:$0xff]
      %v4536 = vld [vmem:[#allocation2 + $0x28] sm:$0xff]
      %v4537 = vld [vmem:[#allocation2 + $0x38] sm:$0xff]
      %v4538 = vld [vmem:[#allocation2 + $0x40] sm:$0xff]
      %v4539 = vld [vmem:[#allocation2 + $0x48] sm:$0xff]
      %v4540 = vld [vmem:[#allocation2 + $0x50] sm:$0xff]
      %v4541 = vld [vmem:[#allocation2 + $0x58] sm:$0xff]
      %v4542 = vld [vmem:[#allocation2 + $0x60] sm:$0xff]
      %4555 = vrot.lane.b32.xlu0 %v4531, 65
      %v4556 = vpop.permute.xlu0 %4555
      %4557 = vrot.lane.b32.xlu0 %v4532, 65
      %v4558 = vpop.permute.xlu0 %4557
      %4559 = vrot.lane.b32.xlu0 %v4533, 65
      %v4560 = vpop.permute.xlu0 %4559
      %4561 = vrot.lane.b32.xlu0 %v4534, 65
      %v4562 = vpop.permute.xlu0 %4561
      %4563 = vrot.lane.b32.xlu0 %v4535, 65
      %v4564 = vpop.permute.xlu0 %4563
      %4565 = vrot.lane.b32.xlu0 %v4536, 65
      %v4566 = vpop.permute.xlu0 %4565
      %4567 = vrot.lane.b32.xlu0 %v4537, 65
      %v4568 = vpop.permute.xlu0 %4567
      %4569 = vrot.lane.b32.xlu0 %v4538, 65
      %v4570 = vpop.permute.xlu0 %4569
      %4571 = vrot.lane.b32.xlu0 %v4539, 65
      %v4572 = vpop.permute.xlu0 %4571
      %4573 = vrot.lane.b32.xlu0 %v4540, 65
      %v4574 = vpop.permute.xlu0 %4573
      %4575 = vrot.lane.b32.xlu0 %v4541, 65
      %v4576 = vpop.permute.xlu0 %4575
      %4577 = vrot.lane.b32.xlu0 %v4542, 65
      %v4578 = vpop.permute.xlu0 %4577
      %v4579 = vsel %vm501, %v4556, %v4558
      %v4580 = vsel %vm501, %v4558, %v4560
      %v4581 = vsel %vm501, %v4560, %v4562
      %v4582 = vsel %vm501, %v4562, %v4564
      %v4583 = vsel %vm501, %v4564, %v4566
      %v4584 = vsel %vm501, %v4568, %v4570
      %v4585 = vsel %vm501, %v4570, %v4572
      %v4586 = vsel %vm501, %v4572, %v4574
      %v4587 = vsel %vm501, %v4574, %v4576
      %v4588 = vsel %vm501, %v4576, %v4578
      %4599 = vst [vmem:[#allocation3 + $0x50] sm:$0xff] %v4579
      %4600 = vst [vmem:[#allocation3 + $0x58] sm:$0xff] %v4580
      %4601 = vst [vmem:[#allocation3 + $0x60] sm:$0xff] %v4581
      %4602 = vst [vmem:[#allocation3 + $0x68] sm:$0xff] %v4582
      %4603 = vst [vmem:[#allocation3 + $0x70] sm:$0xff] %v4583
      %4604 = vst [vmem:[#allocation3 + $0x78] sm:$0xff] %v4584
      %4605 = vst [vmem:[#allocation3 + $0x80] sm:$0xff] %v4585
      %4606 = vst [vmem:[#allocation3 + $0x88] sm:$0xff] %v4586
      %4607 = vst [vmem:[#allocation3 + $0x90] sm:$0xff] %v4587
      %4608 = vst [vmem:[#allocation3 + $0x98] sm:$0xff] %v4588
      %v4609 = vld [vmem:[#allocation2] sm:$0xff]
      %v4610 = vld [vmem:[#allocation2 + $0x8] sm:$0xff]
      %v4611 = vld [vmem:[#allocation2 + $0x10] sm:$0xff]
      %v4612 = vld [vmem:[#allocation2 + $0x18] sm:$0xff]
      %v4613 = vld [vmem:[#allocation2 + $0x20] sm:$0xff]
      %v4614 = vld [vmem:[#allocation2 + $0x28] sm:$0xff]
      %v4615 = vld [vmem:[#allocation2 + $0x38] sm:$0xff]
      %v4616 = vld [vmem:[#allocation2 + $0x40] sm:$0xff]
      %v4617 = vld [vmem:[#allocation2 + $0x48] sm:$0xff]
      %v4618 = vld [vmem:[#allocation2 + $0x50] sm:$0xff]
      %v4619 = vld [vmem:[#allocation2 + $0x58] sm:$0xff]
      %v4620 = vld [vmem:[#allocation2 + $0x60] sm:$0xff]
      %4633 = vrot.lane.b32.xlu0 %v4609, 64
      %v4634 = vpop.permute.xlu0 %4633
      %4635 = vrot.lane.b32.xlu0 %v4610, 64
      %v4636 = vpop.permute.xlu0 %4635
      %4637 = vrot.lane.b32.xlu0 %v4611, 64
      %v4638 = vpop.permute.xlu0 %4637
      %4639 = vrot.lane.b32.xlu0 %v4612, 64
      %v4640 = vpop.permute.xlu0 %4639
      %4641 = vrot.lane.b32.xlu0 %v4613, 64
      %v4642 = vpop.permute.xlu0 %4641
      %4643 = vrot.lane.b32.xlu0 %v4614, 64
      %v4644 = vpop.permute.xlu0 %4643
      %4645 = vrot.lane.b32.xlu0 %v4615, 64
      %v4646 = vpop.permute.xlu0 %4645
      %4647 = vrot.lane.b32.xlu0 %v4616, 64
      %v4648 = vpop.permute.xlu0 %4647
      %4649 = vrot.lane.b32.xlu0 %v4617, 64
      %v4650 = vpop.permute.xlu0 %4649
      %4651 = vrot.lane.b32.xlu0 %v4618, 64
      %v4652 = vpop.permute.xlu0 %4651
      %4653 = vrot.lane.b32.xlu0 %v4619, 64
      %v4654 = vpop.permute.xlu0 %4653
      %4655 = vrot.lane.b32.xlu0 %v4620, 64
      %v4656 = vpop.permute.xlu0 %4655
      %v4657 = vsel %vm541, %v4634, %v4636
      %v4658 = vsel %vm541, %v4636, %v4638
      %v4659 = vsel %vm541, %v4638, %v4640
      %v4660 = vsel %vm541, %v4640, %v4642
      %v4661 = vsel %vm541, %v4642, %v4644
      %v4662 = vsel %vm541, %v4646, %v4648
      %v4663 = vsel %vm541, %v4648, %v4650
      %v4664 = vsel %vm541, %v4650, %v4652
      %v4665 = vsel %vm541, %v4652, %v4654
      %v4666 = vsel %vm541, %v4654, %v4656
      %4677 = vst [vmem:[#allocation3 + $0xa0] sm:$0xff] %v4657
      %4678 = vst [vmem:[#allocation3 + $0xa8] sm:$0xff] %v4658
      %4679 = vst [vmem:[#allocation3 + $0xb0] sm:$0xff] %v4659
      %4680 = vst [vmem:[#allocation3 + $0xb8] sm:$0xff] %v4660
      %4681 = vst [vmem:[#allocation3 + $0xc0] sm:$0xff] %v4661
      %4682 = vst [vmem:[#allocation3 + $0xc8] sm:$0xff] %v4662
      %4683 = vst [vmem:[#allocation3 + $0xd0] sm:$0xff] %v4663
      %4684 = vst [vmem:[#allocation3 + $0xd8] sm:$0xff] %v4664
      %4685 = vst [vmem:[#allocation3 + $0xe0] sm:$0xff] %v4665
      %4686 = vst [vmem:[#allocation3 + $0xe8] sm:$0xff] %v4666
      %v4687 = vld [vmem:[#allocation2] sm:$0xff]
      %v4688 = vld [vmem:[#allocation2 + $0x8] sm:$0xff]
      %v4689 = vld [vmem:[#allocation2 + $0x10] sm:$0xff]
      %v4690 = vld [vmem:[#allocation2 + $0x18] sm:$0xff]
      %v4691 = vld [vmem:[#allocation2 + $0x20] sm:$0xff]
      %v4692 = vld [vmem:[#allocation2 + $0x28] sm:$0xff]
      %v4693 = vld [vmem:[#allocation2 + $0x38] sm:$0xff]
      %v4694 = vld [vmem:[#allocation2 + $0x40] sm:$0xff]
      %v4695 = vld [vmem:[#allocation2 + $0x48] sm:$0xff]
      %v4696 = vld [vmem:[#allocation2 + $0x50] sm:$0xff]
      %v4697 = vld [vmem:[#allocation2 + $0x58] sm:$0xff]
      %v4698 = vld [vmem:[#allocation2 + $0x60] sm:$0xff]
      %4711 = vrot.lane.b32.xlu0 %v4687, 63
      %v4712 = vpop.permute.xlu0 %4711
      %4713 = vrot.lane.b32.xlu0 %v4688, 63
      %v4714 = vpop.permute.xlu0 %4713
      %4715 = vrot.lane.b32.xlu0 %v4689, 63
      %v4716 = vpop.permute.xlu0 %4715
      %4717 = vrot.lane.b32.xlu0 %v4690, 63
      %v4718 = vpop.permute.xlu0 %4717
      %4719 = vrot.lane.b32.xlu0 %v4691, 63
      %v4720 = vpop.permute.xlu0 %4719
      %4721 = vrot.lane.b32.xlu0 %v4692, 63
      %v4722 = vpop.permute.xlu0 %4721
      %4723 = vrot.lane.b32.xlu0 %v4693, 63
      %v4724 = vpop.permute.xlu0 %4723
      %4725 = vrot.lane.b32.xlu0 %v4694, 63
      %v4726 = vpop.permute.xlu0 %4725
      %4727 = vrot.lane.b32.xlu0 %v4695, 63
      %v4728 = vpop.permute.xlu0 %4727
      %4729 = vrot.lane.b32.xlu0 %v4696, 63
      %v4730 = vpop.permute.xlu0 %4729
      %4731 = vrot.lane.b32.xlu0 %v4697, 63
      %v4732 = vpop.permute.xlu0 %4731
      %4733 = vrot.lane.b32.xlu0 %v4698, 63
      %v4734 = vpop.permute.xlu0 %4733
      %v4735 = vsel %vm581, %v4712, %v4714
      %v4736 = vsel %vm581, %v4714, %v4716
      %v4737 = vsel %vm581, %v4716, %v4718
      %v4738 = vsel %vm581, %v4718, %v4720
      %v4739 = vsel %vm581, %v4720, %v4722
      %v4740 = vsel %vm581, %v4724, %v4726
      %v4741 = vsel %vm581, %v4726, %v4728
      %v4742 = vsel %vm581, %v4728, %v4730
      %v4743 = vsel %vm581, %v4730, %v4732
      %v4744 = vsel %vm581, %v4732, %v4734
      %4755 = vst [vmem:[#allocation3 + $0xf0] sm:$0xff] %v4735
      %4756 = vst [vmem:[#allocation3 + $0xf8] sm:$0xff] %v4736
      %4757 = vst [vmem:[#allocation3 + $0x100] sm:$0xff] %v4737
      %4758 = vst [vmem:[#allocation3 + $0x108] sm:$0xff] %v4738
      %4759 = vst [vmem:[#allocation3 + $0x110] sm:$0xff] %v4739
      %4760 = vst [vmem:[#allocation3 + $0x118] sm:$0xff] %v4740
      %4761 = vst [vmem:[#allocation3 + $0x120] sm:$0xff] %v4741
      %4762 = vst [vmem:[#allocation3 + $0x128] sm:$0xff] %v4742
      %4763 = vst [vmem:[#allocation3 + $0x130] sm:$0xff] %v4743
      %4764 = vst [vmem:[#allocation3 + $0x138] sm:$0xff] %v4744
      %v4765 = vld [vmem:[#allocation2] sm:$0xff]
      %v4766 = vld [vmem:[#allocation2 + $0x8] sm:$0xff]
      %v4767 = vld [vmem:[#allocation2 + $0x10] sm:$0xff]
      %v4768 = vld [vmem:[#allocation2 + $0x18] sm:$0xff]
      %v4769 = vld [vmem:[#allocation2 + $0x20] sm:$0xff]
      %v4770 = vld [vmem:[#allocation2 + $0x28] sm:$0xff]
      %v4771 = vld [vmem:[#allocation2 + $0x38] sm:$0xff]
      %v4772 = vld [vmem:[#allocation2 + $0x40] sm:$0xff]
      %v4773 = vld [vmem:[#allocation2 + $0x48] sm:$0xff]
      %v4774 = vld [vmem:[#allocation2 + $0x50] sm:$0xff]
      %v4775 = vld [vmem:[#allocation2 + $0x58] sm:$0xff]
      %v4776 = vld [vmem:[#allocation2 + $0x60] sm:$0xff]
      %4789 = vrot.lane.b32.xlu0 %v4765, 62
      %v4790 = vpop.permute.xlu0 %4789
      %4791 = vrot.lane.b32.xlu0 %v4766, 62
      %v4792 = vpop.permute.xlu0 %4791
      %4793 = vrot.lane.b32.xlu0 %v4767, 62
      %v4794 = vpop.permute.xlu0 %4793
      %4795 = vrot.lane.b32.xlu0 %v4768, 62
      %v4796 = vpop.permute.xlu0 %4795
      %4797 = vrot.lane.b32.xlu0 %v4769, 62
      %v4798 = vpop.permute.xlu0 %4797
      %4799 = vrot.lane.b32.xlu0 %v4770, 62
      %v4800 = vpop.permute.xlu0 %4799
      %4801 = vrot.lane.b32.xlu0 %v4771, 62
      %v4802 = vpop.permute.xlu0 %4801
      %4803 = vrot.lane.b32.xlu0 %v4772, 62
      %v4804 = vpop.permute.xlu0 %4803
      %4805 = vrot.lane.b32.xlu0 %v4773, 62
      %v4806 = vpop.permute.xlu0 %4805
      %4807 = vrot.lane.b32.xlu0 %v4774, 62
      %v4808 = vpop.permute.xlu0 %4807
      %4809 = vrot.lane.b32.xlu0 %v4775, 62
      %v4810 = vpop.permute.xlu0 %4809
      %4811 = vrot.lane.b32.xlu0 %v4776, 62
      %v4812 = vpop.permute.xlu0 %4811
      %v4813 = vsel %vm621, %v4790, %v4792
      %v4814 = vsel %vm621, %v4792, %v4794
      %v4815 = vsel %vm621, %v4794, %v4796
      %v4816 = vsel %vm621, %v4796, %v4798
      %v4817 = vsel %vm621, %v4798, %v4800
      %v4818 = vsel %vm621, %v4802, %v4804
      %v4819 = vsel %vm621, %v4804, %v4806
      %v4820 = vsel %vm621, %v4806, %v4808
      %v4821 = vsel %vm621, %v4808, %v4810
      %v4822 = vsel %vm621, %v4810, %v4812
      %4833 = vst [vmem:[#allocation3 + $0x140] sm:$0xff] %v4813
      %4834 = vst [vmem:[#allocation3 + $0x148] sm:$0xff] %v4814
      %4835 = vst [vmem:[#allocation3 + $0x150] sm:$0xff] %v4815
      %4836 = vst [vmem:[#allocation3 + $0x158] sm:$0xff] %v4816
      %4837 = vst [vmem:[#allocation3 + $0x160] sm:$0xff] %v4817
      %4838 = vst [vmem:[#allocation3 + $0x168] sm:$0xff] %v4818
      %4839 = vst [vmem:[#allocation3 + $0x170] sm:$0xff] %v4819
      %4840 = vst [vmem:[#allocation3 + $0x178] sm:$0xff] %v4820
      %4841 = vst [vmem:[#allocation3 + $0x180] sm:$0xff] %v4821
      %4842 = vst [vmem:[#allocation3 + $0x188] sm:$0xff] %v4822
      %v4843 = vld [vmem:[#allocation2] sm:$0xff]
      %v4844 = vld [vmem:[#allocation2 + $0x8] sm:$0xff]
      %v4845 = vld [vmem:[#allocation2 + $0x10] sm:$0xff]
      %v4846 = vld [vmem:[#allocation2 + $0x18] sm:$0xff]
      %v4847 = vld [vmem:[#allocation2 + $0x20] sm:$0xff]
      %v4848 = vld [vmem:[#allocation2 + $0x28] sm:$0xff]
      %v4849 = vld [vmem:[#allocation2 + $0x38] sm:$0xff]
      %v4850 = vld [vmem:[#allocation2 + $0x40] sm:$0xff]
      %v4851 = vld [vmem:[#allocation2 + $0x48] sm:$0xff]
      %v4852 = vld [vmem:[#allocation2 + $0x50] sm:$0xff]
      %v4853 = vld [vmem:[#allocation2 + $0x58] sm:$0xff]
      %v4854 = vld [vmem:[#allocation2 + $0x60] sm:$0xff]
      %4867 = vrot.lane.b32.xlu0 %v4843, 34
      %v4868 = vpop.permute.xlu0 %4867
      %4869 = vrot.lane.b32.xlu0 %v4844, 34
      %v4870 = vpop.permute.xlu0 %4869
      %4871 = vrot.lane.b32.xlu0 %v4845, 34
      %v4872 = vpop.permute.xlu0 %4871
      %4873 = vrot.lane.b32.xlu0 %v4846, 34
      %v4874 = vpop.permute.xlu0 %4873
      %4875 = vrot.lane.b32.xlu0 %v4847, 34
      %v4876 = vpop.permute.xlu0 %4875
      %4877 = vrot.lane.b32.xlu0 %v4848, 34
      %v4878 = vpop.permute.xlu0 %4877
      %4879 = vrot.lane.b32.xlu0 %v4849, 34
      %v4880 = vpop.permute.xlu0 %4879
      %4881 = vrot.lane.b32.xlu0 %v4850, 34
      %v4882 = vpop.permute.xlu0 %4881
      %4883 = vrot.lane.b32.xlu0 %v4851, 34
      %v4884 = vpop.permute.xlu0 %4883
      %4885 = vrot.lane.b32.xlu0 %v4852, 34
      %v4886 = vpop.permute.xlu0 %4885
      %4887 = vrot.lane.b32.xlu0 %v4853, 34
      %v4888 = vpop.permute.xlu0 %4887
      %4889 = vrot.lane.b32.xlu0 %v4854, 34
      %v4890 = vpop.permute.xlu0 %4889
      %v4891 = vsel %vm661, %v4868, %v4870
      %v4892 = vsel %vm661, %v4870, %v4872
      %v4893 = vsel %vm661, %v4872, %v4874
      %v4894 = vsel %vm661, %v4874, %v4876
      %v4895 = vsel %vm661, %v4876, %v4878
      %v4896 = vsel %vm661, %v4880, %v4882
      %v4897 = vsel %vm661, %v4882, %v4884
      %v4898 = vsel %vm661, %v4884, %v4886
      %v4899 = vsel %vm661, %v4886, %v4888
      %v4900 = vsel %vm661, %v4888, %v4890
      %4911 = vst [vmem:[#allocation3 + $0x190] sm:$0xff] %v4891
      %4912 = vst [vmem:[#allocation3 + $0x198] sm:$0xff] %v4892
      %4913 = vst [vmem:[#allocation3 + $0x1a0] sm:$0xff] %v4893
      %4914 = vst [vmem:[#allocation3 + $0x1a8] sm:$0xff] %v4894
      %4915 = vst [vmem:[#allocation3 + $0x1b0] sm:$0xff] %v4895
      %4916 = vst [vmem:[#allocation3 + $0x1b8] sm:$0xff] %v4896
      %4917 = vst [vmem:[#allocation3 + $0x1c0] sm:$0xff] %v4897
      %4918 = vst [vmem:[#allocation3 + $0x1c8] sm:$0xff] %v4898
      %4919 = vst [vmem:[#allocation3 + $0x1d0] sm:$0xff] %v4899
      %4920 = vst [vmem:[#allocation3 + $0x1d8] sm:$0xff] %v4900
      %v4921 = vld [vmem:[#allocation2] sm:$0xff]
      %v4922 = vld [vmem:[#allocation2 + $0x8] sm:$0xff]
      %v4923 = vld [vmem:[#allocation2 + $0x10] sm:$0xff]
      %v4924 = vld [vmem:[#allocation2 + $0x18] sm:$0xff]
      %v4925 = vld [vmem:[#allocation2 + $0x20] sm:$0xff]
      %v4926 = vld [vmem:[#allocation2 + $0x28] sm:$0xff]
      %v4927 = vld [vmem:[#allocation2 + $0x38] sm:$0xff]
      %v4928 = vld [vmem:[#allocation2 + $0x40] sm:$0xff]
      %v4929 = vld [vmem:[#allocation2 + $0x48] sm:$0xff]
      %v4930 = vld [vmem:[#allocation2 + $0x50] sm:$0xff]
      %v4931 = vld [vmem:[#allocation2 + $0x58] sm:$0xff]
      %v4932 = vld [vmem:[#allocation2 + $0x60] sm:$0xff]
      %4945 = vrot.lane.b32.xlu0 %v4921, 33
      %v4946 = vpop.permute.xlu0 %4945
      %4947 = vrot.lane.b32.xlu0 %v4922, 33
      %v4948 = vpop.permute.xlu0 %4947
      %4949 = vrot.lane.b32.xlu0 %v4923, 33
      %v4950 = vpop.permute.xlu0 %4949
      %4951 = vrot.lane.b32.xlu0 %v4924, 33
      %v4952 = vpop.permute.xlu0 %4951
      %4953 = vrot.lane.b32.xlu0 %v4925, 33
      %v4954 = vpop.permute.xlu0 %4953
      %4955 = vrot.lane.b32.xlu0 %v4926, 33
      %v4956 = vpop.permute.xlu0 %4955
      %4957 = vrot.lane.b32.xlu0 %v4927, 33
      %v4958 = vpop.permute.xlu0 %4957
      %4959 = vrot.lane.b32.xlu0 %v4928, 33
      %v4960 = vpop.permute.xlu0 %4959
      %4961 = vrot.lane.b32.xlu0 %v4929, 33
      %v4962 = vpop.permute.xlu0 %4961
      %4963 = vrot.lane.b32.xlu0 %v4930, 33
      %v4964 = vpop.permute.xlu0 %4963
      %4965 = vrot.lane.b32.xlu0 %v4931, 33
      %v4966 = vpop.permute.xlu0 %4965
      %4967 = vrot.lane.b32.xlu0 %v4932, 33
      %v4968 = vpop.permute.xlu0 %4967
      %v4969 = vsel %vm701, %v4946, %v4948
      %v4970 = vsel %vm701, %v4948, %v4950
      %v4971 = vsel %vm701, %v4950, %v4952
      %v4972 = vsel %vm701, %v4952, %v4954
      %v4973 = vsel %vm701, %v4954, %v4956
      %v4974 = vsel %vm701, %v4958, %v4960
      %v4975 = vsel %vm701, %v4960, %v4962
      %v4976 = vsel %vm701, %v4962, %v4964
      %v4977 = vsel %vm701, %v4964, %v4966
      %v4978 = vsel %vm701, %v4966, %v4968
      %4989 = vst [vmem:[#allocation3 + $0x1e0] sm:$0xff] %v4969
      %4990 = vst [vmem:[#allocation3 + $0x1e8] sm:$0xff] %v4970
      %4991 = vst [vmem:[#allocation3 + $0x1f0] sm:$0xff] %v4971
      %4992 = vst [vmem:[#allocation3 + $0x1f8] sm:$0xff] %v4972
      %4993 = vst [vmem:[#allocation3 + $0x200] sm:$0xff] %v4973
      %4994 = vst [vmem:[#allocation3 + $0x208] sm:$0xff] %v4974
      %4995 = vst [vmem:[#allocation3 + $0x210] sm:$0xff] %v4975
      %4996 = vst [vmem:[#allocation3 + $0x218] sm:$0xff] %v4976
      %4997 = vst [vmem:[#allocation3 + $0x220] sm:$0xff] %v4977
      %4998 = vst [vmem:[#allocation3 + $0x228] sm:$0xff] %v4978
      %v4999 = vld [vmem:[#allocation2] sm:$0xff]
      %v5000 = vld [vmem:[#allocation2 + $0x8] sm:$0xff]
      %v5001 = vld [vmem:[#allocation2 + $0x10] sm:$0xff]
      %v5002 = vld [vmem:[#allocation2 + $0x18] sm:$0xff]
      %v5003 = vld [vmem:[#allocation2 + $0x20] sm:$0xff]
      %v5004 = vld [vmem:[#allocation2 + $0x28] sm:$0xff]
      %v5005 = vld [vmem:[#allocation2 + $0x38] sm:$0xff]
      %v5006 = vld [vmem:[#allocation2 + $0x40] sm:$0xff]
      %v5007 = vld [vmem:[#allocation2 + $0x48] sm:$0xff]
      %v5008 = vld [vmem:[#allocation2 + $0x50] sm:$0xff]
      %v5009 = vld [vmem:[#allocation2 + $0x58] sm:$0xff]
      %v5010 = vld [vmem:[#allocation2 + $0x60] sm:$0xff]
      %5023 = vrot.lane.b32.xlu0 %v4999, 32
      %v5024 = vpop.permute.xlu0 %5023
      %5025 = vrot.lane.b32.xlu0 %v5000, 32
      %v5026 = vpop.permute.xlu0 %5025
      %5027 = vrot.lane.b32.xlu0 %v5001, 32
      %v5028 = vpop.permute.xlu0 %5027
      %5029 = vrot.lane.b32.xlu0 %v5002, 32
      %v5030 = vpop.permute.xlu0 %5029
      %5031 = vrot.lane.b32.xlu0 %v5003, 32
      %v5032 = vpop.permute.xlu0 %5031
      %5033 = vrot.lane.b32.xlu0 %v5004, 32
      %v5034 = vpop.permute.xlu0 %5033
      %5035 = vrot.lane.b32.xlu0 %v5005, 32
      %v5036 = vpop.permute.xlu0 %5035
      %5037 = vrot.lane.b32.xlu0 %v5006, 32
      %v5038 = vpop.permute.xlu0 %5037
      %5039 = vrot.lane.b32.xlu0 %v5007, 32
      %v5040 = vpop.permute.xlu0 %5039
      %5041 = vrot.lane.b32.xlu0 %v5008, 32
      %v5042 = vpop.permute.xlu0 %5041
      %5043 = vrot.lane.b32.xlu0 %v5009, 32
      %v5044 = vpop.permute.xlu0 %5043
      %5045 = vrot.lane.b32.xlu0 %v5010, 32
      %v5046 = vpop.permute.xlu0 %5045
      %v5047 = vsel %vm741, %v5024, %v5026
      %v5048 = vsel %vm741, %v5026, %v5028
      %v5049 = vsel %vm741, %v5028, %v5030
      %v5050 = vsel %vm741, %v5030, %v5032
      %v5051 = vsel %vm741, %v5032, %v5034
      %v5052 = vsel %vm741, %v5036, %v5038
      %v5053 = vsel %vm741, %v5038, %v5040
      %v5054 = vsel %vm741, %v5040, %v5042
      %v5055 = vsel %vm741, %v5042, %v5044
      %v5056 = vsel %vm741, %v5044, %v5046
      %5067 = vst [vmem:[#allocation3 + $0x230] sm:$0xff] %v5047
      %5068 = vst [vmem:[#allocation3 + $0x238] sm:$0xff] %v5048
      %5069 = vst [vmem:[#allocation3 + $0x240] sm:$0xff] %v5049
      %5070 = vst [vmem:[#allocation3 + $0x248] sm:$0xff] %v5050
      %5071 = vst [vmem:[#allocation3 + $0x250] sm:$0xff] %v5051
      %5072 = vst [vmem:[#allocation3 + $0x258] sm:$0xff] %v5052
      %5073 = vst [vmem:[#allocation3 + $0x260] sm:$0xff] %v5053
      %5074 = vst [vmem:[#allocation3 + $0x268] sm:$0xff] %v5054
      %5075 = vst [vmem:[#allocation3 + $0x270] sm:$0xff] %v5055
      %5076 = vst [vmem:[#allocation3 + $0x278] sm:$0xff] %v5056
      %v5077 = vld [vmem:[#allocation2] sm:$0xff]
      %v5078 = vld [vmem:[#allocation2 + $0x8] sm:$0xff]
      %v5079 = vld [vmem:[#allocation2 + $0x10] sm:$0xff]
      %v5080 = vld [vmem:[#allocation2 + $0x18] sm:$0xff]
      %v5081 = vld [vmem:[#allocation2 + $0x20] sm:$0xff]
      %v5082 = vld [vmem:[#allocation2 + $0x28] sm:$0xff]
      %v5083 = vld [vmem:[#allocation2 + $0x38] sm:$0xff]
      %v5084 = vld [vmem:[#allocation2 + $0x40] sm:$0xff]
      %v5085 = vld [vmem:[#allocation2 + $0x48] sm:$0xff]
      %v5086 = vld [vmem:[#allocation2 + $0x50] sm:$0xff]
      %v5087 = vld [vmem:[#allocation2 + $0x58] sm:$0xff]
      %v5088 = vld [vmem:[#allocation2 + $0x60] sm:$0xff]
      %5101 = vrot.lane.b32.xlu0 %v5077, 31
      %v5102 = vpop.permute.xlu0 %5101
      %5103 = vrot.lane.b32.xlu0 %v5078, 31
      %v5104 = vpop.permute.xlu0 %5103
      %5105 = vrot.lane.b32.xlu0 %v5079, 31
      %v5106 = vpop.permute.xlu0 %5105
      %5107 = vrot.lane.b32.xlu0 %v5080, 31
      %v5108 = vpop.permute.xlu0 %5107
      %5109 = vrot.lane.b32.xlu0 %v5081, 31
      %v5110 = vpop.permute.xlu0 %5109
      %5111 = vrot.lane.b32.xlu0 %v5082, 31
      %v5112 = vpop.permute.xlu0 %5111
      %5113 = vrot.lane.b32.xlu0 %v5083, 31
      %v5114 = vpop.permute.xlu0 %5113
      %5115 = vrot.lane.b32.xlu0 %v5084, 31
      %v5116 = vpop.permute.xlu0 %5115
      %5117 = vrot.lane.b32.xlu0 %v5085, 31
      %v5118 = vpop.permute.xlu0 %5117
      %5119 = vrot.lane.b32.xlu0 %v5086, 31
      %v5120 = vpop.permute.xlu0 %5119
      %5121 = vrot.lane.b32.xlu0 %v5087, 31
      %v5122 = vpop.permute.xlu0 %5121
      %5123 = vrot.lane.b32.xlu0 %v5088, 31
      %v5124 = vpop.permute.xlu0 %5123
      %v5125 = vsel %vm781, %v5102, %v5104
      %v5126 = vsel %vm781, %v5104, %v5106
      %v5127 = vsel %vm781, %v5106, %v5108
      %v5128 = vsel %vm781, %v5108, %v5110
      %v5129 = vsel %vm781, %v5110, %v5112
      %v5130 = vsel %vm781, %v5114, %v5116
      %v5131 = vsel %vm781, %v5116, %v5118
      %v5132 = vsel %vm781, %v5118, %v5120
      %v5133 = vsel %vm781, %v5120, %v5122
      %v5134 = vsel %vm781, %v5122, %v5124
      %5145 = vst [vmem:[#allocation3 + $0x280] sm:$0xff] %v5125
      %5146 = vst [vmem:[#allocation3 + $0x288] sm:$0xff] %v5126
      %5147 = vst [vmem:[#allocation3 + $0x290] sm:$0xff] %v5127
      %5148 = vst [vmem:[#allocation3 + $0x298] sm:$0xff] %v5128
      %5149 = vst [vmem:[#allocation3 + $0x2a0] sm:$0xff] %v5129
      %5150 = vst [vmem:[#allocation3 + $0x2a8] sm:$0xff] %v5130
      %5151 = vst [vmem:[#allocation3 + $0x2b0] sm:$0xff] %v5131
      %5152 = vst [vmem:[#allocation3 + $0x2b8] sm:$0xff] %v5132
      %5153 = vst [vmem:[#allocation3 + $0x2c0] sm:$0xff] %v5133
      %5154 = vst [vmem:[#allocation3 + $0x2c8] sm:$0xff] %v5134
      %v5155 = vld [vmem:[#allocation2] sm:$0xff]
      %v5156 = vld [vmem:[#allocation2 + $0x8] sm:$0xff]
      %v5157 = vld [vmem:[#allocation2 + $0x10] sm:$0xff]
      %v5158 = vld [vmem:[#allocation2 + $0x18] sm:$0xff]
      %v5159 = vld [vmem:[#allocation2 + $0x20] sm:$0xff]
      %v5160 = vld [vmem:[#allocation2 + $0x28] sm:$0xff]
      %v5161 = vld [vmem:[#allocation2 + $0x38] sm:$0xff]
      %v5162 = vld [vmem:[#allocation2 + $0x40] sm:$0xff]
      %v5163 = vld [vmem:[#allocation2 + $0x48] sm:$0xff]
      %v5164 = vld [vmem:[#allocation2 + $0x50] sm:$0xff]
      %v5165 = vld [vmem:[#allocation2 + $0x58] sm:$0xff]
      %v5166 = vld [vmem:[#allocation2 + $0x60] sm:$0xff]
      %5179 = vrot.lane.b32.xlu0 %v5155, 30
      %v5180 = vpop.permute.xlu0 %5179
      %5181 = vrot.lane.b32.xlu0 %v5156, 30
      %v5182 = vpop.permute.xlu0 %5181
      %5183 = vrot.lane.b32.xlu0 %v5157, 30
      %v5184 = vpop.permute.xlu0 %5183
      %5185 = vrot.lane.b32.xlu0 %v5158, 30
      %v5186 = vpop.permute.xlu0 %5185
      %5187 = vrot.lane.b32.xlu0 %v5159, 30
      %v5188 = vpop.permute.xlu0 %5187
      %5189 = vrot.lane.b32.xlu0 %v5160, 30
      %v5190 = vpop.permute.xlu0 %5189
      %5191 = vrot.lane.b32.xlu0 %v5161, 30
      %v5192 = vpop.permute.xlu0 %5191
      %5193 = vrot.lane.b32.xlu0 %v5162, 30
      %v5194 = vpop.permute.xlu0 %5193
      %5195 = vrot.lane.b32.xlu0 %v5163, 30
      %v5196 = vpop.permute.xlu0 %5195
      %5197 = vrot.lane.b32.xlu0 %v5164, 30
      %v5198 = vpop.permute.xlu0 %5197
      %5199 = vrot.lane.b32.xlu0 %v5165, 30
      %v5200 = vpop.permute.xlu0 %5199
      %5201 = vrot.lane.b32.xlu0 %v5166, 30
      %v5202 = vpop.permute.xlu0 %5201
      %v5203 = vsel %vm821, %v5180, %v5182
      %v5204 = vsel %vm821, %v5182, %v5184
      %v5205 = vsel %vm821, %v5184, %v5186
      %v5206 = vsel %vm821, %v5186, %v5188
      %v5207 = vsel %vm821, %v5188, %v5190
      %v5208 = vsel %vm821, %v5192, %v5194
      %v5209 = vsel %vm821, %v5194, %v5196
      %v5210 = vsel %vm821, %v5196, %v5198
      %v5211 = vsel %vm821, %v5198, %v5200
      %v5212 = vsel %vm821, %v5200, %v5202
      %5223 = vst [vmem:[#allocation3 + $0x2d0] sm:$0xff] %v5203
      %5224 = vst [vmem:[#allocation3 + $0x2d8] sm:$0xff] %v5204
      %5225 = vst [vmem:[#allocation3 + $0x2e0] sm:$0xff] %v5205
      %5226 = vst [vmem:[#allocation3 + $0x2e8] sm:$0xff] %v5206
      %5227 = vst [vmem:[#allocation3 + $0x2f0] sm:$0xff] %v5207
      %5228 = vst [vmem:[#allocation3 + $0x2f8] sm:$0xff] %v5208
      %5229 = vst [vmem:[#allocation3 + $0x300] sm:$0xff] %v5209
      %5230 = vst [vmem:[#allocation3 + $0x308] sm:$0xff] %v5210
      %5231 = vst [vmem:[#allocation3 + $0x310] sm:$0xff] %v5211
      %5232 = vst [vmem:[#allocation3 + $0x318] sm:$0xff] %v5212
      %v5233 = vld [vmem:[#allocation2] sm:$0xff]
      %v5234 = vld [vmem:[#allocation2 + $0x8] sm:$0xff]
      %v5235 = vld [vmem:[#allocation2 + $0x10] sm:$0xff]
      %v5236 = vld [vmem:[#allocation2 + $0x18] sm:$0xff]
      %v5237 = vld [vmem:[#allocation2 + $0x20] sm:$0xff]
      %v5238 = vld [vmem:[#allocation2 + $0x28] sm:$0xff]
      %v5239 = vld [vmem:[#allocation2 + $0x38] sm:$0xff]
      %v5240 = vld [vmem:[#allocation2 + $0x40] sm:$0xff]
      %v5241 = vld [vmem:[#allocation2 + $0x48] sm:$0xff]
      %v5242 = vld [vmem:[#allocation2 + $0x50] sm:$0xff]
      %v5243 = vld [vmem:[#allocation2 + $0x58] sm:$0xff]
      %v5244 = vld [vmem:[#allocation2 + $0x60] sm:$0xff]
      %5257 = vrot.lane.b32.xlu0 %v5233, 2
      %v5258 = vpop.permute.xlu0 %5257
      %5259 = vrot.lane.b32.xlu0 %v5234, 2
      %v5260 = vpop.permute.xlu0 %5259
      %5261 = vrot.lane.b32.xlu0 %v5235, 2
      %v5262 = vpop.permute.xlu0 %5261
      %5263 = vrot.lane.b32.xlu0 %v5236, 2
      %v5264 = vpop.permute.xlu0 %5263
      %5265 = vrot.lane.b32.xlu0 %v5237, 2
      %v5266 = vpop.permute.xlu0 %5265
      %5267 = vrot.lane.b32.xlu0 %v5238, 2
      %v5268 = vpop.permute.xlu0 %5267
      %5269 = vrot.lane.b32.xlu0 %v5239, 2
      %v5270 = vpop.permute.xlu0 %5269
      %5271 = vrot.lane.b32.xlu0 %v5240, 2
      %v5272 = vpop.permute.xlu0 %5271
      %5273 = vrot.lane.b32.xlu0 %v5241, 2
      %v5274 = vpop.permute.xlu0 %5273
      %5275 = vrot.lane.b32.xlu0 %v5242, 2
      %v5276 = vpop.permute.xlu0 %5275
      %5277 = vrot.lane.b32.xlu0 %v5243, 2
      %v5278 = vpop.permute.xlu0 %5277
      %5279 = vrot.lane.b32.xlu0 %v5244, 2
      %v5280 = vpop.permute.xlu0 %5279
      %v5281 = vsel %vm861, %v5258, %v5260
      %v5282 = vsel %vm861, %v5260, %v5262
      %v5283 = vsel %vm861, %v5262, %v5264
      %v5284 = vsel %vm861, %v5264, %v5266
      %v5285 = vsel %vm861, %v5266, %v5268
      %v5286 = vsel %vm861, %v5270, %v5272
      %v5287 = vsel %vm861, %v5272, %v5274
      %v5288 = vsel %vm861, %v5274, %v5276
      %v5289 = vsel %vm861, %v5276, %v5278
      %v5290 = vsel %vm861, %v5278, %v5280
      %5301 = vst [vmem:[#allocation3 + $0x320] sm:$0xff] %v5281
      %5302 = vst [vmem:[#allocation3 + $0x328] sm:$0xff] %v5282
      %5303 = vst [vmem:[#allocation3 + $0x330] sm:$0xff] %v5283
      %5304 = vst [vmem:[#allocation3 + $0x338] sm:$0xff] %v5284
      %5305 = vst [vmem:[#allocation3 + $0x340] sm:$0xff] %v5285
      %5306 = vst [vmem:[#allocation3 + $0x348] sm:$0xff] %v5286
      %5307 = vst [vmem:[#allocation3 + $0x350] sm:$0xff] %v5287
      %5308 = vst [vmem:[#allocation3 + $0x358] sm:$0xff] %v5288
      %5309 = vst [vmem:[#allocation3 + $0x360] sm:$0xff] %v5289
      %5310 = vst [vmem:[#allocation3 + $0x368] sm:$0xff] %v5290
      %v5311 = vld [vmem:[#allocation2] sm:$0xff]
      %v5312 = vld [vmem:[#allocation2 + $0x8] sm:$0xff]
      %v5313 = vld [vmem:[#allocation2 + $0x10] sm:$0xff]
      %v5314 = vld [vmem:[#allocation2 + $0x18] sm:$0xff]
      %v5315 = vld [vmem:[#allocation2 + $0x20] sm:$0xff]
      %v5316 = vld [vmem:[#allocation2 + $0x28] sm:$0xff]
      %v5317 = vld [vmem:[#allocation2 + $0x38] sm:$0xff]
      %v5318 = vld [vmem:[#allocation2 + $0x40] sm:$0xff]
      %v5319 = vld [vmem:[#allocation2 + $0x48] sm:$0xff]
      %v5320 = vld [vmem:[#allocation2 + $0x50] sm:$0xff]
      %v5321 = vld [vmem:[#allocation2 + $0x58] sm:$0xff]
      %v5322 = vld [vmem:[#allocation2 + $0x60] sm:$0xff]
      %5335 = vrot.lane.b32.xlu0 %v5311, 1
      %v5336 = vpop.permute.xlu0 %5335
      %5337 = vrot.lane.b32.xlu0 %v5312, 1
      %v5338 = vpop.permute.xlu0 %5337
      %5339 = vrot.lane.b32.xlu0 %v5313, 1
      %v5340 = vpop.permute.xlu0 %5339
      %5341 = vrot.lane.b32.xlu0 %v5314, 1
      %v5342 = vpop.permute.xlu0 %5341
      %5343 = vrot.lane.b32.xlu0 %v5315, 1
      %v5344 = vpop.permute.xlu0 %5343
      %5345 = vrot.lane.b32.xlu0 %v5316, 1
      %v5346 = vpop.permute.xlu0 %5345
      %5347 = vrot.lane.b32.xlu0 %v5317, 1
      %v5348 = vpop.permute.xlu0 %5347
      %5349 = vrot.lane.b32.xlu0 %v5318, 1
      %v5350 = vpop.permute.xlu0 %5349
      %5351 = vrot.lane.b32.xlu0 %v5319, 1
      %v5352 = vpop.permute.xlu0 %5351
      %5353 = vrot.lane.b32.xlu0 %v5320, 1
      %v5354 = vpop.permute.xlu0 %5353
      %5355 = vrot.lane.b32.xlu0 %v5321, 1
      %v5356 = vpop.permute.xlu0 %5355
      %5357 = vrot.lane.b32.xlu0 %v5322, 1
      %v5358 = vpop.permute.xlu0 %5357
      %v5359 = vsel %vm901, %v5336, %v5338
      %v5360 = vsel %vm901, %v5338, %v5340
      %v5361 = vsel %vm901, %v5340, %v5342
      %v5362 = vsel %vm901, %v5342, %v5344
      %v5363 = vsel %vm901, %v5344, %v5346
      %v5364 = vsel %vm901, %v5348, %v5350
      %v5365 = vsel %vm901, %v5350, %v5352
      %v5366 = vsel %vm901, %v5352, %v5354
      %v5367 = vsel %vm901, %v5354, %v5356
      %v5368 = vsel %vm901, %v5356, %v5358
      %5379 = vst [vmem:[#allocation3 + $0x370] sm:$0xff] %v5359
      %5380 = vst [vmem:[#allocation3 + $0x378] sm:$0xff] %v5360
      %5381 = vst [vmem:[#allocation3 + $0x380] sm:$0xff] %v5361
      %5382 = vst [vmem:[#allocation3 + $0x388] sm:$0xff] %v5362
      %5383 = vst [vmem:[#allocation3 + $0x390] sm:$0xff] %v5363
      %5384 = vst [vmem:[#allocation3 + $0x398] sm:$0xff] %v5364
      %5385 = vst [vmem:[#allocation3 + $0x3a0] sm:$0xff] %v5365
      %5386 = vst [vmem:[#allocation3 + $0x3a8] sm:$0xff] %v5366
      %5387 = vst [vmem:[#allocation3 + $0x3b0] sm:$0xff] %v5367
      %5388 = vst [vmem:[#allocation3 + $0x3b8] sm:$0xff] %v5368
      %v5389 = vld [vmem:[#allocation2 + $0x8] sm:$0xff]
      %v5390 = vld [vmem:[#allocation2 + $0x10] sm:$0xff]
      %v5391 = vld [vmem:[#allocation2 + $0x18] sm:$0xff]
      %v5392 = vld [vmem:[#allocation2 + $0x20] sm:$0xff]
      %v5393 = vld [vmem:[#allocation2 + $0x28] sm:$0xff]
      %v5394 = vld [vmem:[#allocation2 + $0x40] sm:$0xff]
      %v5395 = vld [vmem:[#allocation2 + $0x48] sm:$0xff]
      %v5396 = vld [vmem:[#allocation2 + $0x50] sm:$0xff]
      %v5397 = vld [vmem:[#allocation2 + $0x58] sm:$0xff]
      %v5398 = vld [vmem:[#allocation2 + $0x60] sm:$0xff]
      %5399 = vst [vmem:[#allocation3 + $0x3c0] sm:$0xff] %v5389
      %5400 = vst [vmem:[#allocation3 + $0x3c8] sm:$0xff] %v5390
      %5401 = vst [vmem:[#allocation3 + $0x3d0] sm:$0xff] %v5391
      %5402 = vst [vmem:[#allocation3 + $0x3d8] sm:$0xff] %v5392
      %5403 = vst [vmem:[#allocation3 + $0x3e0] sm:$0xff] %v5393
      %5404 = vst [vmem:[#allocation3 + $0x3e8] sm:$0xff] %v5394
      %5405 = vst [vmem:[#allocation3 + $0x3f0] sm:$0xff] %v5395
      %5406 = vst [vmem:[#allocation3 + $0x3f8] sm:$0xff] %v5396
      %5407 = vst [vmem:[#allocation3 + $0x400] sm:$0xff] %v5397
      %5408 = vst [vmem:[#allocation3 + $0x408] sm:$0xff] %v5398
      %v5409 = vld [vmem:[#allocation2 + $0x8] sm:$0xff]
      %v5410 = vld [vmem:[#allocation2 + $0x10] sm:$0xff]
      %v5411 = vld [vmem:[#allocation2 + $0x18] sm:$0xff]
      %v5412 = vld [vmem:[#allocation2 + $0x20] sm:$0xff]
      %v5413 = vld [vmem:[#allocation2 + $0x28] sm:$0xff]
      %v5414 = vld [vmem:[#allocation2 + $0x30] sm:$0xff]
      %v5415 = vld [vmem:[#allocation2 + $0x40] sm:$0xff]
      %v5416 = vld [vmem:[#allocation2 + $0x48] sm:$0xff]
      %v5417 = vld [vmem:[#allocation2 + $0x50] sm:$0xff]
      %v5418 = vld [vmem:[#allocation2 + $0x58] sm:$0xff]
      %v5419 = vld [vmem:[#allocation2 + $0x60] sm:$0xff]
      %v5420 = vld [vmem:[#allocation2 + $0x68] sm:$0xff]
      %5433 = vrot.lane.b32.xlu0 %v5409, 127
      %v5434 = vpop.permute.xlu0 %5433
      %5435 = vrot.lane.b32.xlu0 %v5410, 127
      %v5436 = vpop.permute.xlu0 %5435
      %5437 = vrot.lane.b32.xlu0 %v5411, 127
      %v5438 = vpop.permute.xlu0 %5437
      %5439 = vrot.lane.b32.xlu0 %v5412, 127
      %v5440 = vpop.permute.xlu0 %5439
      %5441 = vrot.lane.b32.xlu0 %v5413, 127
      %v5442 = vpop.permute.xlu0 %5441
      %5443 = vrot.lane.b32.xlu0 %v5414, 127
      %v5444 = vpop.permute.xlu0 %5443
      %5445 = vrot.lane.b32.xlu0 %v5415, 127
      %v5446 = vpop.permute.xlu0 %5445
      %5447 = vrot.lane.b32.xlu0 %v5416, 127
      %v5448 = vpop.permute.xlu0 %5447
      %5449 = vrot.lane.b32.xlu0 %v5417, 127
      %v5450 = vpop.permute.xlu0 %5449
      %5451 = vrot.lane.b32.xlu0 %v5418, 127
      %v5452 = vpop.permute.xlu0 %5451
      %5453 = vrot.lane.b32.xlu0 %v5419, 127
      %v5454 = vpop.permute.xlu0 %5453
      %5455 = vrot.lane.b32.xlu0 %v5420, 127
      %v5456 = vpop.permute.xlu0 %5455
      %v5457 = vsel %vm951, %v5434, %v5436
      %v5458 = vsel %vm951, %v5436, %v5438
      %v5459 = vsel %vm951, %v5438, %v5440
      %v5460 = vsel %vm951, %v5440, %v5442
      %v5461 = vsel %vm951, %v5442, %v5444
      %v5462 = vsel %vm951, %v5446, %v5448
      %v5463 = vsel %vm951, %v5448, %v5450
      %v5464 = vsel %vm951, %v5450, %v5452
      %v5465 = vsel %vm951, %v5452, %v5454
      %v5466 = vsel %vm951, %v5454, %v5456
      %5477 = vst [vmem:[#allocation3 + $0x410] sm:$0xff] %v5457
      %5478 = vst [vmem:[#allocation3 + $0x418] sm:$0xff] %v5458
      %5479 = vst [vmem:[#allocation3 + $0x420] sm:$0xff] %v5459
      %5480 = vst [vmem:[#allocation3 + $0x428] sm:$0xff] %v5460
      %5481 = vst [vmem:[#allocation3 + $0x430] sm:$0xff] %v5461
      %5482 = vst [vmem:[#allocation3 + $0x438] sm:$0xff] %v5462
      %5483 = vst [vmem:[#allocation3 + $0x440] sm:$0xff] %v5463
      %5484 = vst [vmem:[#allocation3 + $0x448] sm:$0xff] %v5464
      %5485 = vst [vmem:[#allocation3 + $0x450] sm:$0xff] %v5465
      %5486 = vst [vmem:[#allocation3 + $0x458] sm:$0xff] %v5466
      %v5487 = vld [vmem:[#allocation2 + $0x8] sm:$0xff]
      %v5488 = vld [vmem:[#allocation2 + $0x10] sm:$0xff]
      %v5489 = vld [vmem:[#allocation2 + $0x18] sm:$0xff]
      %v5490 = vld [vmem:[#allocation2 + $0x20] sm:$0xff]
      %v5491 = vld [vmem:[#allocation2 + $0x28] sm:$0xff]
      %v5492 = vld [vmem:[#allocation2 + $0x30] sm:$0xff]
      %v5493 = vld [vmem:[#allocation2 + $0x40] sm:$0xff]
      %v5494 = vld [vmem:[#allocation2 + $0x48] sm:$0xff]
      %v5495 = vld [vmem:[#allocation2 + $0x50] sm:$0xff]
      %v5496 = vld [vmem:[#allocation2 + $0x58] sm:$0xff]
      %v5497 = vld [vmem:[#allocation2 + $0x60] sm:$0xff]
      %v5498 = vld [vmem:[#allocation2 + $0x68] sm:$0xff]
      %5511 = vrot.lane.b32.xlu0 %v5487, 126
      %v5512 = vpop.permute.xlu0 %5511
      %5513 = vrot.lane.b32.xlu0 %v5488, 126
      %v5514 = vpop.permute.xlu0 %5513
      %5515 = vrot.lane.b32.xlu0 %v5489, 126
      %v5516 = vpop.permute.xlu0 %5515
      %5517 = vrot.lane.b32.xlu0 %v5490, 126
      %v5518 = vpop.permute.xlu0 %5517
      %5519 = vrot.lane.b32.xlu0 %v5491, 126
      %v5520 = vpop.permute.xlu0 %5519
      %5521 = vrot.lane.b32.xlu0 %v5492, 126
      %v5522 = vpop.permute.xlu0 %5521
      %5523 = vrot.lane.b32.xlu0 %v5493, 126
      %v5524 = vpop.permute.xlu0 %5523
      %5525 = vrot.lane.b32.xlu0 %v5494, 126
      %v5526 = vpop.permute.xlu0 %5525
      %5527 = vrot.lane.b32.xlu0 %v5495, 126
      %v5528 = vpop.permute.xlu0 %5527
      %5529 = vrot.lane.b32.xlu0 %v5496, 126
      %v5530 = vpop.permute.xlu0 %5529
      %5531 = vrot.lane.b32.xlu0 %v5497, 126
      %v5532 = vpop.permute.xlu0 %5531
      %5533 = vrot.lane.b32.xlu0 %v5498, 126
      %v5534 = vpop.permute.xlu0 %5533
      %v5535 = vsel %vm991, %v5512, %v5514
      %v5536 = vsel %vm991, %v5514, %v5516
      %v5537 = vsel %vm991, %v5516, %v5518
      %v5538 = vsel %vm991, %v5518, %v5520
      %v5539 = vsel %vm991, %v5520, %v5522
      %v5540 = vsel %vm991, %v5524, %v5526
      %v5541 = vsel %vm991, %v5526, %v5528
      %v5542 = vsel %vm991, %v5528, %v5530
      %v5543 = vsel %vm991, %v5530, %v5532
      %v5544 = vsel %vm991, %v5532, %v5534
      %5555 = vst [vmem:[#allocation3 + $0x460] sm:$0xff] %v5535
      %5556 = vst [vmem:[#allocation3 + $0x468] sm:$0xff] %v5536
      %5557 = vst [vmem:[#allocation3 + $0x470] sm:$0xff] %v5537
      %5558 = vst [vmem:[#allocation3 + $0x478] sm:$0xff] %v5538
      %5559 = vst [vmem:[#allocation3 + $0x480] sm:$0xff] %v5539
      %5560 = vst [vmem:[#allocation3 + $0x488] sm:$0xff] %v5540
      %5561 = vst [vmem:[#allocation3 + $0x490] sm:$0xff] %v5541
      %5562 = vst [vmem:[#allocation3 + $0x498] sm:$0xff] %v5542
      %5563 = vst [vmem:[#allocation3 + $0x4a0] sm:$0xff] %v5543
      %5564 = vst [vmem:[#allocation3 + $0x4a8] sm:$0xff] %v5544
      %v5565 = vld [vmem:[#allocation2 + $0x8] sm:$0xff]
      %v5566 = vld [vmem:[#allocation2 + $0x10] sm:$0xff]
      %v5567 = vld [vmem:[#allocation2 + $0x18] sm:$0xff]
      %v5568 = vld [vmem:[#allocation2 + $0x20] sm:$0xff]
      %v5569 = vld [vmem:[#allocation2 + $0x28] sm:$0xff]
      %v5570 = vld [vmem:[#allocation2 + $0x30] sm:$0xff]
      %v5571 = vld [vmem:[#allocation2 + $0x40] sm:$0xff]
      %v5572 = vld [vmem:[#allocation2 + $0x48] sm:$0xff]
      %v5573 = vld [vmem:[#allocation2 + $0x50] sm:$0xff]
      %v5574 = vld [vmem:[#allocation2 + $0x58] sm:$0xff]
      %v5575 = vld [vmem:[#allocation2 + $0x60] sm:$0xff]
      %v5576 = vld [vmem:[#allocation2 + $0x68] sm:$0xff]
      %5589 = vrot.lane.b32.xlu0 %v5565, 98
      %v5590 = vpop.permute.xlu0 %5589
      %5591 = vrot.lane.b32.xlu0 %v5566, 98
      %v5592 = vpop.permute.xlu0 %5591
      %5593 = vrot.lane.b32.xlu0 %v5567, 98
      %v5594 = vpop.permute.xlu0 %5593
      %5595 = vrot.lane.b32.xlu0 %v5568, 98
      %v5596 = vpop.permute.xlu0 %5595
      %5597 = vrot.lane.b32.xlu0 %v5569, 98
      %v5598 = vpop.permute.xlu0 %5597
      %5599 = vrot.lane.b32.xlu0 %v5570, 98
      %v5600 = vpop.permute.xlu0 %5599
      %5601 = vrot.lane.b32.xlu0 %v5571, 98
      %v5602 = vpop.permute.xlu0 %5601
      %5603 = vrot.lane.b32.xlu0 %v5572, 98
      %v5604 = vpop.permute.xlu0 %5603
      %5605 = vrot.lane.b32.xlu0 %v5573, 98
      %v5606 = vpop.permute.xlu0 %5605
      %5607 = vrot.lane.b32.xlu0 %v5574, 98
      %v5608 = vpop.permute.xlu0 %5607
      %5609 = vrot.lane.b32.xlu0 %v5575, 98
      %v5610 = vpop.permute.xlu0 %5609
      %5611 = vrot.lane.b32.xlu0 %v5576, 98
      %v5612 = vpop.permute.xlu0 %5611
      %v5613 = vsel %vm1031, %v5590, %v5592
      %v5614 = vsel %vm1031, %v5592, %v5594
      %v5615 = vsel %vm1031, %v5594, %v5596
      %v5616 = vsel %vm1031, %v5596, %v5598
      %v5617 = vsel %vm1031, %v5598, %v5600
      %v5618 = vsel %vm1031, %v5602, %v5604
      %v5619 = vsel %vm1031, %v5604, %v5606
      %v5620 = vsel %vm1031, %v5606, %v5608
      %v5621 = vsel %vm1031, %v5608, %v5610
      %v5622 = vsel %vm1031, %v5610, %v5612
      %5633 = vst [vmem:[#allocation3 + $0x4b0] sm:$0xff] %v5613
      %5634 = vst [vmem:[#allocation3 + $0x4b8] sm:$0xff] %v5614
      %5635 = vst [vmem:[#allocation3 + $0x4c0] sm:$0xff] %v5615
      %5636 = vst [vmem:[#allocation3 + $0x4c8] sm:$0xff] %v5616
      %5637 = vst [vmem:[#allocation3 + $0x4d0] sm:$0xff] %v5617
      %5638 = vst [vmem:[#allocation3 + $0x4d8] sm:$0xff] %v5618
      %5639 = vst [vmem:[#allocation3 + $0x4e0] sm:$0xff] %v5619
      %5640 = vst [vmem:[#allocation3 + $0x4e8] sm:$0xff] %v5620
      %5641 = vst [vmem:[#allocation3 + $0x4f0] sm:$0xff] %v5621
      %5642 = vst [vmem:[#allocation3 + $0x4f8] sm:$0xff] %v5622
      %v5643 = vld [vmem:[#allocation2 + $0x8] sm:$0xff]
      %v5644 = vld [vmem:[#allocation2 + $0x10] sm:$0xff]
      %v5645 = vld [vmem:[#allocation2 + $0x18] sm:$0xff]
      %v5646 = vld [vmem:[#allocation2 + $0x20] sm:$0xff]
      %v5647 = vld [vmem:[#allocation2 + $0x28] sm:$0xff]
      %v5648 = vld [vmem:[#allocation2 + $0x30] sm:$0xff]
      %v5649 = vld [vmem:[#allocation2 + $0x40] sm:$0xff]
      %v5650 = vld [vmem:[#allocation2 + $0x48] sm:$0xff]
      %v5651 = vld [vmem:[#allocation2 + $0x50] sm:$0xff]
      %v5652 = vld [vmem:[#allocation2 + $0x58] sm:$0xff]
      %v5653 = vld [vmem:[#allocation2 + $0x60] sm:$0xff]
      %v5654 = vld [vmem:[#allocation2 + $0x68] sm:$0xff]
      %5667 = vrot.lane.b32.xlu0 %v5643, 97
      %v5668 = vpop.permute.xlu0 %5667
      %5669 = vrot.lane.b32.xlu0 %v5644, 97
      %v5670 = vpop.permute.xlu0 %5669
      %5671 = vrot.lane.b32.xlu0 %v5645, 97
      %v5672 = vpop.permute.xlu0 %5671
      %5673 = vrot.lane.b32.xlu0 %v5646, 97
      %v5674 = vpop.permute.xlu0 %5673
      %5675 = vrot.lane.b32.xlu0 %v5647, 97
      %v5676 = vpop.permute.xlu0 %5675
      %5677 = vrot.lane.b32.xlu0 %v5648, 97
      %v5678 = vpop.permute.xlu0 %5677
      %5679 = vrot.lane.b32.xlu0 %v5649, 97
      %v5680 = vpop.permute.xlu0 %5679
      %5681 = vrot.lane.b32.xlu0 %v5650, 97
      %v5682 = vpop.permute.xlu0 %5681
      %5683 = vrot.lane.b32.xlu0 %v5651, 97
      %v5684 = vpop.permute.xlu0 %5683
      %5685 = vrot.lane.b32.xlu0 %v5652, 97
      %v5686 = vpop.permute.xlu0 %5685
      %5687 = vrot.lane.b32.xlu0 %v5653, 97
      %v5688 = vpop.permute.xlu0 %5687
      %5689 = vrot.lane.b32.xlu0 %v5654, 97
      %v5690 = vpop.permute.xlu0 %5689
      %v5691 = vsel %vm1071, %v5668, %v5670
      %v5692 = vsel %vm1071, %v5670, %v5672
      %v5693 = vsel %vm1071, %v5672, %v5674
      %v5694 = vsel %vm1071, %v5674, %v5676
      %v5695 = vsel %vm1071, %v5676, %v5678
      %v5696 = vsel %vm1071, %v5680, %v5682
      %v5697 = vsel %vm1071, %v5682, %v5684
      %v5698 = vsel %vm1071, %v5684, %v5686
      %v5699 = vsel %vm1071, %v5686, %v5688
      %v5700 = vsel %vm1071, %v5688, %v5690
      %5711 = vst [vmem:[#allocation3 + $0x500] sm:$0xff] %v5691
      %5712 = vst [vmem:[#allocation3 + $0x508] sm:$0xff] %v5692
      %5713 = vst [vmem:[#allocation3 + $0x510] sm:$0xff] %v5693
      %5714 = vst [vmem:[#allocation3 + $0x518] sm:$0xff] %v5694
      %5715 = vst [vmem:[#allocation3 + $0x520] sm:$0xff] %v5695
      %5716 = vst [vmem:[#allocation3 + $0x528] sm:$0xff] %v5696
      %5717 = vst [vmem:[#allocation3 + $0x530] sm:$0xff] %v5697
      %5718 = vst [vmem:[#allocation3 + $0x538] sm:$0xff] %v5698
      %5719 = vst [vmem:[#allocation3 + $0x540] sm:$0xff] %v5699
      %5720 = vst [vmem:[#allocation3 + $0x548] sm:$0xff] %v5700
      %v5721 = vld [vmem:[#allocation2 + $0x8] sm:$0xff]
      %v5722 = vld [vmem:[#allocation2 + $0x10] sm:$0xff]
      %v5723 = vld [vmem:[#allocation2 + $0x18] sm:$0xff]
      %v5724 = vld [vmem:[#allocation2 + $0x20] sm:$0xff]
      %v5725 = vld [vmem:[#allocation2 + $0x28] sm:$0xff]
      %v5726 = vld [vmem:[#allocation2 + $0x30] sm:$0xff]
      %v5727 = vld [vmem:[#allocation2 + $0x40] sm:$0xff]
      %v5728 = vld [vmem:[#allocation2 + $0x48] sm:$0xff]
      %v5729 = vld [vmem:[#allocation2 + $0x50] sm:$0xff]
      %v5730 = vld [vmem:[#allocation2 + $0x58] sm:$0xff]
      %v5731 = vld [vmem:[#allocation2 + $0x60] sm:$0xff]
      %v5732 = vld [vmem:[#allocation2 + $0x68] sm:$0xff]
      %5745 = vrot.lane.b32.xlu0 %v5721, 96
      %v5746 = vpop.permute.xlu0 %5745
      %5747 = vrot.lane.b32.xlu0 %v5722, 96
      %v5748 = vpop.permute.xlu0 %5747
      %5749 = vrot.lane.b32.xlu0 %v5723, 96
      %v5750 = vpop.permute.xlu0 %5749
      %5751 = vrot.lane.b32.xlu0 %v5724, 96
      %v5752 = vpop.permute.xlu0 %5751
      %5753 = vrot.lane.b32.xlu0 %v5725, 96
      %v5754 = vpop.permute.xlu0 %5753
      %5755 = vrot.lane.b32.xlu0 %v5726, 96
      %v5756 = vpop.permute.xlu0 %5755
      %5757 = vrot.lane.b32.xlu0 %v5727, 96
      %v5758 = vpop.permute.xlu0 %5757
      %5759 = vrot.lane.b32.xlu0 %v5728, 96
      %v5760 = vpop.permute.xlu0 %5759
      %5761 = vrot.lane.b32.xlu0 %v5729, 96
      %v5762 = vpop.permute.xlu0 %5761
      %5763 = vrot.lane.b32.xlu0 %v5730, 96
      %v5764 = vpop.permute.xlu0 %5763
      %5765 = vrot.lane.b32.xlu0 %v5731, 96
      %v5766 = vpop.permute.xlu0 %5765
      %5767 = vrot.lane.b32.xlu0 %v5732, 96
      %v5768 = vpop.permute.xlu0 %5767
      %v5769 = vsel %vm1111, %v5746, %v5748
      %v5770 = vsel %vm1111, %v5748, %v5750
      %v5771 = vsel %vm1111, %v5750, %v5752
      %v5772 = vsel %vm1111, %v5752, %v5754
      %v5773 = vsel %vm1111, %v5754, %v5756
      %v5774 = vsel %vm1111, %v5758, %v5760
      %v5775 = vsel %vm1111, %v5760, %v5762
      %v5776 = vsel %vm1111, %v5762, %v5764
      %v5777 = vsel %vm1111, %v5764, %v5766
      %v5778 = vsel %vm1111, %v5766, %v5768
      %5789 = vst [vmem:[#allocation3 + $0x550] sm:$0xff] %v5769
      %5790 = vst [vmem:[#allocation3 + $0x558] sm:$0xff] %v5770
      %5791 = vst [vmem:[#allocation3 + $0x560] sm:$0xff] %v5771
      %5792 = vst [vmem:[#allocation3 + $0x568] sm:$0xff] %v5772
      %5793 = vst [vmem:[#allocation3 + $0x570] sm:$0xff] %v5773
      %5794 = vst [vmem:[#allocation3 + $0x578] sm:$0xff] %v5774
      %5795 = vst [vmem:[#allocation3 + $0x580] sm:$0xff] %v5775
      %5796 = vst [vmem:[#allocation3 + $0x588] sm:$0xff] %v5776
      %5797 = vst [vmem:[#allocation3 + $0x590] sm:$0xff] %v5777
      %5798 = vst [vmem:[#allocation3 + $0x598] sm:$0xff] %v5778
      %v5799 = vld [vmem:[#allocation2 + $0x8] sm:$0xff]
      %v5800 = vld [vmem:[#allocation2 + $0x10] sm:$0xff]
      %v5801 = vld [vmem:[#allocation2 + $0x18] sm:$0xff]
      %v5802 = vld [vmem:[#allocation2 + $0x20] sm:$0xff]
      %v5803 = vld [vmem:[#allocation2 + $0x28] sm:$0xff]
      %v5804 = vld [vmem:[#allocation2 + $0x30] sm:$0xff]
      %v5805 = vld [vmem:[#allocation2 + $0x40] sm:$0xff]
      %v5806 = vld [vmem:[#allocation2 + $0x48] sm:$0xff]
      %v5807 = vld [vmem:[#allocation2 + $0x50] sm:$0xff]
      %v5808 = vld [vmem:[#allocation2 + $0x58] sm:$0xff]
      %v5809 = vld [vmem:[#allocation2 + $0x60] sm:$0xff]
      %v5810 = vld [vmem:[#allocation2 + $0x68] sm:$0xff]
      %5823 = vrot.lane.b32.xlu0 %v5799, 95
      %v5824 = vpop.permute.xlu0 %5823
      %5825 = vrot.lane.b32.xlu0 %v5800, 95
      %v5826 = vpop.permute.xlu0 %5825
      %5827 = vrot.lane.b32.xlu0 %v5801, 95
      %v5828 = vpop.permute.xlu0 %5827
      %5829 = vrot.lane.b32.xlu0 %v5802, 95
      %v5830 = vpop.permute.xlu0 %5829
      %5831 = vrot.lane.b32.xlu0 %v5803, 95
      %v5832 = vpop.permute.xlu0 %5831
      %5833 = vrot.lane.b32.xlu0 %v5804, 95
      %v5834 = vpop.permute.xlu0 %5833
      %5835 = vrot.lane.b32.xlu0 %v5805, 95
      %v5836 = vpop.permute.xlu0 %5835
      %5837 = vrot.lane.b32.xlu0 %v5806, 95
      %v5838 = vpop.permute.xlu0 %5837
      %5839 = vrot.lane.b32.xlu0 %v5807, 95
      %v5840 = vpop.permute.xlu0 %5839
      %5841 = vrot.lane.b32.xlu0 %v5808, 95
      %v5842 = vpop.permute.xlu0 %5841
      %5843 = vrot.lane.b32.xlu0 %v5809, 95
      %v5844 = vpop.permute.xlu0 %5843
      %5845 = vrot.lane.b32.xlu0 %v5810, 95
      %v5846 = vpop.permute.xlu0 %5845
      %v5847 = vsel %vm1151, %v5824, %v5826
      %v5848 = vsel %vm1151, %v5826, %v5828
      %v5849 = vsel %vm1151, %v5828, %v5830
      %v5850 = vsel %vm1151, %v5830, %v5832
      %v5851 = vsel %vm1151, %v5832, %v5834
      %v5852 = vsel %vm1151, %v5836, %v5838
      %v5853 = vsel %vm1151, %v5838, %v5840
      %v5854 = vsel %vm1151, %v5840, %v5842
      %v5855 = vsel %vm1151, %v5842, %v5844
      %v5856 = vsel %vm1151, %v5844, %v5846
      %5867 = vst [vmem:[#allocation3 + $0x5a0] sm:$0xff] %v5847
      %5868 = vst [vmem:[#allocation3 + $0x5a8] sm:$0xff] %v5848
      %5869 = vst [vmem:[#allocation3 + $0x5b0] sm:$0xff] %v5849
      %5870 = vst [vmem:[#allocation3 + $0x5b8] sm:$0xff] %v5850
      %5871 = vst [vmem:[#allocation3 + $0x5c0] sm:$0xff] %v5851
      %5872 = vst [vmem:[#allocation3 + $0x5c8] sm:$0xff] %v5852
      %5873 = vst [vmem:[#allocation3 + $0x5d0] sm:$0xff] %v5853
      %5874 = vst [vmem:[#allocation3 + $0x5d8] sm:$0xff] %v5854
      %5875 = vst [vmem:[#allocation3 + $0x5e0] sm:$0xff] %v5855
      %5876 = vst [vmem:[#allocation3 + $0x5e8] sm:$0xff] %v5856
      %v5877 = vld [vmem:[#allocation2 + $0x8] sm:$0xff]
      %v5878 = vld [vmem:[#allocation2 + $0x10] sm:$0xff]
      %v5879 = vld [vmem:[#allocation2 + $0x18] sm:$0xff]
      %v5880 = vld [vmem:[#allocation2 + $0x20] sm:$0xff]
      %v5881 = vld [vmem:[#allocation2 + $0x28] sm:$0xff]
      %v5882 = vld [vmem:[#allocation2 + $0x30] sm:$0xff]
      %v5883 = vld [vmem:[#allocation2 + $0x40] sm:$0xff]
      %v5884 = vld [vmem:[#allocation2 + $0x48] sm:$0xff]
      %v5885 = vld [vmem:[#allocation2 + $0x50] sm:$0xff]
      %v5886 = vld [vmem:[#allocation2 + $0x58] sm:$0xff]
      %v5887 = vld [vmem:[#allocation2 + $0x60] sm:$0xff]
      %v5888 = vld [vmem:[#allocation2 + $0x68] sm:$0xff]
      %5901 = vrot.lane.b32.xlu0 %v5877, 94
      %v5902 = vpop.permute.xlu0 %5901
      %5903 = vrot.lane.b32.xlu0 %v5878, 94
      %v5904 = vpop.permute.xlu0 %5903
      %5905 = vrot.lane.b32.xlu0 %v5879, 94
      %v5906 = vpop.permute.xlu0 %5905
      %5907 = vrot.lane.b32.xlu0 %v5880, 94
      %v5908 = vpop.permute.xlu0 %5907
      %5909 = vrot.lane.b32.xlu0 %v5881, 94
      %v5910 = vpop.permute.xlu0 %5909
      %5911 = vrot.lane.b32.xlu0 %v5882, 94
      %v5912 = vpop.permute.xlu0 %5911
      %5913 = vrot.lane.b32.xlu0 %v5883, 94
      %v5914 = vpop.permute.xlu0 %5913
      %5915 = vrot.lane.b32.xlu0 %v5884, 94
      %v5916 = vpop.permute.xlu0 %5915
      %5917 = vrot.lane.b32.xlu0 %v5885, 94
      %v5918 = vpop.permute.xlu0 %5917
      %5919 = vrot.lane.b32.xlu0 %v5886, 94
      %v5920 = vpop.permute.xlu0 %5919
      %5921 = vrot.lane.b32.xlu0 %v5887, 94
      %v5922 = vpop.permute.xlu0 %5921
      %5923 = vrot.lane.b32.xlu0 %v5888, 94
      %v5924 = vpop.permute.xlu0 %5923
      %v5925 = vsel %vm1191, %v5902, %v5904
      %v5926 = vsel %vm1191, %v5904, %v5906
      %v5927 = vsel %vm1191, %v5906, %v5908
      %v5928 = vsel %vm1191, %v5908, %v5910
      %v5929 = vsel %vm1191, %v5910, %v5912
      %v5930 = vsel %vm1191, %v5914, %v5916
      %v5931 = vsel %vm1191, %v5916, %v5918
      %v5932 = vsel %vm1191, %v5918, %v5920
      %v5933 = vsel %vm1191, %v5920, %v5922
      %v5934 = vsel %vm1191, %v5922, %v5924
      %5945 = vst [vmem:[#allocation3 + $0x5f0] sm:$0xff] %v5925
      %5946 = vst [vmem:[#allocation3 + $0x5f8] sm:$0xff] %v5926
      %5947 = vst [vmem:[#allocation3 + $0x600] sm:$0xff] %v5927
      %5948 = vst [vmem:[#allocation3 + $0x608] sm:$0xff] %v5928
      %5949 = vst [vmem:[#allocation3 + $0x610] sm:$0xff] %v5929
      %5950 = vst [vmem:[#allocation3 + $0x618] sm:$0xff] %v5930
      %5951 = vst [vmem:[#allocation3 + $0x620] sm:$0xff] %v5931
      %5952 = vst [vmem:[#allocation3 + $0x628] sm:$0xff] %v5932
      %5953 = vst [vmem:[#allocation3 + $0x630] sm:$0xff] %v5933
      %5954 = vst [vmem:[#allocation3 + $0x638] sm:$0xff] %v5934
      %v5955 = vld [vmem:[#allocation2 + $0x8] sm:$0xff]
      %v5956 = vld [vmem:[#allocation2 + $0x10] sm:$0xff]
      %v5957 = vld [vmem:[#allocation2 + $0x18] sm:$0xff]
      %v5958 = vld [vmem:[#allocation2 + $0x20] sm:$0xff]
      %v5959 = vld [vmem:[#allocation2 + $0x28] sm:$0xff]
      %v5960 = vld [vmem:[#allocation2 + $0x30] sm:$0xff]
      %v5961 = vld [vmem:[#allocation2 + $0x40] sm:$0xff]
      %v5962 = vld [vmem:[#allocation2 + $0x48] sm:$0xff]
      %v5963 = vld [vmem:[#allocation2 + $0x50] sm:$0xff]
      %v5964 = vld [vmem:[#allocation2 + $0x58] sm:$0xff]
      %v5965 = vld [vmem:[#allocation2 + $0x60] sm:$0xff]
      %v5966 = vld [vmem:[#allocation2 + $0x68] sm:$0xff]
      %5979 = vrot.lane.b32.xlu0 %v5955, 66
      %v5980 = vpop.permute.xlu0 %5979
      %5981 = vrot.lane.b32.xlu0 %v5956, 66
      %v5982 = vpop.permute.xlu0 %5981
      %5983 = vrot.lane.b32.xlu0 %v5957, 66
      %v5984 = vpop.permute.xlu0 %5983
      %5985 = vrot.lane.b32.xlu0 %v5958, 66
      %v5986 = vpop.permute.xlu0 %5985
      %5987 = vrot.lane.b32.xlu0 %v5959, 66
      %v5988 = vpop.permute.xlu0 %5987
      %5989 = vrot.lane.b32.xlu0 %v5960, 66
      %v5990 = vpop.permute.xlu0 %5989
      %5991 = vrot.lane.b32.xlu0 %v5961, 66
      %v5992 = vpop.permute.xlu0 %5991
      %5993 = vrot.lane.b32.xlu0 %v5962, 66
      %v5994 = vpop.permute.xlu0 %5993
      %5995 = vrot.lane.b32.xlu0 %v5963, 66
      %v5996 = vpop.permute.xlu0 %5995
      %5997 = vrot.lane.b32.xlu0 %v5964, 66
      %v5998 = vpop.permute.xlu0 %5997
      %5999 = vrot.lane.b32.xlu0 %v5965, 66
      %v6000 = vpop.permute.xlu0 %5999
      %6001 = vrot.lane.b32.xlu0 %v5966, 66
      %v6002 = vpop.permute.xlu0 %6001
      %v6003 = vsel %vm461, %v5980, %v5982
      %v6004 = vsel %vm461, %v5982, %v5984
      %v6005 = vsel %vm461, %v5984, %v5986
      %v6006 = vsel %vm461, %v5986, %v5988
      %v6007 = vsel %vm461, %v5988, %v5990
      %v6008 = vsel %vm461, %v5992, %v5994
      %v6009 = vsel %vm461, %v5994, %v5996
      %v6010 = vsel %vm461, %v5996, %v5998
      %v6011 = vsel %vm461, %v5998, %v6000
      %v6012 = vsel %vm461, %v6000, %v6002
      %6023 = vst [vmem:[#allocation3 + $0x640] sm:$0xff] %v6003
      %6024 = vst [vmem:[#allocation3 + $0x648] sm:$0xff] %v6004
      %6025 = vst [vmem:[#allocation3 + $0x650] sm:$0xff] %v6005
      %6026 = vst [vmem:[#allocation3 + $0x658] sm:$0xff] %v6006
      %6027 = vst [vmem:[#allocation3 + $0x660] sm:$0xff] %v6007
      %6028 = vst [vmem:[#allocation3 + $0x668] sm:$0xff] %v6008
      %6029 = vst [vmem:[#allocation3 + $0x670] sm:$0xff] %v6009
      %6030 = vst [vmem:[#allocation3 + $0x678] sm:$0xff] %v6010
      %6031 = vst [vmem:[#allocation3 + $0x680] sm:$0xff] %v6011
      %6032 = vst [vmem:[#allocation3 + $0x688] sm:$0xff] %v6012
      %v6033 = vld [vmem:[#allocation2 + $0x8] sm:$0xff]
      %v6034 = vld [vmem:[#allocation2 + $0x10] sm:$0xff]
      %v6035 = vld [vmem:[#allocation2 + $0x18] sm:$0xff]
      %v6036 = vld [vmem:[#allocation2 + $0x20] sm:$0xff]
      %v6037 = vld [vmem:[#allocation2 + $0x28] sm:$0xff]
      %v6038 = vld [vmem:[#allocation2 + $0x30] sm:$0xff]
      %v6039 = vld [vmem:[#allocation2 + $0x40] sm:$0xff]
      %v6040 = vld [vmem:[#allocation2 + $0x48] sm:$0xff]
      %v6041 = vld [vmem:[#allocation2 + $0x50] sm:$0xff]
      %v6042 = vld [vmem:[#allocation2 + $0x58] sm:$0xff]
      %v6043 = vld [vmem:[#allocation2 + $0x60] sm:$0xff]
      %v6044 = vld [vmem:[#allocation2 + $0x68] sm:$0xff]
      %6057 = vrot.lane.b32.xlu0 %v6033, 65
      %v6058 = vpop.permute.xlu0 %6057
      %6059 = vrot.lane.b32.xlu0 %v6034, 65
      %v6060 = vpop.permute.xlu0 %6059
      %6061 = vrot.lane.b32.xlu0 %v6035, 65
      %v6062 = vpop.permute.xlu0 %6061
      %6063 = vrot.lane.b32.xlu0 %v6036, 65
      %v6064 = vpop.permute.xlu0 %6063
      %6065 = vrot.lane.b32.xlu0 %v6037, 65
      %v6066 = vpop.permute.xlu0 %6065
      %6067 = vrot.lane.b32.xlu0 %v6038, 65
      %v6068 = vpop.permute.xlu0 %6067
      %6069 = vrot.lane.b32.xlu0 %v6039, 65
      %v6070 = vpop.permute.xlu0 %6069
      %6071 = vrot.lane.b32.xlu0 %v6040, 65
      %v6072 = vpop.permute.xlu0 %6071
      %6073 = vrot.lane.b32.xlu0 %v6041, 65
      %v6074 = vpop.permute.xlu0 %6073
      %6075 = vrot.lane.b32.xlu0 %v6042, 65
      %v6076 = vpop.permute.xlu0 %6075
      %6077 = vrot.lane.b32.xlu0 %v6043, 65
      %v6078 = vpop.permute.xlu0 %6077
      %6079 = vrot.lane.b32.xlu0 %v6044, 65
      %v6080 = vpop.permute.xlu0 %6079
      %v6081 = vsel %vm501, %v6058, %v6060
      %v6082 = vsel %vm501, %v6060, %v6062
      %v6083 = vsel %vm501, %v6062, %v6064
      %v6084 = vsel %vm501, %v6064, %v6066
      %v6085 = vsel %vm501, %v6066, %v6068
      %v6086 = vsel %vm501, %v6070, %v6072
      %v6087 = vsel %vm501, %v6072, %v6074
      %v6088 = vsel %vm501, %v6074, %v6076
      %v6089 = vsel %vm501, %v6076, %v6078
      %v6090 = vsel %vm501, %v6078, %v6080
      %6101 = vst [vmem:[#allocation3 + $0x690] sm:$0xff] %v6081
      %6102 = vst [vmem:[#allocation3 + $0x698] sm:$0xff] %v6082
      %6103 = vst [vmem:[#allocation3 + $0x6a0] sm:$0xff] %v6083
      %6104 = vst [vmem:[#allocation3 + $0x6a8] sm:$0xff] %v6084
      %6105 = vst [vmem:[#allocation3 + $0x6b0] sm:$0xff] %v6085
      %6106 = vst [vmem:[#allocation3 + $0x6b8] sm:$0xff] %v6086
      %6107 = vst [vmem:[#allocation3 + $0x6c0] sm:$0xff] %v6087
      %6108 = vst [vmem:[#allocation3 + $0x6c8] sm:$0xff] %v6088
      %6109 = vst [vmem:[#allocation3 + $0x6d0] sm:$0xff] %v6089
      %6110 = vst [vmem:[#allocation3 + $0x6d8] sm:$0xff] %v6090
      %v6111 = vld [vmem:[#allocation2 + $0x8] sm:$0xff]
      %v6112 = vld [vmem:[#allocation2 + $0x10] sm:$0xff]
      %v6113 = vld [vmem:[#allocation2 + $0x18] sm:$0xff]
      %v6114 = vld [vmem:[#allocation2 + $0x20] sm:$0xff]
      %v6115 = vld [vmem:[#allocation2 + $0x28] sm:$0xff]
      %v6116 = vld [vmem:[#allocation2 + $0x30] sm:$0xff]
      %v6117 = vld [vmem:[#allocation2 + $0x40] sm:$0xff]
      %v6118 = vld [vmem:[#allocation2 + $0x48] sm:$0xff]
      %v6119 = vld [vmem:[#allocation2 + $0x50] sm:$0xff]
      %v6120 = vld [vmem:[#allocation2 + $0x58] sm:$0xff]
      %v6121 = vld [vmem:[#allocation2 + $0x60] sm:$0xff]
      %v6122 = vld [vmem:[#allocation2 + $0x68] sm:$0xff]
      %6135 = vrot.lane.b32.xlu0 %v6111, 64
      %v6136 = vpop.permute.xlu0 %6135
      %6137 = vrot.lane.b32.xlu0 %v6112, 64
      %v6138 = vpop.permute.xlu0 %6137
      %6139 = vrot.lane.b32.xlu0 %v6113, 64
      %v6140 = vpop.permute.xlu0 %6139
      %6141 = vrot.lane.b32.xlu0 %v6114, 64
      %v6142 = vpop.permute.xlu0 %6141
      %6143 = vrot.lane.b32.xlu0 %v6115, 64
      %v6144 = vpop.permute.xlu0 %6143
      %6145 = vrot.lane.b32.xlu0 %v6116, 64
      %v6146 = vpop.permute.xlu0 %6145
      %6147 = vrot.lane.b32.xlu0 %v6117, 64
      %v6148 = vpop.permute.xlu0 %6147
      %6149 = vrot.lane.b32.xlu0 %v6118, 64
      %v6150 = vpop.permute.xlu0 %6149
      %6151 = vrot.lane.b32.xlu0 %v6119, 64
      %v6152 = vpop.permute.xlu0 %6151
      %6153 = vrot.lane.b32.xlu0 %v6120, 64
      %v6154 = vpop.permute.xlu0 %6153
      %6155 = vrot.lane.b32.xlu0 %v6121, 64
      %v6156 = vpop.permute.xlu0 %6155
      %6157 = vrot.lane.b32.xlu0 %v6122, 64
      %v6158 = vpop.permute.xlu0 %6157
      %v6159 = vsel %vm541, %v6136, %v6138
      %v6160 = vsel %vm541, %v6138, %v6140
      %v6161 = vsel %vm541, %v6140, %v6142
      %v6162 = vsel %vm541, %v6142, %v6144
      %v6163 = vsel %vm541, %v6144, %v6146
      %v6164 = vsel %vm541, %v6148, %v6150
      %v6165 = vsel %vm541, %v6150, %v6152
      %v6166 = vsel %vm541, %v6152, %v6154
      %v6167 = vsel %vm541, %v6154, %v6156
      %v6168 = vsel %vm541, %v6156, %v6158
      %6179 = vst [vmem:[#allocation3 + $0x6e0] sm:$0xff] %v6159
      %6180 = vst [vmem:[#allocation3 + $0x6e8] sm:$0xff] %v6160
      %6181 = vst [vmem:[#allocation3 + $0x6f0] sm:$0xff] %v6161
      %6182 = vst [vmem:[#allocation3 + $0x6f8] sm:$0xff] %v6162
      %6183 = vst [vmem:[#allocation3 + $0x700] sm:$0xff] %v6163
      %6184 = vst [vmem:[#allocation3 + $0x708] sm:$0xff] %v6164
      %6185 = vst [vmem:[#allocation3 + $0x710] sm:$0xff] %v6165
      %6186 = vst [vmem:[#allocation3 + $0x718] sm:$0xff] %v6166
      %6187 = vst [vmem:[#allocation3 + $0x720] sm:$0xff] %v6167
      %6188 = vst [vmem:[#allocation3 + $0x728] sm:$0xff] %v6168
      %v6189 = vld [vmem:[#allocation2 + $0x8] sm:$0xff]
      %v6190 = vld [vmem:[#allocation2 + $0x10] sm:$0xff]
      %v6191 = vld [vmem:[#allocation2 + $0x18] sm:$0xff]
      %v6192 = vld [vmem:[#allocation2 + $0x20] sm:$0xff]
      %v6193 = vld [vmem:[#allocation2 + $0x28] sm:$0xff]
      %v6194 = vld [vmem:[#allocation2 + $0x30] sm:$0xff]
      %v6195 = vld [vmem:[#allocation2 + $0x40] sm:$0xff]
      %v6196 = vld [vmem:[#allocation2 + $0x48] sm:$0xff]
      %v6197 = vld [vmem:[#allocation2 + $0x50] sm:$0xff]
      %v6198 = vld [vmem:[#allocation2 + $0x58] sm:$0xff]
      %v6199 = vld [vmem:[#allocation2 + $0x60] sm:$0xff]
      %v6200 = vld [vmem:[#allocation2 + $0x68] sm:$0xff]
      %6213 = vrot.lane.b32.xlu0 %v6189, 63
      %v6214 = vpop.permute.xlu0 %6213
      %6215 = vrot.lane.b32.xlu0 %v6190, 63
      %v6216 = vpop.permute.xlu0 %6215
      %6217 = vrot.lane.b32.xlu0 %v6191, 63
      %v6218 = vpop.permute.xlu0 %6217
      %6219 = vrot.lane.b32.xlu0 %v6192, 63
      %v6220 = vpop.permute.xlu0 %6219
      %6221 = vrot.lane.b32.xlu0 %v6193, 63
      %v6222 = vpop.permute.xlu0 %6221
      %6223 = vrot.lane.b32.xlu0 %v6194, 63
      %v6224 = vpop.permute.xlu0 %6223
      %6225 = vrot.lane.b32.xlu0 %v6195, 63
      %v6226 = vpop.permute.xlu0 %6225
      %6227 = vrot.lane.b32.xlu0 %v6196, 63
      %v6228 = vpop.permute.xlu0 %6227
      %6229 = vrot.lane.b32.xlu0 %v6197, 63
      %v6230 = vpop.permute.xlu0 %6229
      %6231 = vrot.lane.b32.xlu0 %v6198, 63
      %v6232 = vpop.permute.xlu0 %6231
      %6233 = vrot.lane.b32.xlu0 %v6199, 63
      %v6234 = vpop.permute.xlu0 %6233
      %6235 = vrot.lane.b32.xlu0 %v6200, 63
      %v6236 = vpop.permute.xlu0 %6235
      %v6237 = vsel %vm581, %v6214, %v6216
      %v6238 = vsel %vm581, %v6216, %v6218
      %v6239 = vsel %vm581, %v6218, %v6220
      %v6240 = vsel %vm581, %v6220, %v6222
      %v6241 = vsel %vm581, %v6222, %v6224
      %v6242 = vsel %vm581, %v6226, %v6228
      %v6243 = vsel %vm581, %v6228, %v6230
      %v6244 = vsel %vm581, %v6230, %v6232
      %v6245 = vsel %vm581, %v6232, %v6234
      %v6246 = vsel %vm581, %v6234, %v6236
      %6257 = vst [vmem:[#allocation3 + $0x730] sm:$0xff] %v6237
      %6258 = vst [vmem:[#allocation3 + $0x738] sm:$0xff] %v6238
      %6259 = vst [vmem:[#allocation3 + $0x740] sm:$0xff] %v6239
      %6260 = vst [vmem:[#allocation3 + $0x748] sm:$0xff] %v6240
      %6261 = vst [vmem:[#allocation3 + $0x750] sm:$0xff] %v6241
      %6262 = vst [vmem:[#allocation3 + $0x758] sm:$0xff] %v6242
      %6263 = vst [vmem:[#allocation3 + $0x760] sm:$0xff] %v6243
      %6264 = vst [vmem:[#allocation3 + $0x768] sm:$0xff] %v6244
      %6265 = vst [vmem:[#allocation3 + $0x770] sm:$0xff] %v6245
      %6266 = vst [vmem:[#allocation3 + $0x778] sm:$0xff] %v6246
      %v6267 = vld [vmem:[#allocation2 + $0x8] sm:$0xff]
      %v6268 = vld [vmem:[#allocation2 + $0x10] sm:$0xff]
      %v6269 = vld [vmem:[#allocation2 + $0x18] sm:$0xff]
      %v6270 = vld [vmem:[#allocation2 + $0x20] sm:$0xff]
      %v6271 = vld [vmem:[#allocation2 + $0x28] sm:$0xff]
      %v6272 = vld [vmem:[#allocation2 + $0x30] sm:$0xff]
      %v6273 = vld [vmem:[#allocation2 + $0x40] sm:$0xff]
      %v6274 = vld [vmem:[#allocation2 + $0x48] sm:$0xff]
      %v6275 = vld [vmem:[#allocation2 + $0x50] sm:$0xff]
      %v6276 = vld [vmem:[#allocation2 + $0x58] sm:$0xff]
      %v6277 = vld [vmem:[#allocation2 + $0x60] sm:$0xff]
      %v6278 = vld [vmem:[#allocation2 + $0x68] sm:$0xff]
      %6291 = vrot.lane.b32.xlu0 %v6267, 62
      %v6292 = vpop.permute.xlu0 %6291
      %6293 = vrot.lane.b32.xlu0 %v6268, 62
      %v6294 = vpop.permute.xlu0 %6293
      %6295 = vrot.lane.b32.xlu0 %v6269, 62
      %v6296 = vpop.permute.xlu0 %6295
      %6297 = vrot.lane.b32.xlu0 %v6270, 62
      %v6298 = vpop.permute.xlu0 %6297
      %6299 = vrot.lane.b32.xlu0 %v6271, 62
      %v6300 = vpop.permute.xlu0 %6299
      %6301 = vrot.lane.b32.xlu0 %v6272, 62
      %v6302 = vpop.permute.xlu0 %6301
      %6303 = vrot.lane.b32.xlu0 %v6273, 62
      %v6304 = vpop.permute.xlu0 %6303
      %6305 = vrot.lane.b32.xlu0 %v6274, 62
      %v6306 = vpop.permute.xlu0 %6305
      %6307 = vrot.lane.b32.xlu0 %v6275, 62
      %v6308 = vpop.permute.xlu0 %6307
      %6309 = vrot.lane.b32.xlu0 %v6276, 62
      %v6310 = vpop.permute.xlu0 %6309
      %6311 = vrot.lane.b32.xlu0 %v6277, 62
      %v6312 = vpop.permute.xlu0 %6311
      %6313 = vrot.lane.b32.xlu0 %v6278, 62
      %v6314 = vpop.permute.xlu0 %6313
      %v6315 = vsel %vm621, %v6292, %v6294
      %v6316 = vsel %vm621, %v6294, %v6296
      %v6317 = vsel %vm621, %v6296, %v6298
      %v6318 = vsel %vm621, %v6298, %v6300
      %v6319 = vsel %vm621, %v6300, %v6302
      %v6320 = vsel %vm621, %v6304, %v6306
      %v6321 = vsel %vm621, %v6306, %v6308
      %v6322 = vsel %vm621, %v6308, %v6310
      %v6323 = vsel %vm621, %v6310, %v6312
      %v6324 = vsel %vm621, %v6312, %v6314
      %6335 = vst [vmem:[#allocation3 + $0x780] sm:$0xff] %v6315
      %6336 = vst [vmem:[#allocation3 + $0x788] sm:$0xff] %v6316
      %6337 = vst [vmem:[#allocation3 + $0x790] sm:$0xff] %v6317
      %6338 = vst [vmem:[#allocation3 + $0x798] sm:$0xff] %v6318
      %6339 = vst [vmem:[#allocation3 + $0x7a0] sm:$0xff] %v6319
      %6340 = vst [vmem:[#allocation3 + $0x7a8] sm:$0xff] %v6320
      %6341 = vst [vmem:[#allocation3 + $0x7b0] sm:$0xff] %v6321
      %6342 = vst [vmem:[#allocation3 + $0x7b8] sm:$0xff] %v6322
      %6343 = vst [vmem:[#allocation3 + $0x7c0] sm:$0xff] %v6323
      %6344 = vst [vmem:[#allocation3 + $0x7c8] sm:$0xff] %v6324
      %v6345 = vld [vmem:[%s8] sm:$0xff]
      %v6346 = vld [vmem:[%s8 + $0x8] sm:$0xff]
      %v6347 = vld [vmem:[%s8 + $0x10] sm:$0xff]
      %v6348 = vld [vmem:[%s8 + $0x18] sm:$0xff]
      %v6349 = vld [vmem:[#allocation3] sm:$0xff]
      %v6350 = vld [vmem:[#allocation3 + $0x8] sm:$0xff]
      %v6351 = vld [vmem:[#allocation3 + $0x10] sm:$0xff]
      %v6352 = vld [vmem:[#allocation3 + $0x18] sm:$0xff]
      %v6353 = vld [vmem:[#allocation3 + $0x20] sm:$0xff]
      %v6354 = vld [vmem:[#allocation3 + $0x28] sm:$0xff]
      %v6355 = vld [vmem:[#allocation3 + $0x30] sm:$0xff]
      %v6356 = vld [vmem:[#allocation3 + $0x38] sm:$0xff]
      %v6357 = vld [vmem:[#allocation3 + $0x40] sm:$0xff]
      %v6358 = vld [vmem:[#allocation3 + $0x48] sm:$0xff]
      %v6359 = vld [vmem:[#allocation3 + $0x50] sm:$0xff]
      %v6360 = vld [vmem:[#allocation3 + $0x58] sm:$0xff]
      %v6361 = vld [vmem:[#allocation3 + $0x60] sm:$0xff]
      %v6362 = vld [vmem:[#allocation3 + $0x68] sm:$0xff]
      %v6363 = vld [vmem:[#allocation3 + $0x70] sm:$0xff]
      %v6364 = vld [vmem:[#allocation3 + $0x78] sm:$0xff]
      %v6365 = vld [vmem:[#allocation3 + $0x80] sm:$0xff]
      %v6366 = vld [vmem:[#allocation3 + $0x88] sm:$0xff]
      %v6367 = vld [vmem:[#allocation3 + $0x90] sm:$0xff]
      %v6368 = vld [vmem:[#allocation3 + $0x98] sm:$0xff]
      %v6369 = vld [vmem:[#allocation3 + $0xa0] sm:$0xff]
      %v6370 = vld [vmem:[#allocation3 + $0xa8] sm:$0xff]
      %v6371 = vld [vmem:[#allocation3 + $0xb0] sm:$0xff]
      %v6372 = vld [vmem:[#allocation3 + $0xb8] sm:$0xff]
      %v6373 = vld [vmem:[#allocation3 + $0xc0] sm:$0xff]
      %v6374 = vld [vmem:[#allocation3 + $0xc8] sm:$0xff]
      %v6375 = vld [vmem:[#allocation3 + $0xd0] sm:$0xff]
      %v6376 = vld [vmem:[#allocation3 + $0xd8] sm:$0xff]
      %v6377 = vld [vmem:[#allocation3 + $0xe0] sm:$0xff]
      %v6378 = vld [vmem:[#allocation3 + $0xe8] sm:$0xff]
      %v6379 = vld [vmem:[#allocation3 + $0xf0] sm:$0xff]
      %v6380 = vld [vmem:[#allocation3 + $0xf8] sm:$0xff]
      %v6381 = vld [vmem:[#allocation3 + $0x100] sm:$0xff]
      %v6382 = vld [vmem:[#allocation3 + $0x108] sm:$0xff]
      %v6383 = vld [vmem:[#allocation3 + $0x110] sm:$0xff]
      %v6384 = vld [vmem:[#allocation3 + $0x118] sm:$0xff]
      %v6385 = vld [vmem:[#allocation3 + $0x120] sm:$0xff]
      %v6386 = vld [vmem:[#allocation3 + $0x128] sm:$0xff]
      %v6387 = vld [vmem:[#allocation3 + $0x130] sm:$0xff]
      %v6388 = vld [vmem:[#allocation3 + $0x138] sm:$0xff]
      %v6389 = vld [vmem:[#allocation3 + $0x140] sm:$0xff]
      %v6390 = vld [vmem:[#allocation3 + $0x148] sm:$0xff]
      %v6391 = vld [vmem:[#allocation3 + $0x150] sm:$0xff]
      %v6392 = vld [vmem:[#allocation3 + $0x158] sm:$0xff]
      %v6393 = vld [vmem:[#allocation3 + $0x160] sm:$0xff]
      %v6394 = vld [vmem:[#allocation3 + $0x168] sm:$0xff]
      %v6395 = vld [vmem:[#allocation3 + $0x170] sm:$0xff]
      %v6396 = vld [vmem:[#allocation3 + $0x178] sm:$0xff]
      %v6397 = vld [vmem:[#allocation3 + $0x180] sm:$0xff]
      %v6398 = vld [vmem:[#allocation3 + $0x188] sm:$0xff]
      %v6399 = vld [vmem:[#allocation3 + $0x190] sm:$0xff]
      %v6400 = vld [vmem:[#allocation3 + $0x198] sm:$0xff]
      %v6401 = vld [vmem:[#allocation3 + $0x1a0] sm:$0xff]
      %v6402 = vld [vmem:[#allocation3 + $0x1a8] sm:$0xff]
      %v6403 = vld [vmem:[#allocation3 + $0x1b0] sm:$0xff]
      %v6404 = vld [vmem:[#allocation3 + $0x1b8] sm:$0xff]
      %v6405 = vld [vmem:[#allocation3 + $0x1c0] sm:$0xff]
      %v6406 = vld [vmem:[#allocation3 + $0x1c8] sm:$0xff]
      %v6407 = vld [vmem:[#allocation3 + $0x1d0] sm:$0xff]
      %v6408 = vld [vmem:[#allocation3 + $0x1d8] sm:$0xff]
      %v6409 = vld [vmem:[#allocation3 + $0x1e0] sm:$0xff]
      %v6410 = vld [vmem:[#allocation3 + $0x1e8] sm:$0xff]
      %v6411 = vld [vmem:[#allocation3 + $0x1f0] sm:$0xff]
      %v6412 = vld [vmem:[#allocation3 + $0x1f8] sm:$0xff]
      %v6413 = vld [vmem:[#allocation3 + $0x200] sm:$0xff]
      %v6414 = vld [vmem:[#allocation3 + $0x208] sm:$0xff]
      %v6415 = vld [vmem:[#allocation3 + $0x210] sm:$0xff]
      %v6416 = vld [vmem:[#allocation3 + $0x218] sm:$0xff]
      %v6417 = vld [vmem:[#allocation3 + $0x220] sm:$0xff]
      %v6418 = vld [vmem:[#allocation3 + $0x228] sm:$0xff]
      %v6419 = vld [vmem:[#allocation3 + $0x230] sm:$0xff]
      %v6420 = vld [vmem:[#allocation3 + $0x238] sm:$0xff]
      %v6421 = vld [vmem:[#allocation3 + $0x240] sm:$0xff]
      %v6422 = vld [vmem:[#allocation3 + $0x248] sm:$0xff]
      %v6423 = vld [vmem:[#allocation3 + $0x250] sm:$0xff]
      %v6424 = vld [vmem:[#allocation3 + $0x258] sm:$0xff]
      %v6425 = vld [vmem:[#allocation3 + $0x260] sm:$0xff]
      %v6426 = vld [vmem:[#allocation3 + $0x268] sm:$0xff]
      %v6427 = vld [vmem:[#allocation3 + $0x270] sm:$0xff]
      %v6428 = vld [vmem:[#allocation3 + $0x278] sm:$0xff]
      %v6429 = vld [vmem:[#allocation3 + $0x280] sm:$0xff]
      %v6430 = vld [vmem:[#allocation3 + $0x288] sm:$0xff]
      %v6431 = vld [vmem:[#allocation3 + $0x290] sm:$0xff]
      %v6432 = vld [vmem:[#allocation3 + $0x298] sm:$0xff]
      %v6433 = vld [vmem:[#allocation3 + $0x2a0] sm:$0xff]
      %v6434 = vld [vmem:[#allocation3 + $0x2a8] sm:$0xff]
      %v6435 = vld [vmem:[#allocation3 + $0x2b0] sm:$0xff]
      %v6436 = vld [vmem:[#allocation3 + $0x2b8] sm:$0xff]
      %v6437 = vld [vmem:[#allocation3 + $0x2c0] sm:$0xff]
      %v6438 = vld [vmem:[#allocation3 + $0x2c8] sm:$0xff]
      %v6439 = vld [vmem:[#allocation3 + $0x2d0] sm:$0xff]
      %v6440 = vld [vmem:[#allocation3 + $0x2d8] sm:$0xff]
      %v6441 = vld [vmem:[#allocation3 + $0x2e0] sm:$0xff]
      %v6442 = vld [vmem:[#allocation3 + $0x2e8] sm:$0xff]
      %v6443 = vld [vmem:[#allocation3 + $0x2f0] sm:$0xff]
      %v6444 = vld [vmem:[#allocation3 + $0x2f8] sm:$0xff]
      %v6445 = vld [vmem:[#allocation3 + $0x300] sm:$0xff]
      %v6446 = vld [vmem:[#allocation3 + $0x308] sm:$0xff]
      %v6447 = vld [vmem:[#allocation3 + $0x310] sm:$0xff]
      %v6448 = vld [vmem:[#allocation3 + $0x318] sm:$0xff]
      %v6449 = vld [vmem:[#allocation3 + $0x320] sm:$0xff]
      %v6450 = vld [vmem:[#allocation3 + $0x328] sm:$0xff]
      %v6451 = vld [vmem:[#allocation3 + $0x330] sm:$0xff]
      %v6452 = vld [vmem:[#allocation3 + $0x338] sm:$0xff]
      %v6453 = vld [vmem:[#allocation3 + $0x340] sm:$0xff]
      %v6454 = vld [vmem:[#allocation3 + $0x348] sm:$0xff]
      %v6455 = vld [vmem:[#allocation3 + $0x350] sm:$0xff]
      %v6456 = vld [vmem:[#allocation3 + $0x358] sm:$0xff]
      %v6457 = vld [vmem:[#allocation3 + $0x360] sm:$0xff]
      %v6458 = vld [vmem:[#allocation3 + $0x368] sm:$0xff]
      %v6459 = vld [vmem:[#allocation3 + $0x370] sm:$0xff]
      %v6460 = vld [vmem:[#allocation3 + $0x378] sm:$0xff]
      %v6461 = vld [vmem:[#allocation3 + $0x380] sm:$0xff]
      %v6462 = vld [vmem:[#allocation3 + $0x388] sm:$0xff]
      %v6463 = vld [vmem:[#allocation3 + $0x390] sm:$0xff]
      %v6464 = vld [vmem:[#allocation3 + $0x398] sm:$0xff]
      %v6465 = vld [vmem:[#allocation3 + $0x3a0] sm:$0xff]
      %v6466 = vld [vmem:[#allocation3 + $0x3a8] sm:$0xff]
      %v6467 = vld [vmem:[#allocation3 + $0x3b0] sm:$0xff]
      %v6468 = vld [vmem:[#allocation3 + $0x3b8] sm:$0xff]
      %v6469 = vld [vmem:[#allocation3 + $0x3c0] sm:$0xff]
      %v6470 = vld [vmem:[#allocation3 + $0x3c8] sm:$0xff]
      %v6471 = vld [vmem:[#allocation3 + $0x3d0] sm:$0xff]
      %v6472 = vld [vmem:[#allocation3 + $0x3d8] sm:$0xff]
      %v6473 = vld [vmem:[#allocation3 + $0x3e0] sm:$0xff]
      %v6474 = vld [vmem:[#allocation3 + $0x3e8] sm:$0xff]
      %v6475 = vld [vmem:[#allocation3 + $0x3f0] sm:$0xff]
      %v6476 = vld [vmem:[#allocation3 + $0x3f8] sm:$0xff]
      %v6477 = vld [vmem:[#allocation3 + $0x400] sm:$0xff]
      %v6478 = vld [vmem:[#allocation3 + $0x408] sm:$0xff]
      %v6479 = vld [vmem:[#allocation3 + $0x410] sm:$0xff]
      %v6480 = vld [vmem:[#allocation3 + $0x418] sm:$0xff]
      %v6481 = vld [vmem:[#allocation3 + $0x420] sm:$0xff]
      %v6482 = vld [vmem:[#allocation3 + $0x428] sm:$0xff]
      %v6483 = vld [vmem:[#allocation3 + $0x430] sm:$0xff]
      %v6484 = vld [vmem:[#allocation3 + $0x438] sm:$0xff]
      %v6485 = vld [vmem:[#allocation3 + $0x440] sm:$0xff]
      %v6486 = vld [vmem:[#allocation3 + $0x448] sm:$0xff]
      %v6487 = vld [vmem:[#allocation3 + $0x450] sm:$0xff]
      %v6488 = vld [vmem:[#allocation3 + $0x458] sm:$0xff]
      %v6489 = vld [vmem:[#allocation3 + $0x460] sm:$0xff]
      %v6490 = vld [vmem:[#allocation3 + $0x468] sm:$0xff]
      %v6491 = vld [vmem:[#allocation3 + $0x470] sm:$0xff]
      %v6492 = vld [vmem:[#allocation3 + $0x478] sm:$0xff]
      %v6493 = vld [vmem:[#allocation3 + $0x480] sm:$0xff]
      %v6494 = vld [vmem:[#allocation3 + $0x488] sm:$0xff]
      %v6495 = vld [vmem:[#allocation3 + $0x490] sm:$0xff]
      %v6496 = vld [vmem:[#allocation3 + $0x498] sm:$0xff]
      %v6497 = vld [vmem:[#allocation3 + $0x4a0] sm:$0xff]
      %v6498 = vld [vmem:[#allocation3 + $0x4a8] sm:$0xff]
      %v6499 = vld [vmem:[#allocation3 + $0x4b0] sm:$0xff]
      %v6500 = vld [vmem:[#allocation3 + $0x4b8] sm:$0xff]
      %v6501 = vld [vmem:[#allocation3 + $0x4c0] sm:$0xff]
      %v6502 = vld [vmem:[#allocation3 + $0x4c8] sm:$0xff]
      %v6503 = vld [vmem:[#allocation3 + $0x4d0] sm:$0xff]
      %v6504 = vld [vmem:[#allocation3 + $0x4d8] sm:$0xff]
      %v6505 = vld [vmem:[#allocation3 + $0x4e0] sm:$0xff]
      %v6506 = vld [vmem:[#allocation3 + $0x4e8] sm:$0xff]
      %v6507 = vld [vmem:[#allocation3 + $0x4f0] sm:$0xff]
      %v6508 = vld [vmem:[#allocation3 + $0x4f8] sm:$0xff]
      %v6509 = vld [vmem:[#allocation3 + $0x500] sm:$0xff]
      %v6510 = vld [vmem:[#allocation3 + $0x508] sm:$0xff]
      %v6511 = vld [vmem:[#allocation3 + $0x510] sm:$0xff]
      %v6512 = vld [vmem:[#allocation3 + $0x518] sm:$0xff]
      %v6513 = vld [vmem:[#allocation3 + $0x520] sm:$0xff]
      %v6514 = vld [vmem:[#allocation3 + $0x528] sm:$0xff]
      %v6515 = vld [vmem:[#allocation3 + $0x530] sm:$0xff]
      %v6516 = vld [vmem:[#allocation3 + $0x538] sm:$0xff]
      %v6517 = vld [vmem:[#allocation3 + $0x540] sm:$0xff]
      %v6518 = vld [vmem:[#allocation3 + $0x548] sm:$0xff]
      %v6519 = vld [vmem:[#allocation3 + $0x550] sm:$0xff]
      %v6520 = vld [vmem:[#allocation3 + $0x558] sm:$0xff]
      %v6521 = vld [vmem:[#allocation3 + $0x560] sm:$0xff]
      %v6522 = vld [vmem:[#allocation3 + $0x568] sm:$0xff]
      %v6523 = vld [vmem:[#allocation3 + $0x570] sm:$0xff]
      %v6524 = vld [vmem:[#allocation3 + $0x578] sm:$0xff]
      %v6525 = vld [vmem:[#allocation3 + $0x580] sm:$0xff]
      %v6526 = vld [vmem:[#allocation3 + $0x588] sm:$0xff]
      %v6527 = vld [vmem:[#allocation3 + $0x590] sm:$0xff]
      %v6528 = vld [vmem:[#allocation3 + $0x598] sm:$0xff]
      %v6529 = vld [vmem:[#allocation3 + $0x5a0] sm:$0xff]
      %v6530 = vld [vmem:[#allocation3 + $0x5a8] sm:$0xff]
      %v6531 = vld [vmem:[#allocation3 + $0x5b0] sm:$0xff]
      %v6532 = vld [vmem:[#allocation3 + $0x5b8] sm:$0xff]
      %v6533 = vld [vmem:[#allocation3 + $0x5c0] sm:$0xff]
      %v6534 = vld [vmem:[#allocation3 + $0x5c8] sm:$0xff]
      %v6535 = vld [vmem:[#allocation3 + $0x5d0] sm:$0xff]
      %v6536 = vld [vmem:[#allocation3 + $0x5d8] sm:$0xff]
      %v6537 = vld [vmem:[#allocation3 + $0x5e0] sm:$0xff]
      %v6538 = vld [vmem:[#allocation3 + $0x5e8] sm:$0xff]
      %v6539 = vld [vmem:[#allocation3 + $0x5f0] sm:$0xff]
      %v6540 = vld [vmem:[#allocation3 + $0x5f8] sm:$0xff]
      %v6541 = vld [vmem:[#allocation3 + $0x600] sm:$0xff]
      %v6542 = vld [vmem:[#allocation3 + $0x608] sm:$0xff]
      %v6543 = vld [vmem:[#allocation3 + $0x610] sm:$0xff]
      %v6544 = vld [vmem:[#allocation3 + $0x618] sm:$0xff]
      %v6545 = vld [vmem:[#allocation3 + $0x620] sm:$0xff]
      %v6546 = vld [vmem:[#allocation3 + $0x628] sm:$0xff]
      %v6547 = vld [vmem:[#allocation3 + $0x630] sm:$0xff]
      %v6548 = vld [vmem:[#allocation3 + $0x638] sm:$0xff]
      %v6549 = vld [vmem:[#allocation3 + $0x640] sm:$0xff]
      %v6550 = vld [vmem:[#allocation3 + $0x648] sm:$0xff]
      %v6551 = vld [vmem:[#allocation3 + $0x650] sm:$0xff]
      %v6552 = vld [vmem:[#allocation3 + $0x658] sm:$0xff]
      %v6553 = vld [vmem:[#allocation3 + $0x660] sm:$0xff]
      %v6554 = vld [vmem:[#allocation3 + $0x668] sm:$0xff]
      %v6555 = vld [vmem:[#allocation3 + $0x670] sm:$0xff]
      %v6556 = vld [vmem:[#allocation3 + $0x678] sm:$0xff]
      %v6557 = vld [vmem:[#allocation3 + $0x680] sm:$0xff]
      %v6558 = vld [vmem:[#allocation3 + $0x688] sm:$0xff]
      %v6559 = vld [vmem:[#allocation3 + $0x690] sm:$0xff]
      %v6560 = vld [vmem:[#allocation3 + $0x698] sm:$0xff]
      %v6561 = vld [vmem:[#allocation3 + $0x6a0] sm:$0xff]
      %v6562 = vld [vmem:[#allocation3 + $0x6a8] sm:$0xff]
      %v6563 = vld [vmem:[#allocation3 + $0x6b0] sm:$0xff]
      %v6564 = vld [vmem:[#allocation3 + $0x6b8] sm:$0xff]
      %v6565 = vld [vmem:[#allocation3 + $0x6c0] sm:$0xff]
      %v6566 = vld [vmem:[#allocation3 + $0x6c8] sm:$0xff]
      %v6567 = vld [vmem:[#allocation3 + $0x6d0] sm:$0xff]
      %v6568 = vld [vmem:[#allocation3 + $0x6d8] sm:$0xff]
      %v6569 = vld [vmem:[#allocation3 + $0x6e0] sm:$0xff]
      %v6570 = vld [vmem:[#allocation3 + $0x6e8] sm:$0xff]
      %v6571 = vld [vmem:[#allocation3 + $0x6f0] sm:$0xff]
      %v6572 = vld [vmem:[#allocation3 + $0x6f8] sm:$0xff]
      %v6573 = vld [vmem:[#allocation3 + $0x700] sm:$0xff]
      %v6574 = vld [vmem:[#allocation3 + $0x708] sm:$0xff]
      %v6575 = vld [vmem:[#allocation3 + $0x710] sm:$0xff]
      %v6576 = vld [vmem:[#allocation3 + $0x718] sm:$0xff]
      %v6577 = vld [vmem:[#allocation3 + $0x720] sm:$0xff]
      %v6578 = vld [vmem:[#allocation3 + $0x728] sm:$0xff]
      %v6579 = vld [vmem:[#allocation3 + $0x730] sm:$0xff]
      %v6580 = vld [vmem:[#allocation3 + $0x738] sm:$0xff]
      %v6581 = vld [vmem:[#allocation3 + $0x740] sm:$0xff]
      %v6582 = vld [vmem:[#allocation3 + $0x748] sm:$0xff]
      %v6583 = vld [vmem:[#allocation3 + $0x750] sm:$0xff]
      %v6584 = vld [vmem:[#allocation3 + $0x758] sm:$0xff]
      %v6585 = vld [vmem:[#allocation3 + $0x760] sm:$0xff]
      %v6586 = vld [vmem:[#allocation3 + $0x768] sm:$0xff]
      %v6587 = vld [vmem:[#allocation3 + $0x770] sm:$0xff]
      %v6588 = vld [vmem:[#allocation3 + $0x778] sm:$0xff]
      %v6589 = vld [vmem:[#allocation3 + $0x780] sm:$0xff]
      %v6590 = vld [vmem:[#allocation3 + $0x788] sm:$0xff]
      %v6591 = vld [vmem:[#allocation3 + $0x790] sm:$0xff]
      %v6592 = vld [vmem:[#allocation3 + $0x798] sm:$0xff]
      %v6593 = vld [vmem:[#allocation3 + $0x7a0] sm:$0xff]
      %v6594 = vld [vmem:[#allocation3 + $0x7a8] sm:$0xff]
      %v6595 = vld [vmem:[#allocation3 + $0x7b0] sm:$0xff]
      %v6596 = vld [vmem:[#allocation3 + $0x7b8] sm:$0xff]
      %v6597 = vld [vmem:[#allocation3 + $0x7c0] sm:$0xff]
      %v6598 = vld [vmem:[#allocation3 + $0x7c8] sm:$0xff]
      %v6599 = vld [vmem:[%s9] sm:$0xff]
      %6601 = vset.pattern.permute.xlu0 0
      %6602 = vperm.xlu0 %6601, %v6599
      %v6603 = vpop.permute.xlu0 %6602
      %vm6605 = vcmask 130048
      %v6607 = vsel %vm6605, %v6348, 0
      %6609 = vmatprep.subr.mxu0 %v6350
      %6610 = vmatpush1.msra.mxu0 %v6349
      %6611 = vmatprep.subr.mxu0 %v6355
      %6612 = vmatpush1.msra.mxu0 %v6354
      %6613 = vmatprep.subr.mxu0 %v6360
      %6614 = vmatpush1.msra.mxu0 %v6359
      %6615 = vmatprep.subr.mxu0 %v6365
      %6616 = vmatpush1.msra.mxu0 %v6364
      %6617 = vmatprep.subr.mxu0 %v6370
      %6618 = vmatpush1.msra.mxu0 %v6369
      %6619 = vmatprep.subr.mxu0 %v6375
      %6620 = vmatpush1.msra.mxu0 %v6374
      %6621 = vmatprep.subr.mxu0 %v6380
      %6622 = vmatpush1.msra.mxu0 %v6379
      %6623 = vmatprep.subr.mxu0 %v6385
      %6624 = vmatpush1.msra.mxu0 %v6384
      %6625 = vmatprep.subr.mxu0 %v6390
      %6626 = vmatpush1.msra.mxu0 %v6389
      %6627 = vmatprep.subr.mxu0 %v6395
      %6628 = vmatpush1.msra.mxu0 %v6394
      %6629 = vmatprep.subr.mxu0 %v6400
      %6630 = vmatpush1.msra.mxu0 %v6399
      %6631 = vmatprep.subr.mxu0 %v6405
      %6632 = vmatpush1.msra.mxu0 %v6404
      %6633 = vmatprep.subr.mxu0 %v6410
      %6634 = vmatpush1.msra.mxu0 %v6409
      %6635 = vmatprep.subr.mxu0 %v6415
      %6636 = vmatpush1.msra.mxu0 %v6414
      %6637 = vmatprep.subr.mxu0 %v6420
      %6638 = vmatpush1.msra.mxu0 %v6419
      %6639 = vmatprep.subr.mxu0 %v6425
      %6640 = vmatpush1.msra.mxu0 %v6424
      %6641 = vmatprep.subr.mxu0 %v6430
      %6642 = vmatpush1.msra.mxu0 %v6429
      %6643 = vmatprep.subr.mxu0 %v6435
      %6644 = vmatpush1.msra.mxu0 %v6434
      %6645 = vmatprep.subr.mxu0 %v6440
      %6646 = vmatpush1.msra.mxu0 %v6439
      %6647 = vmatprep.subr.mxu0 %v6445
      %6648 = vmatpush1.msra.mxu0 %v6444
      %6649 = vmatprep.subr.mxu0 %v6450
      %6650 = vmatpush1.msra.mxu0 %v6449
      %6651 = vmatprep.subr.mxu0 %v6455
      %6652 = vmatpush1.msra.mxu0 %v6454
      %6653 = vmatprep.subr.mxu0 %v6460
      %6654 = vmatpush1.msra.mxu0 %v6459
      %6655 = vmatprep.subr.mxu0 %v6465
      %6656 = vmatpush1.msra.mxu0 %v6464
      %6657 = vmatprep.subr.mxu0 %v6470
      %6658 = vmatpush1.msra.mxu0 %v6469
      %6659 = vmatprep.subr.mxu0 %v6475
      %6660 = vmatpush1.msra.mxu0 %v6474
      %6661 = vmatprep.subr.mxu0 %v6480
      %6662 = vmatpush1.msra.mxu0 %v6479
      %6663 = vmatprep.subr.mxu0 %v6485
      %6664 = vmatpush1.msra.mxu0 %v6484
      %6665 = vmatprep.subr.mxu0 %v6490
      %6666 = vmatpush1.msra.mxu0 %v6489
      %6667 = vmatprep.subr.mxu0 %v6495
      %6668 = vmatpush1.msra.mxu0 %v6494
      %6669 = vmatprep.subr.mxu0 %v6500
      %6670 = vmatpush1.msra.mxu0 %v6499
      %6671 = vmatprep.subr.mxu0 %v6505
      %6672 = vmatpush1.msra.mxu0 %v6504
      %6673 = vmatprep.mubr.f32.mxu0 %v6346
      %6674 = vmatmul.mubr.f32.gmra.mrb[0].mxu0 %v6345
      %v6675 = vpop.f32.mrb[0].mxu0
      %v6676 = vadd.f32 %v6603, %v6675
      %v6677 = vpop.f32.mrb[0].mxu0
      %v6678 = vadd.f32 %v6603, %v6677
      %6679 = vdwg.mxu0
      %6680 = vmatprep.subr.mxu0 %v6510
      %6681 = vmatpush1.msra.mxu0 %v6509
      %6682 = vmatprep.subr.mxu0 %v6515
      %6683 = vmatpush1.msra.mxu0 %v6514
      %6684 = vmatprep.subr.mxu0 %v6520
      %6685 = vmatpush1.msra.mxu0 %v6519
      %6686 = vmatprep.subr.mxu0 %v6525
      %6687 = vmatpush1.msra.mxu0 %v6524
      %6688 = vmatprep.subr.mxu0 %v6530
      %6689 = vmatpush1.msra.mxu0 %v6529
      %6690 = vmatprep.subr.mxu0 %v6535
      %6691 = vmatpush1.msra.mxu0 %v6534
      %6692 = vmatprep.subr.mxu0 %v6540
      %6693 = vmatpush1.msra.mxu0 %v6539
      %6694 = vmatprep.subr.mxu0 %v6545
      %6695 = vmatpush1.msra.mxu0 %v6544
      %6696 = vmatprep.subr.mxu0 %v6550
      %6697 = vmatpush1.msra.mxu0 %v6549
      %6698 = vmatprep.subr.mxu0 %v6555
      %6699 = vmatpush1.msra.mxu0 %v6554
      %6700 = vmatprep.subr.mxu0 %v6560
      %6701 = vmatpush1.msra.mxu0 %v6559
      %6702 = vmatprep.subr.mxu0 %v6565
      %6703 = vmatpush1.msra.mxu0 %v6564
      %6704 = vmatprep.subr.mxu0 %v6570
      %6705 = vmatpush1.msra.mxu0 %v6569
      %6706 = vmatprep.subr.mxu0 %v6575
      %6707 = vmatpush1.msra.mxu0 %v6574
      %6708 = vmatprep.subr.mxu0 %v6580
      %6709 = vmatpush1.msra.mxu0 %v6579
      %6710 = vmatprep.subr.mxu0 %v6585
      %6711 = vmatpush1.msra.mxu0 %v6584
      %6712 = vmatprep.subr.mxu0 %v6590
      %6713 = vmatpush1.msra.mxu0 %v6589
      %6714 = vmatprep.subr.mxu0 %v6595
      %6715 = vmatpush1.msra.mxu0 %v6594
      %6716 = vmatprep.subr.mxu0 0.0
      %6717 = vmatpush1.msra.mxu0 0.0
      %6718 = vmatprep.subr.mxu0 0.0
      %6719 = vmatpush1.msra.mxu0 0.0
      %6720 = vmatprep.subr.mxu0 0.0
      %6721 = vmatpush1.msra.mxu0 0.0
      %6722 = vmatprep.subr.mxu0 0.0
      %6723 = vmatpush1.msra.mxu0 0.0
      %6724 = vmatprep.subr.mxu0 0.0
      %6725 = vmatpush1.msra.mxu0 0.0
      %6726 = vmatprep.subr.mxu0 0.0
      %6727 = vmatpush1.msra.mxu0 0.0
      %6728 = vmatprep.subr.mxu0 0.0
      %6729 = vmatpush1.msra.mxu0 0.0
      %6730 = vmatprep.subr.mxu0 0.0
      %6731 = vmatpush1.msra.mxu0 0.0
      %6732 = vmatprep.subr.mxu0 0.0
      %6733 = vmatpush1.msra.mxu0 0.0
      %6734 = vmatprep.subr.mxu0 0.0
      %6735 = vmatpush1.msra.mxu0 0.0
      %6736 = vmatprep.subr.mxu0 0.0
      %6737 = vmatpush1.msra.mxu0 0.0
      %6738 = vmatprep.subr.mxu0 0.0
      %6739 = vmatpush1.msra.mxu0 0.0
      %6740 = vmatprep.subr.mxu0 0.0
      %6741 = vmatpush1.msra.mxu0 0.0
      %6742 = vmatprep.subr.mxu0 0.0
      %6743 = vmatpush1.msra.mxu0 0.0
      %6744 = vmatprep.mubr.f32.mxu0 %v6607
      %6745 = vmatmul.mubr.f32.gmra.mrb[0].mxu0 %v6347
      %v6746 = vpop.f32.mrb[0].mxu0
      %v6747 = vadd.f32 %v6676, %v6746
      %v6748 = vpop.f32.mrb[0].mxu0
      %v6749 = vadd.f32 %v6678, %v6748
      %6750 = vdwg.mxu0
      %6751 = vmatprep.subr.mxu0 %v6352
      %6752 = vmatpush1.msra.mxu0 %v6351
      %6753 = vmatprep.subr.mxu0 %v6357
      %6754 = vmatpush1.msra.mxu0 %v6356
      %6755 = vmatprep.subr.mxu0 %v6362
      %6756 = vmatpush1.msra.mxu0 %v6361
      %6757 = vmatprep.subr.mxu0 %v6367
      %6758 = vmatpush1.msra.mxu0 %v6366
      %6759 = vmatprep.subr.mxu0 %v6372
      %6760 = vmatpush1.msra.mxu0 %v6371
      %6761 = vmatprep.subr.mxu0 %v6377
      %6762 = vmatpush1.msra.mxu0 %v6376
      %6763 = vmatprep.subr.mxu0 %v6382
      %6764 = vmatpush1.msra.mxu0 %v6381
      %6765 = vmatprep.subr.mxu0 %v6387
      %6766 = vmatpush1.msra.mxu0 %v6386
      %6767 = vmatprep.subr.mxu0 %v6392
      %6768 = vmatpush1.msra.mxu0 %v6391
      %6769 = vmatprep.subr.mxu0 %v6397
      %6770 = vmatpush1.msra.mxu0 %v6396
      %6771 = vmatprep.subr.mxu0 %v6402
      %6772 = vmatpush1.msra.mxu0 %v6401
      %6773 = vmatprep.subr.mxu0 %v6407
      %6774 = vmatpush1.msra.mxu0 %v6406
      %6775 = vmatprep.subr.mxu0 %v6412
      %6776 = vmatpush1.msra.mxu0 %v6411
      %6777 = vmatprep.subr.mxu0 %v6417
      %6778 = vmatpush1.msra.mxu0 %v6416
      %6779 = vmatprep.subr.mxu0 %v6422
      %6780 = vmatpush1.msra.mxu0 %v6421
      %6781 = vmatprep.subr.mxu0 %v6427
      %6782 = vmatpush1.msra.mxu0 %v6426
      %6783 = vmatprep.subr.mxu0 %v6432
      %6784 = vmatpush1.msra.mxu0 %v6431
      %6785 = vmatprep.subr.mxu0 %v6437
      %6786 = vmatpush1.msra.mxu0 %v6436
      %6787 = vmatprep.subr.mxu0 %v6442
      %6788 = vmatpush1.msra.mxu0 %v6441
      %6789 = vmatprep.subr.mxu0 %v6447
      %6790 = vmatpush1.msra.mxu0 %v6446
      %6791 = vmatprep.subr.mxu0 %v6452
      %6792 = vmatpush1.msra.mxu0 %v6451
      %6793 = vmatprep.subr.mxu0 %v6457
      %6794 = vmatpush1.msra.mxu0 %v6456
      %6795 = vmatprep.subr.mxu0 %v6462
      %6796 = vmatpush1.msra.mxu0 %v6461
      %6797 = vmatprep.subr.mxu0 %v6467
      %6798 = vmatpush1.msra.mxu0 %v6466
      %6799 = vmatprep.subr.mxu0 %v6472
      %6800 = vmatpush1.msra.mxu0 %v6471
      %6801 = vmatprep.subr.mxu0 %v6477
      %6802 = vmatpush1.msra.mxu0 %v6476
      %6803 = vmatprep.subr.mxu0 %v6482
      %6804 = vmatpush1.msra.mxu0 %v6481
      %6805 = vmatprep.subr.mxu0 %v6487
      %6806 = vmatpush1.msra.mxu0 %v6486
      %6807 = vmatprep.subr.mxu0 %v6492
      %6808 = vmatpush1.msra.mxu0 %v6491
      %6809 = vmatprep.subr.mxu0 %v6497
      %6810 = vmatpush1.msra.mxu0 %v6496
      %6811 = vmatprep.subr.mxu0 %v6502
      %6812 = vmatpush1.msra.mxu0 %v6501
      %6813 = vmatprep.subr.mxu0 %v6507
      %6814 = vmatpush1.msra.mxu0 %v6506
      %6815 = vmatprep.mubr.f32.mxu0 %v6346
      %6816 = vmatmul.mubr.f32.gmra.mrb[0].mxu0 %v6345
      %v6817 = vpop.f32.mrb[0].mxu0
      %v6818 = vadd.f32 %v6603, %v6817
      %v6819 = vpop.f32.mrb[0].mxu0
      %v6820 = vadd.f32 %v6603, %v6819
      %6821 = vdwg.mxu0
      %6822 = vmatprep.subr.mxu0 %v6512
      %6823 = vmatpush1.msra.mxu0 %v6511
      %6824 = vmatprep.subr.mxu0 %v6517
      %6825 = vmatpush1.msra.mxu0 %v6516
      %6826 = vmatprep.subr.mxu0 %v6522
      %6827 = vmatpush1.msra.mxu0 %v6521
      %6828 = vmatprep.subr.mxu0 %v6527
      %6829 = vmatpush1.msra.mxu0 %v6526
      %6830 = vmatprep.subr.mxu0 %v6532
      %6831 = vmatpush1.msra.mxu0 %v6531
      %6832 = vmatprep.subr.mxu0 %v6537
      %6833 = vmatpush1.msra.mxu0 %v6536
      %6834 = vmatprep.subr.mxu0 %v6542
      %6835 = vmatpush1.msra.mxu0 %v6541
      %6836 = vmatprep.subr.mxu0 %v6547
      %6837 = vmatpush1.msra.mxu0 %v6546
      %6838 = vmatprep.subr.mxu0 %v6552
      %6839 = vmatpush1.msra.mxu0 %v6551
      %6840 = vmatprep.subr.mxu0 %v6557
      %6841 = vmatpush1.msra.mxu0 %v6556
      %6842 = vmatprep.subr.mxu0 %v6562
      %6843 = vmatpush1.msra.mxu0 %v6561
      %6844 = vmatprep.subr.mxu0 %v6567
      %6845 = vmatpush1.msra.mxu0 %v6566
      %6846 = vmatprep.subr.mxu0 %v6572
      %6847 = vmatpush1.msra.mxu0 %v6571
      %6848 = vmatprep.subr.mxu0 %v6577
      %6849 = vmatpush1.msra.mxu0 %v6576
      %6850 = vmatprep.subr.mxu0 %v6582
      %6851 = vmatpush1.msra.mxu0 %v6581
      %6852 = vmatprep.subr.mxu0 %v6587
      %6853 = vmatpush1.msra.mxu0 %v6586
      %6854 = vmatprep.subr.mxu0 %v6592
      %6855 = vmatpush1.msra.mxu0 %v6591
      %6856 = vmatprep.subr.mxu0 %v6597
      %6857 = vmatpush1.msra.mxu0 %v6596
      %6858 = vmatprep.subr.mxu0 0.0
      %6859 = vmatpush1.msra.mxu0 0.0
      %6860 = vmatprep.subr.mxu0 0.0
      %6861 = vmatpush1.msra.mxu0 0.0
      %6862 = vmatprep.subr.mxu0 0.0
      %6863 = vmatpush1.msra.mxu0 0.0
      %6864 = vmatprep.subr.mxu0 0.0
      %6865 = vmatpush1.msra.mxu0 0.0
      %6866 = vmatprep.subr.mxu0 0.0
      %6867 = vmatpush1.msra.mxu0 0.0
      %6868 = vmatprep.subr.mxu0 0.0
      %6869 = vmatpush1.msra.mxu0 0.0
      %6870 = vmatprep.subr.mxu0 0.0
      %6871 = vmatpush1.msra.mxu0 0.0
      %6872 = vmatprep.subr.mxu0 0.0
      %6873 = vmatpush1.msra.mxu0 0.0
      %6874 = vmatprep.subr.mxu0 0.0
      %6875 = vmatpush1.msra.mxu0 0.0
      %6876 = vmatprep.subr.mxu0 0.0
      %6877 = vmatpush1.msra.mxu0 0.0
      %6878 = vmatprep.subr.mxu0 0.0
      %6879 = vmatpush1.msra.mxu0 0.0
      %6880 = vmatprep.subr.mxu0 0.0
      %6881 = vmatpush1.msra.mxu0 0.0
      %6882 = vmatprep.subr.mxu0 0.0
      %6883 = vmatpush1.msra.mxu0 0.0
      %6884 = vmatprep.subr.mxu0 0.0
      %6885 = vmatpush1.msra.mxu0 0.0
      %6886 = vmatprep.mubr.f32.mxu0 %v6607
      %6887 = vmatmul.mubr.f32.gmra.mrb[0].mxu0 %v6347
      %v6888 = vpop.f32.mrb[0].mxu0
      %v6889 = vadd.f32 %v6818, %v6888
      %v6890 = vpop.f32.mrb[0].mxu0
      %v6891 = vadd.f32 %v6820, %v6890
      %6892 = vdwg.mxu0
      %6893 = vmatprep.subr.mxu0 0.0
      %6894 = vmatpush1.msra.mxu0 %v6353
      %6895 = vmatprep.subr.mxu0 0.0
      %6896 = vmatpush1.msra.mxu0 %v6358
      %6897 = vmatprep.subr.mxu0 0.0
      %6898 = vmatpush1.msra.mxu0 %v6363
      %6899 = vmatprep.subr.mxu0 0.0
      %6900 = vmatpush1.msra.mxu0 %v6368
      %6901 = vmatprep.subr.mxu0 0.0
      %6902 = vmatpush1.msra.mxu0 %v6373
      %6903 = vmatprep.subr.mxu0 0.0
      %6904 = vmatpush1.msra.mxu0 %v6378
      %6905 = vmatprep.subr.mxu0 0.0
      %6906 = vmatpush1.msra.mxu0 %v6383
      %6907 = vmatprep.subr.mxu0 0.0
      %6908 = vmatpush1.msra.mxu0 %v6388
      %6909 = vmatprep.subr.mxu0 0.0
      %6910 = vmatpush1.msra.mxu0 %v6393
      %6911 = vmatprep.subr.mxu0 0.0
      %6912 = vmatpush1.msra.mxu0 %v6398
      %6913 = vmatprep.subr.mxu0 0.0
      %6914 = vmatpush1.msra.mxu0 %v6403
      %6915 = vmatprep.subr.mxu0 0.0
      %6916 = vmatpush1.msra.mxu0 %v6408
      %6917 = vmatprep.subr.mxu0 0.0
      %6918 = vmatpush1.msra.mxu0 %v6413
      %6919 = vmatprep.subr.mxu0 0.0
      %6920 = vmatpush1.msra.mxu0 %v6418
      %6921 = vmatprep.subr.mxu0 0.0
      %6922 = vmatpush1.msra.mxu0 %v6423
      %6923 = vmatprep.subr.mxu0 0.0
      %6924 = vmatpush1.msra.mxu0 %v6428
      %6925 = vmatprep.subr.mxu0 0.0
      %6926 = vmatpush1.msra.mxu0 %v6433
      %6927 = vmatprep.subr.mxu0 0.0
      %6928 = vmatpush1.msra.mxu0 %v6438
      %6929 = vmatprep.subr.mxu0 0.0
      %6930 = vmatpush1.msra.mxu0 %v6443
      %6931 = vmatprep.subr.mxu0 0.0
      %6932 = vmatpush1.msra.mxu0 %v6448
      %6933 = vmatprep.subr.mxu0 0.0
      %6934 = vmatpush1.msra.mxu0 %v6453
      %6935 = vmatprep.subr.mxu0 0.0
      %6936 = vmatpush1.msra.mxu0 %v6458
      %6937 = vmatprep.subr.mxu0 0.0
      %6938 = vmatpush1.msra.mxu0 %v6463
      %6939 = vmatprep.subr.mxu0 0.0
      %6940 = vmatpush1.msra.mxu0 %v6468
      %6941 = vmatprep.subr.mxu0 0.0
      %6942 = vmatpush1.msra.mxu0 %v6473
      %6943 = vmatprep.subr.mxu0 0.0
      %6944 = vmatpush1.msra.mxu0 %v6478
      %6945 = vmatprep.subr.mxu0 0.0
      %6946 = vmatpush1.msra.mxu0 %v6483
      %6947 = vmatprep.subr.mxu0 0.0
      %6948 = vmatpush1.msra.mxu0 %v6488
      %6949 = vmatprep.subr.mxu0 0.0
      %6950 = vmatpush1.msra.mxu0 %v6493
      %6951 = vmatprep.subr.mxu0 0.0
      %6952 = vmatpush1.msra.mxu0 %v6498
      %6953 = vmatprep.subr.mxu0 0.0
      %6954 = vmatpush1.msra.mxu0 %v6503
      %6955 = vmatprep.subr.mxu0 0.0
      %6956 = vmatpush1.msra.mxu0 %v6508
      %6957 = vmatprep.mubr.f32.mxu0 %v6346
      %6958 = vmatmul.mubr.f32.gmra.mrb[0].mxu0 %v6345
      %v6959 = vpop.f32.mrb[0].mxu0
      %v6960 = vadd.f32 %v6603, %v6959
      %v6961 = vpop.f32.mrb[0].mxu0
      %6962 = vdwg.mxu0
      %6963 = vmatprep.subr.mxu0 0.0
      %6964 = vmatpush1.msra.mxu0 %v6513
      %6965 = vmatprep.subr.mxu0 0.0
      %6966 = vmatpush1.msra.mxu0 %v6518
      %6967 = vmatprep.subr.mxu0 0.0
      %6968 = vmatpush1.msra.mxu0 %v6523
      %6969 = vmatprep.subr.mxu0 0.0
      %6970 = vmatpush1.msra.mxu0 %v6528
      %6971 = vmatprep.subr.mxu0 0.0
      %6972 = vmatpush1.msra.mxu0 %v6533
      %6973 = vmatprep.subr.mxu0 0.0
      %6974 = vmatpush1.msra.mxu0 %v6538
      %6975 = vmatprep.subr.mxu0 0.0
      %6976 = vmatpush1.msra.mxu0 %v6543
      %6977 = vmatprep.subr.mxu0 0.0
      %6978 = vmatpush1.msra.mxu0 %v6548
      %6979 = vmatprep.subr.mxu0 0.0
      %6980 = vmatpush1.msra.mxu0 %v6553
      %6981 = vmatprep.subr.mxu0 0.0
      %6982 = vmatpush1.msra.mxu0 %v6558
      %6983 = vmatprep.subr.mxu0 0.0
      %6984 = vmatpush1.msra.mxu0 %v6563
      %6985 = vmatprep.subr.mxu0 0.0
      %6986 = vmatpush1.msra.mxu0 %v6568
      %6987 = vmatprep.subr.mxu0 0.0
      %6988 = vmatpush1.msra.mxu0 %v6573
      %6989 = vmatprep.subr.mxu0 0.0
      %6990 = vmatpush1.msra.mxu0 %v6578
      %6991 = vmatprep.subr.mxu0 0.0
      %6992 = vmatpush1.msra.mxu0 %v6583
      %6993 = vmatprep.subr.mxu0 0.0
      %6994 = vmatpush1.msra.mxu0 %v6588
      %6995 = vmatprep.subr.mxu0 0.0
      %6996 = vmatpush1.msra.mxu0 %v6593
      %6997 = vmatprep.subr.mxu0 0.0
      %6998 = vmatpush1.msra.mxu0 %v6598
      %6999 = vmatprep.subr.mxu0 0.0
      %7000 = vmatpush1.msra.mxu0 0.0
      %7001 = vmatprep.subr.mxu0 0.0
      %7002 = vmatpush1.msra.mxu0 0.0
      %7003 = vmatprep.subr.mxu0 0.0
      %7004 = vmatpush1.msra.mxu0 0.0
      %7005 = vmatprep.subr.mxu0 0.0
      %7006 = vmatpush1.msra.mxu0 0.0
      %7007 = vmatprep.subr.mxu0 0.0
      %7008 = vmatpush1.msra.mxu0 0.0
      %7009 = vmatprep.subr.mxu0 0.0
      %7010 = vmatpush1.msra.mxu0 0.0
      %7011 = vmatprep.subr.mxu0 0.0
      %7012 = vmatpush1.msra.mxu0 0.0
      %7013 = vmatprep.subr.mxu0 0.0
      %7014 = vmatpush1.msra.mxu0 0.0
      %7015 = vmatprep.subr.mxu0 0.0
      %7016 = vmatpush1.msra.mxu0 0.0
      %7017 = vmatprep.subr.mxu0 0.0
      %7018 = vmatpush1.msra.mxu0 0.0
      %7019 = vmatprep.subr.mxu0 0.0
      %7020 = vmatpush1.msra.mxu0 0.0
      %7021 = vmatprep.subr.mxu0 0.0
      %7022 = vmatpush1.msra.mxu0 0.0
      %7023 = vmatprep.subr.mxu0 0.0
      %7024 = vmatpush1.msra.mxu0 0.0
      %7025 = vmatprep.subr.mxu0 0.0
      %7026 = vmatpush1.msra.mxu0 0.0
      %7027 = vmatprep.mubr.f32.mxu0 %v6607
      %7028 = vmatmul.mubr.f32.gmra.mrb[0].mxu0 %v6347
      %v7029 = vpop.f32.mrb[0].mxu0
      %v7030 = vadd.f32 %v6960, %v7029
      %v7031 = vpop.f32.mrb[0].mxu0
      %7032 = vdwg.mxu0
      %v7033 = vmax.f32 %v6747, 0.0
      %v7034 = vmax.f32 %v6749, 0.0
      %v7035 = vmax.f32 %v6889, 0.0
      %v7036 = vmax.f32 %v6891, 0.0
      %v7037 = vmax.f32 %v7030, 0.0
      %v7038 = vmul.f32 %v7033, %v1760
      %v7039 = vmul.f32 %v7034, %v1764
      %v7040 = vmul.f32 %v7035, %v1768
      %v7041 = vmul.f32 %v7036, %v1772
      %v7042 = vmul.f32 %v7037, %v1776
      %7043 = vst [vmem:[#allocation2 + $0x8] sm:$0xff] %v7038
      %7044 = vst [vmem:[#allocation2 + $0x10] sm:$0xff] %v7039
      %7045 = vst [vmem:[#allocation2 + $0x18] sm:$0xff] %v7040
      %7046 = vst [vmem:[#allocation2 + $0x20] sm:$0xff] %v7041
      %7047 = vst [vmem:[#allocation2 + $0x28] sm:$0xff] %v7042
      %v7048 = vld [vmem:[#allocation2] sm:$0xff]
      %v7049 = vld [vmem:[#allocation2 + $0x8] sm:$0xff]
      %v7050 = vld [vmem:[#allocation2 + $0x10] sm:$0xff]
      %v7051 = vld [vmem:[#allocation2 + $0x18] sm:$0xff]
      %v7052 = vld [vmem:[#allocation2 + $0x20] sm:$0xff]
      %v7053 = vld [vmem:[#allocation2 + $0x28] sm:$0xff]
      %7060 = vrot.lane.b32.xlu0 %v7048, 66
      %v7061 = vpop.permute.xlu0 %7060
      %7062 = vrot.lane.b32.xlu0 %v7049, 66
      %v7063 = vpop.permute.xlu0 %7062
      %7064 = vrot.lane.b32.xlu0 %v7050, 66
      %v7065 = vpop.permute.xlu0 %7064
      %7066 = vrot.lane.b32.xlu0 %v7051, 66
      %v7067 = vpop.permute.xlu0 %7066
      %7068 = vrot.lane.b32.xlu0 %v7052, 66
      %v7069 = vpop.permute.xlu0 %7068
      %7070 = vrot.lane.b32.xlu0 %v7053, 66
      %v7071 = vpop.permute.xlu0 %7070
      %v7072 = vsel %vm461, %v7061, %v7063
      %v7073 = vsel %vm461, %v7063, %v7065
      %v7074 = vsel %vm461, %v7065, %v7067
      %v7075 = vsel %vm461, %v7067, %v7069
      %v7076 = vsel %vm461, %v7069, %v7071
      %7082 = vst [vmem:[#allocation3] sm:$0xff] %v7072
      %7083 = vst [vmem:[#allocation3 + $0x8] sm:$0xff] %v7073
      %7084 = vst [vmem:[#allocation3 + $0x10] sm:$0xff] %v7074
      %7085 = vst [vmem:[#allocation3 + $0x18] sm:$0xff] %v7075
      %7086 = vst [vmem:[#allocation3 + $0x20] sm:$0xff] %v7076
      %v7087 = vld [vmem:[#allocation2] sm:$0xff]
      %v7088 = vld [vmem:[#allocation2 + $0x8] sm:$0xff]
      %v7089 = vld [vmem:[#allocation2 + $0x10] sm:$0xff]
      %v7090 = vld [vmem:[#allocation2 + $0x18] sm:$0xff]
      %v7091 = vld [vmem:[#allocation2 + $0x20] sm:$0xff]
      %v7092 = vld [vmem:[#allocation2 + $0x28] sm:$0xff]
      %7099 = vrot.lane.b32.xlu0 %v7087, 65
      %v7100 = vpop.permute.xlu0 %7099
      %7101 = vrot.lane.b32.xlu0 %v7088, 65
      %v7102 = vpop.permute.xlu0 %7101
      %7103 = vrot.lane.b32.xlu0 %v7089, 65
      %v7104 = vpop.permute.xlu0 %7103
      %7105 = vrot.lane.b32.xlu0 %v7090, 65
      %v7106 = vpop.permute.xlu0 %7105
      %7107 = vrot.lane.b32.xlu0 %v7091, 65
      %v7108 = vpop.permute.xlu0 %7107
      %7109 = vrot.lane.b32.xlu0 %v7092, 65
      %v7110 = vpop.permute.xlu0 %7109
      %v7111 = vsel %vm501, %v7100, %v7102
      %v7112 = vsel %vm501, %v7102, %v7104
      %v7113 = vsel %vm501, %v7104, %v7106
      %v7114 = vsel %vm501, %v7106, %v7108
      %v7115 = vsel %vm501, %v7108, %v7110
      %7121 = vst [vmem:[#allocation3 + $0x28] sm:$0xff] %v7111
      %7122 = vst [vmem:[#allocation3 + $0x30] sm:$0xff] %v7112
      %7123 = vst [vmem:[#allocation3 + $0x38] sm:$0xff] %v7113
      %7124 = vst [vmem:[#allocation3 + $0x40] sm:$0xff] %v7114
      %7125 = vst [vmem:[#allocation3 + $0x48] sm:$0xff] %v7115
      %v7126 = vld [vmem:[#allocation2] sm:$0xff]
      %v7127 = vld [vmem:[#allocation2 + $0x8] sm:$0xff]
      %v7128 = vld [vmem:[#allocation2 + $0x10] sm:$0xff]
      %v7129 = vld [vmem:[#allocation2 + $0x18] sm:$0xff]
      %v7130 = vld [vmem:[#allocation2 + $0x20] sm:$0xff]
      %v7131 = vld [vmem:[#allocation2 + $0x28] sm:$0xff]
      %7138 = vrot.lane.b32.xlu0 %v7126, 64
      %v7139 = vpop.permute.xlu0 %7138
      %7140 = vrot.lane.b32.xlu0 %v7127, 64
      %v7141 = vpop.permute.xlu0 %7140
      %7142 = vrot.lane.b32.xlu0 %v7128, 64
      %v7143 = vpop.permute.xlu0 %7142
      %7144 = vrot.lane.b32.xlu0 %v7129, 64
      %v7145 = vpop.permute.xlu0 %7144
      %7146 = vrot.lane.b32.xlu0 %v7130, 64
      %v7147 = vpop.permute.xlu0 %7146
      %7148 = vrot.lane.b32.xlu0 %v7131, 64
      %v7149 = vpop.permute.xlu0 %7148
      %v7150 = vsel %vm541, %v7139, %v7141
      %v7151 = vsel %vm541, %v7141, %v7143
      %v7152 = vsel %vm541, %v7143, %v7145
      %v7153 = vsel %vm541, %v7145, %v7147
      %v7154 = vsel %vm541, %v7147, %v7149
      %7160 = vst [vmem:[#allocation3 + $0x50] sm:$0xff] %v7150
      %7161 = vst [vmem:[#allocation3 + $0x58] sm:$0xff] %v7151
      %7162 = vst [vmem:[#allocation3 + $0x60] sm:$0xff] %v7152
      %7163 = vst [vmem:[#allocation3 + $0x68] sm:$0xff] %v7153
      %7164 = vst [vmem:[#allocation3 + $0x70] sm:$0xff] %v7154
      %v7165 = vld [vmem:[#allocation2] sm:$0xff]
      %v7166 = vld [vmem:[#allocation2 + $0x8] sm:$0xff]
      %v7167 = vld [vmem:[#allocation2 + $0x10] sm:$0xff]
      %v7168 = vld [vmem:[#allocation2 + $0x18] sm:$0xff]
      %v7169 = vld [vmem:[#allocation2 + $0x20] sm:$0xff]
      %v7170 = vld [vmem:[#allocation2 + $0x28] sm:$0xff]
      %7177 = vrot.lane.b32.xlu0 %v7165, 63
      %v7178 = vpop.permute.xlu0 %7177
      %7179 = vrot.lane.b32.xlu0 %v7166, 63
      %v7180 = vpop.permute.xlu0 %7179
      %7181 = vrot.lane.b32.xlu0 %v7167, 63
      %v7182 = vpop.permute.xlu0 %7181
      %7183 = vrot.lane.b32.xlu0 %v7168, 63
      %v7184 = vpop.permute.xlu0 %7183
      %7185 = vrot.lane.b32.xlu0 %v7169, 63
      %v7186 = vpop.permute.xlu0 %7185
      %7187 = vrot.lane.b32.xlu0 %v7170, 63
      %v7188 = vpop.permute.xlu0 %7187
      %v7189 = vsel %vm581, %v7178, %v7180
      %v7190 = vsel %vm581, %v7180, %v7182
      %v7191 = vsel %vm581, %v7182, %v7184
      %v7192 = vsel %vm581, %v7184, %v7186
      %v7193 = vsel %vm581, %v7186, %v7188
      %7199 = vst [vmem:[#allocation3 + $0x78] sm:$0xff] %v7189
      %7200 = vst [vmem:[#allocation3 + $0x80] sm:$0xff] %v7190
      %7201 = vst [vmem:[#allocation3 + $0x88] sm:$0xff] %v7191
      %7202 = vst [vmem:[#allocation3 + $0x90] sm:$0xff] %v7192
      %7203 = vst [vmem:[#allocation3 + $0x98] sm:$0xff] %v7193
      %v7204 = vld [vmem:[#allocation2] sm:$0xff]
      %v7205 = vld [vmem:[#allocation2 + $0x8] sm:$0xff]
      %v7206 = vld [vmem:[#allocation2 + $0x10] sm:$0xff]
      %v7207 = vld [vmem:[#allocation2 + $0x18] sm:$0xff]
      %v7208 = vld [vmem:[#allocation2 + $0x20] sm:$0xff]
      %v7209 = vld [vmem:[#allocation2 + $0x28] sm:$0xff]
      %7216 = vrot.lane.b32.xlu0 %v7204, 62
      %v7217 = vpop.permute.xlu0 %7216
      %7218 = vrot.lane.b32.xlu0 %v7205, 62
      %v7219 = vpop.permute.xlu0 %7218
      %7220 = vrot.lane.b32.xlu0 %v7206, 62
      %v7221 = vpop.permute.xlu0 %7220
      %7222 = vrot.lane.b32.xlu0 %v7207, 62
      %v7223 = vpop.permute.xlu0 %7222
      %7224 = vrot.lane.b32.xlu0 %v7208, 62
      %v7225 = vpop.permute.xlu0 %7224
      %7226 = vrot.lane.b32.xlu0 %v7209, 62
      %v7227 = vpop.permute.xlu0 %7226
      %v7228 = vsel %vm621, %v7217, %v7219
      %v7229 = vsel %vm621, %v7219, %v7221
      %v7230 = vsel %vm621, %v7221, %v7223
      %v7231 = vsel %vm621, %v7223, %v7225
      %v7232 = vsel %vm621, %v7225, %v7227
      %7238 = vst [vmem:[#allocation3 + $0xa0] sm:$0xff] %v7228
      %7239 = vst [vmem:[#allocation3 + $0xa8] sm:$0xff] %v7229
      %7240 = vst [vmem:[#allocation3 + $0xb0] sm:$0xff] %v7230
      %7241 = vst [vmem:[#allocation3 + $0xb8] sm:$0xff] %v7231
      %7242 = vst [vmem:[#allocation3 + $0xc0] sm:$0xff] %v7232
      %v7243 = vld [vmem:[#allocation2] sm:$0xff]
      %v7244 = vld [vmem:[#allocation2 + $0x8] sm:$0xff]
      %v7245 = vld [vmem:[#allocation2 + $0x10] sm:$0xff]
      %v7246 = vld [vmem:[#allocation2 + $0x18] sm:$0xff]
      %v7247 = vld [vmem:[#allocation2 + $0x20] sm:$0xff]
      %v7248 = vld [vmem:[#allocation2 + $0x28] sm:$0xff]
      %7255 = vrot.lane.b32.xlu0 %v7243, 34
      %v7256 = vpop.permute.xlu0 %7255
      %7257 = vrot.lane.b32.xlu0 %v7244, 34
      %v7258 = vpop.permute.xlu0 %7257
      %7259 = vrot.lane.b32.xlu0 %v7245, 34
      %v7260 = vpop.permute.xlu0 %7259
      %7261 = vrot.lane.b32.xlu0 %v7246, 34
      %v7262 = vpop.permute.xlu0 %7261
      %7263 = vrot.lane.b32.xlu0 %v7247, 34
      %v7264 = vpop.permute.xlu0 %7263
      %7265 = vrot.lane.b32.xlu0 %v7248, 34
      %v7266 = vpop.permute.xlu0 %7265
      %v7267 = vsel %vm661, %v7256, %v7258
      %v7268 = vsel %vm661, %v7258, %v7260
      %v7269 = vsel %vm661, %v7260, %v7262
      %v7270 = vsel %vm661, %v7262, %v7264
      %v7271 = vsel %vm661, %v7264, %v7266
      %7277 = vst [vmem:[#allocation3 + $0xc8] sm:$0xff] %v7267
      %7278 = vst [vmem:[#allocation3 + $0xd0] sm:$0xff] %v7268
      %7279 = vst [vmem:[#allocation3 + $0xd8] sm:$0xff] %v7269
      %7280 = vst [vmem:[#allocation3 + $0xe0] sm:$0xff] %v7270
      %7281 = vst [vmem:[#allocation3 + $0xe8] sm:$0xff] %v7271
      %v7282 = vld [vmem:[#allocation2] sm:$0xff]
      %v7283 = vld [vmem:[#allocation2 + $0x8] sm:$0xff]
      %v7284 = vld [vmem:[#allocation2 + $0x10] sm:$0xff]
      %v7285 = vld [vmem:[#allocation2 + $0x18] sm:$0xff]
      %v7286 = vld [vmem:[#allocation2 + $0x20] sm:$0xff]
      %v7287 = vld [vmem:[#allocation2 + $0x28] sm:$0xff]
      %7294 = vrot.lane.b32.xlu0 %v7282, 33
      %v7295 = vpop.permute.xlu0 %7294
      %7296 = vrot.lane.b32.xlu0 %v7283, 33
      %v7297 = vpop.permute.xlu0 %7296
      %7298 = vrot.lane.b32.xlu0 %v7284, 33
      %v7299 = vpop.permute.xlu0 %7298
      %7300 = vrot.lane.b32.xlu0 %v7285, 33
      %v7301 = vpop.permute.xlu0 %7300
      %7302 = vrot.lane.b32.xlu0 %v7286, 33
      %v7303 = vpop.permute.xlu0 %7302
      %7304 = vrot.lane.b32.xlu0 %v7287, 33
      %v7305 = vpop.permute.xlu0 %7304
      %v7306 = vsel %vm701, %v7295, %v7297
      %v7307 = vsel %vm701, %v7297, %v7299
      %v7308 = vsel %vm701, %v7299, %v7301
      %v7309 = vsel %vm701, %v7301, %v7303
      %v7310 = vsel %vm701, %v7303, %v7305
      %7316 = vst [vmem:[#allocation3 + $0xf0] sm:$0xff] %v7306
      %7317 = vst [vmem:[#allocation3 + $0xf8] sm:$0xff] %v7307
      %7318 = vst [vmem:[#allocation3 + $0x100] sm:$0xff] %v7308
      %7319 = vst [vmem:[#allocation3 + $0x108] sm:$0xff] %v7309
      %7320 = vst [vmem:[#allocation3 + $0x110] sm:$0xff] %v7310
      %v7321 = vld [vmem:[#allocation2] sm:$0xff]
      %v7322 = vld [vmem:[#allocation2 + $0x8] sm:$0xff]
      %v7323 = vld [vmem:[#allocation2 + $0x10] sm:$0xff]
      %v7324 = vld [vmem:[#allocation2 + $0x18] sm:$0xff]
      %v7325 = vld [vmem:[#allocation2 + $0x20] sm:$0xff]
      %v7326 = vld [vmem:[#allocation2 + $0x28] sm:$0xff]
      %7333 = vrot.lane.b32.xlu0 %v7321, 32
      %v7334 = vpop.permute.xlu0 %7333
      %7335 = vrot.lane.b32.xlu0 %v7322, 32
      %v7336 = vpop.permute.xlu0 %7335
      %7337 = vrot.lane.b32.xlu0 %v7323, 32
      %v7338 = vpop.permute.xlu0 %7337
      %7339 = vrot.lane.b32.xlu0 %v7324, 32
      %v7340 = vpop.permute.xlu0 %7339
      %7341 = vrot.lane.b32.xlu0 %v7325, 32
      %v7342 = vpop.permute.xlu0 %7341
      %7343 = vrot.lane.b32.xlu0 %v7326, 32
      %v7344 = vpop.permute.xlu0 %7343
      %v7345 = vsel %vm741, %v7334, %v7336
      %v7346 = vsel %vm741, %v7336, %v7338
      %v7347 = vsel %vm741, %v7338, %v7340
      %v7348 = vsel %vm741, %v7340, %v7342
      %v7349 = vsel %vm741, %v7342, %v7344
      %7355 = vst [vmem:[#allocation3 + $0x118] sm:$0xff] %v7345
      %7356 = vst [vmem:[#allocation3 + $0x120] sm:$0xff] %v7346
      %7357 = vst [vmem:[#allocation3 + $0x128] sm:$0xff] %v7347
      %7358 = vst [vmem:[#allocation3 + $0x130] sm:$0xff] %v7348
      %7359 = vst [vmem:[#allocation3 + $0x138] sm:$0xff] %v7349
      %v7360 = vld [vmem:[#allocation2] sm:$0xff]
      %v7361 = vld [vmem:[#allocation2 + $0x8] sm:$0xff]
      %v7362 = vld [vmem:[#allocation2 + $0x10] sm:$0xff]
      %v7363 = vld [vmem:[#allocation2 + $0x18] sm:$0xff]
      %v7364 = vld [vmem:[#allocation2 + $0x20] sm:$0xff]
      %v7365 = vld [vmem:[#allocation2 + $0x28] sm:$0xff]
      %7372 = vrot.lane.b32.xlu0 %v7360, 31
      %v7373 = vpop.permute.xlu0 %7372
      %7374 = vrot.lane.b32.xlu0 %v7361, 31
      %v7375 = vpop.permute.xlu0 %7374
      %7376 = vrot.lane.b32.xlu0 %v7362, 31
      %v7377 = vpop.permute.xlu0 %7376
      %7378 = vrot.lane.b32.xlu0 %v7363, 31
      %v7379 = vpop.permute.xlu0 %7378
      %7380 = vrot.lane.b32.xlu0 %v7364, 31
      %v7381 = vpop.permute.xlu0 %7380
      %7382 = vrot.lane.b32.xlu0 %v7365, 31
      %v7383 = vpop.permute.xlu0 %7382
      %v7384 = vsel %vm781, %v7373, %v7375
      %v7385 = vsel %vm781, %v7375, %v7377
      %v7386 = vsel %vm781, %v7377, %v7379
      %v7387 = vsel %vm781, %v7379, %v7381
      %v7388 = vsel %vm781, %v7381, %v7383
      %7394 = vst [vmem:[#allocation3 + $0x140] sm:$0xff] %v7384
      %7395 = vst [vmem:[#allocation3 + $0x148] sm:$0xff] %v7385
      %7396 = vst [vmem:[#allocation3 + $0x150] sm:$0xff] %v7386
      %7397 = vst [vmem:[#allocation3 + $0x158] sm:$0xff] %v7387
      %7398 = vst [vmem:[#allocation3 + $0x160] sm:$0xff] %v7388
      %v7399 = vld [vmem:[#allocation2] sm:$0xff]
      %v7400 = vld [vmem:[#allocation2 + $0x8] sm:$0xff]
      %v7401 = vld [vmem:[#allocation2 + $0x10] sm:$0xff]
      %v7402 = vld [vmem:[#allocation2 + $0x18] sm:$0xff]
      %v7403 = vld [vmem:[#allocation2 + $0x20] sm:$0xff]
      %v7404 = vld [vmem:[#allocation2 + $0x28] sm:$0xff]
      %7411 = vrot.lane.b32.xlu0 %v7399, 30
      %v7412 = vpop.permute.xlu0 %7411
      %7413 = vrot.lane.b32.xlu0 %v7400, 30
      %v7414 = vpop.permute.xlu0 %7413
      %7415 = vrot.lane.b32.xlu0 %v7401, 30
      %v7416 = vpop.permute.xlu0 %7415
      %7417 = vrot.lane.b32.xlu0 %v7402, 30
      %v7418 = vpop.permute.xlu0 %7417
      %7419 = vrot.lane.b32.xlu0 %v7403, 30
      %v7420 = vpop.permute.xlu0 %7419
      %7421 = vrot.lane.b32.xlu0 %v7404, 30
      %v7422 = vpop.permute.xlu0 %7421
      %v7423 = vsel %vm821, %v7412, %v7414
      %v7424 = vsel %vm821, %v7414, %v7416
      %v7425 = vsel %vm821, %v7416, %v7418
      %v7426 = vsel %vm821, %v7418, %v7420
      %v7427 = vsel %vm821, %v7420, %v7422
      %7433 = vst [vmem:[#allocation3 + $0x168] sm:$0xff] %v7423
      %7434 = vst [vmem:[#allocation3 + $0x170] sm:$0xff] %v7424
      %7435 = vst [vmem:[#allocation3 + $0x178] sm:$0xff] %v7425
      %7436 = vst [vmem:[#allocation3 + $0x180] sm:$0xff] %v7426
      %7437 = vst [vmem:[#allocation3 + $0x188] sm:$0xff] %v7427
      %v7438 = vld [vmem:[#allocation2] sm:$0xff]
      %v7439 = vld [vmem:[#allocation2 + $0x8] sm:$0xff]
      %v7440 = vld [vmem:[#allocation2 + $0x10] sm:$0xff]
      %v7441 = vld [vmem:[#allocation2 + $0x18] sm:$0xff]
      %v7442 = vld [vmem:[#allocation2 + $0x20] sm:$0xff]
      %v7443 = vld [vmem:[#allocation2 + $0x28] sm:$0xff]
      %7450 = vrot.lane.b32.xlu0 %v7438, 2
      %v7451 = vpop.permute.xlu0 %7450
      %7452 = vrot.lane.b32.xlu0 %v7439, 2
      %v7453 = vpop.permute.xlu0 %7452
      %7454 = vrot.lane.b32.xlu0 %v7440, 2
      %v7455 = vpop.permute.xlu0 %7454
      %7456 = vrot.lane.b32.xlu0 %v7441, 2
      %v7457 = vpop.permute.xlu0 %7456
      %7458 = vrot.lane.b32.xlu0 %v7442, 2
      %v7459 = vpop.permute.xlu0 %7458
      %7460 = vrot.lane.b32.xlu0 %v7443, 2
      %v7461 = vpop.permute.xlu0 %7460
      %v7462 = vsel %vm861, %v7451, %v7453
      %v7463 = vsel %vm861, %v7453, %v7455
      %v7464 = vsel %vm861, %v7455, %v7457
      %v7465 = vsel %vm861, %v7457, %v7459
      %v7466 = vsel %vm861, %v7459, %v7461
      %7472 = vst [vmem:[#allocation3 + $0x190] sm:$0xff] %v7462
      %7473 = vst [vmem:[#allocation3 + $0x198] sm:$0xff] %v7463
      %7474 = vst [vmem:[#allocation3 + $0x1a0] sm:$0xff] %v7464
      %7475 = vst [vmem:[#allocation3 + $0x1a8] sm:$0xff] %v7465
      %7476 = vst [vmem:[#allocation3 + $0x1b0] sm:$0xff] %v7466
      %v7477 = vld [vmem:[#allocation2] sm:$0xff]
      %v7478 = vld [vmem:[#allocation2 + $0x8] sm:$0xff]
      %v7479 = vld [vmem:[#allocation2 + $0x10] sm:$0xff]
      %v7480 = vld [vmem:[#allocation2 + $0x18] sm:$0xff]
      %v7481 = vld [vmem:[#allocation2 + $0x20] sm:$0xff]
      %v7482 = vld [vmem:[#allocation2 + $0x28] sm:$0xff]
      %7489 = vrot.lane.b32.xlu0 %v7477, 1
      %v7490 = vpop.permute.xlu0 %7489
      %7491 = vrot.lane.b32.xlu0 %v7478, 1
      %v7492 = vpop.permute.xlu0 %7491
      %7493 = vrot.lane.b32.xlu0 %v7479, 1
      %v7494 = vpop.permute.xlu0 %7493
      %7495 = vrot.lane.b32.xlu0 %v7480, 1
      %v7496 = vpop.permute.xlu0 %7495
      %7497 = vrot.lane.b32.xlu0 %v7481, 1
      %v7498 = vpop.permute.xlu0 %7497
      %7499 = vrot.lane.b32.xlu0 %v7482, 1
      %v7500 = vpop.permute.xlu0 %7499
      %v7501 = vsel %vm901, %v7490, %v7492
      %v7502 = vsel %vm901, %v7492, %v7494
      %v7503 = vsel %vm901, %v7494, %v7496
      %v7504 = vsel %vm901, %v7496, %v7498
      %v7505 = vsel %vm901, %v7498, %v7500
      %7511 = vst [vmem:[#allocation3 + $0x1b8] sm:$0xff] %v7501
      %7512 = vst [vmem:[#allocation3 + $0x1c0] sm:$0xff] %v7502
      %7513 = vst [vmem:[#allocation3 + $0x1c8] sm:$0xff] %v7503
      %7514 = vst [vmem:[#allocation3 + $0x1d0] sm:$0xff] %v7504
      %7515 = vst [vmem:[#allocation3 + $0x1d8] sm:$0xff] %v7505
      %v7516 = vld [vmem:[#allocation2 + $0x8] sm:$0xff]
      %v7517 = vld [vmem:[#allocation2 + $0x10] sm:$0xff]
      %v7518 = vld [vmem:[#allocation2 + $0x18] sm:$0xff]
      %v7519 = vld [vmem:[#allocation2 + $0x20] sm:$0xff]
      %v7520 = vld [vmem:[#allocation2 + $0x28] sm:$0xff]
      %7521 = vst [vmem:[#allocation3 + $0x1e0] sm:$0xff] %v7516
      %7522 = vst [vmem:[#allocation3 + $0x1e8] sm:$0xff] %v7517
      %7523 = vst [vmem:[#allocation3 + $0x1f0] sm:$0xff] %v7518
      %7524 = vst [vmem:[#allocation3 + $0x1f8] sm:$0xff] %v7519
      %7525 = vst [vmem:[#allocation3 + $0x200] sm:$0xff] %v7520
      %v7526 = vld [vmem:[#allocation2 + $0x8] sm:$0xff]
      %v7527 = vld [vmem:[#allocation2 + $0x10] sm:$0xff]
      %v7528 = vld [vmem:[#allocation2 + $0x18] sm:$0xff]
      %v7529 = vld [vmem:[#allocation2 + $0x20] sm:$0xff]
      %v7530 = vld [vmem:[#allocation2 + $0x28] sm:$0xff]
      %v7531 = vld [vmem:[#allocation2 + $0x30] sm:$0xff]
      %7538 = vrot.lane.b32.xlu0 %v7526, 127
      %v7539 = vpop.permute.xlu0 %7538
      %7540 = vrot.lane.b32.xlu0 %v7527, 127
      %v7541 = vpop.permute.xlu0 %7540
      %7542 = vrot.lane.b32.xlu0 %v7528, 127
      %v7543 = vpop.permute.xlu0 %7542
      %7544 = vrot.lane.b32.xlu0 %v7529, 127
      %v7545 = vpop.permute.xlu0 %7544
      %7546 = vrot.lane.b32.xlu0 %v7530, 127
      %v7547 = vpop.permute.xlu0 %7546
      %7548 = vrot.lane.b32.xlu0 %v7531, 127
      %v7549 = vpop.permute.xlu0 %7548
      %v7550 = vsel %vm951, %v7539, %v7541
      %v7551 = vsel %vm951, %v7541, %v7543
      %v7552 = vsel %vm951, %v7543, %v7545
      %v7553 = vsel %vm951, %v7545, %v7547
      %v7554 = vsel %vm951, %v7547, %v7549
      %7560 = vst [vmem:[#allocation3 + $0x208] sm:$0xff] %v7550
      %7561 = vst [vmem:[#allocation3 + $0x210] sm:$0xff] %v7551
      %7562 = vst [vmem:[#allocation3 + $0x218] sm:$0xff] %v7552
      %7563 = vst [vmem:[#allocation3 + $0x220] sm:$0xff] %v7553
      %7564 = vst [vmem:[#allocation3 + $0x228] sm:$0xff] %v7554
      %v7565 = vld [vmem:[#allocation2 + $0x8] sm:$0xff]
      %v7566 = vld [vmem:[#allocation2 + $0x10] sm:$0xff]
      %v7567 = vld [vmem:[#allocation2 + $0x18] sm:$0xff]
      %v7568 = vld [vmem:[#allocation2 + $0x20] sm:$0xff]
      %v7569 = vld [vmem:[#allocation2 + $0x28] sm:$0xff]
      %v7570 = vld [vmem:[#allocation2 + $0x30] sm:$0xff]
      %7577 = vrot.lane.b32.xlu0 %v7565, 126
      %v7578 = vpop.permute.xlu0 %7577
      %7579 = vrot.lane.b32.xlu0 %v7566, 126
      %v7580 = vpop.permute.xlu0 %7579
      %7581 = vrot.lane.b32.xlu0 %v7567, 126
      %v7582 = vpop.permute.xlu0 %7581
      %7583 = vrot.lane.b32.xlu0 %v7568, 126
      %v7584 = vpop.permute.xlu0 %7583
      %7585 = vrot.lane.b32.xlu0 %v7569, 126
      %v7586 = vpop.permute.xlu0 %7585
      %7587 = vrot.lane.b32.xlu0 %v7570, 126
      %v7588 = vpop.permute.xlu0 %7587
      %v7589 = vsel %vm991, %v7578, %v7580
      %v7590 = vsel %vm991, %v7580, %v7582
      %v7591 = vsel %vm991, %v7582, %v7584
      %v7592 = vsel %vm991, %v7584, %v7586
      %v7593 = vsel %vm991, %v7586, %v7588
      %7599 = vst [vmem:[#allocation3 + $0x230] sm:$0xff] %v7589
      %7600 = vst [vmem:[#allocation3 + $0x238] sm:$0xff] %v7590
      %7601 = vst [vmem:[#allocation3 + $0x240] sm:$0xff] %v7591
      %7602 = vst [vmem:[#allocation3 + $0x248] sm:$0xff] %v7592
      %7603 = vst [vmem:[#allocation3 + $0x250] sm:$0xff] %v7593
      %v7604 = vld [vmem:[#allocation2 + $0x8] sm:$0xff]
      %v7605 = vld [vmem:[#allocation2 + $0x10] sm:$0xff]
      %v7606 = vld [vmem:[#allocation2 + $0x18] sm:$0xff]
      %v7607 = vld [vmem:[#allocation2 + $0x20] sm:$0xff]
      %v7608 = vld [vmem:[#allocation2 + $0x28] sm:$0xff]
      %v7609 = vld [vmem:[#allocation2 + $0x30] sm:$0xff]
      %7616 = vrot.lane.b32.xlu0 %v7604, 98
      %v7617 = vpop.permute.xlu0 %7616
      %7618 = vrot.lane.b32.xlu0 %v7605, 98
      %v7619 = vpop.permute.xlu0 %7618
      %7620 = vrot.lane.b32.xlu0 %v7606, 98
      %v7621 = vpop.permute.xlu0 %7620
      %7622 = vrot.lane.b32.xlu0 %v7607, 98
      %v7623 = vpop.permute.xlu0 %7622
      %7624 = vrot.lane.b32.xlu0 %v7608, 98
      %v7625 = vpop.permute.xlu0 %7624
      %7626 = vrot.lane.b32.xlu0 %v7609, 98
      %v7627 = vpop.permute.xlu0 %7626
      %v7628 = vsel %vm1031, %v7617, %v7619
      %v7629 = vsel %vm1031, %v7619, %v7621
      %v7630 = vsel %vm1031, %v7621, %v7623
      %v7631 = vsel %vm1031, %v7623, %v7625
      %v7632 = vsel %vm1031, %v7625, %v7627
      %7638 = vst [vmem:[#allocation3 + $0x258] sm:$0xff] %v7628
      %7639 = vst [vmem:[#allocation3 + $0x260] sm:$0xff] %v7629
      %7640 = vst [vmem:[#allocation3 + $0x268] sm:$0xff] %v7630
      %7641 = vst [vmem:[#allocation3 + $0x270] sm:$0xff] %v7631
      %7642 = vst [vmem:[#allocation3 + $0x278] sm:$0xff] %v7632
      %v7643 = vld [vmem:[#allocation2 + $0x8] sm:$0xff]
      %v7644 = vld [vmem:[#allocation2 + $0x10] sm:$0xff]
      %v7645 = vld [vmem:[#allocation2 + $0x18] sm:$0xff]
      %v7646 = vld [vmem:[#allocation2 + $0x20] sm:$0xff]
      %v7647 = vld [vmem:[#allocation2 + $0x28] sm:$0xff]
      %v7648 = vld [vmem:[#allocation2 + $0x30] sm:$0xff]
      %7655 = vrot.lane.b32.xlu0 %v7643, 97
      %v7656 = vpop.permute.xlu0 %7655
      %7657 = vrot.lane.b32.xlu0 %v7644, 97
      %v7658 = vpop.permute.xlu0 %7657
      %7659 = vrot.lane.b32.xlu0 %v7645, 97
      %v7660 = vpop.permute.xlu0 %7659
      %7661 = vrot.lane.b32.xlu0 %v7646, 97
      %v7662 = vpop.permute.xlu0 %7661
      %7663 = vrot.lane.b32.xlu0 %v7647, 97
      %v7664 = vpop.permute.xlu0 %7663
      %7665 = vrot.lane.b32.xlu0 %v7648, 97
      %v7666 = vpop.permute.xlu0 %7665
      %v7667 = vsel %vm1071, %v7656, %v7658
      %v7668 = vsel %vm1071, %v7658, %v7660
      %v7669 = vsel %vm1071, %v7660, %v7662
      %v7670 = vsel %vm1071, %v7662, %v7664
      %v7671 = vsel %vm1071, %v7664, %v7666
      %7677 = vst [vmem:[#allocation3 + $0x280] sm:$0xff] %v7667
      %7678 = vst [vmem:[#allocation3 + $0x288] sm:$0xff] %v7668
      %7679 = vst [vmem:[#allocation3 + $0x290] sm:$0xff] %v7669
      %7680 = vst [vmem:[#allocation3 + $0x298] sm:$0xff] %v7670
      %7681 = vst [vmem:[#allocation3 + $0x2a0] sm:$0xff] %v7671
      %v7682 = vld [vmem:[#allocation2 + $0x8] sm:$0xff]
      %v7683 = vld [vmem:[#allocation2 + $0x10] sm:$0xff]
      %v7684 = vld [vmem:[#allocation2 + $0x18] sm:$0xff]
      %v7685 = vld [vmem:[#allocation2 + $0x20] sm:$0xff]
      %v7686 = vld [vmem:[#allocation2 + $0x28] sm:$0xff]
      %v7687 = vld [vmem:[#allocation2 + $0x30] sm:$0xff]
      %7694 = vrot.lane.b32.xlu0 %v7682, 96
      %v7695 = vpop.permute.xlu0 %7694
      %7696 = vrot.lane.b32.xlu0 %v7683, 96
      %v7697 = vpop.permute.xlu0 %7696
      %7698 = vrot.lane.b32.xlu0 %v7684, 96
      %v7699 = vpop.permute.xlu0 %7698
      %7700 = vrot.lane.b32.xlu0 %v7685, 96
      %v7701 = vpop.permute.xlu0 %7700
      %7702 = vrot.lane.b32.xlu0 %v7686, 96
      %v7703 = vpop.permute.xlu0 %7702
      %7704 = vrot.lane.b32.xlu0 %v7687, 96
      %v7705 = vpop.permute.xlu0 %7704
      %v7706 = vsel %vm1111, %v7695, %v7697
      %v7707 = vsel %vm1111, %v7697, %v7699
      %v7708 = vsel %vm1111, %v7699, %v7701
      %v7709 = vsel %vm1111, %v7701, %v7703
      %v7710 = vsel %vm1111, %v7703, %v7705
      %7716 = vst [vmem:[#allocation3 + $0x2a8] sm:$0xff] %v7706
      %7717 = vst [vmem:[#allocation3 + $0x2b0] sm:$0xff] %v7707
      %7718 = vst [vmem:[#allocation3 + $0x2b8] sm:$0xff] %v7708
      %7719 = vst [vmem:[#allocation3 + $0x2c0] sm:$0xff] %v7709
      %7720 = vst [vmem:[#allocation3 + $0x2c8] sm:$0xff] %v7710
      %v7721 = vld [vmem:[#allocation2 + $0x8] sm:$0xff]
      %v7722 = vld [vmem:[#allocation2 + $0x10] sm:$0xff]
      %v7723 = vld [vmem:[#allocation2 + $0x18] sm:$0xff]
      %v7724 = vld [vmem:[#allocation2 + $0x20] sm:$0xff]
      %v7725 = vld [vmem:[#allocation2 + $0x28] sm:$0xff]
      %v7726 = vld [vmem:[#allocation2 + $0x30] sm:$0xff]
      %7733 = vrot.lane.b32.xlu0 %v7721, 95
      %v7734 = vpop.permute.xlu0 %7733
      %7735 = vrot.lane.b32.xlu0 %v7722, 95
      %v7736 = vpop.permute.xlu0 %7735
      %7737 = vrot.lane.b32.xlu0 %v7723, 95
      %v7738 = vpop.permute.xlu0 %7737
      %7739 = vrot.lane.b32.xlu0 %v7724, 95
      %v7740 = vpop.permute.xlu0 %7739
      %7741 = vrot.lane.b32.xlu0 %v7725, 95
      %v7742 = vpop.permute.xlu0 %7741
      %7743 = vrot.lane.b32.xlu0 %v7726, 95
      %v7744 = vpop.permute.xlu0 %7743
      %v7745 = vsel %vm1151, %v7734, %v7736
      %v7746 = vsel %vm1151, %v7736, %v7738
      %v7747 = vsel %vm1151, %v7738, %v7740
      %v7748 = vsel %vm1151, %v7740, %v7742
      %v7749 = vsel %vm1151, %v7742, %v7744
      %7755 = vst [vmem:[#allocation3 + $0x2d0] sm:$0xff] %v7745
      %7756 = vst [vmem:[#allocation3 + $0x2d8] sm:$0xff] %v7746
      %7757 = vst [vmem:[#allocation3 + $0x2e0] sm:$0xff] %v7747
      %7758 = vst [vmem:[#allocation3 + $0x2e8] sm:$0xff] %v7748
      %7759 = vst [vmem:[#allocation3 + $0x2f0] sm:$0xff] %v7749
      %v7760 = vld [vmem:[#allocation2 + $0x8] sm:$0xff]
      %v7761 = vld [vmem:[#allocation2 + $0x10] sm:$0xff]
      %v7762 = vld [vmem:[#allocation2 + $0x18] sm:$0xff]
      %v7763 = vld [vmem:[#allocation2 + $0x20] sm:$0xff]
      %v7764 = vld [vmem:[#allocation2 + $0x28] sm:$0xff]
      %v7765 = vld [vmem:[#allocation2 + $0x30] sm:$0xff]
      %7772 = vrot.lane.b32.xlu0 %v7760, 94
      %v7773 = vpop.permute.xlu0 %7772
      %7774 = vrot.lane.b32.xlu0 %v7761, 94
      %v7775 = vpop.permute.xlu0 %7774
      %7776 = vrot.lane.b32.xlu0 %v7762, 94
      %v7777 = vpop.permute.xlu0 %7776
      %7778 = vrot.lane.b32.xlu0 %v7763, 94
      %v7779 = vpop.permute.xlu0 %7778
      %7780 = vrot.lane.b32.xlu0 %v7764, 94
      %v7781 = vpop.permute.xlu0 %7780
      %7782 = vrot.lane.b32.xlu0 %v7765, 94
      %v7783 = vpop.permute.xlu0 %7782
      %v7784 = vsel %vm1191, %v7773, %v7775
      %v7785 = vsel %vm1191, %v7775, %v7777
      %v7786 = vsel %vm1191, %v7777, %v7779
      %v7787 = vsel %vm1191, %v7779, %v7781
      %v7788 = vsel %vm1191, %v7781, %v7783
      %7794 = vst [vmem:[#allocation3 + $0x2f8] sm:$0xff] %v7784
      %7795 = vst [vmem:[#allocation3 + $0x300] sm:$0xff] %v7785
      %7796 = vst [vmem:[#allocation3 + $0x308] sm:$0xff] %v7786
      %7797 = vst [vmem:[#allocation3 + $0x310] sm:$0xff] %v7787
      %7798 = vst [vmem:[#allocation3 + $0x318] sm:$0xff] %v7788
      %v7799 = vld [vmem:[#allocation2 + $0x8] sm:$0xff]
      %v7800 = vld [vmem:[#allocation2 + $0x10] sm:$0xff]
      %v7801 = vld [vmem:[#allocation2 + $0x18] sm:$0xff]
      %v7802 = vld [vmem:[#allocation2 + $0x20] sm:$0xff]
      %v7803 = vld [vmem:[#allocation2 + $0x28] sm:$0xff]
      %v7804 = vld [vmem:[#allocation2 + $0x30] sm:$0xff]
      %7811 = vrot.lane.b32.xlu0 %v7799, 66
      %v7812 = vpop.permute.xlu0 %7811
      %7813 = vrot.lane.b32.xlu0 %v7800, 66
      %v7814 = vpop.permute.xlu0 %7813
      %7815 = vrot.lane.b32.xlu0 %v7801, 66
      %v7816 = vpop.permute.xlu0 %7815
      %7817 = vrot.lane.b32.xlu0 %v7802, 66
      %v7818 = vpop.permute.xlu0 %7817
      %7819 = vrot.lane.b32.xlu0 %v7803, 66
      %v7820 = vpop.permute.xlu0 %7819
      %7821 = vrot.lane.b32.xlu0 %v7804, 66
      %v7822 = vpop.permute.xlu0 %7821
      %v7823 = vsel %vm461, %v7812, %v7814
      %v7824 = vsel %vm461, %v7814, %v7816
      %v7825 = vsel %vm461, %v7816, %v7818
      %v7826 = vsel %vm461, %v7818, %v7820
      %v7827 = vsel %vm461, %v7820, %v7822
      %7833 = vst [vmem:[#allocation3 + $0x320] sm:$0xff] %v7823
      %7834 = vst [vmem:[#allocation3 + $0x328] sm:$0xff] %v7824
      %7835 = vst [vmem:[#allocation3 + $0x330] sm:$0xff] %v7825
      %7836 = vst [vmem:[#allocation3 + $0x338] sm:$0xff] %v7826
      %7837 = vst [vmem:[#allocation3 + $0x340] sm:$0xff] %v7827
      %v7838 = vld [vmem:[#allocation2 + $0x8] sm:$0xff]
      %v7839 = vld [vmem:[#allocation2 + $0x10] sm:$0xff]
      %v7840 = vld [vmem:[#allocation2 + $0x18] sm:$0xff]
      %v7841 = vld [vmem:[#allocation2 + $0x20] sm:$0xff]
      %v7842 = vld [vmem:[#allocation2 + $0x28] sm:$0xff]
      %v7843 = vld [vmem:[#allocation2 + $0x30] sm:$0xff]
      %7850 = vrot.lane.b32.xlu0 %v7838, 65
      %v7851 = vpop.permute.xlu0 %7850
      %7852 = vrot.lane.b32.xlu0 %v7839, 65
      %v7853 = vpop.permute.xlu0 %7852
      %7854 = vrot.lane.b32.xlu0 %v7840, 65
      %v7855 = vpop.permute.xlu0 %7854
      %7856 = vrot.lane.b32.xlu0 %v7841, 65
      %v7857 = vpop.permute.xlu0 %7856
      %7858 = vrot.lane.b32.xlu0 %v7842, 65
      %v7859 = vpop.permute.xlu0 %7858
      %7860 = vrot.lane.b32.xlu0 %v7843, 65
      %v7861 = vpop.permute.xlu0 %7860
      %v7862 = vsel %vm501, %v7851, %v7853
      %v7863 = vsel %vm501, %v7853, %v7855
      %v7864 = vsel %vm501, %v7855, %v7857
      %v7865 = vsel %vm501, %v7857, %v7859
      %v7866 = vsel %vm501, %v7859, %v7861
      %7872 = vst [vmem:[#allocation3 + $0x348] sm:$0xff] %v7862
      %7873 = vst [vmem:[#allocation3 + $0x350] sm:$0xff] %v7863
      %7874 = vst [vmem:[#allocation3 + $0x358] sm:$0xff] %v7864
      %7875 = vst [vmem:[#allocation3 + $0x360] sm:$0xff] %v7865
      %7876 = vst [vmem:[#allocation3 + $0x368] sm:$0xff] %v7866
      %v7877 = vld [vmem:[#allocation2 + $0x8] sm:$0xff]
      %v7878 = vld [vmem:[#allocation2 + $0x10] sm:$0xff]
      %v7879 = vld [vmem:[#allocation2 + $0x18] sm:$0xff]
      %v7880 = vld [vmem:[#allocation2 + $0x20] sm:$0xff]
      %v7881 = vld [vmem:[#allocation2 + $0x28] sm:$0xff]
      %v7882 = vld [vmem:[#allocation2 + $0x30] sm:$0xff]
      %7889 = vrot.lane.b32.xlu0 %v7877, 64
      %v7890 = vpop.permute.xlu0 %7889
      %7891 = vrot.lane.b32.xlu0 %v7878, 64
      %v7892 = vpop.permute.xlu0 %7891
      %7893 = vrot.lane.b32.xlu0 %v7879, 64
      %v7894 = vpop.permute.xlu0 %7893
      %7895 = vrot.lane.b32.xlu0 %v7880, 64
      %v7896 = vpop.permute.xlu0 %7895
      %7897 = vrot.lane.b32.xlu0 %v7881, 64
      %v7898 = vpop.permute.xlu0 %7897
      %7899 = vrot.lane.b32.xlu0 %v7882, 64
      %v7900 = vpop.permute.xlu0 %7899
      %v7901 = vsel %vm541, %v7890, %v7892
      %v7902 = vsel %vm541, %v7892, %v7894
      %v7903 = vsel %vm541, %v7894, %v7896
      %v7904 = vsel %vm541, %v7896, %v7898
      %v7905 = vsel %vm541, %v7898, %v7900
      %7911 = vst [vmem:[#allocation3 + $0x370] sm:$0xff] %v7901
      %7912 = vst [vmem:[#allocation3 + $0x378] sm:$0xff] %v7902
      %7913 = vst [vmem:[#allocation3 + $0x380] sm:$0xff] %v7903
      %7914 = vst [vmem:[#allocation3 + $0x388] sm:$0xff] %v7904
      %7915 = vst [vmem:[#allocation3 + $0x390] sm:$0xff] %v7905
      %v7916 = vld [vmem:[#allocation2 + $0x8] sm:$0xff]
      %v7917 = vld [vmem:[#allocation2 + $0x10] sm:$0xff]
      %v7918 = vld [vmem:[#allocation2 + $0x18] sm:$0xff]
      %v7919 = vld [vmem:[#allocation2 + $0x20] sm:$0xff]
      %v7920 = vld [vmem:[#allocation2 + $0x28] sm:$0xff]
      %v7921 = vld [vmem:[#allocation2 + $0x30] sm:$0xff]
      %7928 = vrot.lane.b32.xlu0 %v7916, 63
      %v7929 = vpop.permute.xlu0 %7928
      %7930 = vrot.lane.b32.xlu0 %v7917, 63
      %v7931 = vpop.permute.xlu0 %7930
      %7932 = vrot.lane.b32.xlu0 %v7918, 63
      %v7933 = vpop.permute.xlu0 %7932
      %7934 = vrot.lane.b32.xlu0 %v7919, 63
      %v7935 = vpop.permute.xlu0 %7934
      %7936 = vrot.lane.b32.xlu0 %v7920, 63
      %v7937 = vpop.permute.xlu0 %7936
      %7938 = vrot.lane.b32.xlu0 %v7921, 63
      %v7939 = vpop.permute.xlu0 %7938
      %v7940 = vsel %vm581, %v7929, %v7931
      %v7941 = vsel %vm581, %v7931, %v7933
      %v7942 = vsel %vm581, %v7933, %v7935
      %v7943 = vsel %vm581, %v7935, %v7937
      %v7944 = vsel %vm581, %v7937, %v7939
      %7950 = vst [vmem:[#allocation3 + $0x398] sm:$0xff] %v7940
      %7951 = vst [vmem:[#allocation3 + $0x3a0] sm:$0xff] %v7941
      %7952 = vst [vmem:[#allocation3 + $0x3a8] sm:$0xff] %v7942
      %7953 = vst [vmem:[#allocation3 + $0x3b0] sm:$0xff] %v7943
      %7954 = vst [vmem:[#allocation3 + $0x3b8] sm:$0xff] %v7944
      %v7955 = vld [vmem:[#allocation2 + $0x8] sm:$0xff]
      %v7956 = vld [vmem:[#allocation2 + $0x10] sm:$0xff]
      %v7957 = vld [vmem:[#allocation2 + $0x18] sm:$0xff]
      %v7958 = vld [vmem:[#allocation2 + $0x20] sm:$0xff]
      %v7959 = vld [vmem:[#allocation2 + $0x28] sm:$0xff]
      %v7960 = vld [vmem:[#allocation2 + $0x30] sm:$0xff]
      %7967 = vrot.lane.b32.xlu0 %v7955, 62
      %v7968 = vpop.permute.xlu0 %7967
      %7969 = vrot.lane.b32.xlu0 %v7956, 62
      %v7970 = vpop.permute.xlu0 %7969
      %7971 = vrot.lane.b32.xlu0 %v7957, 62
      %v7972 = vpop.permute.xlu0 %7971
      %7973 = vrot.lane.b32.xlu0 %v7958, 62
      %v7974 = vpop.permute.xlu0 %7973
      %7975 = vrot.lane.b32.xlu0 %v7959, 62
      %v7976 = vpop.permute.xlu0 %7975
      %7977 = vrot.lane.b32.xlu0 %v7960, 62
      %v7978 = vpop.permute.xlu0 %7977
      %v7979 = vsel %vm621, %v7968, %v7970
      %v7980 = vsel %vm621, %v7970, %v7972
      %v7981 = vsel %vm621, %v7972, %v7974
      %v7982 = vsel %vm621, %v7974, %v7976
      %v7983 = vsel %vm621, %v7976, %v7978
      %7989 = vst [vmem:[#allocation3 + $0x3c0] sm:$0xff] %v7979
      %7990 = vst [vmem:[#allocation3 + $0x3c8] sm:$0xff] %v7980
      %7991 = vst [vmem:[#allocation3 + $0x3d0] sm:$0xff] %v7981
      %7992 = vst [vmem:[#allocation3 + $0x3d8] sm:$0xff] %v7982
      %7993 = vst [vmem:[#allocation3 + $0x3e0] sm:$0xff] %v7983
      %v7994 = vld [vmem:[%s10] sm:$0xff]
      %v7995 = vld [vmem:[%s10 + $0x8] sm:$0xff]
      %v7996 = vld [vmem:[#allocation3] sm:$0xff]
      %v7997 = vld [vmem:[#allocation3 + $0x8] sm:$0xff]
      %v7998 = vld [vmem:[#allocation3 + $0x10] sm:$0xff]
      %v7999 = vld [vmem:[#allocation3 + $0x18] sm:$0xff]
      %v8000 = vld [vmem:[#allocation3 + $0x20] sm:$0xff]
      %v8001 = vld [vmem:[#allocation3 + $0x28] sm:$0xff]
      %v8002 = vld [vmem:[#allocation3 + $0x30] sm:$0xff]
      %v8003 = vld [vmem:[#allocation3 + $0x38] sm:$0xff]
      %v8004 = vld [vmem:[#allocation3 + $0x40] sm:$0xff]
      %v8005 = vld [vmem:[#allocation3 + $0x48] sm:$0xff]
      %v8006 = vld [vmem:[#allocation3 + $0x50] sm:$0xff]
      %v8007 = vld [vmem:[#allocation3 + $0x58] sm:$0xff]
      %v8008 = vld [vmem:[#allocation3 + $0x60] sm:$0xff]
      %v8009 = vld [vmem:[#allocation3 + $0x68] sm:$0xff]
      %v8010 = vld [vmem:[#allocation3 + $0x70] sm:$0xff]
      %v8011 = vld [vmem:[#allocation3 + $0x78] sm:$0xff]
      %v8012 = vld [vmem:[#allocation3 + $0x80] sm:$0xff]
      %v8013 = vld [vmem:[#allocation3 + $0x88] sm:$0xff]
      %v8014 = vld [vmem:[#allocation3 + $0x90] sm:$0xff]
      %v8015 = vld [vmem:[#allocation3 + $0x98] sm:$0xff]
      %v8016 = vld [vmem:[#allocation3 + $0xa0] sm:$0xff]
      %v8017 = vld [vmem:[#allocation3 + $0xa8] sm:$0xff]
      %v8018 = vld [vmem:[#allocation3 + $0xb0] sm:$0xff]
      %v8019 = vld [vmem:[#allocation3 + $0xb8] sm:$0xff]
      %v8020 = vld [vmem:[#allocation3 + $0xc0] sm:$0xff]
      %v8021 = vld [vmem:[#allocation3 + $0xc8] sm:$0xff]
      %v8022 = vld [vmem:[#allocation3 + $0xd0] sm:$0xff]
      %v8023 = vld [vmem:[#allocation3 + $0xd8] sm:$0xff]
      %v8024 = vld [vmem:[#allocation3 + $0xe0] sm:$0xff]
      %v8025 = vld [vmem:[#allocation3 + $0xe8] sm:$0xff]
      %v8026 = vld [vmem:[#allocation3 + $0xf0] sm:$0xff]
      %v8027 = vld [vmem:[#allocation3 + $0xf8] sm:$0xff]
      %v8028 = vld [vmem:[#allocation3 + $0x100] sm:$0xff]
      %v8029 = vld [vmem:[#allocation3 + $0x108] sm:$0xff]
      %v8030 = vld [vmem:[#allocation3 + $0x110] sm:$0xff]
      %v8031 = vld [vmem:[#allocation3 + $0x118] sm:$0xff]
      %v8032 = vld [vmem:[#allocation3 + $0x120] sm:$0xff]
      %v8033 = vld [vmem:[#allocation3 + $0x128] sm:$0xff]
      %v8034 = vld [vmem:[#allocation3 + $0x130] sm:$0xff]
      %v8035 = vld [vmem:[#allocation3 + $0x138] sm:$0xff]
      %v8036 = vld [vmem:[#allocation3 + $0x140] sm:$0xff]
      %v8037 = vld [vmem:[#allocation3 + $0x148] sm:$0xff]
      %v8038 = vld [vmem:[#allocation3 + $0x150] sm:$0xff]
      %v8039 = vld [vmem:[#allocation3 + $0x158] sm:$0xff]
      %v8040 = vld [vmem:[#allocation3 + $0x160] sm:$0xff]
      %v8041 = vld [vmem:[#allocation3 + $0x168] sm:$0xff]
      %v8042 = vld [vmem:[#allocation3 + $0x170] sm:$0xff]
      %v8043 = vld [vmem:[#allocation3 + $0x178] sm:$0xff]
      %v8044 = vld [vmem:[#allocation3 + $0x180] sm:$0xff]
      %v8045 = vld [vmem:[#allocation3 + $0x188] sm:$0xff]
      %v8046 = vld [vmem:[#allocation3 + $0x190] sm:$0xff]
      %v8047 = vld [vmem:[#allocation3 + $0x198] sm:$0xff]
      %v8048 = vld [vmem:[#allocation3 + $0x1a0] sm:$0xff]
      %v8049 = vld [vmem:[#allocation3 + $0x1a8] sm:$0xff]
      %v8050 = vld [vmem:[#allocation3 + $0x1b0] sm:$0xff]
      %v8051 = vld [vmem:[#allocation3 + $0x1b8] sm:$0xff]
      %v8052 = vld [vmem:[#allocation3 + $0x1c0] sm:$0xff]
      %v8053 = vld [vmem:[#allocation3 + $0x1c8] sm:$0xff]
      %v8054 = vld [vmem:[#allocation3 + $0x1d0] sm:$0xff]
      %v8055 = vld [vmem:[#allocation3 + $0x1d8] sm:$0xff]
      %v8056 = vld [vmem:[#allocation3 + $0x1e0] sm:$0xff]
      %v8057 = vld [vmem:[#allocation3 + $0x1e8] sm:$0xff]
      %v8058 = vld [vmem:[#allocation3 + $0x1f0] sm:$0xff]
      %v8059 = vld [vmem:[#allocation3 + $0x1f8] sm:$0xff]
      %v8060 = vld [vmem:[#allocation3 + $0x200] sm:$0xff]
      %v8061 = vld [vmem:[#allocation3 + $0x208] sm:$0xff]
      %v8062 = vld [vmem:[#allocation3 + $0x210] sm:$0xff]
      %v8063 = vld [vmem:[#allocation3 + $0x218] sm:$0xff]
      %v8064 = vld [vmem:[#allocation3 + $0x220] sm:$0xff]
      %v8065 = vld [vmem:[#allocation3 + $0x228] sm:$0xff]
      %v8066 = vld [vmem:[#allocation3 + $0x230] sm:$0xff]
      %v8067 = vld [vmem:[#allocation3 + $0x238] sm:$0xff]
      %v8068 = vld [vmem:[#allocation3 + $0x240] sm:$0xff]
      %v8069 = vld [vmem:[#allocation3 + $0x248] sm:$0xff]
      %v8070 = vld [vmem:[#allocation3 + $0x250] sm:$0xff]
      %v8071 = vld [vmem:[#allocation3 + $0x258] sm:$0xff]
      %v8072 = vld [vmem:[#allocation3 + $0x260] sm:$0xff]
      %v8073 = vld [vmem:[#allocation3 + $0x268] sm:$0xff]
      %v8074 = vld [vmem:[#allocation3 + $0x270] sm:$0xff]
      %v8075 = vld [vmem:[#allocation3 + $0x278] sm:$0xff]
      %v8076 = vld [vmem:[#allocation3 + $0x280] sm:$0xff]
      %v8077 = vld [vmem:[#allocation3 + $0x288] sm:$0xff]
      %v8078 = vld [vmem:[#allocation3 + $0x290] sm:$0xff]
      %v8079 = vld [vmem:[#allocation3 + $0x298] sm:$0xff]
      %v8080 = vld [vmem:[#allocation3 + $0x2a0] sm:$0xff]
      %v8081 = vld [vmem:[#allocation3 + $0x2a8] sm:$0xff]
      %v8082 = vld [vmem:[#allocation3 + $0x2b0] sm:$0xff]
      %v8083 = vld [vmem:[#allocation3 + $0x2b8] sm:$0xff]
      %v8084 = vld [vmem:[#allocation3 + $0x2c0] sm:$0xff]
      %v8085 = vld [vmem:[#allocation3 + $0x2c8] sm:$0xff]
      %v8086 = vld [vmem:[#allocation3 + $0x2d0] sm:$0xff]
      %v8087 = vld [vmem:[#allocation3 + $0x2d8] sm:$0xff]
      %v8088 = vld [vmem:[#allocation3 + $0x2e0] sm:$0xff]
      %v8089 = vld [vmem:[#allocation3 + $0x2e8] sm:$0xff]
      %v8090 = vld [vmem:[#allocation3 + $0x2f0] sm:$0xff]
      %v8091 = vld [vmem:[#allocation3 + $0x2f8] sm:$0xff]
      %v8092 = vld [vmem:[#allocation3 + $0x300] sm:$0xff]
      %v8093 = vld [vmem:[#allocation3 + $0x308] sm:$0xff]
      %v8094 = vld [vmem:[#allocation3 + $0x310] sm:$0xff]
      %v8095 = vld [vmem:[#allocation3 + $0x318] sm:$0xff]
      %v8096 = vld [vmem:[#allocation3 + $0x320] sm:$0xff]
      %v8097 = vld [vmem:[#allocation3 + $0x328] sm:$0xff]
      %v8098 = vld [vmem:[#allocation3 + $0x330] sm:$0xff]
      %v8099 = vld [vmem:[#allocation3 + $0x338] sm:$0xff]
      %v8100 = vld [vmem:[#allocation3 + $0x340] sm:$0xff]
      %v8101 = vld [vmem:[#allocation3 + $0x348] sm:$0xff]
      %v8102 = vld [vmem:[#allocation3 + $0x350] sm:$0xff]
      %v8103 = vld [vmem:[#allocation3 + $0x358] sm:$0xff]
      %v8104 = vld [vmem:[#allocation3 + $0x360] sm:$0xff]
      %v8105 = vld [vmem:[#allocation3 + $0x368] sm:$0xff]
      %v8106 = vld [vmem:[#allocation3 + $0x370] sm:$0xff]
      %v8107 = vld [vmem:[#allocation3 + $0x378] sm:$0xff]
      %v8108 = vld [vmem:[#allocation3 + $0x380] sm:$0xff]
      %v8109 = vld [vmem:[#allocation3 + $0x388] sm:$0xff]
      %v8110 = vld [vmem:[#allocation3 + $0x390] sm:$0xff]
      %v8111 = vld [vmem:[#allocation3 + $0x398] sm:$0xff]
      %v8112 = vld [vmem:[#allocation3 + $0x3a0] sm:$0xff]
      %v8113 = vld [vmem:[#allocation3 + $0x3a8] sm:$0xff]
      %v8114 = vld [vmem:[#allocation3 + $0x3b0] sm:$0xff]
      %v8115 = vld [vmem:[#allocation3 + $0x3b8] sm:$0xff]
      %v8116 = vld [vmem:[#allocation3 + $0x3c0] sm:$0xff]
      %v8117 = vld [vmem:[#allocation3 + $0x3c8] sm:$0xff]
      %v8118 = vld [vmem:[#allocation3 + $0x3d0] sm:$0xff]
      %v8119 = vld [vmem:[#allocation3 + $0x3d8] sm:$0xff]
      %v8120 = vld [vmem:[#allocation3 + $0x3e0] sm:$0xff]
      %v8121 = vld [vmem:[%s11] sm:$0xff]
      %8123 = vset.pattern.permute.xlu0 0
      %8124 = vperm.xlu0 %8123, %v8121
      %v8125 = vpop.permute.xlu0 %8124
      %v8128 = vsel %vm1535, %v7995, 0
      %8130 = vmatprep.subr.mxu0 %v7997
      %8131 = vmatpush1.msra.mxu0 %v7996
      %8132 = vmatprep.subr.mxu0 %v8002
      %8133 = vmatpush1.msra.mxu0 %v8001
      %8134 = vmatprep.subr.mxu0 %v8007
      %8135 = vmatpush1.msra.mxu0 %v8006
      %8136 = vmatprep.subr.mxu0 %v8012
      %8137 = vmatpush1.msra.mxu0 %v8011
      %8138 = vmatprep.subr.mxu0 %v8017
      %8139 = vmatpush1.msra.mxu0 %v8016
      %8140 = vmatprep.subr.mxu0 %v8022
      %8141 = vmatpush1.msra.mxu0 %v8021
      %8142 = vmatprep.subr.mxu0 %v8027
      %8143 = vmatpush1.msra.mxu0 %v8026
      %8144 = vmatprep.subr.mxu0 %v8032
      %8145 = vmatpush1.msra.mxu0 %v8031
      %8146 = vmatprep.subr.mxu0 %v8037
      %8147 = vmatpush1.msra.mxu0 %v8036
      %8148 = vmatprep.subr.mxu0 %v8042
      %8149 = vmatpush1.msra.mxu0 %v8041
      %8150 = vmatprep.subr.mxu0 %v8047
      %8151 = vmatpush1.msra.mxu0 %v8046
      %8152 = vmatprep.subr.mxu0 %v8052
      %8153 = vmatpush1.msra.mxu0 %v8051
      %8154 = vmatprep.subr.mxu0 %v8057
      %8155 = vmatpush1.msra.mxu0 %v8056
      %8156 = vmatprep.subr.mxu0 %v8062
      %8157 = vmatpush1.msra.mxu0 %v8061
      %8158 = vmatprep.subr.mxu0 %v8067
      %8159 = vmatpush1.msra.mxu0 %v8066
      %8160 = vmatprep.subr.mxu0 %v8072
      %8161 = vmatpush1.msra.mxu0 %v8071
      %8162 = vmatprep.subr.mxu0 %v8077
      %8163 = vmatpush1.msra.mxu0 %v8076
      %8164 = vmatprep.subr.mxu0 %v8082
      %8165 = vmatpush1.msra.mxu0 %v8081
      %8166 = vmatprep.subr.mxu0 %v8087
      %8167 = vmatpush1.msra.mxu0 %v8086
      %8168 = vmatprep.subr.mxu0 %v8092
      %8169 = vmatpush1.msra.mxu0 %v8091
      %8170 = vmatprep.subr.mxu0 %v8097
      %8171 = vmatpush1.msra.mxu0 %v8096
      %8172 = vmatprep.subr.mxu0 %v8102
      %8173 = vmatpush1.msra.mxu0 %v8101
      %8174 = vmatprep.subr.mxu0 %v8107
      %8175 = vmatpush1.msra.mxu0 %v8106
      %8176 = vmatprep.subr.mxu0 %v8112
      %8177 = vmatpush1.msra.mxu0 %v8111
      %8178 = vmatprep.subr.mxu0 %v8117
      %8179 = vmatpush1.msra.mxu0 %v8116
      %8180 = vmatprep.subr.mxu0 0.0
      %8181 = vmatpush1.msra.mxu0 0.0
      %8182 = vmatprep.subr.mxu0 0.0
      %8183 = vmatpush1.msra.mxu0 0.0
      %8184 = vmatprep.subr.mxu0 0.0
      %8185 = vmatpush1.msra.mxu0 0.0
      %8186 = vmatprep.subr.mxu0 0.0
      %8187 = vmatpush1.msra.mxu0 0.0
      %8188 = vmatprep.subr.mxu0 0.0
      %8189 = vmatpush1.msra.mxu0 0.0
      %8190 = vmatprep.subr.mxu0 0.0
      %8191 = vmatpush1.msra.mxu0 0.0
      %8192 = vmatprep.subr.mxu0 0.0
      %8193 = vmatpush1.msra.mxu0 0.0
      %8194 = vmatprep.mubr.f32.mxu0 %v8128
      %8195 = vmatmul.mubr.f32.gmra.mrb[0].mxu0 %v7994
      %v8196 = vpop.f32.mrb[0].mxu0
      %v8197 = vadd.f32 %v8125, %v8196
      %v8198 = vpop.f32.mrb[0].mxu0
      %v8199 = vadd.f32 %v8125, %v8198
      %8200 = vdwg.mxu0
      %8201 = vmatprep.subr.mxu0 %v7999
      %8202 = vmatpush1.msra.mxu0 %v7998
      %8203 = vmatprep.subr.mxu0 %v8004
      %8204 = vmatpush1.msra.mxu0 %v8003
      %8205 = vmatprep.subr.mxu0 %v8009
      %8206 = vmatpush1.msra.mxu0 %v8008
      %8207 = vmatprep.subr.mxu0 %v8014
      %8208 = vmatpush1.msra.mxu0 %v8013
      %8209 = vmatprep.subr.mxu0 %v8019
      %8210 = vmatpush1.msra.mxu0 %v8018
      %8211 = vmatprep.subr.mxu0 %v8024
      %8212 = vmatpush1.msra.mxu0 %v8023
      %8213 = vmatprep.subr.mxu0 %v8029
      %8214 = vmatpush1.msra.mxu0 %v8028
      %8215 = vmatprep.subr.mxu0 %v8034
      %8216 = vmatpush1.msra.mxu0 %v8033
      %8217 = vmatprep.subr.mxu0 %v8039
      %8218 = vmatpush1.msra.mxu0 %v8038
      %8219 = vmatprep.subr.mxu0 %v8044
      %8220 = vmatpush1.msra.mxu0 %v8043
      %8221 = vmatprep.subr.mxu0 %v8049
      %8222 = vmatpush1.msra.mxu0 %v8048
      %8223 = vmatprep.subr.mxu0 %v8054
      %8224 = vmatpush1.msra.mxu0 %v8053
      %8225 = vmatprep.subr.mxu0 %v8059
      %8226 = vmatpush1.msra.mxu0 %v8058
      %8227 = vmatprep.subr.mxu0 %v8064
      %8228 = vmatpush1.msra.mxu0 %v8063
      %8229 = vmatprep.subr.mxu0 %v8069
      %8230 = vmatpush1.msra.mxu0 %v8068
      %8231 = vmatprep.subr.mxu0 %v8074
      %8232 = vmatpush1.msra.mxu0 %v8073
      %8233 = vmatprep.subr.mxu0 %v8079
      %8234 = vmatpush1.msra.mxu0 %v8078
      %8235 = vmatprep.subr.mxu0 %v8084
      %8236 = vmatpush1.msra.mxu0 %v8083
      %8237 = vmatprep.subr.mxu0 %v8089
      %8238 = vmatpush1.msra.mxu0 %v8088
      %8239 = vmatprep.subr.mxu0 %v8094
      %8240 = vmatpush1.msra.mxu0 %v8093
      %8241 = vmatprep.subr.mxu0 %v8099
      %8242 = vmatpush1.msra.mxu0 %v8098
      %8243 = vmatprep.subr.mxu0 %v8104
      %8244 = vmatpush1.msra.mxu0 %v8103
      %8245 = vmatprep.subr.mxu0 %v8109
      %8246 = vmatpush1.msra.mxu0 %v8108
      %8247 = vmatprep.subr.mxu0 %v8114
      %8248 = vmatpush1.msra.mxu0 %v8113
      %8249 = vmatprep.subr.mxu0 %v8119
      %8250 = vmatpush1.msra.mxu0 %v8118
      %8251 = vmatprep.subr.mxu0 0.0
      %8252 = vmatpush1.msra.mxu0 0.0
      %8253 = vmatprep.subr.mxu0 0.0
      %8254 = vmatpush1.msra.mxu0 0.0
      %8255 = vmatprep.subr.mxu0 0.0
      %8256 = vmatpush1.msra.mxu0 0.0
      %8257 = vmatprep.subr.mxu0 0.0
      %8258 = vmatpush1.msra.mxu0 0.0
      %8259 = vmatprep.subr.mxu0 0.0
      %8260 = vmatpush1.msra.mxu0 0.0
      %8261 = vmatprep.subr.mxu0 0.0
      %8262 = vmatpush1.msra.mxu0 0.0
      %8263 = vmatprep.subr.mxu0 0.0
      %8264 = vmatpush1.msra.mxu0 0.0
      %8265 = vmatprep.mubr.f32.mxu0 %v8128
      %8266 = vmatmul.mubr.f32.gmra.mrb[0].mxu0 %v7994
      %v8267 = vpop.f32.mrb[0].mxu0
      %v8268 = vadd.f32 %v8125, %v8267
      %v8269 = vpop.f32.mrb[0].mxu0
      %v8270 = vadd.f32 %v8125, %v8269
      %8271 = vdwg.mxu0
      %8272 = vmatprep.subr.mxu0 0.0
      %8273 = vmatpush1.msra.mxu0 %v8000
      %8274 = vmatprep.subr.mxu0 0.0
      %8275 = vmatpush1.msra.mxu0 %v8005
      %8276 = vmatprep.subr.mxu0 0.0
      %8277 = vmatpush1.msra.mxu0 %v8010
      %8278 = vmatprep.subr.mxu0 0.0
      %8279 = vmatpush1.msra.mxu0 %v8015
      %8280 = vmatprep.subr.mxu0 0.0
      %8281 = vmatpush1.msra.mxu0 %v8020
      %8282 = vmatprep.subr.mxu0 0.0
      %8283 = vmatpush1.msra.mxu0 %v8025
      %8284 = vmatprep.subr.mxu0 0.0
      %8285 = vmatpush1.msra.mxu0 %v8030
      %8286 = vmatprep.subr.mxu0 0.0
      %8287 = vmatpush1.msra.mxu0 %v8035
      %8288 = vmatprep.subr.mxu0 0.0
      %8289 = vmatpush1.msra.mxu0 %v8040
      %8290 = vmatprep.subr.mxu0 0.0
      %8291 = vmatpush1.msra.mxu0 %v8045
      %8292 = vmatprep.subr.mxu0 0.0
      %8293 = vmatpush1.msra.mxu0 %v8050
      %8294 = vmatprep.subr.mxu0 0.0
      %8295 = vmatpush1.msra.mxu0 %v8055
      %8296 = vmatprep.subr.mxu0 0.0
      %8297 = vmatpush1.msra.mxu0 %v8060
      %8298 = vmatprep.subr.mxu0 0.0
      %8299 = vmatpush1.msra.mxu0 %v8065
      %8300 = vmatprep.subr.mxu0 0.0
      %8301 = vmatpush1.msra.mxu0 %v8070
      %8302 = vmatprep.subr.mxu0 0.0
      %8303 = vmatpush1.msra.mxu0 %v8075
      %8304 = vmatprep.subr.mxu0 0.0
      %8305 = vmatpush1.msra.mxu0 %v8080
      %8306 = vmatprep.subr.mxu0 0.0
      %8307 = vmatpush1.msra.mxu0 %v8085
      %8308 = vmatprep.subr.mxu0 0.0
      %8309 = vmatpush1.msra.mxu0 %v8090
      %8310 = vmatprep.subr.mxu0 0.0
      %8311 = vmatpush1.msra.mxu0 %v8095
      %8312 = vmatprep.subr.mxu0 0.0
      %8313 = vmatpush1.msra.mxu0 %v8100
      %8314 = vmatprep.subr.mxu0 0.0
      %8315 = vmatpush1.msra.mxu0 %v8105
      %8316 = vmatprep.subr.mxu0 0.0
      %8317 = vmatpush1.msra.mxu0 %v8110
      %8318 = vmatprep.subr.mxu0 0.0
      %8319 = vmatpush1.msra.mxu0 %v8115
      %8320 = vmatprep.subr.mxu0 0.0
      %8321 = vmatpush1.msra.mxu0 %v8120
      %8322 = vmatprep.subr.mxu0 0.0
      %8323 = vmatpush1.msra.mxu0 0.0
      %8324 = vmatprep.subr.mxu0 0.0
      %8325 = vmatpush1.msra.mxu0 0.0
      %8326 = vmatprep.subr.mxu0 0.0
      %8327 = vmatpush1.msra.mxu0 0.0
      %8328 = vmatprep.subr.mxu0 0.0
      %8329 = vmatpush1.msra.mxu0 0.0
      %8330 = vmatprep.subr.mxu0 0.0
      %8331 = vmatpush1.msra.mxu0 0.0
      %8332 = vmatprep.subr.mxu0 0.0
      %8333 = vmatpush1.msra.mxu0 0.0
      %8334 = vmatprep.subr.mxu0 0.0
      %8335 = vmatpush1.msra.mxu0 0.0
      %8336 = vmatprep.mubr.f32.mxu0 %v8128
      %8337 = vmatmul.mubr.f32.gmra.mrb[0].mxu0 %v7994
      %v8338 = vpop.f32.mrb[0].mxu0
      %v8339 = vadd.f32 %v8125, %v8338
      %v8340 = vpop.f32.mrb[0].mxu0
      %8341 = vdwg.mxu0
      %v8347 = vcombine.low %v8197, %v8199
      %v8348 = vcombine.low %v8268, %v8270
      %v8350 = vunpack.c.l.s4 1966171168
      %v8351 = vunpack.c.0.s8 %v8350
      %v8352 = vlaneseq
      %v8353 = vshrl.u32 %v8352, 7
      %v8354 = vsub.s32 %v8351, %v8353
      %v8355 = vrot.slane %v8347, %v8354
      %v8357 = vunpack.c.l.s4 1966171168
      %v8358 = vunpack.c.0.s8 %v8357
      %v8359 = vlaneseq
      %v8360 = vshrl.u32 %v8359, 7
      %v8361 = vsub.s32 %v8358, %v8360
      %v8362 = vrot.slane %v8348, %v8361
      %v8364 = vunpack.c.l.s4 1966171168
      %v8365 = vunpack.c.0.s8 %v8364
      %v8366 = vlaneseq
      %v8367 = vshrl.u32 %v8366, 7
      %v8368 = vsub.s32 %v8365, %v8367
      %v8369 = vrot.slane %v8339, %v8368
      %v8370 = vcombine.low %v8355, %v8362
      %v8372 = vunpack.c.l.s4 1966171168
      %v8373 = vunpack.c.0.s8 %v8372
      %v8374 = vlaneseq
      %v8375 = vshrl.u32 %v8374, 7
      %v8376 = vsub.s32 %v8373, %v8375
      %v8377 = vrot.slane %v8370, %v8376
      %v8379 = vunpack.c.l.s4 1966171168
      %v8380 = vunpack.c.0.s8 %v8379
      %v8381 = vlaneseq
      %v8382 = vshrl.u32 %v8381, 7
      %v8383 = vsub.s32 %v8380, %v8382
      %v8384 = vrot.slane %v8369, %v8383
      %v8385 = vcombine.low %v8377, %v8384
      %v8387 = vlaneseq
      %vm8388 = vcmp.ge.s32.totalorder %v8387, 0
      %vm8389 = vcmp.lt.s32.totalorder %v8387, 640
      %vm8390 = vmand %vm8388, %vm8389
      %8391 = vst.msk [vmem:[%s411] sm:$0x1f] %vm8390, %v8385
      %p8392 = scmp.lt.s32.totalorder %s23, 1
      %s8393 = scalar_select %p8392, %s23, 1
      %s8394 = smul.addr %s8393, 5
      %s8395 = scalar_lea.vmem %s12, %s8394
      // Predicated region
      $region69: #{_lenet_forward_impl.1} parent=67 // pred_check
        %p8396 = pneg %p298
      $region70: #{_lenet_forward_impl.1} parent=67 // pred_check_branch
        %8398 = sbr.rel (%p8396) target = $region72
      $region71: #{_lenet_forward_impl.1} parent=67 // pred_region
        _
      $region72: #{_lenet_forward_impl.1} parent=67 // pred_fallthru
        _
    $region68: #{_lenet_forward_impl.1} parent=5 // pred_fallthru
      _
    %p8399 = scmp.le.s32.totalorder 2, %s18
    // Predicated region
    $region73: #{_lenet_forward_impl.1} parent=5 // pred_check
      %p8400 = pneg %p8399
    $region74: #{_lenet_forward_impl.1} parent=5 // pred_check_branch
      %8402 = sbr.rel (%p8400) target = $region76
    $region75: #{_lenet_forward_impl.1} parent=5 // pred_region
      %s8403 = ssub.s32 %s18, 2
      // Predicated region
      $region77: #{_lenet_forward_impl.1} parent=75 // pred_check
        %p8404 = pneg %p304
      $region78: #{_lenet_forward_impl.1} parent=75 // pred_check_branch
        %8406 = sbr.rel (%p8404) target = $region80
      $region79: #{_lenet_forward_impl.1} parent=75 // pred_region
        %p8407 = scmp.lt.s32.totalorder %s24, 1
        %s8408 = scalar_select %p8407, %s24, 1
        %s8409 = smul.addr %s8408, 5
        %s8410 = scalar_lea.vmem %s12, %s8409
      $region80: #{_lenet_forward_impl.1} parent=75 // pred_fallthru
        _
    $region76: #{_lenet_forward_impl.1} parent=5 // pred_fallthru
      _
  $region6: #{_lenet_forward_impl.1} parent=0 // loop_footer
    %s22 = sadd.s32 1, %s18
  $region7: #{_lenet_forward_impl.1} parent=0 // loop_footer_branch
    %17 = sbr.rel target = $region3
  $region8: #{_lenet_forward_impl.1} parent=0 // loop_exit
    _

</llo_original>
